<compile_context>
chip_gen: v7x
topology: tpu7x:2x2x1
jax: 0.10.0
libtpu: 0.0.40
codegen_flags: <defaults>
</compile_context>

<pallas_src>
import jax
import jax.numpy as jnp
from jax import lax
from jax.experimental import pallas as pl
from jax.experimental.pallas import tpu as pltpu

EPS = 1e-5  # PyTorch BatchNorm1d default eps


def _silu(x):
    # TODO(synk): pl.reciprocal(1+exp(-x), approx=True) would move the divide
    # to the EUP; kept exact so the f32 reference check stays tight.
    return x * jax.nn.sigmoid(x)


# ----------------------------- Pallas kernel ------------------------------- #
def _make_layer_kernel(meta, nb, cdtype, precision):
    """meta: per-block static dicts {l_in, l_out, stride, has_shortcut}."""

    def kernel(x_ref, *refs):
        pad_ref = refs[-1]            # VMEM scratch (nb, L0 + 2, c2), f32
        o_ref = refs[-2]
        w_refs = refs[:-2]
        wi = 0

        def nxt():
            nonlocal wi
            r = w_refs[wi]
            wi += 1
            return r

        def mm(a, b):
            return jnp.dot(a, b, precision=precision,
                           preferred_element_type=jnp.float32)

        l0 = meta[0]['l_in']
        x_flat = x_ref[...].reshape(nb * l0, x_ref.shape[-1])      # f32

        for bi, m in enumerate(meta):
            w1, b1, w2, b2, w3, b3 = nxt(), nxt(), nxt(), nxt(), nxt(), nxt()
            if m['has_shortcut']:
                wsc, bsc = nxt(), nxt()
            s, l_in, l_out = m['stride'], m['l_in'], m['l_out']
            c2 = w1.shape[1]
            c_in = x_flat.shape[-1]

            x_c = x_flat.astype(cdtype)        # cast once; reused by shortcut

            # --- cv1: 1x1 conv (BN scale folded into w1) + bias + SiLU ------
            h = _silu(mm(x_c, w1[...]) + b1[...])          # (nb*l_in, c2) f32

            # --- cv2: k=3, pad=1, stride=s conv as 3 accumulated matmuls ----
            w2a = w2[...]                                   # (3, c2, c2)
            h3d = h.reshape(nb, l_in, c2)
            zrow = jnp.zeros((nb, 1, c2), jnp.float32)
            if s == 1:
                # stride-1: taps are contiguous slices of the padded value;
                # the scratch is never touched.
                hp = jnp.concatenate([zrow, h3d, zrow], axis=1)
                taps = [hp[:, t:t + l_out, :] for t in range(3)]
            else:
                # strided block (first block only): write padded activation
                # once (zero halo rows included -> no separate zeroing), read
                # taps as strided sublane loads.
                pad_ref[...] = jnp.concatenate([zrow, h3d, zrow], axis=1)
                taps = [pad_ref[:, pl.ds(t, l_out, stride=s), :]
                        for t in range(3)]
            y = mm(taps[0].reshape(nb * l_out, c2).astype(cdtype), w2a[0])
            for t in (1, 2):
                y = y + mm(taps[t].reshape(nb * l_out, c2).astype(cdtype),
                           w2a[t])
            h2 = _silu(y + b2[...])                         # (nb*l_out, c2)

            # --- cv3: 1x1 conv + bias (no activation) -----------------------
            h3 = mm(h2.astype(cdtype), w3[...]) + b3[...]

            # --- shortcut ----------------------------------------------------
            if m['has_shortcut']:
                if s == 1:
                    xs = x_c
                else:
                    # strided 1x1 shortcut: strided row read of the input ref
                    # (only occurs on the first block, asserted in the wrapper).
                    xs = x_ref[:, pl.ds(0, l_out, stride=s), :]
                    xs = xs.reshape(nb * l_out, c_in).astype(cdtype)
                sc = mm(xs, wsc[...]) + bsc[...]
            else:
                sc = x_flat                    # identity (c_in == c3, s == 1)

            x_flat = jnp.maximum(h3 + sc, 0.0)              # (nb*l_out, c3)

        c3f = x_flat.shape[-1]
        o_ref[...] = x_flat.reshape(nb, meta[-1]['l_out'], c3f).astype(o_ref.dtype)

    return kernel


# ------------------------------ glue / params ------------------------------ #
def init_conv_bn(key, c_in, c_out, k):
    kw, kg, kb, km, kv = jax.random.split(key, 5)
    return dict(
        w=0.1 * jax.random.normal(kw, (c_out, c_in, k), jnp.float32),
        gamma=1.0 + 0.1 * jax.random.normal(kg, (c_out,), jnp.float32),
        beta=0.1 * jax.random.normal(kb, (c_out,), jnp.float32),
        mean=0.1 * jax.random.normal(km, (c_out,), jnp.float32),
        var=jax.random.uniform(kv, (c_out,), jnp.float32, minval=0.5, maxval=1.5),
    )


def build_layer_params(key, c1, c2, s, n, e):
    c3 = e * c2
    blocks = []
    in_c, stride = c1, s
    for _ in range(n):
        key, k1, k2, k3, k4 = jax.random.split(key, 5)
        p = dict(cv1=init_conv_bn(k1, in_c, c2, 1),
                 cv2=init_conv_bn(k2, c2, c2, 3),
                 cv3=init_conv_bn(k3, c2, c3, 1),
                 stride=stride)
        p['shortcut'] = (init_conv_bn(k4, in_c, c3, 1)
                         if (stride != 1 or in_c != c3) else None)
        blocks.append(p)
        in_c, stride = c3, 1
    return blocks


def fold_bn(p):
    scale = p['gamma'] / jnp.sqrt(p['var'] + EPS)          # (c,)
    bias = (p['beta'] - p['mean'] * scale)[None, :]        # (1, c), stays f32
    return scale, bias


def _prep_block(p, cdtype):
    """Fold BN scales into conv weights, transpose to channels-last matmul form."""
    s1, b1 = fold_bn(p['cv1'])
    s2, b2 = fold_bn(p['cv2'])
    s3, b3 = fold_bn(p['cv3'])
    w1 = (p['cv1']['w'][:, :, 0].T * s1[None, :]).astype(cdtype)          # (c_in, c2)
    w2 = (jnp.transpose(p['cv2']['w'], (2, 1, 0))
          * s2[None, None, :]).astype(cdtype)                             # (3, c2, c2)
    w3 = (p['cv3']['w'][:, :, 0].T * s3[None, :]).astype(cdtype)          # (c2, c3)
    args = [w1, b1, w2, b2, w3, b3]
    if p['shortcut'] is not None:
        ssc, bsc = fold_bn(p['shortcut'])
        wsc = (p['shortcut']['w'][:, :, 0].T * ssc[None, :]).astype(cdtype)
        args += [wsc, bsc]
    return args


def _pick_grid_split(N):
    """1 grid step (serial loop) on single-TC chips; 2 parallel steps on v7x."""
    try:
        kind = jax.devices()[0].device_kind.lower()
    except Exception:
        kind = ""
    if "v7" in kind and N >= 2 and N % 2 == 0:
        return 2
    return 1


def layer_pallas(x_nlc, blocks, cdtype=jnp.bfloat16, grid_splits=None):
    N, L, c1 = x_nlc.shape
    grid_n = _pick_grid_split(N) if grid_splits is None else grid_splits
    assert N % grid_n == 0
    nb = N // grid_n

    meta, wargs = [], []
    l_in = L
    for bi, p in enumerate(blocks):
        s = p['stride']
        l_out = (l_in - 1) // s + 1                 # (l_in + 2*1 - 3)//s + 1
        assert s == 1 or bi == 0, "strided block only supported at position 0"
        meta.append(dict(l_in=l_in, l_out=l_out, stride=s,
                         has_shortcut=p['shortcut'] is not None))
        wargs += _prep_block(p, cdtype)
        l_in = l_out

    c2 = blocks[0]['cv1']['w'].shape[0]
    c3f = blocks[-1]['cv3']['w'].shape[0]
    l_out_f = meta[-1]['l_out']

    precision = (lax.Precision.HIGHEST
                 if jnp.dtype(cdtype) == jnp.dtype(jnp.float32)
                 else lax.Precision.DEFAULT)

    def _full(a):
        nd = a.ndim
        return pl.BlockSpec(a.shape, lambda g, _nd=nd: (0,) * _nd)

    kernel = _make_layer_kernel(meta, nb, cdtype, precision)
    return pl.pallas_call(
        kernel,
        out_shape=jax.ShapeDtypeStruct((N, l_out_f, c3f), jnp.float32),
        grid=(grid_n,),
        in_specs=[pl.BlockSpec((nb, L, c1), lambda g: (g, 0, 0))]
                 + [_full(a) for a in wargs],
        out_specs=pl.BlockSpec((nb, l_out_f, c3f), lambda g: (g, 0, 0)),
        scratch_shapes=[pltpu.VMEM((nb, L + 2, c2), jnp.float32)],
        compiler_params=pltpu.CompilerParams(
            dimension_semantics=("parallel",)),
    )(x_nlc, *wargs)


# --------------------------- pure-JAX reference ----------------------------- #
def _bn_ref(y, p):
    g = p['gamma'][None, :, None]
    b = p['beta'][None, :, None]
    m = p['mean'][None, :, None]
    v = p['var'][None, :, None]
    return (y - m) / jnp.sqrt(v + EPS) * g + b


def _conv_bn_ref(x, p, stride, pad, act):
    y = lax.conv_general_dilated(x, p['w'], (stride,), [(pad, pad)],
                                 dimension_numbers=('NCH', 'OIH', 'NCH'),
                                 precision=lax.Precision.HIGHEST)
    y = _bn_ref(y, p)
    return y * jax.nn.sigmoid(y) if act else y


def _block_ref(x, p):
    h = _conv_bn_ref(x, p['cv1'], 1, 0, True)
    h = _conv_bn_ref(h, p['cv2'], p['stride'], 1, True)
    h = _conv_bn_ref(h, p['cv3'], 1, 0, False)
    sc = (_conv_bn_ref(x, p['shortcut'], p['stride'], 0, False)
          if p['shortcut'] is not None else x)
    return jax.nn.relu(h + sc)


def layer_ref(x_ncl, blocks):
    for p in blocks:
        x_ncl = _block_ref(x_ncl, p)
    return x_ncl


# ---------------------------------- main ------------------------------------ #
if __name__ == "__main__":
    # ResNetLayer(c1=16, c2=32, s=2, is_first=False, n=2, e=4) on x:(N=2,16,L=16)
    N, c1, c2, L, s, n, e = 2, 16, 32, 16, 2, 2, 4

    key = jax.random.PRNGKey(0)
    kx, kp = jax.random.split(key)
    x_ncl = jax.random.normal(kx, (N, c1, L), jnp.float32)     # PyTorch (N, C, L)
    blocks = build_layer_params(kp, c1, c2, s, n, e)

    x_nlc = jnp.transpose(x_ncl, (0, 2, 1))
    ref_ncl = jax.block_until_ready(layer_ref(x_ncl, blocks))
    ref_nlc = jnp.transpose(ref_ncl, (0, 2, 1))

    # 1) semantics check with f32 matmul operands (HIGHEST precision).
    y32 = jax.block_until_ready(layer_pallas(x_nlc, blocks, cdtype=jnp.float32))
    err32 = float(jnp.max(jnp.abs(y32 - ref_nlc)))
    assert jnp.allclose(y32, ref_nlc, atol=1e-3, rtol=1e-3), f"f32 max err {err32}"

    # 2) fast path: bf16 matmul operands, f32 accumulation / element-wise math.
    ybf = jax.block_until_ready(layer_pallas(x_nlc, blocks, cdtype=jnp.bfloat16))
    errbf = float(jnp.max(jnp.abs(ybf - ref_nlc)))
    assert jnp.allclose(ybf, ref_nlc, atol=5e-2, rtol=5e-2), f"bf16 max err {errbf}"

    print("KERNEL_OK")
</pallas_src>

<mosaic_0001>
module attributes {stable_mosaic.version = 11 : i64} {
  func.func @kernel(%arg0: i32, %arg1: memref<2x16x16xf32, #tpu.memory_space<vmem>>, %arg2: memref<16x32xf32, #tpu.memory_space<vmem>>, %arg3: memref<1x32xf32, #tpu.memory_space<vmem>>, %arg4: memref<3x32x32xf32, #tpu.memory_space<vmem>>, %arg5: memref<1x32xf32, #tpu.memory_space<vmem>>, %arg6: memref<32x128xf32, #tpu.memory_space<vmem>>, %arg7: memref<1x128xf32, #tpu.memory_space<vmem>>, %arg8: memref<16x128xf32, #tpu.memory_space<vmem>>, %arg9: memref<1x128xf32, #tpu.memory_space<vmem>>, %arg10: memref<128x32xf32, #tpu.memory_space<vmem>>, %arg11: memref<1x32xf32, #tpu.memory_space<vmem>>, %arg12: memref<3x32x32xf32, #tpu.memory_space<vmem>>, %arg13: memref<1x32xf32, #tpu.memory_space<vmem>>, %arg14: memref<32x128xf32, #tpu.memory_space<vmem>>, %arg15: memref<1x128xf32, #tpu.memory_space<vmem>>, %arg16: memref<2x8x128xf32, #tpu.memory_space<vmem>>, %arg17: memref<2x18x32xf32, #tpu.memory_space<vmem>>) attributes {dimension_semantics = [#tpu.dimension_semantics<parallel>], iteration_bounds = array<i64: 1>, scalar_prefetch = 0 : i64, scratch_operands = 1 : i64, tpu.core_type = #tpu.core_type<tc>, window_params = [{transform_indices = @transform_0, window_bounds = array<i64: 2, 16, 16>}, {pipeline_mode = #tpu.pipeline_mode<synchronous>, transform_indices = @transform_1, window_bounds = array<i64: 16, 32>}, {pipeline_mode = #tpu.pipeline_mode<synchronous>, transform_indices = @transform_2, window_bounds = array<i64: 1, 32>}, {pipeline_mode = #tpu.pipeline_mode<synchronous>, transform_indices = @transform_3, window_bounds = array<i64: 3, 32, 32>}, {pipeline_mode = #tpu.pipeline_mode<synchronous>, transform_indices = @transform_4, window_bounds = array<i64: 1, 32>}, {pipeline_mode = #tpu.pipeline_mode<synchronous>, transform_indices = @transform_5, window_bounds = array<i64: 32, 128>}, {pipeline_mode = #tpu.pipeline_mode<synchronous>, transform_indices = @transform_6, window_bounds = array<i64: 1, 128>}, {pipeline_mode = #tpu.pipeline_mode<synchronous>, transform_indices = @transform_7, window_bounds = array<i64: 16, 128>}, {pipeline_mode = #tpu.pipeline_mode<synchronous>, transform_indices = @transform_8, window_bounds = array<i64: 1, 128>}, {pipeline_mode = #tpu.pipeline_mode<synchronous>, transform_indices = @transform_9, window_bounds = array<i64: 128, 32>}, {pipeline_mode = #tpu.pipeline_mode<synchronous>, transform_indices = @transform_10, window_bounds = array<i64: 1, 32>}, {pipeline_mode = #tpu.pipeline_mode<synchronous>, transform_indices = @transform_11, window_bounds = array<i64: 3, 32, 32>}, {pipeline_mode = #tpu.pipeline_mode<synchronous>, transform_indices = @transform_12, window_bounds = array<i64: 1, 32>}, {pipeline_mode = #tpu.pipeline_mode<synchronous>, transform_indices = @transform_13, window_bounds = array<i64: 32, 128>}, {pipeline_mode = #tpu.pipeline_mode<synchronous>, transform_indices = @transform_14, window_bounds = array<i64: 1, 128>}, {transform_indices = @transform_15, window_bounds = array<i64: 2, 8, 128>}]} {
    %c0 = arith.constant 0 : index
    %c0_0 = arith.constant 0 : index
    %c0_1 = arith.constant 0 : index
    %0 = vector.load %arg1[%c0, %c0_0, %c0_1] : memref<2x16x16xf32, #tpu.memory_space<vmem>>, vector<2x16x16xf32>
    %1 = vector.shape_cast %0 : vector<2x16x16xf32> to vector<32x16xf32>
    %c0_2 = arith.constant 0 : index
    %c0_3 = arith.constant 0 : index
    %2 = vector.load %arg2[%c0_2, %c0_3] : memref<16x32xf32, #tpu.memory_space<vmem>>, vector<16x32xf32>
    %cst = arith.constant dense<0.000000e+00> : vector<32x32xf32>
    %3 = tpu.matmul %1, %2, %cst {dimension_numbers = #tpu.dot_dimension_numbers<[1], [0], [0], [1], [0, 0, 1, 1], [], []>, precision = #tpu.contract_precision<fp32>} : vector<32x16xf32>, vector<16x32xf32>, vector<32x32xf32> -> vector<32x32xf32>
    %c0_4 = arith.constant 0 : index
    %c0_5 = arith.constant 0 : index
    %4 = vector.load %arg3[%c0_4, %c0_5] : memref<1x32xf32, #tpu.memory_space<vmem>>, vector<1x32xf32>
    %5 = vector.broadcast %4 : vector<1x32xf32> to vector<32x32xf32>
    %6 = arith.addf %3, %5 : vector<32x32xf32>
    %7 = arith.negf %6 : vector<32x32xf32>
    %8 = math.exp %7 : vector<32x32xf32>
    %cst_6 = arith.constant 1.000000e+00 : f32
    %9 = vector.broadcast %cst_6 : f32 to vector<32x32xf32>
    %10 = arith.addf %9, %8 : vector<32x32xf32>
    %11 = arith.divf %9, %10 : vector<32x32xf32>
    %12 = arith.mulf %6, %11 : vector<32x32xf32>
    %c0_7 = arith.constant 0 : index
    %c0_8 = arith.constant 0 : index
    %c0_9 = arith.constant 0 : index
    %13 = vector.load %arg4[%c0_7, %c0_8, %c0_9] : memref<3x32x32xf32, #tpu.memory_space<vmem>>, vector<3x32x32xf32>
    %14 = vector.shape_cast %12 : vector<32x32xf32> to vector<2x16x32xf32>
    %cst_10 = arith.constant 0.000000e+00 : f32
    %15 = vector.broadcast %cst_10 : f32 to vector<2x1x32xf32>
    %16 = tpu.concatenate %15, %14, %15 in 1 : vector<2x1x32xf32>, vector<2x16x32xf32>, vector<2x1x32xf32> -> vector<2x18x32xf32>
    %c0_11 = arith.constant 0 : index
    %c0_12 = arith.constant 0 : index
    %c0_13 = arith.constant 0 : index
    %17 = vector.load %arg17[%c0_11, %c0_12, %c0_13] : memref<2x18x32xf32, #tpu.memory_space<vmem>>, vector<2x18x32xf32>
    tpu.vector_store %arg17[%c0_11, %c0_12, %c0_13], %16 {strides = array<i32>} : memref<2x18x32xf32, #tpu.memory_space<vmem>>, vector<2x18x32xf32>,
    %c0_14 = arith.constant 0 : index
    %c0_15 = arith.constant 0 : index
    %c0_16 = arith.constant 0 : index
    %18 = tpu.strided_load %arg17[%c0_14, %c0_15, %c0_16] {strides = array<i32: 1, 2, 1>} : memref<2x18x32xf32, #tpu.memory_space<vmem>>, vector<2x8x32xf32>
    %c0_17 = arith.constant 0 : index
    %c1 = arith.constant 1 : index
    %c0_18 = arith.constant 0 : index
    %19 = tpu.strided_load %arg17[%c0_17, %c1, %c0_18] {strides = array<i32: 1, 2, 1>} : memref<2x18x32xf32, #tpu.memory_space<vmem>>, vector<2x8x32xf32>
    %c0_19 = arith.constant 0 : index
    %c2 = arith.constant 2 : index
    %c0_20 = arith.constant 0 : index
    %20 = tpu.strided_load %arg17[%c0_19, %c2, %c0_20] {strides = array<i32: 1, 2, 1>} : memref<2x18x32xf32, #tpu.memory_space<vmem>>, vector<2x8x32xf32>
    %21 = vector.shape_cast %18 : vector<2x8x32xf32> to vector<16x32xf32>
    %22 = vector.extract_strided_slice %13 {offsets = [0, 0, 0], sizes = [1, 32, 32], strides = [1, 1, 1]} : vector<3x32x32xf32> to vector<1x32x32xf32>
    %23 = vector.shape_cast %22 : vector<1x32x32xf32> to vector<32x32xf32>
    %cst_21 = arith.constant dense<0.000000e+00> : vector<16x32xf32>
    %24 = tpu.matmul %21, %23, %cst_21 {dimension_numbers = #tpu.dot_dimension_numbers<[1], [0], [0], [1], [0, 0, 1, 1], [], []>, precision = #tpu.contract_precision<fp32>} : vector<16x32xf32>, vector<32x32xf32>, vector<16x32xf32> -> vector<16x32xf32>
    %25 = vector.shape_cast %19 : vector<2x8x32xf32> to vector<16x32xf32>
    %26 = vector.extract_strided_slice %13 {offsets = [1, 0, 0], sizes = [1, 32, 32], strides = [1, 1, 1]} : vector<3x32x32xf32> to vector<1x32x32xf32>
    %27 = vector.shape_cast %26 : vector<1x32x32xf32> to vector<32x32xf32>
    %cst_22 = arith.constant dense<0.000000e+00> : vector<16x32xf32>
    %28 = tpu.matmul %25, %27, %cst_22 {dimension_numbers = #tpu.dot_dimension_numbers<[1], [0], [0], [1], [0, 0, 1, 1], [], []>, precision = #tpu.contract_precision<fp32>} : vector<16x32xf32>, vector<32x32xf32>, vector<16x32xf32> -> vector<16x32xf32>
    %29 = arith.addf %24, %28 : vector<16x32xf32>
    %30 = vector.shape_cast %20 : vector<2x8x32xf32> to vector<16x32xf32>
    %31 = vector.extract_strided_slice %13 {offsets = [2, 0, 0], sizes = [1, 32, 32], strides = [1, 1, 1]} : vector<3x32x32xf32> to vector<1x32x32xf32>
    %32 = vector.shape_cast %31 : vector<1x32x32xf32> to vector<32x32xf32>
    %cst_23 = arith.constant dense<0.000000e+00> : vector<16x32xf32>
    %33 = tpu.matmul %30, %32, %cst_23 {dimension_numbers = #tpu.dot_dimension_numbers<[1], [0], [0], [1], [0, 0, 1, 1], [], []>, precision = #tpu.contract_precision<fp32>} : vector<16x32xf32>, vector<32x32xf32>, vector<16x32xf32> -> vector<16x32xf32>
    %34 = arith.addf %29, %33 : vector<16x32xf32>
    %c0_24 = arith.constant 0 : index
    %c0_25 = arith.constant 0 : index
    %35 = vector.load %arg5[%c0_24, %c0_25] : memref<1x32xf32, #tpu.memory_space<vmem>>, vector<1x32xf32>
    %36 = vector.broadcast %35 : vector<1x32xf32> to vector<16x32xf32>
    %37 = arith.addf %34, %36 : vector<16x32xf32>
    %38 = arith.negf %37 : vector<16x32xf32>
    %39 = math.exp %38 : vector<16x32xf32>
    %cst_26 = arith.constant 1.000000e+00 : f32
    %40 = vector.broadcast %cst_26 : f32 to vector<16x32xf32>
    %41 = arith.addf %40, %39 : vector<16x32xf32>
    %42 = arith.divf %40, %41 : vector<16x32xf32>
    %43 = arith.mulf %37, %42 : vector<16x32xf32>
    %c0_27 = arith.constant 0 : index
    %c0_28 = arith.constant 0 : index
    %44 = vector.load %arg6[%c0_27, %c0_28] : memref<32x128xf32, #tpu.memory_space<vmem>>, vector<32x128xf32>
    %cst_29 = arith.constant dense<0.000000e+00> : vector<16x128xf32>
    %45 = tpu.matmul %43, %44, %cst_29 {dimension_numbers = #tpu.dot_dimension_numbers<[1], [0], [0], [1], [0, 0, 1, 1], [], []>, precision = #tpu.contract_precision<fp32>} : vector<16x32xf32>, vector<32x128xf32>, vector<16x128xf32> -> vector<16x128xf32>
    %c0_30 = arith.constant 0 : index
    %c0_31 = arith.constant 0 : index
    %46 = vector.load %arg7[%c0_30, %c0_31] : memref<1x128xf32, #tpu.memory_space<vmem>>, vector<1x128xf32>
    %47 = vector.broadcast %46 : vector<1x128xf32> to vector<16x128xf32>
    %48 = arith.addf %45, %47 : vector<16x128xf32>
    %c0_32 = arith.constant 0 : index
    %c0_33 = arith.constant 0 : index
    %c0_34 = arith.constant 0 : index
    %49 = tpu.strided_load %arg1[%c0_32, %c0_33, %c0_34] {strides = array<i32: 1, 2, 1>} : memref<2x16x16xf32, #tpu.memory_space<vmem>>, vector<2x8x16xf32>
    %50 = vector.shape_cast %49 : vector<2x8x16xf32> to vector<16x16xf32>
    %c0_35 = arith.constant 0 : index
    %c0_36 = arith.constant 0 : index
    %51 = vector.load %arg8[%c0_35, %c0_36] : memref<16x128xf32, #tpu.memory_space<vmem>>, vector<16x128xf32>
    %cst_37 = arith.constant dense<0.000000e+00> : vector<16x128xf32>
    %52 = tpu.matmul %50, %51, %cst_37 {dimension_numbers = #tpu.dot_dimension_numbers<[1], [0], [0], [1], [0, 0, 1, 1], [], []>, precision = #tpu.contract_precision<fp32>} : vector<16x16xf32>, vector<16x128xf32>, vector<16x128xf32> -> vector<16x128xf32>
    %c0_38 = arith.constant 0 : index
    %c0_39 = arith.constant 0 : index
    %53 = vector.load %arg9[%c0_38, %c0_39] : memref<1x128xf32, #tpu.memory_space<vmem>>, vector<1x128xf32>
    %54 = vector.broadcast %53 : vector<1x128xf32> to vector<16x128xf32>
    %55 = arith.addf %52, %54 : vector<16x128xf32>
    %56 = arith.addf %48, %55 : vector<16x128xf32>
    %cst_40 = arith.constant 0.000000e+00 : f32
    %57 = vector.broadcast %cst_40 : f32 to vector<16x128xf32>
    %58 = arith.maximumf %56, %57 : vector<16x128xf32>
    %c0_41 = arith.constant 0 : index
    %c0_42 = arith.constant 0 : index
    %59 = vector.load %arg10[%c0_41, %c0_42] : memref<128x32xf32, #tpu.memory_space<vmem>>, vector<128x32xf32>
    %cst_43 = arith.constant dense<0.000000e+00> : vector<16x32xf32>
    %60 = tpu.matmul %58, %59, %cst_43 {dimension_numbers = #tpu.dot_dimension_numbers<[1], [0], [0], [1], [0, 0, 1, 1], [], []>, precision = #tpu.contract_precision<fp32>} : vector<16x128xf32>, vector<128x32xf32>, vector<16x32xf32> -> vector<16x32xf32>
    %c0_44 = arith.constant 0 : index
    %c0_45 = arith.constant 0 : index
    %61 = vector.load %arg11[%c0_44, %c0_45] : memref<1x32xf32, #tpu.memory_space<vmem>>, vector<1x32xf32>
    %62 = vector.broadcast %61 : vector<1x32xf32> to vector<16x32xf32>
    %63 = arith.addf %60, %62 : vector<16x32xf32>
    %64 = arith.negf %63 : vector<16x32xf32>
    %65 = math.exp %64 : vector<16x32xf32>
    %cst_46 = arith.constant 1.000000e+00 : f32
    %66 = vector.broadcast %cst_46 : f32 to vector<16x32xf32>
    %67 = arith.addf %66, %65 : vector<16x32xf32>
    %68 = arith.divf %66, %67 : vector<16x32xf32>
    %69 = arith.mulf %63, %68 : vector<16x32xf32>
    %c0_47 = arith.constant 0 : index
    %c0_48 = arith.constant 0 : index
    %c0_49 = arith.constant 0 : index
    %70 = vector.load %arg12[%c0_47, %c0_48, %c0_49] : memref<3x32x32xf32, #tpu.memory_space<vmem>>, vector<3x32x32xf32>
    %71 = vector.shape_cast %69 : vector<16x32xf32> to vector<2x8x32xf32>
    %cst_50 = arith.constant 0.000000e+00 : f32
    %72 = vector.broadcast %cst_50 : f32 to vector<2x1x32xf32>
    %73 = tpu.concatenate %72, %71, %72 in 1 : vector<2x1x32xf32>, vector<2x8x32xf32>, vector<2x1x32xf32> -> vector<2x10x32xf32>
    %74 = vector.extract_strided_slice %73 {offsets = [0, 0, 0], sizes = [2, 8, 32], strides = [1, 1, 1]} : vector<2x10x32xf32> to vector<2x8x32xf32>
    %75 = vector.extract_strided_slice %73 {offsets = [0, 1, 0], sizes = [2, 8, 32], strides = [1, 1, 1]} : vector<2x10x32xf32> to vector<2x8x32xf32>
    %76 = vector.extract_strided_slice %73 {offsets = [0, 2, 0], sizes = [2, 8, 32], strides = [1, 1, 1]} : vector<2x10x32xf32> to vector<2x8x32xf32>
    %77 = vector.shape_cast %74 : vector<2x8x32xf32> to vector<16x32xf32>
    %78 = vector.extract_strided_slice %70 {offsets = [0, 0, 0], sizes = [1, 32, 32], strides = [1, 1, 1]} : vector<3x32x32xf32> to vector<1x32x32xf32>
    %79 = vector.shape_cast %78 : vector<1x32x32xf32> to vector<32x32xf32>
    %cst_51 = arith.constant dense<0.000000e+00> : vector<16x32xf32>
    %80 = tpu.matmul %77, %79, %cst_51 {dimension_numbers = #tpu.dot_dimension_numbers<[1], [0], [0], [1], [0, 0, 1, 1], [], []>, precision = #tpu.contract_precision<fp32>} : vector<16x32xf32>, vector<32x32xf32>, vector<16x32xf32> -> vector<16x32xf32>
    %81 = vector.shape_cast %75 : vector<2x8x32xf32> to vector<16x32xf32>
    %82 = vector.extract_strided_slice %70 {offsets = [1, 0, 0], sizes = [1, 32, 32], strides = [1, 1, 1]} : vector<3x32x32xf32> to vector<1x32x32xf32>
    %83 = vector.shape_cast %82 : vector<1x32x32xf32> to vector<32x32xf32>
    %cst_52 = arith.constant dense<0.000000e+00> : vector<16x32xf32>
    %84 = tpu.matmul %81, %83, %cst_52 {dimension_numbers = #tpu.dot_dimension_numbers<[1], [0], [0], [1], [0, 0, 1, 1], [], []>, precision = #tpu.contract_precision<fp32>} : vector<16x32xf32>, vector<32x32xf32>, vector<16x32xf32> -> vector<16x32xf32>
    %85 = arith.addf %80, %84 : vector<16x32xf32>
    %86 = vector.shape_cast %76 : vector<2x8x32xf32> to vector<16x32xf32>
    %87 = vector.extract_strided_slice %70 {offsets = [2, 0, 0], sizes = [1, 32, 32], strides = [1, 1, 1]} : vector<3x32x32xf32> to vector<1x32x32xf32>
    %88 = vector.shape_cast %87 : vector<1x32x32xf32> to vector<32x32xf32>
    %cst_53 = arith.constant dense<0.000000e+00> : vector<16x32xf32>
    %89 = tpu.matmul %86, %88, %cst_53 {dimension_numbers = #tpu.dot_dimension_numbers<[1], [0], [0], [1], [0, 0, 1, 1], [], []>, precision = #tpu.contract_precision<fp32>} : vector<16x32xf32>, vector<32x32xf32>, vector<16x32xf32> -> vector<16x32xf32>
    %90 = arith.addf %85, %89 : vector<16x32xf32>
    %c0_54 = arith.constant 0 : index
    %c0_55 = arith.constant 0 : index
    %91 = vector.load %arg13[%c0_54, %c0_55] : memref<1x32xf32, #tpu.memory_space<vmem>>, vector<1x32xf32>
    %92 = vector.broadcast %91 : vector<1x32xf32> to vector<16x32xf32>
    %93 = arith.addf %90, %92 : vector<16x32xf32>
    %94 = arith.negf %93 : vector<16x32xf32>
    %95 = math.exp %94 : vector<16x32xf32>
    %cst_56 = arith.constant 1.000000e+00 : f32
    %96 = vector.broadcast %cst_56 : f32 to vector<16x32xf32>
    %97 = arith.addf %96, %95 : vector<16x32xf32>
    %98 = arith.divf %96, %97 : vector<16x32xf32>
    %99 = arith.mulf %93, %98 : vector<16x32xf32>
    %c0_57 = arith.constant 0 : index
    %c0_58 = arith.constant 0 : index
    %100 = vector.load %arg14[%c0_57, %c0_58] : memref<32x128xf32, #tpu.memory_space<vmem>>, vector<32x128xf32>
    %cst_59 = arith.constant dense<0.000000e+00> : vector<16x128xf32>
    %101 = tpu.matmul %99, %100, %cst_59 {dimension_numbers = #tpu.dot_dimension_numbers<[1], [0], [0], [1], [0, 0, 1, 1], [], []>, precision = #tpu.contract_precision<fp32>} : vector<16x32xf32>, vector<32x128xf32>, vector<16x128xf32> -> vector<16x128xf32>
    %c0_60 = arith.constant 0 : index
    %c0_61 = arith.constant 0 : index
    %102 = vector.load %arg15[%c0_60, %c0_61] : memref<1x128xf32, #tpu.memory_space<vmem>>, vector<1x128xf32>
    %103 = vector.broadcast %102 : vector<1x128xf32> to vector<16x128xf32>
    %104 = arith.addf %101, %103 : vector<16x128xf32>
    %105 = arith.addf %104, %58 : vector<16x128xf32>
    %cst_62 = arith.constant 0.000000e+00 : f32
    %106 = vector.broadcast %cst_62 : f32 to vector<16x128xf32>
    %107 = arith.maximumf %105, %106 : vector<16x128xf32>
    %108 = vector.shape_cast %107 : vector<16x128xf32> to vector<2x8x128xf32>
    %c0_63 = arith.constant 0 : index
    %c0_64 = arith.constant 0 : index
    %c0_65 = arith.constant 0 : index
    %109 = vector.load %arg16[%c0_63, %c0_64, %c0_65] : memref<2x8x128xf32, #tpu.memory_space<vmem>>, vector<2x8x128xf32>
    tpu.vector_store %arg16[%c0_63, %c0_64, %c0_65], %108 {strides = array<i32>} : memref<2x8x128xf32, #tpu.memory_space<vmem>>, vector<2x8x128xf32>,
    return
  }
  func.func @transform_0(%arg0: i32) -> (i32, i32, i32) {
    %c0_i32 = arith.constant 0 : i32
    %c0_i32_0 = arith.constant 0 : i32
    %c0_i32_1 = arith.constant 0 : i32
    return %arg0, %c0_i32, %c0_i32_0 : i32, i32, i32
  }
  func.func @transform_1(%arg0: i32) -> (i32, i32) {
    %c0_i32 = arith.constant 0 : i32
    %c0_i32_0 = arith.constant 0 : i32
    %c0_i32_1 = arith.constant 0 : i32
    return %c0_i32, %c0_i32_0 : i32, i32
  }
  func.func @transform_2(%arg0: i32) -> (i32, i32) {
    %c0_i32 = arith.constant 0 : i32
    %c0_i32_0 = arith.constant 0 : i32
    %c0_i32_1 = arith.constant 0 : i32
    return %c0_i32, %c0_i32_0 : i32, i32
  }
  func.func @transform_3(%arg0: i32) -> (i32, i32, i32) {
    %c0_i32 = arith.constant 0 : i32
    %c0_i32_0 = arith.constant 0 : i32
    %c0_i32_1 = arith.constant 0 : i32
    %c0_i32_2 = arith.constant 0 : i32
    return %c0_i32, %c0_i32_0, %c0_i32_1 : i32, i32, i32
  }
  func.func @transform_4(%arg0: i32) -> (i32, i32) {
    %c0_i32 = arith.constant 0 : i32
    %c0_i32_0 = arith.constant 0 : i32
    %c0_i32_1 = arith.constant 0 : i32
    return %c0_i32, %c0_i32_0 : i32, i32
  }
  func.func @transform_5(%arg0: i32) -> (i32, i32) {
    %c0_i32 = arith.constant 0 : i32
    %c0_i32_0 = arith.constant 0 : i32
    %c0_i32_1 = arith.constant 0 : i32
    return %c0_i32, %c0_i32_0 : i32, i32
  }
  func.func @transform_6(%arg0: i32) -> (i32, i32) {
    %c0_i32 = arith.constant 0 : i32
    %c0_i32_0 = arith.constant 0 : i32
    %c0_i32_1 = arith.constant 0 : i32
    return %c0_i32, %c0_i32_0 : i32, i32
  }
  func.func @transform_7(%arg0: i32) -> (i32, i32) {
    %c0_i32 = arith.constant 0 : i32
    %c0_i32_0 = arith.constant 0 : i32
    %c0_i32_1 = arith.constant 0 : i32
    return %c0_i32, %c0_i32_0 : i32, i32
  }
  func.func @transform_8(%arg0: i32) -> (i32, i32) {
    %c0_i32 = arith.constant 0 : i32
    %c0_i32_0 = arith.constant 0 : i32
    %c0_i32_1 = arith.constant 0 : i32
    return %c0_i32, %c0_i32_0 : i32, i32
  }
  func.func @transform_9(%arg0: i32) -> (i32, i32) {
    %c0_i32 = arith.constant 0 : i32
    %c0_i32_0 = arith.constant 0 : i32
    %c0_i32_1 = arith.constant 0 : i32
    return %c0_i32, %c0_i32_0 : i32, i32
  }
  func.func @transform_10(%arg0: i32) -> (i32, i32) {
    %c0_i32 = arith.constant 0 : i32
    %c0_i32_0 = arith.constant 0 : i32
    %c0_i32_1 = arith.constant 0 : i32
    return %c0_i32, %c0_i32_0 : i32, i32
  }
  func.func @transform_11(%arg0: i32) -> (i32, i32, i32) {
    %c0_i32 = arith.constant 0 : i32
    %c0_i32_0 = arith.constant 0 : i32
    %c0_i32_1 = arith.constant 0 : i32
    %c0_i32_2 = arith.constant 0 : i32
    return %c0_i32, %c0_i32_0, %c0_i32_1 : i32, i32, i32
  }
  func.func @transform_12(%arg0: i32) -> (i32, i32) {
    %c0_i32 = arith.constant 0 : i32
    %c0_i32_0 = arith.constant 0 : i32
    %c0_i32_1 = arith.constant 0 : i32
    return %c0_i32, %c0_i32_0 : i32, i32
  }
  func.func @transform_13(%arg0: i32) -> (i32, i32) {
    %c0_i32 = arith.constant 0 : i32
    %c0_i32_0 = arith.constant 0 : i32
    %c0_i32_1 = arith.constant 0 : i32
    return %c0_i32, %c0_i32_0 : i32, i32
  }
  func.func @transform_14(%arg0: i32) -> (i32, i32) {
    %c0_i32 = arith.constant 0 : i32
    %c0_i32_0 = arith.constant 0 : i32
    %c0_i32_1 = arith.constant 0 : i32
    return %c0_i32, %c0_i32_0 : i32, i32
  }
  func.func @transform_15(%arg0: i32) -> (i32, i32, i32) {
    %c0_i32 = arith.constant 0 : i32
    %c0_i32_0 = arith.constant 0 : i32
    %c0_i32_1 = arith.constant 0 : i32
    return %arg0, %c0_i32, %c0_i32_0 : i32, i32, i32
  }
}

</mosaic_0001>

<llo_original>
// kernel: tpu_custom_call.1
$region0: #{tpu_custom_call.1}
  #allocation0 [shape = 'u32[]', space=smem, size = 0x4, offset = 0x4, fixed_abs, tag = 'smem constant byte address 0x4 - core index']
  #allocation1 [shape = 'u32[144,128]{1,0:T(1,128)}', space=vmem, size = 0x12000, scoped, tag = 'internal scratch']
  #allocation2 [shape = 'f32[2,18,32]{2,1,0:T(8,128)}', space=vmem, size = 0x6000, scoped, tag = 'scratch operand']
  %s0 = inlined_call_operand.hbm [shape: f32[2,16,16], index: 0, kind: input, shape index: {}]
  %s1 = inlined_call_operand.hbm [shape: f32[16,32], index: 1, kind: input, shape index: {}]
  %s2 = inlined_call_operand.vmem [shape: f32[1,32], index: 2, kind: input, shape index: {}]
  %s3 = inlined_call_operand.vmem [shape: f32[3,32,32], index: 3, kind: input, shape index: {}]
  %s4 = inlined_call_operand.vmem [shape: f32[1,32], index: 4, kind: input, shape index: {}]
  %s5 = inlined_call_operand.hbm [shape: f32[32,128], index: 5, kind: input, shape index: {}]
  %s6 = inlined_call_operand.hbm [shape: f32[1,128], index: 6, kind: input, shape index: {}]
  %s7 = inlined_call_operand.hbm [shape: f32[16,128], index: 7, kind: input, shape index: {}]
  %s8 = inlined_call_operand.hbm [shape: f32[1,128], index: 8, kind: input, shape index: {}]
  %s9 = inlined_call_operand.vmem [shape: f32[128,32], index: 9, kind: input, shape index: {}]
  %s10 = inlined_call_operand.vmem [shape: f32[1,32], index: 10, kind: input, shape index: {}]
  %s11 = inlined_call_operand.vmem [shape: f32[3,32,32], index: 11, kind: input, shape index: {}]
  %s12 = inlined_call_operand.vmem [shape: f32[1,32], index: 12, kind: input, shape index: {}]
  %s13 = inlined_call_operand.hbm [shape: f32[32,128], index: 13, kind: input, shape index: {}]
  %s14 = inlined_call_operand.vmem [shape: f32[1,128], index: 14, kind: input, shape index: {}]
  %s15 = inlined_call_operand.hbm [shape: f32[2,8,128], index: 15, kind: output, shape index: {}]
  %s16 = sld [smem:[#allocation0]]
  $region98: #{tpu_custom_call.1} parent=0
    _
  %s18 = ssub.s32 1, %s16
  %s19 = scalar_select 0, %s18, %s16
  $region1: #{tpu_custom_call.1} parent=0
    #allocation3 [shape = 'u8[16384]{0}', space=vmem, size = 0x4000, scoped, tag = 'input window, operand 0, single buffered']
    #allocation4 [shape = 's32[1]{0}', space=sflag, size = 0x4, scoped, tag = 'scoped memory for tpu_custom_call.1']
    #allocation5 [shape = 's32[1]{0}', space=sflag, size = 0x4, scoped, tag = 'scoped memory for tpu_custom_call.1']
    #allocation6 [shape = 'u8[8192]{0}', space=vmem, size = 0x2000, scoped, tag = 'input window, operand 1, single buffered']
    #allocation7 [shape = 's32[1]{0}', space=sflag, size = 0x4, scoped, tag = 'scoped memory for tpu_custom_call.1']
    #allocation8 [shape = 'u8[16384]{0}', space=vmem, size = 0x4000, scoped, tag = 'input window, operand 5, single buffered']
    #allocation9 [shape = 'u8[512]{0}', space=vmem, size = 0x400, scoped, tag = 'input window, operand 6, single buffered']
    #allocation10 [shape = 's32[1]{0}', space=sflag, size = 0x4, scoped, tag = 'scoped memory for tpu_custom_call.1']
    #allocation11 [shape = 'u8[8192]{0}', space=vmem, size = 0x2000, scoped, tag = 'input window, operand 7, single buffered']
    #allocation12 [shape = 'u8[512]{0}', space=vmem, size = 0x400, scoped, tag = 'input window, operand 8, single buffered']
    #allocation13 [shape = 's32[1]{0}', space=sflag, size = 0x4, scoped, tag = 'scoped memory for tpu_custom_call.1']
    #allocation14 [shape = 'u8[16384]{0}', space=vmem, size = 0x4000, scoped, tag = 'input window, operand 13, single buffered']
    #allocation15 [shape = 'u8[8192]{0}', space=vmem, size = 0x2000, scoped, tag = 'output window, operand 0, single buffered']
    %20 = vsyncpa [#allocation4], 0
    %21 = vsyncpa [#allocation7], 0
    %22 = vsyncpa [#allocation10], 0
    %23 = vsyncpa [#allocation13], 0
    %24 = vsyncpa [#allocation5], 0
    // Predicated region
    $region2: #{tpu_custom_call.1} parent=1 // pred_check
      _
    $region3: #{tpu_custom_call.1} parent=1 // pred_check_branch
      %26 = sbr.rel (0) target = $region5
    $region4: #{tpu_custom_call.1} parent=1 // pred_region
      %s28 = ssub.s32 512, 512
      %29 = vsyncadd [#allocation4], %s28
      %s30 = sshll.u32 [#allocation3], 4
      %s31 = int_to_ptr.vmem [resolvable:$true] %s30
      %36 = dma.hbm_to_vmem [thread:$0]  %s0, 512, %s31, [#allocation4], 128, 128, 8
    $region5: #{tpu_custom_call.1} parent=1 // pred_fallthru
      _
    // Predicated region
    $region6: #{tpu_custom_call.1} parent=1 // pred_check
      _
    $region7: #{tpu_custom_call.1} parent=1 // pred_check_branch
      %38 = sbr.rel (0) target = $region9
    $region8: #{tpu_custom_call.1} parent=1 // pred_region
      %s40 = ssub.s32 256, 256
      %41 = vsyncadd [#allocation7], %s40
      %s42 = sshll.u32 [#allocation6], 4
      %s43 = int_to_ptr.vmem [resolvable:$true] %s42
      %48 = dma.hbm_to_vmem [thread:$0]  %s1, 256, %s43, [#allocation7], 128, 128, 8
    $region9: #{tpu_custom_call.1} parent=1 // pred_fallthru
      _
    // Predicated region
    $region10: #{tpu_custom_call.1} parent=1 // pred_check
      _
    $region11: #{tpu_custom_call.1} parent=1 // pred_check_branch
      %50 = sbr.rel (0) target = $region13
    $region12: #{tpu_custom_call.1} parent=1 // pred_region
      _
    $region13: #{tpu_custom_call.1} parent=1 // pred_fallthru
      _
    // Predicated region
    $region14: #{tpu_custom_call.1} parent=1 // pred_check
      _
    $region15: #{tpu_custom_call.1} parent=1 // pred_check_branch
      %52 = sbr.rel (0) target = $region17
    $region16: #{tpu_custom_call.1} parent=1 // pred_region
      _
    $region17: #{tpu_custom_call.1} parent=1 // pred_fallthru
      _
    // Predicated region
    $region18: #{tpu_custom_call.1} parent=1 // pred_check
      _
    $region19: #{tpu_custom_call.1} parent=1 // pred_check_branch
      %54 = sbr.rel (0) target = $region21
    $region20: #{tpu_custom_call.1} parent=1 // pred_region
      _
    $region21: #{tpu_custom_call.1} parent=1 // pred_fallthru
      _
    // Predicated region
    $region22: #{tpu_custom_call.1} parent=1 // pred_check
      _
    $region23: #{tpu_custom_call.1} parent=1 // pred_check_branch
      %56 = sbr.rel (0) target = $region25
    $region24: #{tpu_custom_call.1} parent=1 // pred_region
      %s58 = ssub.s32 512, 512
      %59 = vsyncadd [#allocation7], %s58
      %s60 = sshll.u32 [#allocation8], 4
      %s61 = int_to_ptr.vmem [resolvable:$true] %s60
      %66 = dma.hbm_to_vmem [thread:$0]  %s5, 512, %s61, [#allocation7], 128, 128, 8
    $region25: #{tpu_custom_call.1} parent=1 // pred_fallthru
      _
    // Predicated region
    $region26: #{tpu_custom_call.1} parent=1 // pred_check
      _
    $region27: #{tpu_custom_call.1} parent=1 // pred_check_branch
      %68 = sbr.rel (0) target = $region29
    $region28: #{tpu_custom_call.1} parent=1 // pred_region
      %s70 = ssub.s32 16, 16
      %71 = vsyncadd [#allocation10], %s70
      %s73 = sshll.u32 [#allocation9], 4
      %s74 = int_to_ptr.vmem [resolvable:$true] %s73
      %76 = dma.hbm_to_vmem [thread:$0]  %s6, 16, %s74, [#allocation10]
    $region29: #{tpu_custom_call.1} parent=1 // pred_fallthru
      _
    // Predicated region
    $region30: #{tpu_custom_call.1} parent=1 // pred_check
      _
    $region31: #{tpu_custom_call.1} parent=1 // pred_check_branch
      %78 = sbr.rel (0) target = $region33
    $region32: #{tpu_custom_call.1} parent=1 // pred_region
      %s80 = ssub.s32 256, 256
      %81 = vsyncadd [#allocation10], %s80
      %s82 = sshll.u32 [#allocation11], 4
      %s83 = int_to_ptr.vmem [resolvable:$true] %s82
      %88 = dma.hbm_to_vmem [thread:$0]  %s7, 256, %s83, [#allocation10], 128, 128, 8
    $region33: #{tpu_custom_call.1} parent=1 // pred_fallthru
      _
    // Predicated region
    $region34: #{tpu_custom_call.1} parent=1 // pred_check
      _
    $region35: #{tpu_custom_call.1} parent=1 // pred_check_branch
      %90 = sbr.rel (0) target = $region37
    $region36: #{tpu_custom_call.1} parent=1 // pred_region
      %s92 = ssub.s32 16, 16
      %93 = vsyncadd [#allocation13], %s92
      %s95 = sshll.u32 [#allocation12], 4
      %s96 = int_to_ptr.vmem [resolvable:$true] %s95
      %98 = dma.hbm_to_vmem [thread:$0]  %s8, 16, %s96, [#allocation13]
    $region37: #{tpu_custom_call.1} parent=1 // pred_fallthru
      _
    // Predicated region
    $region38: #{tpu_custom_call.1} parent=1 // pred_check
      _
    $region39: #{tpu_custom_call.1} parent=1 // pred_check_branch
      %100 = sbr.rel (0) target = $region41
    $region40: #{tpu_custom_call.1} parent=1 // pred_region
      _
    $region41: #{tpu_custom_call.1} parent=1 // pred_fallthru
      _
    // Predicated region
    $region42: #{tpu_custom_call.1} parent=1 // pred_check
      _
    $region43: #{tpu_custom_call.1} parent=1 // pred_check_branch
      %102 = sbr.rel (0) target = $region45
    $region44: #{tpu_custom_call.1} parent=1 // pred_region
      _
    $region45: #{tpu_custom_call.1} parent=1 // pred_fallthru
      _
    // Predicated region
    $region46: #{tpu_custom_call.1} parent=1 // pred_check
      _
    $region47: #{tpu_custom_call.1} parent=1 // pred_check_branch
      %104 = sbr.rel (0) target = $region49
    $region48: #{tpu_custom_call.1} parent=1 // pred_region
      _
    $region49: #{tpu_custom_call.1} parent=1 // pred_fallthru
      _
    // Predicated region
    $region50: #{tpu_custom_call.1} parent=1 // pred_check
      _
    $region51: #{tpu_custom_call.1} parent=1 // pred_check_branch
      %106 = sbr.rel (0) target = $region53
    $region52: #{tpu_custom_call.1} parent=1 // pred_region
      _
    $region53: #{tpu_custom_call.1} parent=1 // pred_fallthru
      _
    // Predicated region
    $region54: #{tpu_custom_call.1} parent=1 // pred_check
      _
    $region55: #{tpu_custom_call.1} parent=1 // pred_check_branch
      %108 = sbr.rel (0) target = $region57
    $region56: #{tpu_custom_call.1} parent=1 // pred_region
      %s110 = ssub.s32 512, 512
      %111 = vsyncadd [#allocation13], %s110
      %s112 = sshll.u32 [#allocation14], 4
      %s113 = int_to_ptr.vmem [resolvable:$true] %s112
      %118 = dma.hbm_to_vmem [thread:$0]  %s13, 512, %s113, [#allocation13], 128, 128, 8
    $region57: #{tpu_custom_call.1} parent=1 // pred_fallthru
      _
    // Predicated region
    $region58: #{tpu_custom_call.1} parent=1 // pred_check
      _
    $region59: #{tpu_custom_call.1} parent=1 // pred_check_branch
      %120 = sbr.rel (0) target = $region61
    $region60: #{tpu_custom_call.1} parent=1 // pred_region
      _
    $region61: #{tpu_custom_call.1} parent=1 // pred_fallthru
      _
    // Predicated region
    $region62: #{tpu_custom_call.1} parent=1 // pred_check
      _
    $region63: #{tpu_custom_call.1} parent=1 // pred_check_branch
      %122 = sbr.rel (0) target = $region65
    $region64: #{tpu_custom_call.1} parent=1 // pred_region
      %123 = dma.done [#allocation4], 512
    $region65: #{tpu_custom_call.1} parent=1 // pred_fallthru
      _
    // Predicated region
    $region66: #{tpu_custom_call.1} parent=1 // pred_check
      _
    $region67: #{tpu_custom_call.1} parent=1 // pred_check_branch
      %125 = sbr.rel (0) target = $region69
    $region68: #{tpu_custom_call.1} parent=1 // pred_region
      %126 = dma.done [#allocation7], 256
    $region69: #{tpu_custom_call.1} parent=1 // pred_fallthru
      _
    // Predicated region
    $region70: #{tpu_custom_call.1} parent=1 // pred_check
      _
    $region71: #{tpu_custom_call.1} parent=1 // pred_check_branch
      %128 = sbr.rel (0) target = $region73
    $region72: #{tpu_custom_call.1} parent=1 // pred_region
      %129 = dma.done [#allocation7], 512
    $region73: #{tpu_custom_call.1} parent=1 // pred_fallthru
      _
    // Predicated region
    $region74: #{tpu_custom_call.1} parent=1 // pred_check
      _
    $region75: #{tpu_custom_call.1} parent=1 // pred_check_branch
      %131 = sbr.rel (0) target = $region77
    $region76: #{tpu_custom_call.1} parent=1 // pred_region
      %132 = dma.done [#allocation10], 16
    $region77: #{tpu_custom_call.1} parent=1 // pred_fallthru
      _
    // Predicated region
    $region78: #{tpu_custom_call.1} parent=1 // pred_check
      _
    $region79: #{tpu_custom_call.1} parent=1 // pred_check_branch
      %134 = sbr.rel (0) target = $region81
    $region80: #{tpu_custom_call.1} parent=1 // pred_region
      %135 = dma.done [#allocation10], 256
    $region81: #{tpu_custom_call.1} parent=1 // pred_fallthru
      _
    // Predicated region
    $region82: #{tpu_custom_call.1} parent=1 // pred_check
      _
    $region83: #{tpu_custom_call.1} parent=1 // pred_check_branch
      %137 = sbr.rel (0) target = $region85
    $region84: #{tpu_custom_call.1} parent=1 // pred_region
      %138 = dma.done [#allocation13], 16
    $region85: #{tpu_custom_call.1} parent=1 // pred_fallthru
      _
    // Predicated region
    $region86: #{tpu_custom_call.1} parent=1 // pred_check
      _
    $region87: #{tpu_custom_call.1} parent=1 // pred_check_branch
      %140 = sbr.rel (0) target = $region89
    $region88: #{tpu_custom_call.1} parent=1 // pred_region
      %141 = dma.done [#allocation13], 512
    $region89: #{tpu_custom_call.1} parent=1 // pred_fallthru
      _
    %v142 = vld [vmem:[#allocation3] sm:$0xff]
    %v143 = vld [vmem:[#allocation3 + $0x8] sm:$0xff]
    %v144 = vld [vmem:[#allocation3 + $0x10] sm:$0xff]
    %v145 = vld [vmem:[#allocation3 + $0x18] sm:$0xff]
    %v146 = vld [vmem:[#allocation6] sm:$0xff]
    %v147 = vld [vmem:[#allocation6 + $0x8] sm:$0xff]
    %v148 = vld [vmem:[%s2] sm:$0x1]
    %v150 = vlaneseq
    %v151 = vshrl.u32 %v150, 7
    %v152 = vsub.s32 0, %v151
    %v153 = vrot.slane %v148, %v152
    %vm155 = vcmask 130048
    %v157 = vsel %vm155, %v142, 0
    %v160 = vsel %vm155, %v143, 0
    %v163 = vsel %vm155, %v144, 0
    %v166 = vsel %vm155, %v145, 0
    %168 = vmatprep.subr.mxu0 0.0
    %v169 = vand.u32 %v146, 4294901760
    %170 = vmatpush1.msra.mxu0 %v169
    %171 = vmatprep.subr.mxu0 0.0
    %v172 = vand.u32 %v147, 4294901760
    %173 = vmatpush1.msra.mxu0 %v172
    %174 = vmatprep.subr.mxu0 0.0
    %175 = vmatpush1.msra.mxu0 0.0
    %176 = vmatprep.subr.mxu0 0.0
    %177 = vmatpush1.msra.mxu0 0.0
    %178 = vmatprep.subr.mxu0 0.0
    %179 = vmatpush1.msra.mxu0 0.0
    %180 = vmatprep.subr.mxu0 0.0
    %181 = vmatpush1.msra.mxu0 0.0
    %182 = vmatprep.subr.mxu0 0.0
    %183 = vmatpush1.msra.mxu0 0.0
    %184 = vmatprep.subr.mxu0 0.0
    %185 = vmatpush1.msra.mxu0 0.0
    %186 = vmatprep.subr.mxu0 0.0
    %187 = vmatpush1.msra.mxu0 0.0
    %188 = vmatprep.subr.mxu0 0.0
    %189 = vmatpush1.msra.mxu0 0.0
    %190 = vmatprep.subr.mxu0 0.0
    %191 = vmatpush1.msra.mxu0 0.0
    %192 = vmatprep.subr.mxu0 0.0
    %193 = vmatpush1.msra.mxu0 0.0
    %194 = vmatprep.subr.mxu0 0.0
    %195 = vmatpush1.msra.mxu0 0.0
    %196 = vmatprep.subr.mxu0 0.0
    %197 = vmatpush1.msra.mxu0 0.0
    %198 = vmatprep.subr.mxu0 0.0
    %199 = vmatpush1.msra.mxu0 0.0
    %200 = vmatprep.subr.mxu0 0.0
    %201 = vmatpush1.msra.mxu0 0.0
    %202 = vmatprep.subr.mxu0 0.0
    %203 = vmatpush1.msra.mxu0 0.0
    %204 = vmatprep.subr.mxu0 0.0
    %205 = vmatpush1.msra.mxu0 0.0
    %206 = vmatprep.subr.mxu0 0.0
    %207 = vmatpush1.msra.mxu0 0.0
    %208 = vmatprep.subr.mxu0 0.0
    %209 = vmatpush1.msra.mxu0 0.0
    %210 = vmatprep.subr.mxu0 0.0
    %211 = vmatpush1.msra.mxu0 0.0
    %212 = vmatprep.subr.mxu0 0.0
    %213 = vmatpush1.msra.mxu0 0.0
    %214 = vmatprep.subr.mxu0 0.0
    %215 = vmatpush1.msra.mxu0 0.0
    %216 = vmatprep.subr.mxu0 0.0
    %217 = vmatpush1.msra.mxu0 0.0
    %218 = vmatprep.subr.mxu0 0.0
    %219 = vmatpush1.msra.mxu0 0.0
    %220 = vmatprep.subr.mxu0 0.0
    %221 = vmatpush1.msra.mxu0 0.0
    %222 = vmatprep.subr.mxu0 0.0
    %223 = vmatpush1.msra.mxu0 0.0
    %224 = vmatprep.subr.mxu0 0.0
    %225 = vmatpush1.msra.mxu0 0.0
    %226 = vmatprep.subr.mxu0 0.0
    %227 = vmatpush1.msra.mxu0 0.0
    %228 = vmatprep.subr.mxu0 0.0
    %229 = vmatpush1.msra.mxu0 0.0
    %230 = vmatprep.subr.mxu0 0.0
    %231 = vmatpush1.msra.mxu0 0.0
    %232 = vmatprep.subr.mxu0 0.0
    %233 = vmatpush1.msra.mxu0 0.0
    %234 = vmatprep.mubr.f32.mxu0 0.0
    %v235 = vand.u32 %v157, 4294901760
    %v236 = vsub.f32 %v157, %v235
    %v237 = vand.u32 %v236, 4294901760
    %v238 = vsub.f32 %v236, %v237
    %v239 = vand.u32 %v238, 4294901760
    %240 = vmatmul.mubr.f32.gmra.mrb[0].mxu0 %v239
    %v241 = vpop.f32.mrb[0].mxu0
    %v242 = vadd.f32 %v153, %v241
    %v243 = vpop.f32.mrb[0].mxu0
    %244 = vmatprep.mubr.f32.mxu0 0.0
    %v245 = vand.u32 %v160, 4294901760
    %v246 = vsub.f32 %v160, %v245
    %v247 = vand.u32 %v246, 4294901760
    %v248 = vsub.f32 %v246, %v247
    %v249 = vand.u32 %v248, 4294901760
    %250 = vmatmul.mubr.f32.gmra.mrb[0].mxu0 %v249
    %v251 = vpop.f32.mrb[0].mxu0
    %v252 = vadd.f32 %v153, %v251
    %v253 = vpop.f32.mrb[0].mxu0
    %254 = vmatprep.mubr.f32.mxu0 0.0
    %v255 = vand.u32 %v163, 4294901760
    %v256 = vsub.f32 %v163, %v255
    %v257 = vand.u32 %v256, 4294901760
    %v258 = vsub.f32 %v256, %v257
    %v259 = vand.u32 %v258, 4294901760
    %260 = vmatmul.mubr.f32.gmra.mrb[0].mxu0 %v259
    %v261 = vpop.f32.mrb[0].mxu0
    %v262 = vadd.f32 %v153, %v261
    %v263 = vpop.f32.mrb[0].mxu0
    %264 = vmatprep.mubr.f32.mxu0 0.0
    %v265 = vand.u32 %v166, 4294901760
    %v266 = vsub.f32 %v166, %v265
    %v267 = vand.u32 %v266, 4294901760
    %v268 = vsub.f32 %v266, %v267
    %v269 = vand.u32 %v268, 4294901760
    %270 = vmatmul.mubr.f32.gmra.mrb[0].mxu0 %v269
    %v271 = vpop.f32.mrb[0].mxu0
    %v272 = vadd.f32 %v153, %v271
    %v273 = vpop.f32.mrb[0].mxu0
    %274 = vdwg.mxu0
    %275 = vmatprep.subr.mxu0 0.0
    %v276 = vand.u32 %v146, 4294901760
    %v277 = vsub.f32 %v146, %v276
    %v278 = vand.u32 %v277, 4294901760
    %v279 = vsub.f32 %v277, %v278
    %v280 = vand.u32 %v279, 4294901760
    %281 = vmatpush1.msra.mxu0 %v280
    %282 = vmatprep.subr.mxu0 0.0
    %v283 = vand.u32 %v147, 4294901760
    %v284 = vsub.f32 %v147, %v283
    %v285 = vand.u32 %v284, 4294901760
    %v286 = vsub.f32 %v284, %v285
    %v287 = vand.u32 %v286, 4294901760
    %288 = vmatpush1.msra.mxu0 %v287
    %289 = vmatprep.subr.mxu0 0.0
    %290 = vmatpush1.msra.mxu0 0.0
    %291 = vmatprep.subr.mxu0 0.0
    %292 = vmatpush1.msra.mxu0 0.0
    %293 = vmatprep.subr.mxu0 0.0
    %294 = vmatpush1.msra.mxu0 0.0
    %295 = vmatprep.subr.mxu0 0.0
    %296 = vmatpush1.msra.mxu0 0.0
    %297 = vmatprep.subr.mxu0 0.0
    %298 = vmatpush1.msra.mxu0 0.0
    %299 = vmatprep.subr.mxu0 0.0
    %300 = vmatpush1.msra.mxu0 0.0
    %301 = vmatprep.subr.mxu0 0.0
    %302 = vmatpush1.msra.mxu0 0.0
    %303 = vmatprep.subr.mxu0 0.0
    %304 = vmatpush1.msra.mxu0 0.0
    %305 = vmatprep.subr.mxu0 0.0
    %306 = vmatpush1.msra.mxu0 0.0
    %307 = vmatprep.subr.mxu0 0.0
    %308 = vmatpush1.msra.mxu0 0.0
    %309 = vmatprep.subr.mxu0 0.0
    %310 = vmatpush1.msra.mxu0 0.0
    %311 = vmatprep.subr.mxu0 0.0
    %312 = vmatpush1.msra.mxu0 0.0
    %313 = vmatprep.subr.mxu0 0.0
    %314 = vmatpush1.msra.mxu0 0.0
    %315 = vmatprep.subr.mxu0 0.0
    %316 = vmatpush1.msra.mxu0 0.0
    %317 = vmatprep.subr.mxu0 0.0
    %318 = vmatpush1.msra.mxu0 0.0
    %319 = vmatprep.subr.mxu0 0.0
    %320 = vmatpush1.msra.mxu0 0.0
    %321 = vmatprep.subr.mxu0 0.0
    %322 = vmatpush1.msra.mxu0 0.0
    %323 = vmatprep.subr.mxu0 0.0
    %324 = vmatpush1.msra.mxu0 0.0
    %325 = vmatprep.subr.mxu0 0.0
    %326 = vmatpush1.msra.mxu0 0.0
    %327 = vmatprep.subr.mxu0 0.0
    %328 = vmatpush1.msra.mxu0 0.0
    %329 = vmatprep.subr.mxu0 0.0
    %330 = vmatpush1.msra.mxu0 0.0
    %331 = vmatprep.subr.mxu0 0.0
    %332 = vmatpush1.msra.mxu0 0.0
    %333 = vmatprep.subr.mxu0 0.0
    %334 = vmatpush1.msra.mxu0 0.0
    %335 = vmatprep.subr.mxu0 0.0
    %336 = vmatpush1.msra.mxu0 0.0
    %337 = vmatprep.subr.mxu0 0.0
    %338 = vmatpush1.msra.mxu0 0.0
    %339 = vmatprep.subr.mxu0 0.0
    %340 = vmatpush1.msra.mxu0 0.0
    %341 = vmatprep.subr.mxu0 0.0
    %342 = vmatpush1.msra.mxu0 0.0
    %343 = vmatprep.subr.mxu0 0.0
    %344 = vmatpush1.msra.mxu0 0.0
    %345 = vmatprep.subr.mxu0 0.0
    %346 = vmatpush1.msra.mxu0 0.0
    %347 = vmatprep.subr.mxu0 0.0
    %348 = vmatpush1.msra.mxu0 0.0
    %349 = vmatprep.mubr.f32.mxu0 0.0
    %v350 = vand.u32 %v157, 4294901760
    %351 = vmatmul.mubr.f32.gmra.mrb[0].mxu0 %v350
    %v352 = vpop.f32.mrb[0].mxu0
    %v353 = vadd.f32 %v242, %v352
    %v354 = vpop.f32.mrb[0].mxu0
    %355 = vmatprep.mubr.f32.mxu0 0.0
    %v356 = vand.u32 %v160, 4294901760
    %357 = vmatmul.mubr.f32.gmra.mrb[0].mxu0 %v356
    %v358 = vpop.f32.mrb[0].mxu0
    %v359 = vadd.f32 %v252, %v358
    %v360 = vpop.f32.mrb[0].mxu0
    %361 = vmatprep.mubr.f32.mxu0 0.0
    %v362 = vand.u32 %v163, 4294901760
    %363 = vmatmul.mubr.f32.gmra.mrb[0].mxu0 %v362
    %v364 = vpop.f32.mrb[0].mxu0
    %v365 = vadd.f32 %v262, %v364
    %v366 = vpop.f32.mrb[0].mxu0
    %367 = vmatprep.mubr.f32.mxu0 0.0
    %v368 = vand.u32 %v166, 4294901760
    %369 = vmatmul.mubr.f32.gmra.mrb[0].mxu0 %v368
    %v370 = vpop.f32.mrb[0].mxu0
    %v371 = vadd.f32 %v272, %v370
    %v372 = vpop.f32.mrb[0].mxu0
    %373 = vdwg.mxu0
    %374 = vmatprep.subr.mxu0 0.0
    %v375 = vand.u32 %v146, 4294901760
    %v376 = vsub.f32 %v146, %v375
    %377 = vmatpush1.msra.mxu0 %v376
    %378 = vmatprep.subr.mxu0 0.0
    %v379 = vand.u32 %v147, 4294901760
    %v380 = vsub.f32 %v147, %v379
    %381 = vmatpush1.msra.mxu0 %v380
    %382 = vmatprep.subr.mxu0 0.0
    %383 = vmatpush1.msra.mxu0 0.0
    %384 = vmatprep.subr.mxu0 0.0
    %385 = vmatpush1.msra.mxu0 0.0
    %386 = vmatprep.subr.mxu0 0.0
    %387 = vmatpush1.msra.mxu0 0.0
    %388 = vmatprep.subr.mxu0 0.0
    %389 = vmatpush1.msra.mxu0 0.0
    %390 = vmatprep.subr.mxu0 0.0
    %391 = vmatpush1.msra.mxu0 0.0
    %392 = vmatprep.subr.mxu0 0.0
    %393 = vmatpush1.msra.mxu0 0.0
    %394 = vmatprep.subr.mxu0 0.0
    %395 = vmatpush1.msra.mxu0 0.0
    %396 = vmatprep.subr.mxu0 0.0
    %397 = vmatpush1.msra.mxu0 0.0
    %398 = vmatprep.subr.mxu0 0.0
    %399 = vmatpush1.msra.mxu0 0.0
    %400 = vmatprep.subr.mxu0 0.0
    %401 = vmatpush1.msra.mxu0 0.0
    %402 = vmatprep.subr.mxu0 0.0
    %403 = vmatpush1.msra.mxu0 0.0
    %404 = vmatprep.subr.mxu0 0.0
    %405 = vmatpush1.msra.mxu0 0.0
    %406 = vmatprep.subr.mxu0 0.0
    %407 = vmatpush1.msra.mxu0 0.0
    %408 = vmatprep.subr.mxu0 0.0
    %409 = vmatpush1.msra.mxu0 0.0
    %410 = vmatprep.subr.mxu0 0.0
    %411 = vmatpush1.msra.mxu0 0.0
    %412 = vmatprep.subr.mxu0 0.0
    %413 = vmatpush1.msra.mxu0 0.0
    %414 = vmatprep.subr.mxu0 0.0
    %415 = vmatpush1.msra.mxu0 0.0
    %416 = vmatprep.subr.mxu0 0.0
    %417 = vmatpush1.msra.mxu0 0.0
    %418 = vmatprep.subr.mxu0 0.0
    %419 = vmatpush1.msra.mxu0 0.0
    %420 = vmatprep.subr.mxu0 0.0
    %421 = vmatpush1.msra.mxu0 0.0
    %422 = vmatprep.subr.mxu0 0.0
    %423 = vmatpush1.msra.mxu0 0.0
    %424 = vmatprep.subr.mxu0 0.0
    %425 = vmatpush1.msra.mxu0 0.0
    %426 = vmatprep.subr.mxu0 0.0
    %427 = vmatpush1.msra.mxu0 0.0
    %428 = vmatprep.subr.mxu0 0.0
    %429 = vmatpush1.msra.mxu0 0.0
    %430 = vmatprep.subr.mxu0 0.0
    %431 = vmatpush1.msra.mxu0 0.0
    %432 = vmatprep.subr.mxu0 0.0
    %433 = vmatpush1.msra.mxu0 0.0
    %434 = vmatprep.subr.mxu0 0.0
    %435 = vmatpush1.msra.mxu0 0.0
    %436 = vmatprep.subr.mxu0 0.0
    %437 = vmatpush1.msra.mxu0 0.0
    %438 = vmatprep.subr.mxu0 0.0
    %439 = vmatpush1.msra.mxu0 0.0
    %440 = vmatprep.subr.mxu0 0.0
    %441 = vmatpush1.msra.mxu0 0.0
    %442 = vmatprep.mubr.f32.mxu0 0.0
    %v443 = vand.u32 %v157, 4294901760
    %v444 = vsub.f32 %v157, %v443
    %445 = vmatmul.mubr.f32.gmra.mrb[0].mxu0 %v444
    %v446 = vpop.f32.mrb[0].mxu0
    %v447 = vadd.f32 %v353, %v446
    %v448 = vpop.f32.mrb[0].mxu0
    %449 = vmatprep.mubr.f32.mxu0 0.0
    %v450 = vand.u32 %v160, 4294901760
    %v451 = vsub.f32 %v160, %v450
    %452 = vmatmul.mubr.f32.gmra.mrb[0].mxu0 %v451
    %v453 = vpop.f32.mrb[0].mxu0
    %v454 = vadd.f32 %v359, %v453
    %v455 = vpop.f32.mrb[0].mxu0
    %456 = vmatprep.mubr.f32.mxu0 0.0
    %v457 = vand.u32 %v163, 4294901760
    %v458 = vsub.f32 %v163, %v457
    %459 = vmatmul.mubr.f32.gmra.mrb[0].mxu0 %v458
    %v460 = vpop.f32.mrb[0].mxu0
    %v461 = vadd.f32 %v365, %v460
    %v462 = vpop.f32.mrb[0].mxu0
    %463 = vmatprep.mubr.f32.mxu0 0.0
    %v464 = vand.u32 %v166, 4294901760
    %v465 = vsub.f32 %v166, %v464
    %466 = vmatmul.mubr.f32.gmra.mrb[0].mxu0 %v465
    %v467 = vpop.f32.mrb[0].mxu0
    %v468 = vadd.f32 %v371, %v467
    %v469 = vpop.f32.mrb[0].mxu0
    %470 = vdwg.mxu0
    %471 = vmatprep.subr.mxu0 0.0
    %v472 = vand.u32 %v146, 4294901760
    %473 = vmatpush1.msra.mxu0 %v472
    %474 = vmatprep.subr.mxu0 0.0
    %v475 = vand.u32 %v147, 4294901760
    %476 = vmatpush1.msra.mxu0 %v475
    %477 = vmatprep.subr.mxu0 0.0
    %478 = vmatpush1.msra.mxu0 0.0
    %479 = vmatprep.subr.mxu0 0.0
    %480 = vmatpush1.msra.mxu0 0.0
    %481 = vmatprep.subr.mxu0 0.0
    %482 = vmatpush1.msra.mxu0 0.0
    %483 = vmatprep.subr.mxu0 0.0
    %484 = vmatpush1.msra.mxu0 0.0
    %485 = vmatprep.subr.mxu0 0.0
    %486 = vmatpush1.msra.mxu0 0.0
    %487 = vmatprep.subr.mxu0 0.0
    %488 = vmatpush1.msra.mxu0 0.0
    %489 = vmatprep.subr.mxu0 0.0
    %490 = vmatpush1.msra.mxu0 0.0
    %491 = vmatprep.subr.mxu0 0.0
    %492 = vmatpush1.msra.mxu0 0.0
    %493 = vmatprep.subr.mxu0 0.0
    %494 = vmatpush1.msra.mxu0 0.0
    %495 = vmatprep.subr.mxu0 0.0
    %496 = vmatpush1.msra.mxu0 0.0
    %497 = vmatprep.subr.mxu0 0.0
    %498 = vmatpush1.msra.mxu0 0.0
    %499 = vmatprep.subr.mxu0 0.0
    %500 = vmatpush1.msra.mxu0 0.0
    %501 = vmatprep.subr.mxu0 0.0
    %502 = vmatpush1.msra.mxu0 0.0
    %503 = vmatprep.subr.mxu0 0.0
    %504 = vmatpush1.msra.mxu0 0.0
    %505 = vmatprep.subr.mxu0 0.0
    %506 = vmatpush1.msra.mxu0 0.0
    %507 = vmatprep.subr.mxu0 0.0
    %508 = vmatpush1.msra.mxu0 0.0
    %509 = vmatprep.subr.mxu0 0.0
    %510 = vmatpush1.msra.mxu0 0.0
    %511 = vmatprep.subr.mxu0 0.0
    %512 = vmatpush1.msra.mxu0 0.0
    %513 = vmatprep.subr.mxu0 0.0
    %514 = vmatpush1.msra.mxu0 0.0
    %515 = vmatprep.subr.mxu0 0.0
    %516 = vmatpush1.msra.mxu0 0.0
    %517 = vmatprep.subr.mxu0 0.0
    %518 = vmatpush1.msra.mxu0 0.0
    %519 = vmatprep.subr.mxu0 0.0
    %520 = vmatpush1.msra.mxu0 0.0
    %521 = vmatprep.subr.mxu0 0.0
    %522 = vmatpush1.msra.mxu0 0.0
    %523 = vmatprep.subr.mxu0 0.0
    %524 = vmatpush1.msra.mxu0 0.0
    %525 = vmatprep.subr.mxu0 0.0
    %526 = vmatpush1.msra.mxu0 0.0
    %527 = vmatprep.subr.mxu0 0.0
    %528 = vmatpush1.msra.mxu0 0.0
    %529 = vmatprep.subr.mxu0 0.0
    %530 = vmatpush1.msra.mxu0 0.0
    %531 = vmatprep.subr.mxu0 0.0
    %532 = vmatpush1.msra.mxu0 0.0
    %533 = vmatprep.subr.mxu0 0.0
    %534 = vmatpush1.msra.mxu0 0.0
    %535 = vmatprep.subr.mxu0 0.0
    %536 = vmatpush1.msra.mxu0 0.0
    %537 = vmatprep.mubr.f32.mxu0 0.0
    %v538 = vand.u32 %v157, 4294901760
    %v539 = vsub.f32 %v157, %v538
    %v540 = vand.u32 %v539, 4294901760
    %541 = vmatmul.mubr.f32.gmra.mrb[0].mxu0 %v540
    %v542 = vpop.f32.mrb[0].mxu0
    %v543 = vadd.f32 %v447, %v542
    %v544 = vpop.f32.mrb[0].mxu0
    %545 = vmatprep.mubr.f32.mxu0 0.0
    %v546 = vand.u32 %v160, 4294901760
    %v547 = vsub.f32 %v160, %v546
    %v548 = vand.u32 %v547, 4294901760
    %549 = vmatmul.mubr.f32.gmra.mrb[0].mxu0 %v548
    %v550 = vpop.f32.mrb[0].mxu0
    %v551 = vadd.f32 %v454, %v550
    %v552 = vpop.f32.mrb[0].mxu0
    %553 = vmatprep.mubr.f32.mxu0 0.0
    %v554 = vand.u32 %v163, 4294901760
    %v555 = vsub.f32 %v163, %v554
    %v556 = vand.u32 %v555, 4294901760
    %557 = vmatmul.mubr.f32.gmra.mrb[0].mxu0 %v556
    %v558 = vpop.f32.mrb[0].mxu0
    %v559 = vadd.f32 %v461, %v558
    %v560 = vpop.f32.mrb[0].mxu0
    %561 = vmatprep.mubr.f32.mxu0 0.0
    %v562 = vand.u32 %v166, 4294901760
    %v563 = vsub.f32 %v166, %v562
    %v564 = vand.u32 %v563, 4294901760
    %565 = vmatmul.mubr.f32.gmra.mrb[0].mxu0 %v564
    %v566 = vpop.f32.mrb[0].mxu0
    %v567 = vadd.f32 %v468, %v566
    %v568 = vpop.f32.mrb[0].mxu0
    %569 = vdwg.mxu0
    %570 = vmatprep.subr.mxu0 0.0
    %v571 = vand.u32 %v146, 4294901760
    %v572 = vsub.f32 %v146, %v571
    %v573 = vand.u32 %v572, 4294901760
    %574 = vmatpush1.msra.mxu0 %v573
    %575 = vmatprep.subr.mxu0 0.0
    %v576 = vand.u32 %v147, 4294901760
    %v577 = vsub.f32 %v147, %v576
    %v578 = vand.u32 %v577, 4294901760
    %579 = vmatpush1.msra.mxu0 %v578
    %580 = vmatprep.subr.mxu0 0.0
    %581 = vmatpush1.msra.mxu0 0.0
    %582 = vmatprep.subr.mxu0 0.0
    %583 = vmatpush1.msra.mxu0 0.0
    %584 = vmatprep.subr.mxu0 0.0
    %585 = vmatpush1.msra.mxu0 0.0
    %586 = vmatprep.subr.mxu0 0.0
    %587 = vmatpush1.msra.mxu0 0.0
    %588 = vmatprep.subr.mxu0 0.0
    %589 = vmatpush1.msra.mxu0 0.0
    %590 = vmatprep.subr.mxu0 0.0
    %591 = vmatpush1.msra.mxu0 0.0
    %592 = vmatprep.subr.mxu0 0.0
    %593 = vmatpush1.msra.mxu0 0.0
    %594 = vmatprep.subr.mxu0 0.0
    %595 = vmatpush1.msra.mxu0 0.0
    %596 = vmatprep.subr.mxu0 0.0
    %597 = vmatpush1.msra.mxu0 0.0
    %598 = vmatprep.subr.mxu0 0.0
    %599 = vmatpush1.msra.mxu0 0.0
    %600 = vmatprep.subr.mxu0 0.0
    %601 = vmatpush1.msra.mxu0 0.0
    %602 = vmatprep.subr.mxu0 0.0
    %603 = vmatpush1.msra.mxu0 0.0
    %604 = vmatprep.subr.mxu0 0.0
    %605 = vmatpush1.msra.mxu0 0.0
    %606 = vmatprep.subr.mxu0 0.0
    %607 = vmatpush1.msra.mxu0 0.0
    %608 = vmatprep.subr.mxu0 0.0
    %609 = vmatpush1.msra.mxu0 0.0
    %610 = vmatprep.subr.mxu0 0.0
    %611 = vmatpush1.msra.mxu0 0.0
    %612 = vmatprep.subr.mxu0 0.0
    %613 = vmatpush1.msra.mxu0 0.0
    %614 = vmatprep.subr.mxu0 0.0
    %615 = vmatpush1.msra.mxu0 0.0
    %616 = vmatprep.subr.mxu0 0.0
    %617 = vmatpush1.msra.mxu0 0.0
    %618 = vmatprep.subr.mxu0 0.0
    %619 = vmatpush1.msra.mxu0 0.0
    %620 = vmatprep.subr.mxu0 0.0
    %621 = vmatpush1.msra.mxu0 0.0
    %622 = vmatprep.subr.mxu0 0.0
    %623 = vmatpush1.msra.mxu0 0.0
    %624 = vmatprep.subr.mxu0 0.0
    %625 = vmatpush1.msra.mxu0 0.0
    %626 = vmatprep.subr.mxu0 0.0
    %627 = vmatpush1.msra.mxu0 0.0
    %628 = vmatprep.subr.mxu0 0.0
    %629 = vmatpush1.msra.mxu0 0.0
    %630 = vmatprep.subr.mxu0 0.0
    %631 = vmatpush1.msra.mxu0 0.0
    %632 = vmatprep.subr.mxu0 0.0
    %633 = vmatpush1.msra.mxu0 0.0
    %634 = vmatprep.subr.mxu0 0.0
    %635 = vmatpush1.msra.mxu0 0.0
    %636 = vmatprep.subr.mxu0 0.0
    %637 = vmatpush1.msra.mxu0 0.0
    %638 = vmatprep.subr.mxu0 0.0
    %639 = vmatpush1.msra.mxu0 0.0
    %640 = vmatprep.mubr.f32.mxu0 0.0
    %v641 = vand.u32 %v157, 4294901760
    %642 = vmatmul.mubr.f32.gmra.mrb[0].mxu0 %v641
    %v643 = vpop.f32.mrb[0].mxu0
    %v644 = vadd.f32 %v543, %v643
    %v645 = vpop.f32.mrb[0].mxu0
    %646 = vmatprep.mubr.f32.mxu0 0.0
    %v647 = vand.u32 %v160, 4294901760
    %648 = vmatmul.mubr.f32.gmra.mrb[0].mxu0 %v647
    %v649 = vpop.f32.mrb[0].mxu0
    %v650 = vadd.f32 %v551, %v649
    %v651 = vpop.f32.mrb[0].mxu0
    %652 = vmatprep.mubr.f32.mxu0 0.0
    %v653 = vand.u32 %v163, 4294901760
    %654 = vmatmul.mubr.f32.gmra.mrb[0].mxu0 %v653
    %v655 = vpop.f32.mrb[0].mxu0
    %v656 = vadd.f32 %v559, %v655
    %v657 = vpop.f32.mrb[0].mxu0
    %658 = vmatprep.mubr.f32.mxu0 0.0
    %v659 = vand.u32 %v166, 4294901760
    %660 = vmatmul.mubr.f32.gmra.mrb[0].mxu0 %v659
    %v661 = vpop.f32.mrb[0].mxu0
    %v662 = vadd.f32 %v567, %v661
    %v663 = vpop.f32.mrb[0].mxu0
    %664 = vdwg.mxu0
    %665 = vmatprep.subr.mxu0 0.0
    %v666 = vand.u32 %v146, 4294901760
    %667 = vmatpush1.msra.mxu0 %v666
    %668 = vmatprep.subr.mxu0 0.0
    %v669 = vand.u32 %v147, 4294901760
    %670 = vmatpush1.msra.mxu0 %v669
    %671 = vmatprep.subr.mxu0 0.0
    %672 = vmatpush1.msra.mxu0 0.0
    %673 = vmatprep.subr.mxu0 0.0
    %674 = vmatpush1.msra.mxu0 0.0
    %675 = vmatprep.subr.mxu0 0.0
    %676 = vmatpush1.msra.mxu0 0.0
    %677 = vmatprep.subr.mxu0 0.0
    %678 = vmatpush1.msra.mxu0 0.0
    %679 = vmatprep.subr.mxu0 0.0
    %680 = vmatpush1.msra.mxu0 0.0
    %681 = vmatprep.subr.mxu0 0.0
    %682 = vmatpush1.msra.mxu0 0.0
    %683 = vmatprep.subr.mxu0 0.0
    %684 = vmatpush1.msra.mxu0 0.0
    %685 = vmatprep.subr.mxu0 0.0
    %686 = vmatpush1.msra.mxu0 0.0
    %687 = vmatprep.subr.mxu0 0.0
    %688 = vmatpush1.msra.mxu0 0.0
    %689 = vmatprep.subr.mxu0 0.0
    %690 = vmatpush1.msra.mxu0 0.0
    %691 = vmatprep.subr.mxu0 0.0
    %692 = vmatpush1.msra.mxu0 0.0
    %693 = vmatprep.subr.mxu0 0.0
    %694 = vmatpush1.msra.mxu0 0.0
    %695 = vmatprep.subr.mxu0 0.0
    %696 = vmatpush1.msra.mxu0 0.0
    %697 = vmatprep.subr.mxu0 0.0
    %698 = vmatpush1.msra.mxu0 0.0
    %699 = vmatprep.subr.mxu0 0.0
    %700 = vmatpush1.msra.mxu0 0.0
    %701 = vmatprep.subr.mxu0 0.0
    %702 = vmatpush1.msra.mxu0 0.0
    %703 = vmatprep.subr.mxu0 0.0
    %704 = vmatpush1.msra.mxu0 0.0
    %705 = vmatprep.subr.mxu0 0.0
    %706 = vmatpush1.msra.mxu0 0.0
    %707 = vmatprep.subr.mxu0 0.0
    %708 = vmatpush1.msra.mxu0 0.0
    %709 = vmatprep.subr.mxu0 0.0
    %710 = vmatpush1.msra.mxu0 0.0
    %711 = vmatprep.subr.mxu0 0.0
    %712 = vmatpush1.msra.mxu0 0.0
    %713 = vmatprep.subr.mxu0 0.0
    %714 = vmatpush1.msra.mxu0 0.0
    %715 = vmatprep.subr.mxu0 0.0
    %716 = vmatpush1.msra.mxu0 0.0
    %717 = vmatprep.subr.mxu0 0.0
    %718 = vmatpush1.msra.mxu0 0.0
    %719 = vmatprep.subr.mxu0 0.0
    %720 = vmatpush1.msra.mxu0 0.0
    %721 = vmatprep.subr.mxu0 0.0
    %722 = vmatpush1.msra.mxu0 0.0
    %723 = vmatprep.subr.mxu0 0.0
    %724 = vmatpush1.msra.mxu0 0.0
    %725 = vmatprep.subr.mxu0 0.0
    %726 = vmatpush1.msra.mxu0 0.0
    %727 = vmatprep.subr.mxu0 0.0
    %728 = vmatpush1.msra.mxu0 0.0
    %729 = vmatprep.subr.mxu0 0.0
    %730 = vmatpush1.msra.mxu0 0.0
    %731 = vmatprep.mubr.f32.mxu0 0.0
    %v732 = vand.u32 %v157, 4294901760
    %733 = vmatmul.mubr.f32.gmra.mrb[0].mxu0 %v732
    %v734 = vpop.f32.mrb[0].mxu0
    %v735 = vadd.f32 %v644, %v734
    %v736 = vpop.f32.mrb[0].mxu0
    %737 = vmatprep.mubr.f32.mxu0 0.0
    %v738 = vand.u32 %v160, 4294901760
    %739 = vmatmul.mubr.f32.gmra.mrb[0].mxu0 %v738
    %v740 = vpop.f32.mrb[0].mxu0
    %v741 = vadd.f32 %v650, %v740
    %v742 = vpop.f32.mrb[0].mxu0
    %743 = vmatprep.mubr.f32.mxu0 0.0
    %v744 = vand.u32 %v163, 4294901760
    %745 = vmatmul.mubr.f32.gmra.mrb[0].mxu0 %v744
    %v746 = vpop.f32.mrb[0].mxu0
    %v747 = vadd.f32 %v656, %v746
    %v748 = vpop.f32.mrb[0].mxu0
    %749 = vmatprep.mubr.f32.mxu0 0.0
    %v750 = vand.u32 %v166, 4294901760
    %751 = vmatmul.mubr.f32.gmra.mrb[0].mxu0 %v750
    %v752 = vpop.f32.mrb[0].mxu0
    %v753 = vadd.f32 %v662, %v752
    %v754 = vpop.f32.mrb[0].mxu0
    %755 = vdwg.mxu0
    %v756 = vxor.u32 %v735, 2147483648
    %v757 = vxor.u32 %v741, 2147483648
    %v758 = vxor.u32 %v747, 2147483648
    %v759 = vxor.u32 %v753, 2147483648
    %v760 = vmul.f32 %v756, 1.442695
    %v761 = vpow.pop %v760
    %v762 = vmul.f32 %v757, 1.442695
    %v763 = vpow.pop %v762
    %v764 = vmul.f32 %v758, 1.442695
    %v765 = vpow.pop %v764
    %v766 = vmul.f32 %v759, 1.442695
    %v767 = vpow.pop %v766
    %v768 = vadd.f32 %v761, 1.0
    %v769 = vadd.f32 %v763, 1.0
    %v770 = vadd.f32 %v765, 1.0
    %v771 = vadd.f32 %v767, 1.0
    %v772 = vrcp.pop %v768
    %v773 = vmul.f32 1.0, %v772
    %v774 = vrcp.pop %v769
    %v775 = vmul.f32 1.0, %v774
    %v776 = vrcp.pop %v770
    %v777 = vmul.f32 1.0, %v776
    %v778 = vrcp.pop %v771
    %v779 = vmul.f32 1.0, %v778
    %v780 = vmul.f32 %v735, %v773
    %v781 = vmul.f32 %v741, %v775
    %v782 = vmul.f32 %v747, %v777
    %v783 = vmul.f32 %v753, %v779
    %v784 = vld [vmem:[%s3] sm:$0xff]
    %v785 = vld [vmem:[%s3 + $0x8] sm:$0xff]
    %v786 = vld [vmem:[%s3 + $0x10] sm:$0xff]
    %v787 = vld [vmem:[%s3 + $0x18] sm:$0xff]
    %v788 = vld [vmem:[%s3 + $0x20] sm:$0xff]
    %v789 = vld [vmem:[%s3 + $0x28] sm:$0xff]
    %v790 = vld [vmem:[%s3 + $0x30] sm:$0xff]
    %v791 = vld [vmem:[%s3 + $0x38] sm:$0xff]
    %v792 = vld [vmem:[%s3 + $0x40] sm:$0xff]
    %v793 = vld [vmem:[%s3 + $0x48] sm:$0xff]
    %v794 = vld [vmem:[%s3 + $0x50] sm:$0xff]
    %v795 = vld [vmem:[%s3 + $0x58] sm:$0xff]
    %vm800 = vcmask 1040384
    %v801 = vrot.slane %v780, 7
    %v802 = vrot.slane %v781, 7
    %v803 = vsel %vm800, %v801, %v802
    %v804 = vrot.slane %v782, 7
    %v805 = vrot.slane %v783, 7
    %v806 = vsel %vm800, %v804, %v805
    %v813 = vsel %vm800, 0.0, %v801
    %v814 = vsel %vm800, 0.0, %v804
    %v815 = vsel %vm800, %v802, 0.0
    %v816 = vsel %vm800, %v805, 0.0
    %vm817 = vcmask 261120
    %818 = vst.msk [vmem:[#allocation2] sm:$0xff] %vm817, %v813
    %819 = vst.msk [vmem:[#allocation2 + $0x8] sm:$0xff] %vm817, %v803
    %vm820 = vcmask 254976
    %821 = vst.msk [vmem:[#allocation2 + $0x10] sm:$0x3] %vm820, %v815
    %822 = vst.msk [vmem:[#allocation2 + $0x18] sm:$0xff] %vm817, %v814
    %823 = vst.msk [vmem:[#allocation2 + $0x20] sm:$0xff] %vm817, %v806
    %824 = vst.msk [vmem:[#allocation2 + $0x28] sm:$0x3] %vm820, %v816
    %v825 = vld [vmem:[#allocation2] ss:$2 sm:$0xff]
    %s826 = scalar_lea.vmem [#allocation2], 24
    %v827 = vld [vmem:[%s826] ss:$2 sm:$0xff]
    %s828 = scalar_lea.vmem [#allocation2], 1
    %v829 = vld [vmem:[%s828] ss:$2 sm:$0xff]
    %s830 = scalar_lea.vmem [#allocation2], 25
    %v831 = vld [vmem:[%s830] ss:$2 sm:$0xff]
    %s832 = scalar_lea.vmem [#allocation2], 2
    %v833 = vld [vmem:[%s832] ss:$2 sm:$0xff]
    %s834 = scalar_lea.vmem [#allocation2], 26
    %v835 = vld [vmem:[%s834] ss:$2 sm:$0xff]
    %v837 = vsel %vm817, %v829, 0
    %v840 = vsel %vm817, %v831, 0
    %842 = vmatprep.subr.mxu0 0.0
    %v843 = vand.u32 %v788, 4294901760
    %844 = vmatpush1.msra.mxu0 %v843
    %845 = vmatprep.subr.mxu0 0.0
    %v846 = vand.u32 %v789, 4294901760
    %847 = vmatpush1.msra.mxu0 %v846
    %848 = vmatprep.subr.mxu0 0.0
    %v849 = vand.u32 %v790, 4294901760
    %850 = vmatpush1.msra.mxu0 %v849
    %851 = vmatprep.subr.mxu0 0.0
    %v852 = vand.u32 %v791, 4294901760
    %853 = vmatpush1.msra.mxu0 %v852
    %854 = vmatprep.subr.mxu0 0.0
    %855 = vmatpush1.msra.mxu0 0.0
    %856 = vmatprep.subr.mxu0 0.0
    %857 = vmatpush1.msra.mxu0 0.0
    %858 = vmatprep.subr.mxu0 0.0
    %859 = vmatpush1.msra.mxu0 0.0
    %860 = vmatprep.subr.mxu0 0.0
    %861 = vmatpush1.msra.mxu0 0.0
    %862 = vmatprep.subr.mxu0 0.0
    %863 = vmatpush1.msra.mxu0 0.0
    %864 = vmatprep.subr.mxu0 0.0
    %865 = vmatpush1.msra.mxu0 0.0
    %866 = vmatprep.subr.mxu0 0.0
    %867 = vmatpush1.msra.mxu0 0.0
    %868 = vmatprep.subr.mxu0 0.0
    %869 = vmatpush1.msra.mxu0 0.0
    %870 = vmatprep.subr.mxu0 0.0
    %871 = vmatpush1.msra.mxu0 0.0
    %872 = vmatprep.subr.mxu0 0.0
    %873 = vmatpush1.msra.mxu0 0.0
    %874 = vmatprep.subr.mxu0 0.0
    %875 = vmatpush1.msra.mxu0 0.0
    %876 = vmatprep.subr.mxu0 0.0
    %877 = vmatpush1.msra.mxu0 0.0
    %878 = vmatprep.subr.mxu0 0.0
    %879 = vmatpush1.msra.mxu0 0.0
    %880 = vmatprep.subr.mxu0 0.0
    %881 = vmatpush1.msra.mxu0 0.0
    %882 = vmatprep.subr.mxu0 0.0
    %883 = vmatpush1.msra.mxu0 0.0
    %884 = vmatprep.subr.mxu0 0.0
    %885 = vmatpush1.msra.mxu0 0.0
    %886 = vmatprep.subr.mxu0 0.0
    %887 = vmatpush1.msra.mxu0 0.0
    %888 = vmatprep.subr.mxu0 0.0
    %889 = vmatpush1.msra.mxu0 0.0
    %890 = vmatprep.subr.mxu0 0.0
    %891 = vmatpush1.msra.mxu0 0.0
    %892 = vmatprep.subr.mxu0 0.0
    %893 = vmatpush1.msra.mxu0 0.0
    %894 = vmatprep.subr.mxu0 0.0
    %895 = vmatpush1.msra.mxu0 0.0
    %896 = vmatprep.subr.mxu0 0.0
    %897 = vmatpush1.msra.mxu0 0.0
    %898 = vmatprep.subr.mxu0 0.0
    %899 = vmatpush1.msra.mxu0 0.0
    %900 = vmatprep.subr.mxu0 0.0
    %901 = vmatpush1.msra.mxu0 0.0
    %902 = vmatprep.subr.mxu0 0.0
    %903 = vmatpush1.msra.mxu0 0.0
    %904 = vmatprep.subr.mxu0 0.0
    %905 = vmatpush1.msra.mxu0 0.0
    %906 = vmatprep.subr.mxu0 0.0
    %907 = vmatpush1.msra.mxu0 0.0
    %908 = vmatprep.subr.mxu0 0.0
    %909 = vmatpush1.msra.mxu0 0.0
    %910 = vmatprep.mubr.f32.mxu0 0.0
    %v911 = vand.u32 %v837, 4294901760
    %v912 = vsub.f32 %v837, %v911
    %v913 = vand.u32 %v912, 4294901760
    %v914 = vsub.f32 %v912, %v913
    %v915 = vand.u32 %v914, 4294901760
    %916 = vmatmul.mubr.f32.gmra.mrb[0].mxu0 %v915
    %v917 = vpop.f32.mrb[0].mxu0
    %v918 = vadd.f32 0.0, %v917
    %v919 = vpop.f32.mrb[0].mxu0
    %920 = vmatprep.mubr.f32.mxu0 0.0
    %v921 = vand.u32 %v840, 4294901760
    %v922 = vsub.f32 %v840, %v921
    %v923 = vand.u32 %v922, 4294901760
    %v924 = vsub.f32 %v922, %v923
    %v925 = vand.u32 %v924, 4294901760
    %926 = vmatmul.mubr.f32.gmra.mrb[0].mxu0 %v925
    %v927 = vpop.f32.mrb[0].mxu0
    %v928 = vadd.f32 0.0, %v927
    %v929 = vpop.f32.mrb[0].mxu0
    %930 = vdwg.mxu0
    %931 = vmatprep.subr.mxu0 0.0
    %v932 = vand.u32 %v788, 4294901760
    %v933 = vsub.f32 %v788, %v932
    %v934 = vand.u32 %v933, 4294901760
    %v935 = vsub.f32 %v933, %v934
    %v936 = vand.u32 %v935, 4294901760
    %937 = vmatpush1.msra.mxu0 %v936
    %938 = vmatprep.subr.mxu0 0.0
    %v939 = vand.u32 %v789, 4294901760
    %v940 = vsub.f32 %v789, %v939
    %v941 = vand.u32 %v940, 4294901760
    %v942 = vsub.f32 %v940, %v941
    %v943 = vand.u32 %v942, 4294901760
    %944 = vmatpush1.msra.mxu0 %v943
    %945 = vmatprep.subr.mxu0 0.0
    %v946 = vand.u32 %v790, 4294901760
    %v947 = vsub.f32 %v790, %v946
    %v948 = vand.u32 %v947, 4294901760
    %v949 = vsub.f32 %v947, %v948
    %v950 = vand.u32 %v949, 4294901760
    %951 = vmatpush1.msra.mxu0 %v950
    %952 = vmatprep.subr.mxu0 0.0
    %v953 = vand.u32 %v791, 4294901760
    %v954 = vsub.f32 %v791, %v953
    %v955 = vand.u32 %v954, 4294901760
    %v956 = vsub.f32 %v954, %v955
    %v957 = vand.u32 %v956, 4294901760
    %958 = vmatpush1.msra.mxu0 %v957
    %959 = vmatprep.subr.mxu0 0.0
    %960 = vmatpush1.msra.mxu0 0.0
    %961 = vmatprep.subr.mxu0 0.0
    %962 = vmatpush1.msra.mxu0 0.0
    %963 = vmatprep.subr.mxu0 0.0
    %964 = vmatpush1.msra.mxu0 0.0
    %965 = vmatprep.subr.mxu0 0.0
    %966 = vmatpush1.msra.mxu0 0.0
    %967 = vmatprep.subr.mxu0 0.0
    %968 = vmatpush1.msra.mxu0 0.0
    %969 = vmatprep.subr.mxu0 0.0
    %970 = vmatpush1.msra.mxu0 0.0
    %971 = vmatprep.subr.mxu0 0.0
    %972 = vmatpush1.msra.mxu0 0.0
    %973 = vmatprep.subr.mxu0 0.0
    %974 = vmatpush1.msra.mxu0 0.0
    %975 = vmatprep.subr.mxu0 0.0
    %976 = vmatpush1.msra.mxu0 0.0
    %977 = vmatprep.subr.mxu0 0.0
    %978 = vmatpush1.msra.mxu0 0.0
    %979 = vmatprep.subr.mxu0 0.0
    %980 = vmatpush1.msra.mxu0 0.0
    %981 = vmatprep.subr.mxu0 0.0
    %982 = vmatpush1.msra.mxu0 0.0
    %983 = vmatprep.subr.mxu0 0.0
    %984 = vmatpush1.msra.mxu0 0.0
    %985 = vmatprep.subr.mxu0 0.0
    %986 = vmatpush1.msra.mxu0 0.0
    %987 = vmatprep.subr.mxu0 0.0
    %988 = vmatpush1.msra.mxu0 0.0
    %989 = vmatprep.subr.mxu0 0.0
    %990 = vmatpush1.msra.mxu0 0.0
    %991 = vmatprep.subr.mxu0 0.0
    %992 = vmatpush1.msra.mxu0 0.0
    %993 = vmatprep.subr.mxu0 0.0
    %994 = vmatpush1.msra.mxu0 0.0
    %995 = vmatprep.subr.mxu0 0.0
    %996 = vmatpush1.msra.mxu0 0.0
    %997 = vmatprep.subr.mxu0 0.0
    %998 = vmatpush1.msra.mxu0 0.0
    %999 = vmatprep.subr.mxu0 0.0
    %1000 = vmatpush1.msra.mxu0 0.0
    %1001 = vmatprep.subr.mxu0 0.0
    %1002 = vmatpush1.msra.mxu0 0.0
    %1003 = vmatprep.subr.mxu0 0.0
    %1004 = vmatpush1.msra.mxu0 0.0
    %1005 = vmatprep.subr.mxu0 0.0
    %1006 = vmatpush1.msra.mxu0 0.0
    %1007 = vmatprep.subr.mxu0 0.0
    %1008 = vmatpush1.msra.mxu0 0.0
    %1009 = vmatprep.subr.mxu0 0.0
    %1010 = vmatpush1.msra.mxu0 0.0
    %1011 = vmatprep.subr.mxu0 0.0
    %1012 = vmatpush1.msra.mxu0 0.0
    %1013 = vmatprep.subr.mxu0 0.0
    %1014 = vmatpush1.msra.mxu0 0.0
    %1015 = vmatprep.mubr.f32.mxu0 0.0
    %v1016 = vand.u32 %v837, 4294901760
    %1017 = vmatmul.mubr.f32.gmra.mrb[0].mxu0 %v1016
    %v1018 = vpop.f32.mrb[0].mxu0
    %v1019 = vadd.f32 %v918, %v1018
    %v1020 = vpop.f32.mrb[0].mxu0
    %1021 = vmatprep.mubr.f32.mxu0 0.0
    %v1022 = vand.u32 %v840, 4294901760
    %1023 = vmatmul.mubr.f32.gmra.mrb[0].mxu0 %v1022
    %v1024 = vpop.f32.mrb[0].mxu0
    %v1025 = vadd.f32 %v928, %v1024
    %v1026 = vpop.f32.mrb[0].mxu0
    %1027 = vdwg.mxu0
    %1028 = vmatprep.subr.mxu0 0.0
    %v1029 = vand.u32 %v788, 4294901760
    %v1030 = vsub.f32 %v788, %v1029
    %1031 = vmatpush1.msra.mxu0 %v1030
    %1032 = vmatprep.subr.mxu0 0.0
    %v1033 = vand.u32 %v789, 4294901760
    %v1034 = vsub.f32 %v789, %v1033
    %1035 = vmatpush1.msra.mxu0 %v1034
    %1036 = vmatprep.subr.mxu0 0.0
    %v1037 = vand.u32 %v790, 4294901760
    %v1038 = vsub.f32 %v790, %v1037
    %1039 = vmatpush1.msra.mxu0 %v1038
    %1040 = vmatprep.subr.mxu0 0.0
    %v1041 = vand.u32 %v791, 4294901760
    %v1042 = vsub.f32 %v791, %v1041
    %1043 = vmatpush1.msra.mxu0 %v1042
    %1044 = vmatprep.subr.mxu0 0.0
    %1045 = vmatpush1.msra.mxu0 0.0
    %1046 = vmatprep.subr.mxu0 0.0
    %1047 = vmatpush1.msra.mxu0 0.0
    %1048 = vmatprep.subr.mxu0 0.0
    %1049 = vmatpush1.msra.mxu0 0.0
    %1050 = vmatprep.subr.mxu0 0.0
    %1051 = vmatpush1.msra.mxu0 0.0
    %1052 = vmatprep.subr.mxu0 0.0
    %1053 = vmatpush1.msra.mxu0 0.0
    %1054 = vmatprep.subr.mxu0 0.0
    %1055 = vmatpush1.msra.mxu0 0.0
    %1056 = vmatprep.subr.mxu0 0.0
    %1057 = vmatpush1.msra.mxu0 0.0
    %1058 = vmatprep.subr.mxu0 0.0
    %1059 = vmatpush1.msra.mxu0 0.0
    %1060 = vmatprep.subr.mxu0 0.0
    %1061 = vmatpush1.msra.mxu0 0.0
    %1062 = vmatprep.subr.mxu0 0.0
    %1063 = vmatpush1.msra.mxu0 0.0
    %1064 = vmatprep.subr.mxu0 0.0
    %1065 = vmatpush1.msra.mxu0 0.0
    %1066 = vmatprep.subr.mxu0 0.0
    %1067 = vmatpush1.msra.mxu0 0.0
    %1068 = vmatprep.subr.mxu0 0.0
    %1069 = vmatpush1.msra.mxu0 0.0
    %1070 = vmatprep.subr.mxu0 0.0
    %1071 = vmatpush1.msra.mxu0 0.0
    %1072 = vmatprep.subr.mxu0 0.0
    %1073 = vmatpush1.msra.mxu0 0.0
    %1074 = vmatprep.subr.mxu0 0.0
    %1075 = vmatpush1.msra.mxu0 0.0
    %1076 = vmatprep.subr.mxu0 0.0
    %1077 = vmatpush1.msra.mxu0 0.0
    %1078 = vmatprep.subr.mxu0 0.0
    %1079 = vmatpush1.msra.mxu0 0.0
    %1080 = vmatprep.subr.mxu0 0.0
    %1081 = vmatpush1.msra.mxu0 0.0
    %1082 = vmatprep.subr.mxu0 0.0
    %1083 = vmatpush1.msra.mxu0 0.0
    %1084 = vmatprep.subr.mxu0 0.0
    %1085 = vmatpush1.msra.mxu0 0.0
    %1086 = vmatprep.subr.mxu0 0.0
    %1087 = vmatpush1.msra.mxu0 0.0
    %1088 = vmatprep.subr.mxu0 0.0
    %1089 = vmatpush1.msra.mxu0 0.0
    %1090 = vmatprep.subr.mxu0 0.0
    %1091 = vmatpush1.msra.mxu0 0.0
    %1092 = vmatprep.subr.mxu0 0.0
    %1093 = vmatpush1.msra.mxu0 0.0
    %1094 = vmatprep.subr.mxu0 0.0
    %1095 = vmatpush1.msra.mxu0 0.0
    %1096 = vmatprep.subr.mxu0 0.0
    %1097 = vmatpush1.msra.mxu0 0.0
    %1098 = vmatprep.subr.mxu0 0.0
    %1099 = vmatpush1.msra.mxu0 0.0
    %1100 = vmatprep.mubr.f32.mxu0 0.0
    %v1101 = vand.u32 %v837, 4294901760
    %v1102 = vsub.f32 %v837, %v1101
    %1103 = vmatmul.mubr.f32.gmra.mrb[0].mxu0 %v1102
    %v1104 = vpop.f32.mrb[0].mxu0
    %v1105 = vadd.f32 %v1019, %v1104
    %v1106 = vpop.f32.mrb[0].mxu0
    %1107 = vmatprep.mubr.f32.mxu0 0.0
    %v1108 = vand.u32 %v840, 4294901760
    %v1109 = vsub.f32 %v840, %v1108
    %1110 = vmatmul.mubr.f32.gmra.mrb[0].mxu0 %v1109
    %v1111 = vpop.f32.mrb[0].mxu0
    %v1112 = vadd.f32 %v1025, %v1111
    %v1113 = vpop.f32.mrb[0].mxu0
    %1114 = vdwg.mxu0
    %1115 = vmatprep.subr.mxu0 0.0
    %v1116 = vand.u32 %v788, 4294901760
    %1117 = vmatpush1.msra.mxu0 %v1116
    %1118 = vmatprep.subr.mxu0 0.0
    %v1119 = vand.u32 %v789, 4294901760
    %1120 = vmatpush1.msra.mxu0 %v1119
    %1121 = vmatprep.subr.mxu0 0.0
    %v1122 = vand.u32 %v790, 4294901760
    %1123 = vmatpush1.msra.mxu0 %v1122
    %1124 = vmatprep.subr.mxu0 0.0
    %v1125 = vand.u32 %v791, 4294901760
    %1126 = vmatpush1.msra.mxu0 %v1125
    %1127 = vmatprep.subr.mxu0 0.0
    %1128 = vmatpush1.msra.mxu0 0.0
    %1129 = vmatprep.subr.mxu0 0.0
    %1130 = vmatpush1.msra.mxu0 0.0
    %1131 = vmatprep.subr.mxu0 0.0
    %1132 = vmatpush1.msra.mxu0 0.0
    %1133 = vmatprep.subr.mxu0 0.0
    %1134 = vmatpush1.msra.mxu0 0.0
    %1135 = vmatprep.subr.mxu0 0.0
    %1136 = vmatpush1.msra.mxu0 0.0
    %1137 = vmatprep.subr.mxu0 0.0
    %1138 = vmatpush1.msra.mxu0 0.0
    %1139 = vmatprep.subr.mxu0 0.0
    %1140 = vmatpush1.msra.mxu0 0.0
    %1141 = vmatprep.subr.mxu0 0.0
    %1142 = vmatpush1.msra.mxu0 0.0
    %1143 = vmatprep.subr.mxu0 0.0
    %1144 = vmatpush1.msra.mxu0 0.0
    %1145 = vmatprep.subr.mxu0 0.0
    %1146 = vmatpush1.msra.mxu0 0.0
    %1147 = vmatprep.subr.mxu0 0.0
    %1148 = vmatpush1.msra.mxu0 0.0
    %1149 = vmatprep.subr.mxu0 0.0
    %1150 = vmatpush1.msra.mxu0 0.0
    %1151 = vmatprep.subr.mxu0 0.0
    %1152 = vmatpush1.msra.mxu0 0.0
    %1153 = vmatprep.subr.mxu0 0.0
    %1154 = vmatpush1.msra.mxu0 0.0
    %1155 = vmatprep.subr.mxu0 0.0
    %1156 = vmatpush1.msra.mxu0 0.0
    %1157 = vmatprep.subr.mxu0 0.0
    %1158 = vmatpush1.msra.mxu0 0.0
    %1159 = vmatprep.subr.mxu0 0.0
    %1160 = vmatpush1.msra.mxu0 0.0
    %1161 = vmatprep.subr.mxu0 0.0
    %1162 = vmatpush1.msra.mxu0 0.0
    %1163 = vmatprep.subr.mxu0 0.0
    %1164 = vmatpush1.msra.mxu0 0.0
    %1165 = vmatprep.subr.mxu0 0.0
    %1166 = vmatpush1.msra.mxu0 0.0
    %1167 = vmatprep.subr.mxu0 0.0
    %1168 = vmatpush1.msra.mxu0 0.0
    %1169 = vmatprep.subr.mxu0 0.0
    %1170 = vmatpush1.msra.mxu0 0.0
    %1171 = vmatprep.subr.mxu0 0.0
    %1172 = vmatpush1.msra.mxu0 0.0
    %1173 = vmatprep.subr.mxu0 0.0
    %1174 = vmatpush1.msra.mxu0 0.0
    %1175 = vmatprep.subr.mxu0 0.0
    %1176 = vmatpush1.msra.mxu0 0.0
    %1177 = vmatprep.subr.mxu0 0.0
    %1178 = vmatpush1.msra.mxu0 0.0
    %1179 = vmatprep.subr.mxu0 0.0
    %1180 = vmatpush1.msra.mxu0 0.0
    %1181 = vmatprep.subr.mxu0 0.0
    %1182 = vmatpush1.msra.mxu0 0.0
    %1183 = vmatprep.mubr.f32.mxu0 0.0
    %v1184 = vand.u32 %v837, 4294901760
    %v1185 = vsub.f32 %v837, %v1184
    %v1186 = vand.u32 %v1185, 4294901760
    %1187 = vmatmul.mubr.f32.gmra.mrb[0].mxu0 %v1186
    %v1188 = vpop.f32.mrb[0].mxu0
    %v1189 = vadd.f32 %v1105, %v1188
    %v1190 = vpop.f32.mrb[0].mxu0
    %1191 = vmatprep.mubr.f32.mxu0 0.0
    %v1192 = vand.u32 %v840, 4294901760
    %v1193 = vsub.f32 %v840, %v1192
    %v1194 = vand.u32 %v1193, 4294901760
    %1195 = vmatmul.mubr.f32.gmra.mrb[0].mxu0 %v1194
    %v1196 = vpop.f32.mrb[0].mxu0
    %v1197 = vadd.f32 %v1112, %v1196
    %v1198 = vpop.f32.mrb[0].mxu0
    %1199 = vdwg.mxu0
    %1200 = vmatprep.subr.mxu0 0.0
    %v1201 = vand.u32 %v788, 4294901760
    %v1202 = vsub.f32 %v788, %v1201
    %v1203 = vand.u32 %v1202, 4294901760
    %1204 = vmatpush1.msra.mxu0 %v1203
    %1205 = vmatprep.subr.mxu0 0.0
    %v1206 = vand.u32 %v789, 4294901760
    %v1207 = vsub.f32 %v789, %v1206
    %v1208 = vand.u32 %v1207, 4294901760
    %1209 = vmatpush1.msra.mxu0 %v1208
    %1210 = vmatprep.subr.mxu0 0.0
    %v1211 = vand.u32 %v790, 4294901760
    %v1212 = vsub.f32 %v790, %v1211
    %v1213 = vand.u32 %v1212, 4294901760
    %1214 = vmatpush1.msra.mxu0 %v1213
    %1215 = vmatprep.subr.mxu0 0.0
    %v1216 = vand.u32 %v791, 4294901760
    %v1217 = vsub.f32 %v791, %v1216
    %v1218 = vand.u32 %v1217, 4294901760
    %1219 = vmatpush1.msra.mxu0 %v1218
    %1220 = vmatprep.subr.mxu0 0.0
    %1221 = vmatpush1.msra.mxu0 0.0
    %1222 = vmatprep.subr.mxu0 0.0
    %1223 = vmatpush1.msra.mxu0 0.0
    %1224 = vmatprep.subr.mxu0 0.0
    %1225 = vmatpush1.msra.mxu0 0.0
    %1226 = vmatprep.subr.mxu0 0.0
    %1227 = vmatpush1.msra.mxu0 0.0
    %1228 = vmatprep.subr.mxu0 0.0
    %1229 = vmatpush1.msra.mxu0 0.0
    %1230 = vmatprep.subr.mxu0 0.0
    %1231 = vmatpush1.msra.mxu0 0.0
    %1232 = vmatprep.subr.mxu0 0.0
    %1233 = vmatpush1.msra.mxu0 0.0
    %1234 = vmatprep.subr.mxu0 0.0
    %1235 = vmatpush1.msra.mxu0 0.0
    %1236 = vmatprep.subr.mxu0 0.0
    %1237 = vmatpush1.msra.mxu0 0.0
    %1238 = vmatprep.subr.mxu0 0.0
    %1239 = vmatpush1.msra.mxu0 0.0
    %1240 = vmatprep.subr.mxu0 0.0
    %1241 = vmatpush1.msra.mxu0 0.0
    %1242 = vmatprep.subr.mxu0 0.0
    %1243 = vmatpush1.msra.mxu0 0.0
    %1244 = vmatprep.subr.mxu0 0.0
    %1245 = vmatpush1.msra.mxu0 0.0
    %1246 = vmatprep.subr.mxu0 0.0
    %1247 = vmatpush1.msra.mxu0 0.0
    %1248 = vmatprep.subr.mxu0 0.0
    %1249 = vmatpush1.msra.mxu0 0.0
    %1250 = vmatprep.subr.mxu0 0.0
    %1251 = vmatpush1.msra.mxu0 0.0
    %1252 = vmatprep.subr.mxu0 0.0
    %1253 = vmatpush1.msra.mxu0 0.0
    %1254 = vmatprep.subr.mxu0 0.0
    %1255 = vmatpush1.msra.mxu0 0.0
    %1256 = vmatprep.subr.mxu0 0.0
    %1257 = vmatpush1.msra.mxu0 0.0
    %1258 = vmatprep.subr.mxu0 0.0
    %1259 = vmatpush1.msra.mxu0 0.0
    %1260 = vmatprep.subr.mxu0 0.0
    %1261 = vmatpush1.msra.mxu0 0.0
    %1262 = vmatprep.subr.mxu0 0.0
    %1263 = vmatpush1.msra.mxu0 0.0
    %1264 = vmatprep.subr.mxu0 0.0
    %1265 = vmatpush1.msra.mxu0 0.0
    %1266 = vmatprep.subr.mxu0 0.0
    %1267 = vmatpush1.msra.mxu0 0.0
    %1268 = vmatprep.subr.mxu0 0.0
    %1269 = vmatpush1.msra.mxu0 0.0
    %1270 = vmatprep.subr.mxu0 0.0
    %1271 = vmatpush1.msra.mxu0 0.0
    %1272 = vmatprep.subr.mxu0 0.0
    %1273 = vmatpush1.msra.mxu0 0.0
    %1274 = vmatprep.subr.mxu0 0.0
    %1275 = vmatpush1.msra.mxu0 0.0
    %1276 = vmatprep.mubr.f32.mxu0 0.0
    %v1277 = vand.u32 %v837, 4294901760
    %1278 = vmatmul.mubr.f32.gmra.mrb[0].mxu0 %v1277
    %v1279 = vpop.f32.mrb[0].mxu0
    %v1280 = vadd.f32 %v1189, %v1279
    %v1281 = vpop.f32.mrb[0].mxu0
    %1282 = vmatprep.mubr.f32.mxu0 0.0
    %v1283 = vand.u32 %v840, 4294901760
    %1284 = vmatmul.mubr.f32.gmra.mrb[0].mxu0 %v1283
    %v1285 = vpop.f32.mrb[0].mxu0
    %v1286 = vadd.f32 %v1197, %v1285
    %v1287 = vpop.f32.mrb[0].mxu0
    %1288 = vdwg.mxu0
    %1289 = vmatprep.subr.mxu0 0.0
    %v1290 = vand.u32 %v788, 4294901760
    %1291 = vmatpush1.msra.mxu0 %v1290
    %1292 = vmatprep.subr.mxu0 0.0
    %v1293 = vand.u32 %v789, 4294901760
    %1294 = vmatpush1.msra.mxu0 %v1293
    %1295 = vmatprep.subr.mxu0 0.0
    %v1296 = vand.u32 %v790, 4294901760
    %1297 = vmatpush1.msra.mxu0 %v1296
    %1298 = vmatprep.subr.mxu0 0.0
    %v1299 = vand.u32 %v791, 4294901760
    %1300 = vmatpush1.msra.mxu0 %v1299
    %1301 = vmatprep.subr.mxu0 0.0
    %1302 = vmatpush1.msra.mxu0 0.0
    %1303 = vmatprep.subr.mxu0 0.0
    %1304 = vmatpush1.msra.mxu0 0.0
    %1305 = vmatprep.subr.mxu0 0.0
    %1306 = vmatpush1.msra.mxu0 0.0
    %1307 = vmatprep.subr.mxu0 0.0
    %1308 = vmatpush1.msra.mxu0 0.0
    %1309 = vmatprep.subr.mxu0 0.0
    %1310 = vmatpush1.msra.mxu0 0.0
    %1311 = vmatprep.subr.mxu0 0.0
    %1312 = vmatpush1.msra.mxu0 0.0
    %1313 = vmatprep.subr.mxu0 0.0
    %1314 = vmatpush1.msra.mxu0 0.0
    %1315 = vmatprep.subr.mxu0 0.0
    %1316 = vmatpush1.msra.mxu0 0.0
    %1317 = vmatprep.subr.mxu0 0.0
    %1318 = vmatpush1.msra.mxu0 0.0
    %1319 = vmatprep.subr.mxu0 0.0
    %1320 = vmatpush1.msra.mxu0 0.0
    %1321 = vmatprep.subr.mxu0 0.0
    %1322 = vmatpush1.msra.mxu0 0.0
    %1323 = vmatprep.subr.mxu0 0.0
    %1324 = vmatpush1.msra.mxu0 0.0
    %1325 = vmatprep.subr.mxu0 0.0
    %1326 = vmatpush1.msra.mxu0 0.0
    %1327 = vmatprep.subr.mxu0 0.0
    %1328 = vmatpush1.msra.mxu0 0.0
    %1329 = vmatprep.subr.mxu0 0.0
    %1330 = vmatpush1.msra.mxu0 0.0
    %1331 = vmatprep.subr.mxu0 0.0
    %1332 = vmatpush1.msra.mxu0 0.0
    %1333 = vmatprep.subr.mxu0 0.0
    %1334 = vmatpush1.msra.mxu0 0.0
    %1335 = vmatprep.subr.mxu0 0.0
    %1336 = vmatpush1.msra.mxu0 0.0
    %1337 = vmatprep.subr.mxu0 0.0
    %1338 = vmatpush1.msra.mxu0 0.0
    %1339 = vmatprep.subr.mxu0 0.0
    %1340 = vmatpush1.msra.mxu0 0.0
    %1341 = vmatprep.subr.mxu0 0.0
    %1342 = vmatpush1.msra.mxu0 0.0
    %1343 = vmatprep.subr.mxu0 0.0
    %1344 = vmatpush1.msra.mxu0 0.0
    %1345 = vmatprep.subr.mxu0 0.0
    %1346 = vmatpush1.msra.mxu0 0.0
    %1347 = vmatprep.subr.mxu0 0.0
    %1348 = vmatpush1.msra.mxu0 0.0
    %1349 = vmatprep.subr.mxu0 0.0
    %1350 = vmatpush1.msra.mxu0 0.0
    %1351 = vmatprep.subr.mxu0 0.0
    %1352 = vmatpush1.msra.mxu0 0.0
    %1353 = vmatprep.subr.mxu0 0.0
    %1354 = vmatpush1.msra.mxu0 0.0
    %1355 = vmatprep.subr.mxu0 0.0
    %1356 = vmatpush1.msra.mxu0 0.0
    %1357 = vmatprep.mubr.f32.mxu0 0.0
    %v1358 = vand.u32 %v837, 4294901760
    %1359 = vmatmul.mubr.f32.gmra.mrb[0].mxu0 %v1358
    %v1360 = vpop.f32.mrb[0].mxu0
    %v1361 = vadd.f32 %v1280, %v1360
    %v1362 = vpop.f32.mrb[0].mxu0
    %1363 = vmatprep.mubr.f32.mxu0 0.0
    %v1364 = vand.u32 %v840, 4294901760
    %1365 = vmatmul.mubr.f32.gmra.mrb[0].mxu0 %v1364
    %v1366 = vpop.f32.mrb[0].mxu0
    %v1367 = vadd.f32 %v1286, %v1366
    %v1368 = vpop.f32.mrb[0].mxu0
    %1369 = vdwg.mxu0
    %v1371 = vsel %vm817, %v825, 0
    %v1374 = vsel %vm817, %v827, 0
    %1376 = vmatprep.subr.mxu0 0.0
    %v1377 = vand.u32 %v784, 4294901760
    %1378 = vmatpush1.msra.mxu0 %v1377
    %1379 = vmatprep.subr.mxu0 0.0
    %v1380 = vand.u32 %v785, 4294901760
    %1381 = vmatpush1.msra.mxu0 %v1380
    %1382 = vmatprep.subr.mxu0 0.0
    %v1383 = vand.u32 %v786, 4294901760
    %1384 = vmatpush1.msra.mxu0 %v1383
    %1385 = vmatprep.subr.mxu0 0.0
    %v1386 = vand.u32 %v787, 4294901760
    %1387 = vmatpush1.msra.mxu0 %v1386
    %1388 = vmatprep.subr.mxu0 0.0
    %1389 = vmatpush1.msra.mxu0 0.0
    %1390 = vmatprep.subr.mxu0 0.0
    %1391 = vmatpush1.msra.mxu0 0.0
    %1392 = vmatprep.subr.mxu0 0.0
    %1393 = vmatpush1.msra.mxu0 0.0
    %1394 = vmatprep.subr.mxu0 0.0
    %1395 = vmatpush1.msra.mxu0 0.0
    %1396 = vmatprep.subr.mxu0 0.0
    %1397 = vmatpush1.msra.mxu0 0.0
    %1398 = vmatprep.subr.mxu0 0.0
    %1399 = vmatpush1.msra.mxu0 0.0
    %1400 = vmatprep.subr.mxu0 0.0
    %1401 = vmatpush1.msra.mxu0 0.0
    %1402 = vmatprep.subr.mxu0 0.0
    %1403 = vmatpush1.msra.mxu0 0.0
    %1404 = vmatprep.subr.mxu0 0.0
    %1405 = vmatpush1.msra.mxu0 0.0
    %1406 = vmatprep.subr.mxu0 0.0
    %1407 = vmatpush1.msra.mxu0 0.0
    %1408 = vmatprep.subr.mxu0 0.0
    %1409 = vmatpush1.msra.mxu0 0.0
    %1410 = vmatprep.subr.mxu0 0.0
    %1411 = vmatpush1.msra.mxu0 0.0
    %1412 = vmatprep.subr.mxu0 0.0
    %1413 = vmatpush1.msra.mxu0 0.0
    %1414 = vmatprep.subr.mxu0 0.0
    %1415 = vmatpush1.msra.mxu0 0.0
    %1416 = vmatprep.subr.mxu0 0.0
    %1417 = vmatpush1.msra.mxu0 0.0
    %1418 = vmatprep.subr.mxu0 0.0
    %1419 = vmatpush1.msra.mxu0 0.0
    %1420 = vmatprep.subr.mxu0 0.0
    %1421 = vmatpush1.msra.mxu0 0.0
    %1422 = vmatprep.subr.mxu0 0.0
    %1423 = vmatpush1.msra.mxu0 0.0
    %1424 = vmatprep.subr.mxu0 0.0
    %1425 = vmatpush1.msra.mxu0 0.0
    %1426 = vmatprep.subr.mxu0 0.0
    %1427 = vmatpush1.msra.mxu0 0.0
    %1428 = vmatprep.subr.mxu0 0.0
    %1429 = vmatpush1.msra.mxu0 0.0
    %1430 = vmatprep.subr.mxu0 0.0
    %1431 = vmatpush1.msra.mxu0 0.0
    %1432 = vmatprep.subr.mxu0 0.0
    %1433 = vmatpush1.msra.mxu0 0.0
    %1434 = vmatprep.subr.mxu0 0.0
    %1435 = vmatpush1.msra.mxu0 0.0
    %1436 = vmatprep.subr.mxu0 0.0
    %1437 = vmatpush1.msra.mxu0 0.0
    %1438 = vmatprep.subr.mxu0 0.0
    %1439 = vmatpush1.msra.mxu0 0.0
    %1440 = vmatprep.subr.mxu0 0.0
    %1441 = vmatpush1.msra.mxu0 0.0
    %1442 = vmatprep.subr.mxu0 0.0
    %1443 = vmatpush1.msra.mxu0 0.0
    %1444 = vmatprep.mubr.f32.mxu0 0.0
    %v1445 = vand.u32 %v1371, 4294901760
    %v1446 = vsub.f32 %v1371, %v1445
    %v1447 = vand.u32 %v1446, 4294901760
    %v1448 = vsub.f32 %v1446, %v1447
    %v1449 = vand.u32 %v1448, 4294901760
    %1450 = vmatmul.mubr.f32.gmra.mrb[0].mxu0 %v1449
    %v1451 = vpop.f32.mrb[0].mxu0
    %v1452 = vadd.f32 %v1361, %v1451
    %v1453 = vpop.f32.mrb[0].mxu0
    %1454 = vmatprep.mubr.f32.mxu0 0.0
    %v1455 = vand.u32 %v1374, 4294901760
    %v1456 = vsub.f32 %v1374, %v1455
    %v1457 = vand.u32 %v1456, 4294901760
    %v1458 = vsub.f32 %v1456, %v1457
    %v1459 = vand.u32 %v1458, 4294901760
    %1460 = vmatmul.mubr.f32.gmra.mrb[0].mxu0 %v1459
    %v1461 = vpop.f32.mrb[0].mxu0
    %v1462 = vadd.f32 %v1367, %v1461
    %v1463 = vpop.f32.mrb[0].mxu0
    %1464 = vdwg.mxu0
    %1465 = vmatprep.subr.mxu0 0.0
    %v1466 = vand.u32 %v784, 4294901760
    %v1467 = vsub.f32 %v784, %v1466
    %v1468 = vand.u32 %v1467, 4294901760
    %v1469 = vsub.f32 %v1467, %v1468
    %v1470 = vand.u32 %v1469, 4294901760
    %1471 = vmatpush1.msra.mxu0 %v1470
    %1472 = vmatprep.subr.mxu0 0.0
    %v1473 = vand.u32 %v785, 4294901760
    %v1474 = vsub.f32 %v785, %v1473
    %v1475 = vand.u32 %v1474, 4294901760
    %v1476 = vsub.f32 %v1474, %v1475
    %v1477 = vand.u32 %v1476, 4294901760
    %1478 = vmatpush1.msra.mxu0 %v1477
    %1479 = vmatprep.subr.mxu0 0.0
    %v1480 = vand.u32 %v786, 4294901760
    %v1481 = vsub.f32 %v786, %v1480
    %v1482 = vand.u32 %v1481, 4294901760
    %v1483 = vsub.f32 %v1481, %v1482
    %v1484 = vand.u32 %v1483, 4294901760
    %1485 = vmatpush1.msra.mxu0 %v1484
    %1486 = vmatprep.subr.mxu0 0.0
    %v1487 = vand.u32 %v787, 4294901760
    %v1488 = vsub.f32 %v787, %v1487
    %v1489 = vand.u32 %v1488, 4294901760
    %v1490 = vsub.f32 %v1488, %v1489
    %v1491 = vand.u32 %v1490, 4294901760
    %1492 = vmatpush1.msra.mxu0 %v1491
    %1493 = vmatprep.subr.mxu0 0.0
    %1494 = vmatpush1.msra.mxu0 0.0
    %1495 = vmatprep.subr.mxu0 0.0
    %1496 = vmatpush1.msra.mxu0 0.0
    %1497 = vmatprep.subr.mxu0 0.0
    %1498 = vmatpush1.msra.mxu0 0.0
    %1499 = vmatprep.subr.mxu0 0.0
    %1500 = vmatpush1.msra.mxu0 0.0
    %1501 = vmatprep.subr.mxu0 0.0
    %1502 = vmatpush1.msra.mxu0 0.0
    %1503 = vmatprep.subr.mxu0 0.0
    %1504 = vmatpush1.msra.mxu0 0.0
    %1505 = vmatprep.subr.mxu0 0.0
    %1506 = vmatpush1.msra.mxu0 0.0
    %1507 = vmatprep.subr.mxu0 0.0
    %1508 = vmatpush1.msra.mxu0 0.0
    %1509 = vmatprep.subr.mxu0 0.0
    %1510 = vmatpush1.msra.mxu0 0.0
    %1511 = vmatprep.subr.mxu0 0.0
    %1512 = vmatpush1.msra.mxu0 0.0
    %1513 = vmatprep.subr.mxu0 0.0
    %1514 = vmatpush1.msra.mxu0 0.0
    %1515 = vmatprep.subr.mxu0 0.0
    %1516 = vmatpush1.msra.mxu0 0.0
    %1517 = vmatprep.subr.mxu0 0.0
    %1518 = vmatpush1.msra.mxu0 0.0
    %1519 = vmatprep.subr.mxu0 0.0
    %1520 = vmatpush1.msra.mxu0 0.0
    %1521 = vmatprep.subr.mxu0 0.0
    %1522 = vmatpush1.msra.mxu0 0.0
    %1523 = vmatprep.subr.mxu0 0.0
    %1524 = vmatpush1.msra.mxu0 0.0
    %1525 = vmatprep.subr.mxu0 0.0
    %1526 = vmatpush1.msra.mxu0 0.0
    %1527 = vmatprep.subr.mxu0 0.0
    %1528 = vmatpush1.msra.mxu0 0.0
    %1529 = vmatprep.subr.mxu0 0.0
    %1530 = vmatpush1.msra.mxu0 0.0
    %1531 = vmatprep.subr.mxu0 0.0
    %1532 = vmatpush1.msra.mxu0 0.0
    %1533 = vmatprep.subr.mxu0 0.0
    %1534 = vmatpush1.msra.mxu0 0.0
    %1535 = vmatprep.subr.mxu0 0.0
    %1536 = vmatpush1.msra.mxu0 0.0
    %1537 = vmatprep.subr.mxu0 0.0
    %1538 = vmatpush1.msra.mxu0 0.0
    %1539 = vmatprep.subr.mxu0 0.0
    %1540 = vmatpush1.msra.mxu0 0.0
    %1541 = vmatprep.subr.mxu0 0.0
    %1542 = vmatpush1.msra.mxu0 0.0
    %1543 = vmatprep.subr.mxu0 0.0
    %1544 = vmatpush1.msra.mxu0 0.0
    %1545 = vmatprep.subr.mxu0 0.0
    %1546 = vmatpush1.msra.mxu0 0.0
    %1547 = vmatprep.subr.mxu0 0.0
    %1548 = vmatpush1.msra.mxu0 0.0
    %1549 = vmatprep.mubr.f32.mxu0 0.0
    %v1550 = vand.u32 %v1371, 4294901760
    %1551 = vmatmul.mubr.f32.gmra.mrb[0].mxu0 %v1550
    %v1552 = vpop.f32.mrb[0].mxu0
    %v1553 = vadd.f32 %v1452, %v1552
    %v1554 = vpop.f32.mrb[0].mxu0
    %1555 = vmatprep.mubr.f32.mxu0 0.0
    %v1556 = vand.u32 %v1374, 4294901760
    %1557 = vmatmul.mubr.f32.gmra.mrb[0].mxu0 %v1556
    %v1558 = vpop.f32.mrb[0].mxu0
    %v1559 = vadd.f32 %v1462, %v1558
    %v1560 = vpop.f32.mrb[0].mxu0
    %1561 = vdwg.mxu0
    %1562 = vmatprep.subr.mxu0 0.0
    %v1563 = vand.u32 %v784, 4294901760
    %v1564 = vsub.f32 %v784, %v1563
    %1565 = vmatpush1.msra.mxu0 %v1564
    %1566 = vmatprep.subr.mxu0 0.0
    %v1567 = vand.u32 %v785, 4294901760
    %v1568 = vsub.f32 %v785, %v1567
    %1569 = vmatpush1.msra.mxu0 %v1568
    %1570 = vmatprep.subr.mxu0 0.0
    %v1571 = vand.u32 %v786, 4294901760
    %v1572 = vsub.f32 %v786, %v1571
    %1573 = vmatpush1.msra.mxu0 %v1572
    %1574 = vmatprep.subr.mxu0 0.0
    %v1575 = vand.u32 %v787, 4294901760
    %v1576 = vsub.f32 %v787, %v1575
    %1577 = vmatpush1.msra.mxu0 %v1576
    %1578 = vmatprep.subr.mxu0 0.0
    %1579 = vmatpush1.msra.mxu0 0.0
    %1580 = vmatprep.subr.mxu0 0.0
    %1581 = vmatpush1.msra.mxu0 0.0
    %1582 = vmatprep.subr.mxu0 0.0
    %1583 = vmatpush1.msra.mxu0 0.0
    %1584 = vmatprep.subr.mxu0 0.0
    %1585 = vmatpush1.msra.mxu0 0.0
    %1586 = vmatprep.subr.mxu0 0.0
    %1587 = vmatpush1.msra.mxu0 0.0
    %1588 = vmatprep.subr.mxu0 0.0
    %1589 = vmatpush1.msra.mxu0 0.0
    %1590 = vmatprep.subr.mxu0 0.0
    %1591 = vmatpush1.msra.mxu0 0.0
    %1592 = vmatprep.subr.mxu0 0.0
    %1593 = vmatpush1.msra.mxu0 0.0
    %1594 = vmatprep.subr.mxu0 0.0
    %1595 = vmatpush1.msra.mxu0 0.0
    %1596 = vmatprep.subr.mxu0 0.0
    %1597 = vmatpush1.msra.mxu0 0.0
    %1598 = vmatprep.subr.mxu0 0.0
    %1599 = vmatpush1.msra.mxu0 0.0
    %1600 = vmatprep.subr.mxu0 0.0
    %1601 = vmatpush1.msra.mxu0 0.0
    %1602 = vmatprep.subr.mxu0 0.0
    %1603 = vmatpush1.msra.mxu0 0.0
    %1604 = vmatprep.subr.mxu0 0.0
    %1605 = vmatpush1.msra.mxu0 0.0
    %1606 = vmatprep.subr.mxu0 0.0
    %1607 = vmatpush1.msra.mxu0 0.0
    %1608 = vmatprep.subr.mxu0 0.0
    %1609 = vmatpush1.msra.mxu0 0.0
    %1610 = vmatprep.subr.mxu0 0.0
    %1611 = vmatpush1.msra.mxu0 0.0
    %1612 = vmatprep.subr.mxu0 0.0
    %1613 = vmatpush1.msra.mxu0 0.0
    %1614 = vmatprep.subr.mxu0 0.0
    %1615 = vmatpush1.msra.mxu0 0.0
    %1616 = vmatprep.subr.mxu0 0.0
    %1617 = vmatpush1.msra.mxu0 0.0
    %1618 = vmatprep.subr.mxu0 0.0
    %1619 = vmatpush1.msra.mxu0 0.0
    %1620 = vmatprep.subr.mxu0 0.0
    %1621 = vmatpush1.msra.mxu0 0.0
    %1622 = vmatprep.subr.mxu0 0.0
    %1623 = vmatpush1.msra.mxu0 0.0
    %1624 = vmatprep.subr.mxu0 0.0
    %1625 = vmatpush1.msra.mxu0 0.0
    %1626 = vmatprep.subr.mxu0 0.0
    %1627 = vmatpush1.msra.mxu0 0.0
    %1628 = vmatprep.subr.mxu0 0.0
    %1629 = vmatpush1.msra.mxu0 0.0
    %1630 = vmatprep.subr.mxu0 0.0
    %1631 = vmatpush1.msra.mxu0 0.0
    %1632 = vmatprep.subr.mxu0 0.0
    %1633 = vmatpush1.msra.mxu0 0.0
    %1634 = vmatprep.mubr.f32.mxu0 0.0
    %v1635 = vand.u32 %v1371, 4294901760
    %v1636 = vsub.f32 %v1371, %v1635
    %1637 = vmatmul.mubr.f32.gmra.mrb[0].mxu0 %v1636
    %v1638 = vpop.f32.mrb[0].mxu0
    %v1639 = vadd.f32 %v1553, %v1638
    %v1640 = vpop.f32.mrb[0].mxu0
    %1641 = vmatprep.mubr.f32.mxu0 0.0
    %v1642 = vand.u32 %v1374, 4294901760
    %v1643 = vsub.f32 %v1374, %v1642
    %1644 = vmatmul.mubr.f32.gmra.mrb[0].mxu0 %v1643
    %v1645 = vpop.f32.mrb[0].mxu0
    %v1646 = vadd.f32 %v1559, %v1645
    %v1647 = vpop.f32.mrb[0].mxu0
    %1648 = vdwg.mxu0
    %1649 = vmatprep.subr.mxu0 0.0
    %v1650 = vand.u32 %v784, 4294901760
    %1651 = vmatpush1.msra.mxu0 %v1650
    %1652 = vmatprep.subr.mxu0 0.0
    %v1653 = vand.u32 %v785, 4294901760
    %1654 = vmatpush1.msra.mxu0 %v1653
    %1655 = vmatprep.subr.mxu0 0.0
    %v1656 = vand.u32 %v786, 4294901760
    %1657 = vmatpush1.msra.mxu0 %v1656
    %1658 = vmatprep.subr.mxu0 0.0
    %v1659 = vand.u32 %v787, 4294901760
    %1660 = vmatpush1.msra.mxu0 %v1659
    %1661 = vmatprep.subr.mxu0 0.0
    %1662 = vmatpush1.msra.mxu0 0.0
    %1663 = vmatprep.subr.mxu0 0.0
    %1664 = vmatpush1.msra.mxu0 0.0
    %1665 = vmatprep.subr.mxu0 0.0
    %1666 = vmatpush1.msra.mxu0 0.0
    %1667 = vmatprep.subr.mxu0 0.0
    %1668 = vmatpush1.msra.mxu0 0.0
    %1669 = vmatprep.subr.mxu0 0.0
    %1670 = vmatpush1.msra.mxu0 0.0
    %1671 = vmatprep.subr.mxu0 0.0
    %1672 = vmatpush1.msra.mxu0 0.0
    %1673 = vmatprep.subr.mxu0 0.0
    %1674 = vmatpush1.msra.mxu0 0.0
    %1675 = vmatprep.subr.mxu0 0.0
    %1676 = vmatpush1.msra.mxu0 0.0
    %1677 = vmatprep.subr.mxu0 0.0
    %1678 = vmatpush1.msra.mxu0 0.0
    %1679 = vmatprep.subr.mxu0 0.0
    %1680 = vmatpush1.msra.mxu0 0.0
    %1681 = vmatprep.subr.mxu0 0.0
    %1682 = vmatpush1.msra.mxu0 0.0
    %1683 = vmatprep.subr.mxu0 0.0
    %1684 = vmatpush1.msra.mxu0 0.0
    %1685 = vmatprep.subr.mxu0 0.0
    %1686 = vmatpush1.msra.mxu0 0.0
    %1687 = vmatprep.subr.mxu0 0.0
    %1688 = vmatpush1.msra.mxu0 0.0
    %1689 = vmatprep.subr.mxu0 0.0
    %1690 = vmatpush1.msra.mxu0 0.0
    %1691 = vmatprep.subr.mxu0 0.0
    %1692 = vmatpush1.msra.mxu0 0.0
    %1693 = vmatprep.subr.mxu0 0.0
    %1694 = vmatpush1.msra.mxu0 0.0
    %1695 = vmatprep.subr.mxu0 0.0
    %1696 = vmatpush1.msra.mxu0 0.0
    %1697 = vmatprep.subr.mxu0 0.0
    %1698 = vmatpush1.msra.mxu0 0.0
    %1699 = vmatprep.subr.mxu0 0.0
    %1700 = vmatpush1.msra.mxu0 0.0
    %1701 = vmatprep.subr.mxu0 0.0
    %1702 = vmatpush1.msra.mxu0 0.0
    %1703 = vmatprep.subr.mxu0 0.0
    %1704 = vmatpush1.msra.mxu0 0.0
    %1705 = vmatprep.subr.mxu0 0.0
    %1706 = vmatpush1.msra.mxu0 0.0
    %1707 = vmatprep.subr.mxu0 0.0
    %1708 = vmatpush1.msra.mxu0 0.0
    %1709 = vmatprep.subr.mxu0 0.0
    %1710 = vmatpush1.msra.mxu0 0.0
    %1711 = vmatprep.subr.mxu0 0.0
    %1712 = vmatpush1.msra.mxu0 0.0
    %1713 = vmatprep.subr.mxu0 0.0
    %1714 = vmatpush1.msra.mxu0 0.0
    %1715 = vmatprep.subr.mxu0 0.0
    %1716 = vmatpush1.msra.mxu0 0.0
    %1717 = vmatprep.mubr.f32.mxu0 0.0
    %v1718 = vand.u32 %v1371, 4294901760
    %v1719 = vsub.f32 %v1371, %v1718
    %v1720 = vand.u32 %v1719, 4294901760
    %1721 = vmatmul.mubr.f32.gmra.mrb[0].mxu0 %v1720
    %v1722 = vpop.f32.mrb[0].mxu0
    %v1723 = vadd.f32 %v1639, %v1722
    %v1724 = vpop.f32.mrb[0].mxu0
    %1725 = vmatprep.mubr.f32.mxu0 0.0
    %v1726 = vand.u32 %v1374, 4294901760
    %v1727 = vsub.f32 %v1374, %v1726
    %v1728 = vand.u32 %v1727, 4294901760
    %1729 = vmatmul.mubr.f32.gmra.mrb[0].mxu0 %v1728
    %v1730 = vpop.f32.mrb[0].mxu0
    %v1731 = vadd.f32 %v1646, %v1730
    %v1732 = vpop.f32.mrb[0].mxu0
    %1733 = vdwg.mxu0
    %1734 = vmatprep.subr.mxu0 0.0
    %v1735 = vand.u32 %v784, 4294901760
    %v1736 = vsub.f32 %v784, %v1735
    %v1737 = vand.u32 %v1736, 4294901760
    %1738 = vmatpush1.msra.mxu0 %v1737
    %1739 = vmatprep.subr.mxu0 0.0
    %v1740 = vand.u32 %v785, 4294901760
    %v1741 = vsub.f32 %v785, %v1740
    %v1742 = vand.u32 %v1741, 4294901760
    %1743 = vmatpush1.msra.mxu0 %v1742
    %1744 = vmatprep.subr.mxu0 0.0
    %v1745 = vand.u32 %v786, 4294901760
    %v1746 = vsub.f32 %v786, %v1745
    %v1747 = vand.u32 %v1746, 4294901760
    %1748 = vmatpush1.msra.mxu0 %v1747
    %1749 = vmatprep.subr.mxu0 0.0
    %v1750 = vand.u32 %v787, 4294901760
    %v1751 = vsub.f32 %v787, %v1750
    %v1752 = vand.u32 %v1751, 4294901760
    %1753 = vmatpush1.msra.mxu0 %v1752
    %1754 = vmatprep.subr.mxu0 0.0
    %1755 = vmatpush1.msra.mxu0 0.0
    %1756 = vmatprep.subr.mxu0 0.0
    %1757 = vmatpush1.msra.mxu0 0.0
    %1758 = vmatprep.subr.mxu0 0.0
    %1759 = vmatpush1.msra.mxu0 0.0
    %1760 = vmatprep.subr.mxu0 0.0
    %1761 = vmatpush1.msra.mxu0 0.0
    %1762 = vmatprep.subr.mxu0 0.0
    %1763 = vmatpush1.msra.mxu0 0.0
    %1764 = vmatprep.subr.mxu0 0.0
    %1765 = vmatpush1.msra.mxu0 0.0
    %1766 = vmatprep.subr.mxu0 0.0
    %1767 = vmatpush1.msra.mxu0 0.0
    %1768 = vmatprep.subr.mxu0 0.0
    %1769 = vmatpush1.msra.mxu0 0.0
    %1770 = vmatprep.subr.mxu0 0.0
    %1771 = vmatpush1.msra.mxu0 0.0
    %1772 = vmatprep.subr.mxu0 0.0
    %1773 = vmatpush1.msra.mxu0 0.0
    %1774 = vmatprep.subr.mxu0 0.0
    %1775 = vmatpush1.msra.mxu0 0.0
    %1776 = vmatprep.subr.mxu0 0.0
    %1777 = vmatpush1.msra.mxu0 0.0
    %1778 = vmatprep.subr.mxu0 0.0
    %1779 = vmatpush1.msra.mxu0 0.0
    %1780 = vmatprep.subr.mxu0 0.0
    %1781 = vmatpush1.msra.mxu0 0.0
    %1782 = vmatprep.subr.mxu0 0.0
    %1783 = vmatpush1.msra.mxu0 0.0
    %1784 = vmatprep.subr.mxu0 0.0
    %1785 = vmatpush1.msra.mxu0 0.0
    %1786 = vmatprep.subr.mxu0 0.0
    %1787 = vmatpush1.msra.mxu0 0.0
    %1788 = vmatprep.subr.mxu0 0.0
    %1789 = vmatpush1.msra.mxu0 0.0
    %1790 = vmatprep.subr.mxu0 0.0
    %1791 = vmatpush1.msra.mxu0 0.0
    %1792 = vmatprep.subr.mxu0 0.0
    %1793 = vmatpush1.msra.mxu0 0.0
    %1794 = vmatprep.subr.mxu0 0.0
    %1795 = vmatpush1.msra.mxu0 0.0
    %1796 = vmatprep.subr.mxu0 0.0
    %1797 = vmatpush1.msra.mxu0 0.0
    %1798 = vmatprep.subr.mxu0 0.0
    %1799 = vmatpush1.msra.mxu0 0.0
    %1800 = vmatprep.subr.mxu0 0.0
    %1801 = vmatpush1.msra.mxu0 0.0
    %1802 = vmatprep.subr.mxu0 0.0
    %1803 = vmatpush1.msra.mxu0 0.0
    %1804 = vmatprep.subr.mxu0 0.0
    %1805 = vmatpush1.msra.mxu0 0.0
    %1806 = vmatprep.subr.mxu0 0.0
    %1807 = vmatpush1.msra.mxu0 0.0
    %1808 = vmatprep.subr.mxu0 0.0
    %1809 = vmatpush1.msra.mxu0 0.0
    %1810 = vmatprep.mubr.f32.mxu0 0.0
    %v1811 = vand.u32 %v1371, 4294901760
    %1812 = vmatmul.mubr.f32.gmra.mrb[0].mxu0 %v1811
    %v1813 = vpop.f32.mrb[0].mxu0
    %v1814 = vadd.f32 %v1723, %v1813
    %v1815 = vpop.f32.mrb[0].mxu0
    %1816 = vmatprep.mubr.f32.mxu0 0.0
    %v1817 = vand.u32 %v1374, 4294901760
    %1818 = vmatmul.mubr.f32.gmra.mrb[0].mxu0 %v1817
    %v1819 = vpop.f32.mrb[0].mxu0
    %v1820 = vadd.f32 %v1731, %v1819
    %v1821 = vpop.f32.mrb[0].mxu0
    %1822 = vdwg.mxu0
    %1823 = vmatprep.subr.mxu0 0.0
    %v1824 = vand.u32 %v784, 4294901760
    %1825 = vmatpush1.msra.mxu0 %v1824
    %1826 = vmatprep.subr.mxu0 0.0
    %v1827 = vand.u32 %v785, 4294901760
    %1828 = vmatpush1.msra.mxu0 %v1827
    %1829 = vmatprep.subr.mxu0 0.0
    %v1830 = vand.u32 %v786, 4294901760
    %1831 = vmatpush1.msra.mxu0 %v1830
    %1832 = vmatprep.subr.mxu0 0.0
    %v1833 = vand.u32 %v787, 4294901760
    %1834 = vmatpush1.msra.mxu0 %v1833
    %1835 = vmatprep.subr.mxu0 0.0
    %1836 = vmatpush1.msra.mxu0 0.0
    %1837 = vmatprep.subr.mxu0 0.0
    %1838 = vmatpush1.msra.mxu0 0.0
    %1839 = vmatprep.subr.mxu0 0.0
    %1840 = vmatpush1.msra.mxu0 0.0
    %1841 = vmatprep.subr.mxu0 0.0
    %1842 = vmatpush1.msra.mxu0 0.0
    %1843 = vmatprep.subr.mxu0 0.0
    %1844 = vmatpush1.msra.mxu0 0.0
    %1845 = vmatprep.subr.mxu0 0.0
    %1846 = vmatpush1.msra.mxu0 0.0
    %1847 = vmatprep.subr.mxu0 0.0
    %1848 = vmatpush1.msra.mxu0 0.0
    %1849 = vmatprep.subr.mxu0 0.0
    %1850 = vmatpush1.msra.mxu0 0.0
    %1851 = vmatprep.subr.mxu0 0.0
    %1852 = vmatpush1.msra.mxu0 0.0
    %1853 = vmatprep.subr.mxu0 0.0
    %1854 = vmatpush1.msra.mxu0 0.0
    %1855 = vmatprep.subr.mxu0 0.0
    %1856 = vmatpush1.msra.mxu0 0.0
    %1857 = vmatprep.subr.mxu0 0.0
    %1858 = vmatpush1.msra.mxu0 0.0
    %1859 = vmatprep.subr.mxu0 0.0
    %1860 = vmatpush1.msra.mxu0 0.0
    %1861 = vmatprep.subr.mxu0 0.0
    %1862 = vmatpush1.msra.mxu0 0.0
    %1863 = vmatprep.subr.mxu0 0.0
    %1864 = vmatpush1.msra.mxu0 0.0
    %1865 = vmatprep.subr.mxu0 0.0
    %1866 = vmatpush1.msra.mxu0 0.0
    %1867 = vmatprep.subr.mxu0 0.0
    %1868 = vmatpush1.msra.mxu0 0.0
    %1869 = vmatprep.subr.mxu0 0.0
    %1870 = vmatpush1.msra.mxu0 0.0
    %1871 = vmatprep.subr.mxu0 0.0
    %1872 = vmatpush1.msra.mxu0 0.0
    %1873 = vmatprep.subr.mxu0 0.0
    %1874 = vmatpush1.msra.mxu0 0.0
    %1875 = vmatprep.subr.mxu0 0.0
    %1876 = vmatpush1.msra.mxu0 0.0
    %1877 = vmatprep.subr.mxu0 0.0
    %1878 = vmatpush1.msra.mxu0 0.0
    %1879 = vmatprep.subr.mxu0 0.0
    %1880 = vmatpush1.msra.mxu0 0.0
    %1881 = vmatprep.subr.mxu0 0.0
    %1882 = vmatpush1.msra.mxu0 0.0
    %1883 = vmatprep.subr.mxu0 0.0
    %1884 = vmatpush1.msra.mxu0 0.0
    %1885 = vmatprep.subr.mxu0 0.0
    %1886 = vmatpush1.msra.mxu0 0.0
    %1887 = vmatprep.subr.mxu0 0.0
    %1888 = vmatpush1.msra.mxu0 0.0
    %1889 = vmatprep.subr.mxu0 0.0
    %1890 = vmatpush1.msra.mxu0 0.0
    %1891 = vmatprep.mubr.f32.mxu0 0.0
    %v1892 = vand.u32 %v1371, 4294901760
    %1893 = vmatmul.mubr.f32.gmra.mrb[0].mxu0 %v1892
    %v1894 = vpop.f32.mrb[0].mxu0
    %v1895 = vadd.f32 %v1814, %v1894
    %v1896 = vpop.f32.mrb[0].mxu0
    %1897 = vmatprep.mubr.f32.mxu0 0.0
    %v1898 = vand.u32 %v1374, 4294901760
    %1899 = vmatmul.mubr.f32.gmra.mrb[0].mxu0 %v1898
    %v1900 = vpop.f32.mrb[0].mxu0
    %v1901 = vadd.f32 %v1820, %v1900
    %v1902 = vpop.f32.mrb[0].mxu0
    %1903 = vdwg.mxu0
    %v1905 = vsel %vm817, %v833, 0
    %v1908 = vsel %vm817, %v835, 0
    %1910 = vmatprep.subr.mxu0 0.0
    %v1911 = vand.u32 %v792, 4294901760
    %1912 = vmatpush1.msra.mxu0 %v1911
    %1913 = vmatprep.subr.mxu0 0.0
    %v1914 = vand.u32 %v793, 4294901760
    %1915 = vmatpush1.msra.mxu0 %v1914
    %1916 = vmatprep.subr.mxu0 0.0
    %v1917 = vand.u32 %v794, 4294901760
    %1918 = vmatpush1.msra.mxu0 %v1917
    %1919 = vmatprep.subr.mxu0 0.0
    %v1920 = vand.u32 %v795, 4294901760
    %1921 = vmatpush1.msra.mxu0 %v1920
    %1922 = vmatprep.subr.mxu0 0.0
    %1923 = vmatpush1.msra.mxu0 0.0
    %1924 = vmatprep.subr.mxu0 0.0
    %1925 = vmatpush1.msra.mxu0 0.0
    %1926 = vmatprep.subr.mxu0 0.0
    %1927 = vmatpush1.msra.mxu0 0.0
    %1928 = vmatprep.subr.mxu0 0.0
    %1929 = vmatpush1.msra.mxu0 0.0
    %1930 = vmatprep.subr.mxu0 0.0
    %1931 = vmatpush1.msra.mxu0 0.0
    %1932 = vmatprep.subr.mxu0 0.0
    %1933 = vmatpush1.msra.mxu0 0.0
    %1934 = vmatprep.subr.mxu0 0.0
    %1935 = vmatpush1.msra.mxu0 0.0
    %1936 = vmatprep.subr.mxu0 0.0
    %1937 = vmatpush1.msra.mxu0 0.0
    %1938 = vmatprep.subr.mxu0 0.0
    %1939 = vmatpush1.msra.mxu0 0.0
    %1940 = vmatprep.subr.mxu0 0.0
    %1941 = vmatpush1.msra.mxu0 0.0
    %1942 = vmatprep.subr.mxu0 0.0
    %1943 = vmatpush1.msra.mxu0 0.0
    %1944 = vmatprep.subr.mxu0 0.0
    %1945 = vmatpush1.msra.mxu0 0.0
    %1946 = vmatprep.subr.mxu0 0.0
    %1947 = vmatpush1.msra.mxu0 0.0
    %1948 = vmatprep.subr.mxu0 0.0
    %1949 = vmatpush1.msra.mxu0 0.0
    %1950 = vmatprep.subr.mxu0 0.0
    %1951 = vmatpush1.msra.mxu0 0.0
    %1952 = vmatprep.subr.mxu0 0.0
    %1953 = vmatpush1.msra.mxu0 0.0
    %1954 = vmatprep.subr.mxu0 0.0
    %1955 = vmatpush1.msra.mxu0 0.0
    %1956 = vmatprep.subr.mxu0 0.0
    %1957 = vmatpush1.msra.mxu0 0.0
    %1958 = vmatprep.subr.mxu0 0.0
    %1959 = vmatpush1.msra.mxu0 0.0
    %1960 = vmatprep.subr.mxu0 0.0
    %1961 = vmatpush1.msra.mxu0 0.0
    %1962 = vmatprep.subr.mxu0 0.0
    %1963 = vmatpush1.msra.mxu0 0.0
    %1964 = vmatprep.subr.mxu0 0.0
    %1965 = vmatpush1.msra.mxu0 0.0
    %1966 = vmatprep.subr.mxu0 0.0
    %1967 = vmatpush1.msra.mxu0 0.0
    %1968 = vmatprep.subr.mxu0 0.0
    %1969 = vmatpush1.msra.mxu0 0.0
    %1970 = vmatprep.subr.mxu0 0.0
    %1971 = vmatpush1.msra.mxu0 0.0
    %1972 = vmatprep.subr.mxu0 0.0
    %1973 = vmatpush1.msra.mxu0 0.0
    %1974 = vmatprep.subr.mxu0 0.0
    %1975 = vmatpush1.msra.mxu0 0.0
    %1976 = vmatprep.subr.mxu0 0.0
    %1977 = vmatpush1.msra.mxu0 0.0
    %1978 = vmatprep.mubr.f32.mxu0 0.0
    %v1979 = vand.u32 %v1905, 4294901760
    %v1980 = vsub.f32 %v1905, %v1979
    %v1981 = vand.u32 %v1980, 4294901760
    %v1982 = vsub.f32 %v1980, %v1981
    %v1983 = vand.u32 %v1982, 4294901760
    %1984 = vmatmul.mubr.f32.gmra.mrb[0].mxu0 %v1983
    %v1985 = vpop.f32.mrb[0].mxu0
    %v1986 = vadd.f32 0.0, %v1985
    %v1987 = vpop.f32.mrb[0].mxu0
    %1988 = vmatprep.mubr.f32.mxu0 0.0
    %v1989 = vand.u32 %v1908, 4294901760
    %v1990 = vsub.f32 %v1908, %v1989
    %v1991 = vand.u32 %v1990, 4294901760
    %v1992 = vsub.f32 %v1990, %v1991
    %v1993 = vand.u32 %v1992, 4294901760
    %1994 = vmatmul.mubr.f32.gmra.mrb[0].mxu0 %v1993
    %v1995 = vpop.f32.mrb[0].mxu0
    %v1996 = vadd.f32 0.0, %v1995
    %v1997 = vpop.f32.mrb[0].mxu0
    %1998 = vdwg.mxu0
    %1999 = vmatprep.subr.mxu0 0.0
    %v2000 = vand.u32 %v792, 4294901760
    %v2001 = vsub.f32 %v792, %v2000
    %v2002 = vand.u32 %v2001, 4294901760
    %v2003 = vsub.f32 %v2001, %v2002
    %v2004 = vand.u32 %v2003, 4294901760
    %2005 = vmatpush1.msra.mxu0 %v2004
    %2006 = vmatprep.subr.mxu0 0.0
    %v2007 = vand.u32 %v793, 4294901760
    %v2008 = vsub.f32 %v793, %v2007
    %v2009 = vand.u32 %v2008, 4294901760
    %v2010 = vsub.f32 %v2008, %v2009
    %v2011 = vand.u32 %v2010, 4294901760
    %2012 = vmatpush1.msra.mxu0 %v2011
    %2013 = vmatprep.subr.mxu0 0.0
    %v2014 = vand.u32 %v794, 4294901760
    %v2015 = vsub.f32 %v794, %v2014
    %v2016 = vand.u32 %v2015, 4294901760
    %v2017 = vsub.f32 %v2015, %v2016
    %v2018 = vand.u32 %v2017, 4294901760
    %2019 = vmatpush1.msra.mxu0 %v2018
    %2020 = vmatprep.subr.mxu0 0.0
    %v2021 = vand.u32 %v795, 4294901760
    %v2022 = vsub.f32 %v795, %v2021
    %v2023 = vand.u32 %v2022, 4294901760
    %v2024 = vsub.f32 %v2022, %v2023
    %v2025 = vand.u32 %v2024, 4294901760
    %2026 = vmatpush1.msra.mxu0 %v2025
    %2027 = vmatprep.subr.mxu0 0.0
    %2028 = vmatpush1.msra.mxu0 0.0
    %2029 = vmatprep.subr.mxu0 0.0
    %2030 = vmatpush1.msra.mxu0 0.0
    %2031 = vmatprep.subr.mxu0 0.0
    %2032 = vmatpush1.msra.mxu0 0.0
    %2033 = vmatprep.subr.mxu0 0.0
    %2034 = vmatpush1.msra.mxu0 0.0
    %2035 = vmatprep.subr.mxu0 0.0
    %2036 = vmatpush1.msra.mxu0 0.0
    %2037 = vmatprep.subr.mxu0 0.0
    %2038 = vmatpush1.msra.mxu0 0.0
    %2039 = vmatprep.subr.mxu0 0.0
    %2040 = vmatpush1.msra.mxu0 0.0
    %2041 = vmatprep.subr.mxu0 0.0
    %2042 = vmatpush1.msra.mxu0 0.0
    %2043 = vmatprep.subr.mxu0 0.0
    %2044 = vmatpush1.msra.mxu0 0.0
    %2045 = vmatprep.subr.mxu0 0.0
    %2046 = vmatpush1.msra.mxu0 0.0
    %2047 = vmatprep.subr.mxu0 0.0
    %2048 = vmatpush1.msra.mxu0 0.0
    %2049 = vmatprep.subr.mxu0 0.0
    %2050 = vmatpush1.msra.mxu0 0.0
    %2051 = vmatprep.subr.mxu0 0.0
    %2052 = vmatpush1.msra.mxu0 0.0
    %2053 = vmatprep.subr.mxu0 0.0
    %2054 = vmatpush1.msra.mxu0 0.0
    %2055 = vmatprep.subr.mxu0 0.0
    %2056 = vmatpush1.msra.mxu0 0.0
    %2057 = vmatprep.subr.mxu0 0.0
    %2058 = vmatpush1.msra.mxu0 0.0
    %2059 = vmatprep.subr.mxu0 0.0
    %2060 = vmatpush1.msra.mxu0 0.0
    %2061 = vmatprep.subr.mxu0 0.0
    %2062 = vmatpush1.msra.mxu0 0.0
    %2063 = vmatprep.subr.mxu0 0.0
    %2064 = vmatpush1.msra.mxu0 0.0
    %2065 = vmatprep.subr.mxu0 0.0
    %2066 = vmatpush1.msra.mxu0 0.0
    %2067 = vmatprep.subr.mxu0 0.0
    %2068 = vmatpush1.msra.mxu0 0.0
    %2069 = vmatprep.subr.mxu0 0.0
    %2070 = vmatpush1.msra.mxu0 0.0
    %2071 = vmatprep.subr.mxu0 0.0
    %2072 = vmatpush1.msra.mxu0 0.0
    %2073 = vmatprep.subr.mxu0 0.0
    %2074 = vmatpush1.msra.mxu0 0.0
    %2075 = vmatprep.subr.mxu0 0.0
    %2076 = vmatpush1.msra.mxu0 0.0
    %2077 = vmatprep.subr.mxu0 0.0
    %2078 = vmatpush1.msra.mxu0 0.0
    %2079 = vmatprep.subr.mxu0 0.0
    %2080 = vmatpush1.msra.mxu0 0.0
    %2081 = vmatprep.subr.mxu0 0.0
    %2082 = vmatpush1.msra.mxu0 0.0
    %2083 = vmatprep.mubr.f32.mxu0 0.0
    %v2084 = vand.u32 %v1905, 4294901760
    %2085 = vmatmul.mubr.f32.gmra.mrb[0].mxu0 %v2084
    %v2086 = vpop.f32.mrb[0].mxu0
    %v2087 = vadd.f32 %v1986, %v2086
    %v2088 = vpop.f32.mrb[0].mxu0
    %2089 = vmatprep.mubr.f32.mxu0 0.0
    %v2090 = vand.u32 %v1908, 4294901760
    %2091 = vmatmul.mubr.f32.gmra.mrb[0].mxu0 %v2090
    %v2092 = vpop.f32.mrb[0].mxu0
    %v2093 = vadd.f32 %v1996, %v2092
    %v2094 = vpop.f32.mrb[0].mxu0
    %2095 = vdwg.mxu0
    %2096 = vmatprep.subr.mxu0 0.0
    %v2097 = vand.u32 %v792, 4294901760
    %v2098 = vsub.f32 %v792, %v2097
    %2099 = vmatpush1.msra.mxu0 %v2098
    %2100 = vmatprep.subr.mxu0 0.0
    %v2101 = vand.u32 %v793, 4294901760
    %v2102 = vsub.f32 %v793, %v2101
    %2103 = vmatpush1.msra.mxu0 %v2102
    %2104 = vmatprep.subr.mxu0 0.0
    %v2105 = vand.u32 %v794, 4294901760
    %v2106 = vsub.f32 %v794, %v2105
    %2107 = vmatpush1.msra.mxu0 %v2106
    %2108 = vmatprep.subr.mxu0 0.0
    %v2109 = vand.u32 %v795, 4294901760
    %v2110 = vsub.f32 %v795, %v2109
    %2111 = vmatpush1.msra.mxu0 %v2110
    %2112 = vmatprep.subr.mxu0 0.0
    %2113 = vmatpush1.msra.mxu0 0.0
    %2114 = vmatprep.subr.mxu0 0.0
    %2115 = vmatpush1.msra.mxu0 0.0
    %2116 = vmatprep.subr.mxu0 0.0
    %2117 = vmatpush1.msra.mxu0 0.0
    %2118 = vmatprep.subr.mxu0 0.0
    %2119 = vmatpush1.msra.mxu0 0.0
    %2120 = vmatprep.subr.mxu0 0.0
    %2121 = vmatpush1.msra.mxu0 0.0
    %2122 = vmatprep.subr.mxu0 0.0
    %2123 = vmatpush1.msra.mxu0 0.0
    %2124 = vmatprep.subr.mxu0 0.0
    %2125 = vmatpush1.msra.mxu0 0.0
    %2126 = vmatprep.subr.mxu0 0.0
    %2127 = vmatpush1.msra.mxu0 0.0
    %2128 = vmatprep.subr.mxu0 0.0
    %2129 = vmatpush1.msra.mxu0 0.0
    %2130 = vmatprep.subr.mxu0 0.0
    %2131 = vmatpush1.msra.mxu0 0.0
    %2132 = vmatprep.subr.mxu0 0.0
    %2133 = vmatpush1.msra.mxu0 0.0
    %2134 = vmatprep.subr.mxu0 0.0
    %2135 = vmatpush1.msra.mxu0 0.0
    %2136 = vmatprep.subr.mxu0 0.0
    %2137 = vmatpush1.msra.mxu0 0.0
    %2138 = vmatprep.subr.mxu0 0.0
    %2139 = vmatpush1.msra.mxu0 0.0
    %2140 = vmatprep.subr.mxu0 0.0
    %2141 = vmatpush1.msra.mxu0 0.0
    %2142 = vmatprep.subr.mxu0 0.0
    %2143 = vmatpush1.msra.mxu0 0.0
    %2144 = vmatprep.subr.mxu0 0.0
    %2145 = vmatpush1.msra.mxu0 0.0
    %2146 = vmatprep.subr.mxu0 0.0
    %2147 = vmatpush1.msra.mxu0 0.0
    %2148 = vmatprep.subr.mxu0 0.0
    %2149 = vmatpush1.msra.mxu0 0.0
    %2150 = vmatprep.subr.mxu0 0.0
    %2151 = vmatpush1.msra.mxu0 0.0
    %2152 = vmatprep.subr.mxu0 0.0
    %2153 = vmatpush1.msra.mxu0 0.0
    %2154 = vmatprep.subr.mxu0 0.0
    %2155 = vmatpush1.msra.mxu0 0.0
    %2156 = vmatprep.subr.mxu0 0.0
    %2157 = vmatpush1.msra.mxu0 0.0
    %2158 = vmatprep.subr.mxu0 0.0
    %2159 = vmatpush1.msra.mxu0 0.0
    %2160 = vmatprep.subr.mxu0 0.0
    %2161 = vmatpush1.msra.mxu0 0.0
    %2162 = vmatprep.subr.mxu0 0.0
    %2163 = vmatpush1.msra.mxu0 0.0
    %2164 = vmatprep.subr.mxu0 0.0
    %2165 = vmatpush1.msra.mxu0 0.0
    %2166 = vmatprep.subr.mxu0 0.0
    %2167 = vmatpush1.msra.mxu0 0.0
    %2168 = vmatprep.mubr.f32.mxu0 0.0
    %v2169 = vand.u32 %v1905, 4294901760
    %v2170 = vsub.f32 %v1905, %v2169
    %2171 = vmatmul.mubr.f32.gmra.mrb[0].mxu0 %v2170
    %v2172 = vpop.f32.mrb[0].mxu0
    %v2173 = vadd.f32 %v2087, %v2172
    %v2174 = vpop.f32.mrb[0].mxu0
    %2175 = vmatprep.mubr.f32.mxu0 0.0
    %v2176 = vand.u32 %v1908, 4294901760
    %v2177 = vsub.f32 %v1908, %v2176
    %2178 = vmatmul.mubr.f32.gmra.mrb[0].mxu0 %v2177
    %v2179 = vpop.f32.mrb[0].mxu0
    %v2180 = vadd.f32 %v2093, %v2179
    %v2181 = vpop.f32.mrb[0].mxu0
    %2182 = vdwg.mxu0
    %2183 = vmatprep.subr.mxu0 0.0
    %v2184 = vand.u32 %v792, 4294901760
    %2185 = vmatpush1.msra.mxu0 %v2184
    %2186 = vmatprep.subr.mxu0 0.0
    %v2187 = vand.u32 %v793, 4294901760
    %2188 = vmatpush1.msra.mxu0 %v2187
    %2189 = vmatprep.subr.mxu0 0.0
    %v2190 = vand.u32 %v794, 4294901760
    %2191 = vmatpush1.msra.mxu0 %v2190
    %2192 = vmatprep.subr.mxu0 0.0
    %v2193 = vand.u32 %v795, 4294901760
    %2194 = vmatpush1.msra.mxu0 %v2193
    %2195 = vmatprep.subr.mxu0 0.0
    %2196 = vmatpush1.msra.mxu0 0.0
    %2197 = vmatprep.subr.mxu0 0.0
    %2198 = vmatpush1.msra.mxu0 0.0
    %2199 = vmatprep.subr.mxu0 0.0
    %2200 = vmatpush1.msra.mxu0 0.0
    %2201 = vmatprep.subr.mxu0 0.0
    %2202 = vmatpush1.msra.mxu0 0.0
    %2203 = vmatprep.subr.mxu0 0.0
    %2204 = vmatpush1.msra.mxu0 0.0
    %2205 = vmatprep.subr.mxu0 0.0
    %2206 = vmatpush1.msra.mxu0 0.0
    %2207 = vmatprep.subr.mxu0 0.0
    %2208 = vmatpush1.msra.mxu0 0.0
    %2209 = vmatprep.subr.mxu0 0.0
    %2210 = vmatpush1.msra.mxu0 0.0
    %2211 = vmatprep.subr.mxu0 0.0
    %2212 = vmatpush1.msra.mxu0 0.0
    %2213 = vmatprep.subr.mxu0 0.0
    %2214 = vmatpush1.msra.mxu0 0.0
    %2215 = vmatprep.subr.mxu0 0.0
    %2216 = vmatpush1.msra.mxu0 0.0
    %2217 = vmatprep.subr.mxu0 0.0
    %2218 = vmatpush1.msra.mxu0 0.0
    %2219 = vmatprep.subr.mxu0 0.0
    %2220 = vmatpush1.msra.mxu0 0.0
    %2221 = vmatprep.subr.mxu0 0.0
    %2222 = vmatpush1.msra.mxu0 0.0
    %2223 = vmatprep.subr.mxu0 0.0
    %2224 = vmatpush1.msra.mxu0 0.0
    %2225 = vmatprep.subr.mxu0 0.0
    %2226 = vmatpush1.msra.mxu0 0.0
    %2227 = vmatprep.subr.mxu0 0.0
    %2228 = vmatpush1.msra.mxu0 0.0
    %2229 = vmatprep.subr.mxu0 0.0
    %2230 = vmatpush1.msra.mxu0 0.0
    %2231 = vmatprep.subr.mxu0 0.0
    %2232 = vmatpush1.msra.mxu0 0.0
    %2233 = vmatprep.subr.mxu0 0.0
    %2234 = vmatpush1.msra.mxu0 0.0
    %2235 = vmatprep.subr.mxu0 0.0
    %2236 = vmatpush1.msra.mxu0 0.0
    %2237 = vmatprep.subr.mxu0 0.0
    %2238 = vmatpush1.msra.mxu0 0.0
    %2239 = vmatprep.subr.mxu0 0.0
    %2240 = vmatpush1.msra.mxu0 0.0
    %2241 = vmatprep.subr.mxu0 0.0
    %2242 = vmatpush1.msra.mxu0 0.0
    %2243 = vmatprep.subr.mxu0 0.0
    %2244 = vmatpush1.msra.mxu0 0.0
    %2245 = vmatprep.subr.mxu0 0.0
    %2246 = vmatpush1.msra.mxu0 0.0
    %2247 = vmatprep.subr.mxu0 0.0
    %2248 = vmatpush1.msra.mxu0 0.0
    %2249 = vmatprep.subr.mxu0 0.0
    %2250 = vmatpush1.msra.mxu0 0.0
    %2251 = vmatprep.mubr.f32.mxu0 0.0
    %v2252 = vand.u32 %v1905, 4294901760
    %v2253 = vsub.f32 %v1905, %v2252
    %v2254 = vand.u32 %v2253, 4294901760
    %2255 = vmatmul.mubr.f32.gmra.mrb[0].mxu0 %v2254
    %v2256 = vpop.f32.mrb[0].mxu0
    %v2257 = vadd.f32 %v2173, %v2256
    %v2258 = vpop.f32.mrb[0].mxu0
    %2259 = vmatprep.mubr.f32.mxu0 0.0
    %v2260 = vand.u32 %v1908, 4294901760
    %v2261 = vsub.f32 %v1908, %v2260
    %v2262 = vand.u32 %v2261, 4294901760
    %2263 = vmatmul.mubr.f32.gmra.mrb[0].mxu0 %v2262
    %v2264 = vpop.f32.mrb[0].mxu0
    %v2265 = vadd.f32 %v2180, %v2264
    %v2266 = vpop.f32.mrb[0].mxu0
    %2267 = vdwg.mxu0
    %2268 = vmatprep.subr.mxu0 0.0
    %v2269 = vand.u32 %v792, 4294901760
    %v2270 = vsub.f32 %v792, %v2269
    %v2271 = vand.u32 %v2270, 4294901760
    %2272 = vmatpush1.msra.mxu0 %v2271
    %2273 = vmatprep.subr.mxu0 0.0
    %v2274 = vand.u32 %v793, 4294901760
    %v2275 = vsub.f32 %v793, %v2274
    %v2276 = vand.u32 %v2275, 4294901760
    %2277 = vmatpush1.msra.mxu0 %v2276
    %2278 = vmatprep.subr.mxu0 0.0
    %v2279 = vand.u32 %v794, 4294901760
    %v2280 = vsub.f32 %v794, %v2279
    %v2281 = vand.u32 %v2280, 4294901760
    %2282 = vmatpush1.msra.mxu0 %v2281
    %2283 = vmatprep.subr.mxu0 0.0
    %v2284 = vand.u32 %v795, 4294901760
    %v2285 = vsub.f32 %v795, %v2284
    %v2286 = vand.u32 %v2285, 4294901760
    %2287 = vmatpush1.msra.mxu0 %v2286
    %2288 = vmatprep.subr.mxu0 0.0
    %2289 = vmatpush1.msra.mxu0 0.0
    %2290 = vmatprep.subr.mxu0 0.0
    %2291 = vmatpush1.msra.mxu0 0.0
    %2292 = vmatprep.subr.mxu0 0.0
    %2293 = vmatpush1.msra.mxu0 0.0
    %2294 = vmatprep.subr.mxu0 0.0
    %2295 = vmatpush1.msra.mxu0 0.0
    %2296 = vmatprep.subr.mxu0 0.0
    %2297 = vmatpush1.msra.mxu0 0.0
    %2298 = vmatprep.subr.mxu0 0.0
    %2299 = vmatpush1.msra.mxu0 0.0
    %2300 = vmatprep.subr.mxu0 0.0
    %2301 = vmatpush1.msra.mxu0 0.0
    %2302 = vmatprep.subr.mxu0 0.0
    %2303 = vmatpush1.msra.mxu0 0.0
    %2304 = vmatprep.subr.mxu0 0.0
    %2305 = vmatpush1.msra.mxu0 0.0
    %2306 = vmatprep.subr.mxu0 0.0
    %2307 = vmatpush1.msra.mxu0 0.0
    %2308 = vmatprep.subr.mxu0 0.0
    %2309 = vmatpush1.msra.mxu0 0.0
    %2310 = vmatprep.subr.mxu0 0.0
    %2311 = vmatpush1.msra.mxu0 0.0
    %2312 = vmatprep.subr.mxu0 0.0
    %2313 = vmatpush1.msra.mxu0 0.0
    %2314 = vmatprep.subr.mxu0 0.0
    %2315 = vmatpush1.msra.mxu0 0.0
    %2316 = vmatprep.subr.mxu0 0.0
    %2317 = vmatpush1.msra.mxu0 0.0
    %2318 = vmatprep.subr.mxu0 0.0
    %2319 = vmatpush1.msra.mxu0 0.0
    %2320 = vmatprep.subr.mxu0 0.0
    %2321 = vmatpush1.msra.mxu0 0.0
    %2322 = vmatprep.subr.mxu0 0.0
    %2323 = vmatpush1.msra.mxu0 0.0
    %2324 = vmatprep.subr.mxu0 0.0
    %2325 = vmatpush1.msra.mxu0 0.0
    %2326 = vmatprep.subr.mxu0 0.0
    %2327 = vmatpush1.msra.mxu0 0.0
    %2328 = vmatprep.subr.mxu0 0.0
    %2329 = vmatpush1.msra.mxu0 0.0
    %2330 = vmatprep.subr.mxu0 0.0
    %2331 = vmatpush1.msra.mxu0 0.0
    %2332 = vmatprep.subr.mxu0 0.0
    %2333 = vmatpush1.msra.mxu0 0.0
    %2334 = vmatprep.subr.mxu0 0.0
    %2335 = vmatpush1.msra.mxu0 0.0
    %2336 = vmatprep.subr.mxu0 0.0
    %2337 = vmatpush1.msra.mxu0 0.0
    %2338 = vmatprep.subr.mxu0 0.0
    %2339 = vmatpush1.msra.mxu0 0.0
    %2340 = vmatprep.subr.mxu0 0.0
    %2341 = vmatpush1.msra.mxu0 0.0
    %2342 = vmatprep.subr.mxu0 0.0
    %2343 = vmatpush1.msra.mxu0 0.0
    %2344 = vmatprep.mubr.f32.mxu0 0.0
    %v2345 = vand.u32 %v1905, 4294901760
    %2346 = vmatmul.mubr.f32.gmra.mrb[0].mxu0 %v2345
    %v2347 = vpop.f32.mrb[0].mxu0
    %v2348 = vadd.f32 %v2257, %v2347
    %v2349 = vpop.f32.mrb[0].mxu0
    %2350 = vmatprep.mubr.f32.mxu0 0.0
    %v2351 = vand.u32 %v1908, 4294901760
    %2352 = vmatmul.mubr.f32.gmra.mrb[0].mxu0 %v2351
    %v2353 = vpop.f32.mrb[0].mxu0
    %v2354 = vadd.f32 %v2265, %v2353
    %v2355 = vpop.f32.mrb[0].mxu0
    %2356 = vdwg.mxu0
    %2357 = vmatprep.subr.mxu0 0.0
    %v2358 = vand.u32 %v792, 4294901760
    %2359 = vmatpush1.msra.mxu0 %v2358
    %2360 = vmatprep.subr.mxu0 0.0
    %v2361 = vand.u32 %v793, 4294901760
    %2362 = vmatpush1.msra.mxu0 %v2361
    %2363 = vmatprep.subr.mxu0 0.0
    %v2364 = vand.u32 %v794, 4294901760
    %2365 = vmatpush1.msra.mxu0 %v2364
    %2366 = vmatprep.subr.mxu0 0.0
    %v2367 = vand.u32 %v795, 4294901760
    %2368 = vmatpush1.msra.mxu0 %v2367
    %2369 = vmatprep.subr.mxu0 0.0
    %2370 = vmatpush1.msra.mxu0 0.0
    %2371 = vmatprep.subr.mxu0 0.0
    %2372 = vmatpush1.msra.mxu0 0.0
    %2373 = vmatprep.subr.mxu0 0.0
    %2374 = vmatpush1.msra.mxu0 0.0
    %2375 = vmatprep.subr.mxu0 0.0
    %2376 = vmatpush1.msra.mxu0 0.0
    %2377 = vmatprep.subr.mxu0 0.0
    %2378 = vmatpush1.msra.mxu0 0.0
    %2379 = vmatprep.subr.mxu0 0.0
    %2380 = vmatpush1.msra.mxu0 0.0
    %2381 = vmatprep.subr.mxu0 0.0
    %2382 = vmatpush1.msra.mxu0 0.0
    %2383 = vmatprep.subr.mxu0 0.0
    %2384 = vmatpush1.msra.mxu0 0.0
    %2385 = vmatprep.subr.mxu0 0.0
    %2386 = vmatpush1.msra.mxu0 0.0
    %2387 = vmatprep.subr.mxu0 0.0
    %2388 = vmatpush1.msra.mxu0 0.0
    %2389 = vmatprep.subr.mxu0 0.0
    %2390 = vmatpush1.msra.mxu0 0.0
    %2391 = vmatprep.subr.mxu0 0.0
    %2392 = vmatpush1.msra.mxu0 0.0
    %2393 = vmatprep.subr.mxu0 0.0
    %2394 = vmatpush1.msra.mxu0 0.0
    %2395 = vmatprep.subr.mxu0 0.0
    %2396 = vmatpush1.msra.mxu0 0.0
    %2397 = vmatprep.subr.mxu0 0.0
    %2398 = vmatpush1.msra.mxu0 0.0
    %2399 = vmatprep.subr.mxu0 0.0
    %2400 = vmatpush1.msra.mxu0 0.0
    %2401 = vmatprep.subr.mxu0 0.0
    %2402 = vmatpush1.msra.mxu0 0.0
    %2403 = vmatprep.subr.mxu0 0.0
    %2404 = vmatpush1.msra.mxu0 0.0
    %2405 = vmatprep.subr.mxu0 0.0
    %2406 = vmatpush1.msra.mxu0 0.0
    %2407 = vmatprep.subr.mxu0 0.0
    %2408 = vmatpush1.msra.mxu0 0.0
    %2409 = vmatprep.subr.mxu0 0.0
    %2410 = vmatpush1.msra.mxu0 0.0
    %2411 = vmatprep.subr.mxu0 0.0
    %2412 = vmatpush1.msra.mxu0 0.0
    %2413 = vmatprep.subr.mxu0 0.0
    %2414 = vmatpush1.msra.mxu0 0.0
    %2415 = vmatprep.subr.mxu0 0.0
    %2416 = vmatpush1.msra.mxu0 0.0
    %2417 = vmatprep.subr.mxu0 0.0
    %2418 = vmatpush1.msra.mxu0 0.0
    %2419 = vmatprep.subr.mxu0 0.0
    %2420 = vmatpush1.msra.mxu0 0.0
    %2421 = vmatprep.subr.mxu0 0.0
    %2422 = vmatpush1.msra.mxu0 0.0
    %2423 = vmatprep.subr.mxu0 0.0
    %2424 = vmatpush1.msra.mxu0 0.0
    %2425 = vmatprep.mubr.f32.mxu0 0.0
    %v2426 = vand.u32 %v1905, 4294901760
    %2427 = vmatmul.mubr.f32.gmra.mrb[0].mxu0 %v2426
    %v2428 = vpop.f32.mrb[0].mxu0
    %v2429 = vadd.f32 %v2348, %v2428
    %v2430 = vpop.f32.mrb[0].mxu0
    %2431 = vmatprep.mubr.f32.mxu0 0.0
    %v2432 = vand.u32 %v1908, 4294901760
    %2433 = vmatmul.mubr.f32.gmra.mrb[0].mxu0 %v2432
    %v2434 = vpop.f32.mrb[0].mxu0
    %v2435 = vadd.f32 %v2354, %v2434
    %v2436 = vpop.f32.mrb[0].mxu0
    %2437 = vdwg.mxu0
    %v2438 = vadd.f32 %v1895, %v2429
    %v2439 = vadd.f32 %v1901, %v2435
    %v2440 = vld [vmem:[%s4] sm:$0x1]
    %v2442 = vlaneseq
    %v2443 = vshrl.u32 %v2442, 7
    %v2444 = vsub.s32 0, %v2443
    %v2445 = vrot.slane %v2440, %v2444
    %v2447 = vadd.f32 %v2438, %v2445
    %v2448 = vadd.f32 %v2439, %v2445
    %v2449 = vxor.u32 %v2447, 2147483648
    %v2450 = vxor.u32 %v2448, 2147483648
    %v2451 = vmul.f32 %v2449, 1.442695
    %v2452 = vpow.pop %v2451
    %v2453 = vmul.f32 %v2450, 1.442695
    %v2454 = vpow.pop %v2453
    %v2455 = vadd.f32 %v2452, 1.0
    %v2456 = vadd.f32 %v2454, 1.0
    %v2457 = vrcp.pop %v2455
    %v2458 = vmul.f32 1.0, %v2457
    %v2459 = vrcp.pop %v2456
    %v2460 = vmul.f32 1.0, %v2459
    %v2461 = vmul.f32 %v2447, %v2458
    %v2462 = vmul.f32 %v2448, %v2460
    %v2463 = vld [vmem:[#allocation8] sm:$0xff]
    %v2464 = vld [vmem:[#allocation8 + $0x8] sm:$0xff]
    %v2465 = vld [vmem:[#allocation8 + $0x10] sm:$0xff]
    %v2466 = vld [vmem:[#allocation8 + $0x18] sm:$0xff]
    %v2467 = vld [vmem:[#allocation9] sm:$0x1]
    %v2469 = vlaneseq
    %v2470 = vshrl.u32 %v2469, 7
    %v2471 = vsub.s32 0, %v2470
    %v2472 = vrot.slane %v2467, %v2471
    %v2475 = vsel %vm817, %v2461, 0
    %v2478 = vsel %vm817, %v2462, 0
    %2480 = vmatprep.subr.mxu0 0.0
    %v2481 = vand.u32 %v2463, 4294901760
    %2482 = vmatpush1.msra.mxu0 %v2481
    %2483 = vmatprep.subr.mxu0 0.0
    %v2484 = vand.u32 %v2464, 4294901760
    %2485 = vmatpush1.msra.mxu0 %v2484
    %2486 = vmatprep.subr.mxu0 0.0
    %v2487 = vand.u32 %v2465, 4294901760
    %2488 = vmatpush1.msra.mxu0 %v2487
    %2489 = vmatprep.subr.mxu0 0.0
    %v2490 = vand.u32 %v2466, 4294901760
    %2491 = vmatpush1.msra.mxu0 %v2490
    %2492 = vmatprep.subr.mxu0 0.0
    %2493 = vmatpush1.msra.mxu0 0.0
    %2494 = vmatprep.subr.mxu0 0.0
    %2495 = vmatpush1.msra.mxu0 0.0
    %2496 = vmatprep.subr.mxu0 0.0
    %2497 = vmatpush1.msra.mxu0 0.0
    %2498 = vmatprep.subr.mxu0 0.0
    %2499 = vmatpush1.msra.mxu0 0.0
    %2500 = vmatprep.subr.mxu0 0.0
    %2501 = vmatpush1.msra.mxu0 0.0
    %2502 = vmatprep.subr.mxu0 0.0
    %2503 = vmatpush1.msra.mxu0 0.0
    %2504 = vmatprep.subr.mxu0 0.0
    %2505 = vmatpush1.msra.mxu0 0.0
    %2506 = vmatprep.subr.mxu0 0.0
    %2507 = vmatpush1.msra.mxu0 0.0
    %2508 = vmatprep.subr.mxu0 0.0
    %2509 = vmatpush1.msra.mxu0 0.0
    %2510 = vmatprep.subr.mxu0 0.0
    %2511 = vmatpush1.msra.mxu0 0.0
    %2512 = vmatprep.subr.mxu0 0.0
    %2513 = vmatpush1.msra.mxu0 0.0
    %2514 = vmatprep.subr.mxu0 0.0
    %2515 = vmatpush1.msra.mxu0 0.0
    %2516 = vmatprep.subr.mxu0 0.0
    %2517 = vmatpush1.msra.mxu0 0.0
    %2518 = vmatprep.subr.mxu0 0.0
    %2519 = vmatpush1.msra.mxu0 0.0
    %2520 = vmatprep.subr.mxu0 0.0
    %2521 = vmatpush1.msra.mxu0 0.0
    %2522 = vmatprep.subr.mxu0 0.0
    %2523 = vmatpush1.msra.mxu0 0.0
    %2524 = vmatprep.subr.mxu0 0.0
    %2525 = vmatpush1.msra.mxu0 0.0
    %2526 = vmatprep.subr.mxu0 0.0
    %2527 = vmatpush1.msra.mxu0 0.0
    %2528 = vmatprep.subr.mxu0 0.0
    %2529 = vmatpush1.msra.mxu0 0.0
    %2530 = vmatprep.subr.mxu0 0.0
    %2531 = vmatpush1.msra.mxu0 0.0
    %2532 = vmatprep.subr.mxu0 0.0
    %2533 = vmatpush1.msra.mxu0 0.0
    %2534 = vmatprep.subr.mxu0 0.0
    %2535 = vmatpush1.msra.mxu0 0.0
    %2536 = vmatprep.subr.mxu0 0.0
    %2537 = vmatpush1.msra.mxu0 0.0
    %2538 = vmatprep.subr.mxu0 0.0
    %2539 = vmatpush1.msra.mxu0 0.0
    %2540 = vmatprep.subr.mxu0 0.0
    %2541 = vmatpush1.msra.mxu0 0.0
    %2542 = vmatprep.subr.mxu0 0.0
    %2543 = vmatpush1.msra.mxu0 0.0
    %2544 = vmatprep.subr.mxu0 0.0
    %2545 = vmatpush1.msra.mxu0 0.0
    %2546 = vmatprep.subr.mxu0 0.0
    %2547 = vmatpush1.msra.mxu0 0.0
    %2548 = vmatprep.mubr.f32.mxu0 0.0
    %v2549 = vand.u32 %v2475, 4294901760
    %v2550 = vsub.f32 %v2475, %v2549
    %v2551 = vand.u32 %v2550, 4294901760
    %v2552 = vsub.f32 %v2550, %v2551
    %v2553 = vand.u32 %v2552, 4294901760
    %2554 = vmatmul.mubr.f32.gmra.mrb[0].mxu0 %v2553
    %v2555 = vpop.f32.mrb[0].mxu0
    %v2556 = vadd.f32 %v2472, %v2555
    %v2557 = vpop.f32.mrb[0].mxu0
    %2558 = vmatprep.mubr.f32.mxu0 0.0
    %v2559 = vand.u32 %v2478, 4294901760
    %v2560 = vsub.f32 %v2478, %v2559
    %v2561 = vand.u32 %v2560, 4294901760
    %v2562 = vsub.f32 %v2560, %v2561
    %v2563 = vand.u32 %v2562, 4294901760
    %2564 = vmatmul.mubr.f32.gmra.mrb[0].mxu0 %v2563
    %v2565 = vpop.f32.mrb[0].mxu0
    %v2566 = vadd.f32 %v2472, %v2565
    %v2567 = vpop.f32.mrb[0].mxu0
    %2568 = vdwg.mxu0
    %2569 = vmatprep.subr.mxu0 0.0
    %v2570 = vand.u32 %v2463, 4294901760
    %v2571 = vsub.f32 %v2463, %v2570
    %v2572 = vand.u32 %v2571, 4294901760
    %v2573 = vsub.f32 %v2571, %v2572
    %v2574 = vand.u32 %v2573, 4294901760
    %2575 = vmatpush1.msra.mxu0 %v2574
    %2576 = vmatprep.subr.mxu0 0.0
    %v2577 = vand.u32 %v2464, 4294901760
    %v2578 = vsub.f32 %v2464, %v2577
    %v2579 = vand.u32 %v2578, 4294901760
    %v2580 = vsub.f32 %v2578, %v2579
    %v2581 = vand.u32 %v2580, 4294901760
    %2582 = vmatpush1.msra.mxu0 %v2581
    %2583 = vmatprep.subr.mxu0 0.0
    %v2584 = vand.u32 %v2465, 4294901760
    %v2585 = vsub.f32 %v2465, %v2584
    %v2586 = vand.u32 %v2585, 4294901760
    %v2587 = vsub.f32 %v2585, %v2586
    %v2588 = vand.u32 %v2587, 4294901760
    %2589 = vmatpush1.msra.mxu0 %v2588
    %2590 = vmatprep.subr.mxu0 0.0
    %v2591 = vand.u32 %v2466, 4294901760
    %v2592 = vsub.f32 %v2466, %v2591
    %v2593 = vand.u32 %v2592, 4294901760
    %v2594 = vsub.f32 %v2592, %v2593
    %v2595 = vand.u32 %v2594, 4294901760
    %2596 = vmatpush1.msra.mxu0 %v2595
    %2597 = vmatprep.subr.mxu0 0.0
    %2598 = vmatpush1.msra.mxu0 0.0
    %2599 = vmatprep.subr.mxu0 0.0
    %2600 = vmatpush1.msra.mxu0 0.0
    %2601 = vmatprep.subr.mxu0 0.0
    %2602 = vmatpush1.msra.mxu0 0.0
    %2603 = vmatprep.subr.mxu0 0.0
    %2604 = vmatpush1.msra.mxu0 0.0
    %2605 = vmatprep.subr.mxu0 0.0
    %2606 = vmatpush1.msra.mxu0 0.0
    %2607 = vmatprep.subr.mxu0 0.0
    %2608 = vmatpush1.msra.mxu0 0.0
    %2609 = vmatprep.subr.mxu0 0.0
    %2610 = vmatpush1.msra.mxu0 0.0
    %2611 = vmatprep.subr.mxu0 0.0
    %2612 = vmatpush1.msra.mxu0 0.0
    %2613 = vmatprep.subr.mxu0 0.0
    %2614 = vmatpush1.msra.mxu0 0.0
    %2615 = vmatprep.subr.mxu0 0.0
    %2616 = vmatpush1.msra.mxu0 0.0
    %2617 = vmatprep.subr.mxu0 0.0
    %2618 = vmatpush1.msra.mxu0 0.0
    %2619 = vmatprep.subr.mxu0 0.0
    %2620 = vmatpush1.msra.mxu0 0.0
    %2621 = vmatprep.subr.mxu0 0.0
    %2622 = vmatpush1.msra.mxu0 0.0
    %2623 = vmatprep.subr.mxu0 0.0
    %2624 = vmatpush1.msra.mxu0 0.0
    %2625 = vmatprep.subr.mxu0 0.0
    %2626 = vmatpush1.msra.mxu0 0.0
    %2627 = vmatprep.subr.mxu0 0.0
    %2628 = vmatpush1.msra.mxu0 0.0
    %2629 = vmatprep.subr.mxu0 0.0
    %2630 = vmatpush1.msra.mxu0 0.0
    %2631 = vmatprep.subr.mxu0 0.0
    %2632 = vmatpush1.msra.mxu0 0.0
    %2633 = vmatprep.subr.mxu0 0.0
    %2634 = vmatpush1.msra.mxu0 0.0
    %2635 = vmatprep.subr.mxu0 0.0
    %2636 = vmatpush1.msra.mxu0 0.0
    %2637 = vmatprep.subr.mxu0 0.0
    %2638 = vmatpush1.msra.mxu0 0.0
    %2639 = vmatprep.subr.mxu0 0.0
    %2640 = vmatpush1.msra.mxu0 0.0
    %2641 = vmatprep.subr.mxu0 0.0
    %2642 = vmatpush1.msra.mxu0 0.0
    %2643 = vmatprep.subr.mxu0 0.0
    %2644 = vmatpush1.msra.mxu0 0.0
    %2645 = vmatprep.subr.mxu0 0.0
    %2646 = vmatpush1.msra.mxu0 0.0
    %2647 = vmatprep.subr.mxu0 0.0
    %2648 = vmatpush1.msra.mxu0 0.0
    %2649 = vmatprep.subr.mxu0 0.0
    %2650 = vmatpush1.msra.mxu0 0.0
    %2651 = vmatprep.subr.mxu0 0.0
    %2652 = vmatpush1.msra.mxu0 0.0
    %2653 = vmatprep.mubr.f32.mxu0 0.0
    %v2654 = vand.u32 %v2475, 4294901760
    %2655 = vmatmul.mubr.f32.gmra.mrb[0].mxu0 %v2654
    %v2656 = vpop.f32.mrb[0].mxu0
    %v2657 = vadd.f32 %v2556, %v2656
    %v2658 = vpop.f32.mrb[0].mxu0
    %2659 = vmatprep.mubr.f32.mxu0 0.0
    %v2660 = vand.u32 %v2478, 4294901760
    %2661 = vmatmul.mubr.f32.gmra.mrb[0].mxu0 %v2660
    %v2662 = vpop.f32.mrb[0].mxu0
    %v2663 = vadd.f32 %v2566, %v2662
    %v2664 = vpop.f32.mrb[0].mxu0
    %2665 = vdwg.mxu0
    %2666 = vmatprep.subr.mxu0 0.0
    %v2667 = vand.u32 %v2463, 4294901760
    %v2668 = vsub.f32 %v2463, %v2667
    %2669 = vmatpush1.msra.mxu0 %v2668
    %2670 = vmatprep.subr.mxu0 0.0
    %v2671 = vand.u32 %v2464, 4294901760
    %v2672 = vsub.f32 %v2464, %v2671
    %2673 = vmatpush1.msra.mxu0 %v2672
    %2674 = vmatprep.subr.mxu0 0.0
    %v2675 = vand.u32 %v2465, 4294901760
    %v2676 = vsub.f32 %v2465, %v2675
    %2677 = vmatpush1.msra.mxu0 %v2676
    %2678 = vmatprep.subr.mxu0 0.0
    %v2679 = vand.u32 %v2466, 4294901760
    %v2680 = vsub.f32 %v2466, %v2679
    %2681 = vmatpush1.msra.mxu0 %v2680
    %2682 = vmatprep.subr.mxu0 0.0
    %2683 = vmatpush1.msra.mxu0 0.0
    %2684 = vmatprep.subr.mxu0 0.0
    %2685 = vmatpush1.msra.mxu0 0.0
    %2686 = vmatprep.subr.mxu0 0.0
    %2687 = vmatpush1.msra.mxu0 0.0
    %2688 = vmatprep.subr.mxu0 0.0
    %2689 = vmatpush1.msra.mxu0 0.0
    %2690 = vmatprep.subr.mxu0 0.0
    %2691 = vmatpush1.msra.mxu0 0.0
    %2692 = vmatprep.subr.mxu0 0.0
    %2693 = vmatpush1.msra.mxu0 0.0
    %2694 = vmatprep.subr.mxu0 0.0
    %2695 = vmatpush1.msra.mxu0 0.0
    %2696 = vmatprep.subr.mxu0 0.0
    %2697 = vmatpush1.msra.mxu0 0.0
    %2698 = vmatprep.subr.mxu0 0.0
    %2699 = vmatpush1.msra.mxu0 0.0
    %2700 = vmatprep.subr.mxu0 0.0
    %2701 = vmatpush1.msra.mxu0 0.0
    %2702 = vmatprep.subr.mxu0 0.0
    %2703 = vmatpush1.msra.mxu0 0.0
    %2704 = vmatprep.subr.mxu0 0.0
    %2705 = vmatpush1.msra.mxu0 0.0
    %2706 = vmatprep.subr.mxu0 0.0
    %2707 = vmatpush1.msra.mxu0 0.0
    %2708 = vmatprep.subr.mxu0 0.0
    %2709 = vmatpush1.msra.mxu0 0.0
    %2710 = vmatprep.subr.mxu0 0.0
    %2711 = vmatpush1.msra.mxu0 0.0
    %2712 = vmatprep.subr.mxu0 0.0
    %2713 = vmatpush1.msra.mxu0 0.0
    %2714 = vmatprep.subr.mxu0 0.0
    %2715 = vmatpush1.msra.mxu0 0.0
    %2716 = vmatprep.subr.mxu0 0.0
    %2717 = vmatpush1.msra.mxu0 0.0
    %2718 = vmatprep.subr.mxu0 0.0
    %2719 = vmatpush1.msra.mxu0 0.0
    %2720 = vmatprep.subr.mxu0 0.0
    %2721 = vmatpush1.msra.mxu0 0.0
    %2722 = vmatprep.subr.mxu0 0.0
    %2723 = vmatpush1.msra.mxu0 0.0
    %2724 = vmatprep.subr.mxu0 0.0
    %2725 = vmatpush1.msra.mxu0 0.0
    %2726 = vmatprep.subr.mxu0 0.0
    %2727 = vmatpush1.msra.mxu0 0.0
    %2728 = vmatprep.subr.mxu0 0.0
    %2729 = vmatpush1.msra.mxu0 0.0
    %2730 = vmatprep.subr.mxu0 0.0
    %2731 = vmatpush1.msra.mxu0 0.0
    %2732 = vmatprep.subr.mxu0 0.0
    %2733 = vmatpush1.msra.mxu0 0.0
    %2734 = vmatprep.subr.mxu0 0.0
    %2735 = vmatpush1.msra.mxu0 0.0
    %2736 = vmatprep.subr.mxu0 0.0
    %2737 = vmatpush1.msra.mxu0 0.0
    %2738 = vmatprep.mubr.f32.mxu0 0.0
    %v2739 = vand.u32 %v2475, 4294901760
    %v2740 = vsub.f32 %v2475, %v2739
    %2741 = vmatmul.mubr.f32.gmra.mrb[0].mxu0 %v2740
    %v2742 = vpop.f32.mrb[0].mxu0
    %v2743 = vadd.f32 %v2657, %v2742
    %v2744 = vpop.f32.mrb[0].mxu0
    %2745 = vmatprep.mubr.f32.mxu0 0.0
    %v2746 = vand.u32 %v2478, 4294901760
    %v2747 = vsub.f32 %v2478, %v2746
    %2748 = vmatmul.mubr.f32.gmra.mrb[0].mxu0 %v2747
    %v2749 = vpop.f32.mrb[0].mxu0
    %v2750 = vadd.f32 %v2663, %v2749
    %v2751 = vpop.f32.mrb[0].mxu0
    %2752 = vdwg.mxu0
    %2753 = vmatprep.subr.mxu0 0.0
    %v2754 = vand.u32 %v2463, 4294901760
    %2755 = vmatpush1.msra.mxu0 %v2754
    %2756 = vmatprep.subr.mxu0 0.0
    %v2757 = vand.u32 %v2464, 4294901760
    %2758 = vmatpush1.msra.mxu0 %v2757
    %2759 = vmatprep.subr.mxu0 0.0
    %v2760 = vand.u32 %v2465, 4294901760
    %2761 = vmatpush1.msra.mxu0 %v2760
    %2762 = vmatprep.subr.mxu0 0.0
    %v2763 = vand.u32 %v2466, 4294901760
    %2764 = vmatpush1.msra.mxu0 %v2763
    %2765 = vmatprep.subr.mxu0 0.0
    %2766 = vmatpush1.msra.mxu0 0.0
    %2767 = vmatprep.subr.mxu0 0.0
    %2768 = vmatpush1.msra.mxu0 0.0
    %2769 = vmatprep.subr.mxu0 0.0
    %2770 = vmatpush1.msra.mxu0 0.0
    %2771 = vmatprep.subr.mxu0 0.0
    %2772 = vmatpush1.msra.mxu0 0.0
    %2773 = vmatprep.subr.mxu0 0.0
    %2774 = vmatpush1.msra.mxu0 0.0
    %2775 = vmatprep.subr.mxu0 0.0
    %2776 = vmatpush1.msra.mxu0 0.0
    %2777 = vmatprep.subr.mxu0 0.0
    %2778 = vmatpush1.msra.mxu0 0.0
    %2779 = vmatprep.subr.mxu0 0.0
    %2780 = vmatpush1.msra.mxu0 0.0
    %2781 = vmatprep.subr.mxu0 0.0
    %2782 = vmatpush1.msra.mxu0 0.0
    %2783 = vmatprep.subr.mxu0 0.0
    %2784 = vmatpush1.msra.mxu0 0.0
    %2785 = vmatprep.subr.mxu0 0.0
    %2786 = vmatpush1.msra.mxu0 0.0
    %2787 = vmatprep.subr.mxu0 0.0
    %2788 = vmatpush1.msra.mxu0 0.0
    %2789 = vmatprep.subr.mxu0 0.0
    %2790 = vmatpush1.msra.mxu0 0.0
    %2791 = vmatprep.subr.mxu0 0.0
    %2792 = vmatpush1.msra.mxu0 0.0
    %2793 = vmatprep.subr.mxu0 0.0
    %2794 = vmatpush1.msra.mxu0 0.0
    %2795 = vmatprep.subr.mxu0 0.0
    %2796 = vmatpush1.msra.mxu0 0.0
    %2797 = vmatprep.subr.mxu0 0.0
    %2798 = vmatpush1.msra.mxu0 0.0
    %2799 = vmatprep.subr.mxu0 0.0
    %2800 = vmatpush1.msra.mxu0 0.0
    %2801 = vmatprep.subr.mxu0 0.0
    %2802 = vmatpush1.msra.mxu0 0.0
    %2803 = vmatprep.subr.mxu0 0.0
    %2804 = vmatpush1.msra.mxu0 0.0
    %2805 = vmatprep.subr.mxu0 0.0
    %2806 = vmatpush1.msra.mxu0 0.0
    %2807 = vmatprep.subr.mxu0 0.0
    %2808 = vmatpush1.msra.mxu0 0.0
    %2809 = vmatprep.subr.mxu0 0.0
    %2810 = vmatpush1.msra.mxu0 0.0
    %2811 = vmatprep.subr.mxu0 0.0
    %2812 = vmatpush1.msra.mxu0 0.0
    %2813 = vmatprep.subr.mxu0 0.0
    %2814 = vmatpush1.msra.mxu0 0.0
    %2815 = vmatprep.subr.mxu0 0.0
    %2816 = vmatpush1.msra.mxu0 0.0
    %2817 = vmatprep.subr.mxu0 0.0
    %2818 = vmatpush1.msra.mxu0 0.0
    %2819 = vmatprep.subr.mxu0 0.0
    %2820 = vmatpush1.msra.mxu0 0.0
    %2821 = vmatprep.mubr.f32.mxu0 0.0
    %v2822 = vand.u32 %v2475, 4294901760
    %v2823 = vsub.f32 %v2475, %v2822
    %v2824 = vand.u32 %v2823, 4294901760
    %2825 = vmatmul.mubr.f32.gmra.mrb[0].mxu0 %v2824
    %v2826 = vpop.f32.mrb[0].mxu0
    %v2827 = vadd.f32 %v2743, %v2826
    %v2828 = vpop.f32.mrb[0].mxu0
    %2829 = vmatprep.mubr.f32.mxu0 0.0
    %v2830 = vand.u32 %v2478, 4294901760
    %v2831 = vsub.f32 %v2478, %v2830
    %v2832 = vand.u32 %v2831, 4294901760
    %2833 = vmatmul.mubr.f32.gmra.mrb[0].mxu0 %v2832
    %v2834 = vpop.f32.mrb[0].mxu0
    %v2835 = vadd.f32 %v2750, %v2834
    %v2836 = vpop.f32.mrb[0].mxu0
    %2837 = vdwg.mxu0
    %2838 = vmatprep.subr.mxu0 0.0
    %v2839 = vand.u32 %v2463, 4294901760
    %v2840 = vsub.f32 %v2463, %v2839
    %v2841 = vand.u32 %v2840, 4294901760
    %2842 = vmatpush1.msra.mxu0 %v2841
    %2843 = vmatprep.subr.mxu0 0.0
    %v2844 = vand.u32 %v2464, 4294901760
    %v2845 = vsub.f32 %v2464, %v2844
    %v2846 = vand.u32 %v2845, 4294901760
    %2847 = vmatpush1.msra.mxu0 %v2846
    %2848 = vmatprep.subr.mxu0 0.0
    %v2849 = vand.u32 %v2465, 4294901760
    %v2850 = vsub.f32 %v2465, %v2849
    %v2851 = vand.u32 %v2850, 4294901760
    %2852 = vmatpush1.msra.mxu0 %v2851
    %2853 = vmatprep.subr.mxu0 0.0
    %v2854 = vand.u32 %v2466, 4294901760
    %v2855 = vsub.f32 %v2466, %v2854
    %v2856 = vand.u32 %v2855, 4294901760
    %2857 = vmatpush1.msra.mxu0 %v2856
    %2858 = vmatprep.subr.mxu0 0.0
    %2859 = vmatpush1.msra.mxu0 0.0
    %2860 = vmatprep.subr.mxu0 0.0
    %2861 = vmatpush1.msra.mxu0 0.0
    %2862 = vmatprep.subr.mxu0 0.0
    %2863 = vmatpush1.msra.mxu0 0.0
    %2864 = vmatprep.subr.mxu0 0.0
    %2865 = vmatpush1.msra.mxu0 0.0
    %2866 = vmatprep.subr.mxu0 0.0
    %2867 = vmatpush1.msra.mxu0 0.0
    %2868 = vmatprep.subr.mxu0 0.0
    %2869 = vmatpush1.msra.mxu0 0.0
    %2870 = vmatprep.subr.mxu0 0.0
    %2871 = vmatpush1.msra.mxu0 0.0
    %2872 = vmatprep.subr.mxu0 0.0
    %2873 = vmatpush1.msra.mxu0 0.0
    %2874 = vmatprep.subr.mxu0 0.0
    %2875 = vmatpush1.msra.mxu0 0.0
    %2876 = vmatprep.subr.mxu0 0.0
    %2877 = vmatpush1.msra.mxu0 0.0
    %2878 = vmatprep.subr.mxu0 0.0
    %2879 = vmatpush1.msra.mxu0 0.0
    %2880 = vmatprep.subr.mxu0 0.0
    %2881 = vmatpush1.msra.mxu0 0.0
    %2882 = vmatprep.subr.mxu0 0.0
    %2883 = vmatpush1.msra.mxu0 0.0
    %2884 = vmatprep.subr.mxu0 0.0
    %2885 = vmatpush1.msra.mxu0 0.0
    %2886 = vmatprep.subr.mxu0 0.0
    %2887 = vmatpush1.msra.mxu0 0.0
    %2888 = vmatprep.subr.mxu0 0.0
    %2889 = vmatpush1.msra.mxu0 0.0
    %2890 = vmatprep.subr.mxu0 0.0
    %2891 = vmatpush1.msra.mxu0 0.0
    %2892 = vmatprep.subr.mxu0 0.0
    %2893 = vmatpush1.msra.mxu0 0.0
    %2894 = vmatprep.subr.mxu0 0.0
    %2895 = vmatpush1.msra.mxu0 0.0
    %2896 = vmatprep.subr.mxu0 0.0
    %2897 = vmatpush1.msra.mxu0 0.0
    %2898 = vmatprep.subr.mxu0 0.0
    %2899 = vmatpush1.msra.mxu0 0.0
    %2900 = vmatprep.subr.mxu0 0.0
    %2901 = vmatpush1.msra.mxu0 0.0
    %2902 = vmatprep.subr.mxu0 0.0
    %2903 = vmatpush1.msra.mxu0 0.0
    %2904 = vmatprep.subr.mxu0 0.0
    %2905 = vmatpush1.msra.mxu0 0.0
    %2906 = vmatprep.subr.mxu0 0.0
    %2907 = vmatpush1.msra.mxu0 0.0
    %2908 = vmatprep.subr.mxu0 0.0
    %2909 = vmatpush1.msra.mxu0 0.0
    %2910 = vmatprep.subr.mxu0 0.0
    %2911 = vmatpush1.msra.mxu0 0.0
    %2912 = vmatprep.subr.mxu0 0.0
    %2913 = vmatpush1.msra.mxu0 0.0
    %2914 = vmatprep.mubr.f32.mxu0 0.0
    %v2915 = vand.u32 %v2475, 4294901760
    %2916 = vmatmul.mubr.f32.gmra.mrb[0].mxu0 %v2915
    %v2917 = vpop.f32.mrb[0].mxu0
    %v2918 = vadd.f32 %v2827, %v2917
    %v2919 = vpop.f32.mrb[0].mxu0
    %2920 = vmatprep.mubr.f32.mxu0 0.0
    %v2921 = vand.u32 %v2478, 4294901760
    %2922 = vmatmul.mubr.f32.gmra.mrb[0].mxu0 %v2921
    %v2923 = vpop.f32.mrb[0].mxu0
    %v2924 = vadd.f32 %v2835, %v2923
    %v2925 = vpop.f32.mrb[0].mxu0
    %2926 = vdwg.mxu0
    %2927 = vmatprep.subr.mxu0 0.0
    %v2928 = vand.u32 %v2463, 4294901760
    %2929 = vmatpush1.msra.mxu0 %v2928
    %2930 = vmatprep.subr.mxu0 0.0
    %v2931 = vand.u32 %v2464, 4294901760
    %2932 = vmatpush1.msra.mxu0 %v2931
    %2933 = vmatprep.subr.mxu0 0.0
    %v2934 = vand.u32 %v2465, 4294901760
    %2935 = vmatpush1.msra.mxu0 %v2934
    %2936 = vmatprep.subr.mxu0 0.0
    %v2937 = vand.u32 %v2466, 4294901760
    %2938 = vmatpush1.msra.mxu0 %v2937
    %2939 = vmatprep.subr.mxu0 0.0
    %2940 = vmatpush1.msra.mxu0 0.0
    %2941 = vmatprep.subr.mxu0 0.0
    %2942 = vmatpush1.msra.mxu0 0.0
    %2943 = vmatprep.subr.mxu0 0.0
    %2944 = vmatpush1.msra.mxu0 0.0
    %2945 = vmatprep.subr.mxu0 0.0
    %2946 = vmatpush1.msra.mxu0 0.0
    %2947 = vmatprep.subr.mxu0 0.0
    %2948 = vmatpush1.msra.mxu0 0.0
    %2949 = vmatprep.subr.mxu0 0.0
    %2950 = vmatpush1.msra.mxu0 0.0
    %2951 = vmatprep.subr.mxu0 0.0
    %2952 = vmatpush1.msra.mxu0 0.0
    %2953 = vmatprep.subr.mxu0 0.0
    %2954 = vmatpush1.msra.mxu0 0.0
    %2955 = vmatprep.subr.mxu0 0.0
    %2956 = vmatpush1.msra.mxu0 0.0
    %2957 = vmatprep.subr.mxu0 0.0
    %2958 = vmatpush1.msra.mxu0 0.0
    %2959 = vmatprep.subr.mxu0 0.0
    %2960 = vmatpush1.msra.mxu0 0.0
    %2961 = vmatprep.subr.mxu0 0.0
    %2962 = vmatpush1.msra.mxu0 0.0
    %2963 = vmatprep.subr.mxu0 0.0
    %2964 = vmatpush1.msra.mxu0 0.0
    %2965 = vmatprep.subr.mxu0 0.0
    %2966 = vmatpush1.msra.mxu0 0.0
    %2967 = vmatprep.subr.mxu0 0.0
    %2968 = vmatpush1.msra.mxu0 0.0
    %2969 = vmatprep.subr.mxu0 0.0
    %2970 = vmatpush1.msra.mxu0 0.0
    %2971 = vmatprep.subr.mxu0 0.0
    %2972 = vmatpush1.msra.mxu0 0.0
    %2973 = vmatprep.subr.mxu0 0.0
    %2974 = vmatpush1.msra.mxu0 0.0
    %2975 = vmatprep.subr.mxu0 0.0
    %2976 = vmatpush1.msra.mxu0 0.0
    %2977 = vmatprep.subr.mxu0 0.0
    %2978 = vmatpush1.msra.mxu0 0.0
    %2979 = vmatprep.subr.mxu0 0.0
    %2980 = vmatpush1.msra.mxu0 0.0
    %2981 = vmatprep.subr.mxu0 0.0
    %2982 = vmatpush1.msra.mxu0 0.0
    %2983 = vmatprep.subr.mxu0 0.0
    %2984 = vmatpush1.msra.mxu0 0.0
    %2985 = vmatprep.subr.mxu0 0.0
    %2986 = vmatpush1.msra.mxu0 0.0
    %2987 = vmatprep.subr.mxu0 0.0
    %2988 = vmatpush1.msra.mxu0 0.0
    %2989 = vmatprep.subr.mxu0 0.0
    %2990 = vmatpush1.msra.mxu0 0.0
    %2991 = vmatprep.subr.mxu0 0.0
    %2992 = vmatpush1.msra.mxu0 0.0
    %2993 = vmatprep.subr.mxu0 0.0
    %2994 = vmatpush1.msra.mxu0 0.0
    %2995 = vmatprep.mubr.f32.mxu0 0.0
    %v2996 = vand.u32 %v2475, 4294901760
    %2997 = vmatmul.mubr.f32.gmra.mrb[0].mxu0 %v2996
    %v2998 = vpop.f32.mrb[0].mxu0
    %v2999 = vadd.f32 %v2918, %v2998
    %v3000 = vpop.f32.mrb[0].mxu0
    %3001 = vmatprep.mubr.f32.mxu0 0.0
    %v3002 = vand.u32 %v2478, 4294901760
    %3003 = vmatmul.mubr.f32.gmra.mrb[0].mxu0 %v3002
    %v3004 = vpop.f32.mrb[0].mxu0
    %v3005 = vadd.f32 %v2924, %v3004
    %v3006 = vpop.f32.mrb[0].mxu0
    %3007 = vdwg.mxu0
    %v3008 = vld [vmem:[#allocation3] ss:$2 sm:$0xff]
    %s3009 = scalar_lea.vmem [#allocation3], 16
    %v3010 = vld [vmem:[%s3009] ss:$2 sm:$0xff]
    %v3011 = vld [vmem:[#allocation11] sm:$0xff]
    %v3012 = vld [vmem:[#allocation11 + $0x8] sm:$0xff]
    %v3013 = vld [vmem:[#allocation12] sm:$0x1]
    %v3015 = vlaneseq
    %v3016 = vshrl.u32 %v3015, 7
    %v3017 = vsub.s32 0, %v3016
    %v3018 = vrot.slane %v3013, %v3017
    %v3021 = vsel %vm155, %v3008, 0
    %v3024 = vsel %vm155, %v3010, 0
    %3026 = vmatprep.subr.mxu0 0.0
    %v3027 = vand.u32 %v3011, 4294901760
    %3028 = vmatpush1.msra.mxu0 %v3027
    %3029 = vmatprep.subr.mxu0 0.0
    %v3030 = vand.u32 %v3012, 4294901760
    %3031 = vmatpush1.msra.mxu0 %v3030
    %3032 = vmatprep.subr.mxu0 0.0
    %3033 = vmatpush1.msra.mxu0 0.0
    %3034 = vmatprep.subr.mxu0 0.0
    %3035 = vmatpush1.msra.mxu0 0.0
    %3036 = vmatprep.subr.mxu0 0.0
    %3037 = vmatpush1.msra.mxu0 0.0
    %3038 = vmatprep.subr.mxu0 0.0
    %3039 = vmatpush1.msra.mxu0 0.0
    %3040 = vmatprep.subr.mxu0 0.0
    %3041 = vmatpush1.msra.mxu0 0.0
    %3042 = vmatprep.subr.mxu0 0.0
    %3043 = vmatpush1.msra.mxu0 0.0
    %3044 = vmatprep.subr.mxu0 0.0
    %3045 = vmatpush1.msra.mxu0 0.0
    %3046 = vmatprep.subr.mxu0 0.0
    %3047 = vmatpush1.msra.mxu0 0.0
    %3048 = vmatprep.subr.mxu0 0.0
    %3049 = vmatpush1.msra.mxu0 0.0
    %3050 = vmatprep.subr.mxu0 0.0
    %3051 = vmatpush1.msra.mxu0 0.0
    %3052 = vmatprep.subr.mxu0 0.0
    %3053 = vmatpush1.msra.mxu0 0.0
    %3054 = vmatprep.subr.mxu0 0.0
    %3055 = vmatpush1.msra.mxu0 0.0
    %3056 = vmatprep.subr.mxu0 0.0
    %3057 = vmatpush1.msra.mxu0 0.0
    %3058 = vmatprep.subr.mxu0 0.0
    %3059 = vmatpush1.msra.mxu0 0.0
    %3060 = vmatprep.subr.mxu0 0.0
    %3061 = vmatpush1.msra.mxu0 0.0
    %3062 = vmatprep.subr.mxu0 0.0
    %3063 = vmatpush1.msra.mxu0 0.0
    %3064 = vmatprep.subr.mxu0 0.0
    %3065 = vmatpush1.msra.mxu0 0.0
    %3066 = vmatprep.subr.mxu0 0.0
    %3067 = vmatpush1.msra.mxu0 0.0
    %3068 = vmatprep.subr.mxu0 0.0
    %3069 = vmatpush1.msra.mxu0 0.0
    %3070 = vmatprep.subr.mxu0 0.0
    %3071 = vmatpush1.msra.mxu0 0.0
    %3072 = vmatprep.subr.mxu0 0.0
    %3073 = vmatpush1.msra.mxu0 0.0
    %3074 = vmatprep.subr.mxu0 0.0
    %3075 = vmatpush1.msra.mxu0 0.0
    %3076 = vmatprep.subr.mxu0 0.0
    %3077 = vmatpush1.msra.mxu0 0.0
    %3078 = vmatprep.subr.mxu0 0.0
    %3079 = vmatpush1.msra.mxu0 0.0
    %3080 = vmatprep.subr.mxu0 0.0
    %3081 = vmatpush1.msra.mxu0 0.0
    %3082 = vmatprep.subr.mxu0 0.0
    %3083 = vmatpush1.msra.mxu0 0.0
    %3084 = vmatprep.subr.mxu0 0.0
    %3085 = vmatpush1.msra.mxu0 0.0
    %3086 = vmatprep.subr.mxu0 0.0
    %3087 = vmatpush1.msra.mxu0 0.0
    %3088 = vmatprep.subr.mxu0 0.0
    %3089 = vmatpush1.msra.mxu0 0.0
    %3090 = vmatprep.subr.mxu0 0.0
    %3091 = vmatpush1.msra.mxu0 0.0
    %3092 = vmatprep.mubr.f32.mxu0 0.0
    %v3093 = vand.u32 %v3021, 4294901760
    %v3094 = vsub.f32 %v3021, %v3093
    %v3095 = vand.u32 %v3094, 4294901760
    %v3096 = vsub.f32 %v3094, %v3095
    %v3097 = vand.u32 %v3096, 4294901760
    %3098 = vmatmul.mubr.f32.gmra.mrb[0].mxu0 %v3097
    %v3099 = vpop.f32.mrb[0].mxu0
    %v3100 = vadd.f32 %v3018, %v3099
    %v3101 = vpop.f32.mrb[0].mxu0
    %3102 = vmatprep.mubr.f32.mxu0 0.0
    %v3103 = vand.u32 %v3024, 4294901760
    %v3104 = vsub.f32 %v3024, %v3103
    %v3105 = vand.u32 %v3104, 4294901760
    %v3106 = vsub.f32 %v3104, %v3105
    %v3107 = vand.u32 %v3106, 4294901760
    %3108 = vmatmul.mubr.f32.gmra.mrb[0].mxu0 %v3107
    %v3109 = vpop.f32.mrb[0].mxu0
    %v3110 = vadd.f32 %v3018, %v3109
    %v3111 = vpop.f32.mrb[0].mxu0
    %3112 = vdwg.mxu0
    %3113 = vmatprep.subr.mxu0 0.0
    %v3114 = vand.u32 %v3011, 4294901760
    %v3115 = vsub.f32 %v3011, %v3114
    %v3116 = vand.u32 %v3115, 4294901760
    %v3117 = vsub.f32 %v3115, %v3116
    %v3118 = vand.u32 %v3117, 4294901760
    %3119 = vmatpush1.msra.mxu0 %v3118
    %3120 = vmatprep.subr.mxu0 0.0
    %v3121 = vand.u32 %v3012, 4294901760
    %v3122 = vsub.f32 %v3012, %v3121
    %v3123 = vand.u32 %v3122, 4294901760
    %v3124 = vsub.f32 %v3122, %v3123
    %v3125 = vand.u32 %v3124, 4294901760
    %3126 = vmatpush1.msra.mxu0 %v3125
    %3127 = vmatprep.subr.mxu0 0.0
    %3128 = vmatpush1.msra.mxu0 0.0
    %3129 = vmatprep.subr.mxu0 0.0
    %3130 = vmatpush1.msra.mxu0 0.0
    %3131 = vmatprep.subr.mxu0 0.0
    %3132 = vmatpush1.msra.mxu0 0.0
    %3133 = vmatprep.subr.mxu0 0.0
    %3134 = vmatpush1.msra.mxu0 0.0
    %3135 = vmatprep.subr.mxu0 0.0
    %3136 = vmatpush1.msra.mxu0 0.0
    %3137 = vmatprep.subr.mxu0 0.0
    %3138 = vmatpush1.msra.mxu0 0.0
    %3139 = vmatprep.subr.mxu0 0.0
    %3140 = vmatpush1.msra.mxu0 0.0
    %3141 = vmatprep.subr.mxu0 0.0
    %3142 = vmatpush1.msra.mxu0 0.0
    %3143 = vmatprep.subr.mxu0 0.0
    %3144 = vmatpush1.msra.mxu0 0.0
    %3145 = vmatprep.subr.mxu0 0.0
    %3146 = vmatpush1.msra.mxu0 0.0
    %3147 = vmatprep.subr.mxu0 0.0
    %3148 = vmatpush1.msra.mxu0 0.0
    %3149 = vmatprep.subr.mxu0 0.0
    %3150 = vmatpush1.msra.mxu0 0.0
    %3151 = vmatprep.subr.mxu0 0.0
    %3152 = vmatpush1.msra.mxu0 0.0
    %3153 = vmatprep.subr.mxu0 0.0
    %3154 = vmatpush1.msra.mxu0 0.0
    %3155 = vmatprep.subr.mxu0 0.0
    %3156 = vmatpush1.msra.mxu0 0.0
    %3157 = vmatprep.subr.mxu0 0.0
    %3158 = vmatpush1.msra.mxu0 0.0
    %3159 = vmatprep.subr.mxu0 0.0
    %3160 = vmatpush1.msra.mxu0 0.0
    %3161 = vmatprep.subr.mxu0 0.0
    %3162 = vmatpush1.msra.mxu0 0.0
    %3163 = vmatprep.subr.mxu0 0.0
    %3164 = vmatpush1.msra.mxu0 0.0
    %3165 = vmatprep.subr.mxu0 0.0
    %3166 = vmatpush1.msra.mxu0 0.0
    %3167 = vmatprep.subr.mxu0 0.0
    %3168 = vmatpush1.msra.mxu0 0.0
    %3169 = vmatprep.subr.mxu0 0.0
    %3170 = vmatpush1.msra.mxu0 0.0
    %3171 = vmatprep.subr.mxu0 0.0
    %3172 = vmatpush1.msra.mxu0 0.0
    %3173 = vmatprep.subr.mxu0 0.0
    %3174 = vmatpush1.msra.mxu0 0.0
    %3175 = vmatprep.subr.mxu0 0.0
    %3176 = vmatpush1.msra.mxu0 0.0
    %3177 = vmatprep.subr.mxu0 0.0
    %3178 = vmatpush1.msra.mxu0 0.0
    %3179 = vmatprep.subr.mxu0 0.0
    %3180 = vmatpush1.msra.mxu0 0.0
    %3181 = vmatprep.subr.mxu0 0.0
    %3182 = vmatpush1.msra.mxu0 0.0
    %3183 = vmatprep.subr.mxu0 0.0
    %3184 = vmatpush1.msra.mxu0 0.0
    %3185 = vmatprep.subr.mxu0 0.0
    %3186 = vmatpush1.msra.mxu0 0.0
    %3187 = vmatprep.mubr.f32.mxu0 0.0
    %v3188 = vand.u32 %v3021, 4294901760
    %3189 = vmatmul.mubr.f32.gmra.mrb[0].mxu0 %v3188
    %v3190 = vpop.f32.mrb[0].mxu0
    %v3191 = vadd.f32 %v3100, %v3190
    %v3192 = vpop.f32.mrb[0].mxu0
    %3193 = vmatprep.mubr.f32.mxu0 0.0
    %v3194 = vand.u32 %v3024, 4294901760
    %3195 = vmatmul.mubr.f32.gmra.mrb[0].mxu0 %v3194
    %v3196 = vpop.f32.mrb[0].mxu0
    %v3197 = vadd.f32 %v3110, %v3196
    %v3198 = vpop.f32.mrb[0].mxu0
    %3199 = vdwg.mxu0
    %3200 = vmatprep.subr.mxu0 0.0
    %v3201 = vand.u32 %v3011, 4294901760
    %v3202 = vsub.f32 %v3011, %v3201
    %3203 = vmatpush1.msra.mxu0 %v3202
    %3204 = vmatprep.subr.mxu0 0.0
    %v3205 = vand.u32 %v3012, 4294901760
    %v3206 = vsub.f32 %v3012, %v3205
    %3207 = vmatpush1.msra.mxu0 %v3206
    %3208 = vmatprep.subr.mxu0 0.0
    %3209 = vmatpush1.msra.mxu0 0.0
    %3210 = vmatprep.subr.mxu0 0.0
    %3211 = vmatpush1.msra.mxu0 0.0
    %3212 = vmatprep.subr.mxu0 0.0
    %3213 = vmatpush1.msra.mxu0 0.0
    %3214 = vmatprep.subr.mxu0 0.0
    %3215 = vmatpush1.msra.mxu0 0.0
    %3216 = vmatprep.subr.mxu0 0.0
    %3217 = vmatpush1.msra.mxu0 0.0
    %3218 = vmatprep.subr.mxu0 0.0
    %3219 = vmatpush1.msra.mxu0 0.0
    %3220 = vmatprep.subr.mxu0 0.0
    %3221 = vmatpush1.msra.mxu0 0.0
    %3222 = vmatprep.subr.mxu0 0.0
    %3223 = vmatpush1.msra.mxu0 0.0
    %3224 = vmatprep.subr.mxu0 0.0
    %3225 = vmatpush1.msra.mxu0 0.0
    %3226 = vmatprep.subr.mxu0 0.0
    %3227 = vmatpush1.msra.mxu0 0.0
    %3228 = vmatprep.subr.mxu0 0.0
    %3229 = vmatpush1.msra.mxu0 0.0
    %3230 = vmatprep.subr.mxu0 0.0
    %3231 = vmatpush1.msra.mxu0 0.0
    %3232 = vmatprep.subr.mxu0 0.0
    %3233 = vmatpush1.msra.mxu0 0.0
    %3234 = vmatprep.subr.mxu0 0.0
    %3235 = vmatpush1.msra.mxu0 0.0
    %3236 = vmatprep.subr.mxu0 0.0
    %3237 = vmatpush1.msra.mxu0 0.0
    %3238 = vmatprep.subr.mxu0 0.0
    %3239 = vmatpush1.msra.mxu0 0.0
    %3240 = vmatprep.subr.mxu0 0.0
    %3241 = vmatpush1.msra.mxu0 0.0
    %3242 = vmatprep.subr.mxu0 0.0
    %3243 = vmatpush1.msra.mxu0 0.0
    %3244 = vmatprep.subr.mxu0 0.0
    %3245 = vmatpush1.msra.mxu0 0.0
    %3246 = vmatprep.subr.mxu0 0.0
    %3247 = vmatpush1.msra.mxu0 0.0
    %3248 = vmatprep.subr.mxu0 0.0
    %3249 = vmatpush1.msra.mxu0 0.0
    %3250 = vmatprep.subr.mxu0 0.0
    %3251 = vmatpush1.msra.mxu0 0.0
    %3252 = vmatprep.subr.mxu0 0.0
    %3253 = vmatpush1.msra.mxu0 0.0
    %3254 = vmatprep.subr.mxu0 0.0
    %3255 = vmatpush1.msra.mxu0 0.0
    %3256 = vmatprep.subr.mxu0 0.0
    %3257 = vmatpush1.msra.mxu0 0.0
    %3258 = vmatprep.subr.mxu0 0.0
    %3259 = vmatpush1.msra.mxu0 0.0
    %3260 = vmatprep.subr.mxu0 0.0
    %3261 = vmatpush1.msra.mxu0 0.0
    %3262 = vmatprep.subr.mxu0 0.0
    %3263 = vmatpush1.msra.mxu0 0.0
    %3264 = vmatprep.subr.mxu0 0.0
    %3265 = vmatpush1.msra.mxu0 0.0
    %3266 = vmatprep.subr.mxu0 0.0
    %3267 = vmatpush1.msra.mxu0 0.0
    %3268 = vmatprep.mubr.f32.mxu0 0.0
    %v3269 = vand.u32 %v3021, 4294901760
    %v3270 = vsub.f32 %v3021, %v3269
    %3271 = vmatmul.mubr.f32.gmra.mrb[0].mxu0 %v3270
    %v3272 = vpop.f32.mrb[0].mxu0
    %v3273 = vadd.f32 %v3191, %v3272
    %v3274 = vpop.f32.mrb[0].mxu0
    %3275 = vmatprep.mubr.f32.mxu0 0.0
    %v3276 = vand.u32 %v3024, 4294901760
    %v3277 = vsub.f32 %v3024, %v3276
    %3278 = vmatmul.mubr.f32.gmra.mrb[0].mxu0 %v3277
    %v3279 = vpop.f32.mrb[0].mxu0
    %v3280 = vadd.f32 %v3197, %v3279
    %v3281 = vpop.f32.mrb[0].mxu0
    %3282 = vdwg.mxu0
    %3283 = vmatprep.subr.mxu0 0.0
    %v3284 = vand.u32 %v3011, 4294901760
    %3285 = vmatpush1.msra.mxu0 %v3284
    %3286 = vmatprep.subr.mxu0 0.0
    %v3287 = vand.u32 %v3012, 4294901760
    %3288 = vmatpush1.msra.mxu0 %v3287
    %3289 = vmatprep.subr.mxu0 0.0
    %3290 = vmatpush1.msra.mxu0 0.0
    %3291 = vmatprep.subr.mxu0 0.0
    %3292 = vmatpush1.msra.mxu0 0.0
    %3293 = vmatprep.subr.mxu0 0.0
    %3294 = vmatpush1.msra.mxu0 0.0
    %3295 = vmatprep.subr.mxu0 0.0
    %3296 = vmatpush1.msra.mxu0 0.0
    %3297 = vmatprep.subr.mxu0 0.0
    %3298 = vmatpush1.msra.mxu0 0.0
    %3299 = vmatprep.subr.mxu0 0.0
    %3300 = vmatpush1.msra.mxu0 0.0
    %3301 = vmatprep.subr.mxu0 0.0
    %3302 = vmatpush1.msra.mxu0 0.0
    %3303 = vmatprep.subr.mxu0 0.0
    %3304 = vmatpush1.msra.mxu0 0.0
    %3305 = vmatprep.subr.mxu0 0.0
    %3306 = vmatpush1.msra.mxu0 0.0
    %3307 = vmatprep.subr.mxu0 0.0
    %3308 = vmatpush1.msra.mxu0 0.0
    %3309 = vmatprep.subr.mxu0 0.0
    %3310 = vmatpush1.msra.mxu0 0.0
    %3311 = vmatprep.subr.mxu0 0.0
    %3312 = vmatpush1.msra.mxu0 0.0
    %3313 = vmatprep.subr.mxu0 0.0
    %3314 = vmatpush1.msra.mxu0 0.0
    %3315 = vmatprep.subr.mxu0 0.0
    %3316 = vmatpush1.msra.mxu0 0.0
    %3317 = vmatprep.subr.mxu0 0.0
    %3318 = vmatpush1.msra.mxu0 0.0
    %3319 = vmatprep.subr.mxu0 0.0
    %3320 = vmatpush1.msra.mxu0 0.0
    %3321 = vmatprep.subr.mxu0 0.0
    %3322 = vmatpush1.msra.mxu0 0.0
    %3323 = vmatprep.subr.mxu0 0.0
    %3324 = vmatpush1.msra.mxu0 0.0
    %3325 = vmatprep.subr.mxu0 0.0
    %3326 = vmatpush1.msra.mxu0 0.0
    %3327 = vmatprep.subr.mxu0 0.0
    %3328 = vmatpush1.msra.mxu0 0.0
    %3329 = vmatprep.subr.mxu0 0.0
    %3330 = vmatpush1.msra.mxu0 0.0
    %3331 = vmatprep.subr.mxu0 0.0
    %3332 = vmatpush1.msra.mxu0 0.0
    %3333 = vmatprep.subr.mxu0 0.0
    %3334 = vmatpush1.msra.mxu0 0.0
    %3335 = vmatprep.subr.mxu0 0.0
    %3336 = vmatpush1.msra.mxu0 0.0
    %3337 = vmatprep.subr.mxu0 0.0
    %3338 = vmatpush1.msra.mxu0 0.0
    %3339 = vmatprep.subr.mxu0 0.0
    %3340 = vmatpush1.msra.mxu0 0.0
    %3341 = vmatprep.subr.mxu0 0.0
    %3342 = vmatpush1.msra.mxu0 0.0
    %3343 = vmatprep.subr.mxu0 0.0
    %3344 = vmatpush1.msra.mxu0 0.0
    %3345 = vmatprep.subr.mxu0 0.0
    %3346 = vmatpush1.msra.mxu0 0.0
    %3347 = vmatprep.subr.mxu0 0.0
    %3348 = vmatpush1.msra.mxu0 0.0
    %3349 = vmatprep.mubr.f32.mxu0 0.0
    %v3350 = vand.u32 %v3021, 4294901760
    %v3351 = vsub.f32 %v3021, %v3350
    %v3352 = vand.u32 %v3351, 4294901760
    %3353 = vmatmul.mubr.f32.gmra.mrb[0].mxu0 %v3352
    %v3354 = vpop.f32.mrb[0].mxu0
    %v3355 = vadd.f32 %v3273, %v3354
    %v3356 = vpop.f32.mrb[0].mxu0
    %3357 = vmatprep.mubr.f32.mxu0 0.0
    %v3358 = vand.u32 %v3024, 4294901760
    %v3359 = vsub.f32 %v3024, %v3358
    %v3360 = vand.u32 %v3359, 4294901760
    %3361 = vmatmul.mubr.f32.gmra.mrb[0].mxu0 %v3360
    %v3362 = vpop.f32.mrb[0].mxu0
    %v3363 = vadd.f32 %v3280, %v3362
    %v3364 = vpop.f32.mrb[0].mxu0
    %3365 = vdwg.mxu0
    %3366 = vmatprep.subr.mxu0 0.0
    %v3367 = vand.u32 %v3011, 4294901760
    %v3368 = vsub.f32 %v3011, %v3367
    %v3369 = vand.u32 %v3368, 4294901760
    %3370 = vmatpush1.msra.mxu0 %v3369
    %3371 = vmatprep.subr.mxu0 0.0
    %v3372 = vand.u32 %v3012, 4294901760
    %v3373 = vsub.f32 %v3012, %v3372
    %v3374 = vand.u32 %v3373, 4294901760
    %3375 = vmatpush1.msra.mxu0 %v3374
    %3376 = vmatprep.subr.mxu0 0.0
    %3377 = vmatpush1.msra.mxu0 0.0
    %3378 = vmatprep.subr.mxu0 0.0
    %3379 = vmatpush1.msra.mxu0 0.0
    %3380 = vmatprep.subr.mxu0 0.0
    %3381 = vmatpush1.msra.mxu0 0.0
    %3382 = vmatprep.subr.mxu0 0.0
    %3383 = vmatpush1.msra.mxu0 0.0
    %3384 = vmatprep.subr.mxu0 0.0
    %3385 = vmatpush1.msra.mxu0 0.0
    %3386 = vmatprep.subr.mxu0 0.0
    %3387 = vmatpush1.msra.mxu0 0.0
    %3388 = vmatprep.subr.mxu0 0.0
    %3389 = vmatpush1.msra.mxu0 0.0
    %3390 = vmatprep.subr.mxu0 0.0
    %3391 = vmatpush1.msra.mxu0 0.0
    %3392 = vmatprep.subr.mxu0 0.0
    %3393 = vmatpush1.msra.mxu0 0.0
    %3394 = vmatprep.subr.mxu0 0.0
    %3395 = vmatpush1.msra.mxu0 0.0
    %3396 = vmatprep.subr.mxu0 0.0
    %3397 = vmatpush1.msra.mxu0 0.0
    %3398 = vmatprep.subr.mxu0 0.0
    %3399 = vmatpush1.msra.mxu0 0.0
    %3400 = vmatprep.subr.mxu0 0.0
    %3401 = vmatpush1.msra.mxu0 0.0
    %3402 = vmatprep.subr.mxu0 0.0
    %3403 = vmatpush1.msra.mxu0 0.0
    %3404 = vmatprep.subr.mxu0 0.0
    %3405 = vmatpush1.msra.mxu0 0.0
    %3406 = vmatprep.subr.mxu0 0.0
    %3407 = vmatpush1.msra.mxu0 0.0
    %3408 = vmatprep.subr.mxu0 0.0
    %3409 = vmatpush1.msra.mxu0 0.0
    %3410 = vmatprep.subr.mxu0 0.0
    %3411 = vmatpush1.msra.mxu0 0.0
    %3412 = vmatprep.subr.mxu0 0.0
    %3413 = vmatpush1.msra.mxu0 0.0
    %3414 = vmatprep.subr.mxu0 0.0
    %3415 = vmatpush1.msra.mxu0 0.0
    %3416 = vmatprep.subr.mxu0 0.0
    %3417 = vmatpush1.msra.mxu0 0.0
    %3418 = vmatprep.subr.mxu0 0.0
    %3419 = vmatpush1.msra.mxu0 0.0
    %3420 = vmatprep.subr.mxu0 0.0
    %3421 = vmatpush1.msra.mxu0 0.0
    %3422 = vmatprep.subr.mxu0 0.0
    %3423 = vmatpush1.msra.mxu0 0.0
    %3424 = vmatprep.subr.mxu0 0.0
    %3425 = vmatpush1.msra.mxu0 0.0
    %3426 = vmatprep.subr.mxu0 0.0
    %3427 = vmatpush1.msra.mxu0 0.0
    %3428 = vmatprep.subr.mxu0 0.0
    %3429 = vmatpush1.msra.mxu0 0.0
    %3430 = vmatprep.subr.mxu0 0.0
    %3431 = vmatpush1.msra.mxu0 0.0
    %3432 = vmatprep.subr.mxu0 0.0
    %3433 = vmatpush1.msra.mxu0 0.0
    %3434 = vmatprep.subr.mxu0 0.0
    %3435 = vmatpush1.msra.mxu0 0.0
    %3436 = vmatprep.mubr.f32.mxu0 0.0
    %v3437 = vand.u32 %v3021, 4294901760
    %3438 = vmatmul.mubr.f32.gmra.mrb[0].mxu0 %v3437
    %v3439 = vpop.f32.mrb[0].mxu0
    %v3440 = vadd.f32 %v3355, %v3439
    %v3441 = vpop.f32.mrb[0].mxu0
    %3442 = vmatprep.mubr.f32.mxu0 0.0
    %v3443 = vand.u32 %v3024, 4294901760
    %3444 = vmatmul.mubr.f32.gmra.mrb[0].mxu0 %v3443
    %v3445 = vpop.f32.mrb[0].mxu0
    %v3446 = vadd.f32 %v3363, %v3445
    %v3447 = vpop.f32.mrb[0].mxu0
    %3448 = vdwg.mxu0
    %3449 = vmatprep.subr.mxu0 0.0
    %v3450 = vand.u32 %v3011, 4294901760
    %3451 = vmatpush1.msra.mxu0 %v3450
    %3452 = vmatprep.subr.mxu0 0.0
    %v3453 = vand.u32 %v3012, 4294901760
    %3454 = vmatpush1.msra.mxu0 %v3453
    %3455 = vmatprep.subr.mxu0 0.0
    %3456 = vmatpush1.msra.mxu0 0.0
    %3457 = vmatprep.subr.mxu0 0.0
    %3458 = vmatpush1.msra.mxu0 0.0
    %3459 = vmatprep.subr.mxu0 0.0
    %3460 = vmatpush1.msra.mxu0 0.0
    %3461 = vmatprep.subr.mxu0 0.0
    %3462 = vmatpush1.msra.mxu0 0.0
    %3463 = vmatprep.subr.mxu0 0.0
    %3464 = vmatpush1.msra.mxu0 0.0
    %3465 = vmatprep.subr.mxu0 0.0
    %3466 = vmatpush1.msra.mxu0 0.0
    %3467 = vmatprep.subr.mxu0 0.0
    %3468 = vmatpush1.msra.mxu0 0.0
    %3469 = vmatprep.subr.mxu0 0.0
    %3470 = vmatpush1.msra.mxu0 0.0
    %3471 = vmatprep.subr.mxu0 0.0
    %3472 = vmatpush1.msra.mxu0 0.0
    %3473 = vmatprep.subr.mxu0 0.0
    %3474 = vmatpush1.msra.mxu0 0.0
    %3475 = vmatprep.subr.mxu0 0.0
    %3476 = vmatpush1.msra.mxu0 0.0
    %3477 = vmatprep.subr.mxu0 0.0
    %3478 = vmatpush1.msra.mxu0 0.0
    %3479 = vmatprep.subr.mxu0 0.0
    %3480 = vmatpush1.msra.mxu0 0.0
    %3481 = vmatprep.subr.mxu0 0.0
    %3482 = vmatpush1.msra.mxu0 0.0
    %3483 = vmatprep.subr.mxu0 0.0
    %3484 = vmatpush1.msra.mxu0 0.0
    %3485 = vmatprep.subr.mxu0 0.0
    %3486 = vmatpush1.msra.mxu0 0.0
    %3487 = vmatprep.subr.mxu0 0.0
    %3488 = vmatpush1.msra.mxu0 0.0
    %3489 = vmatprep.subr.mxu0 0.0
    %3490 = vmatpush1.msra.mxu0 0.0
    %3491 = vmatprep.subr.mxu0 0.0
    %3492 = vmatpush1.msra.mxu0 0.0
    %3493 = vmatprep.subr.mxu0 0.0
    %3494 = vmatpush1.msra.mxu0 0.0
    %3495 = vmatprep.subr.mxu0 0.0
    %3496 = vmatpush1.msra.mxu0 0.0
    %3497 = vmatprep.subr.mxu0 0.0
    %3498 = vmatpush1.msra.mxu0 0.0
    %3499 = vmatprep.subr.mxu0 0.0
    %3500 = vmatpush1.msra.mxu0 0.0
    %3501 = vmatprep.subr.mxu0 0.0
    %3502 = vmatpush1.msra.mxu0 0.0
    %3503 = vmatprep.subr.mxu0 0.0
    %3504 = vmatpush1.msra.mxu0 0.0
    %3505 = vmatprep.subr.mxu0 0.0
    %3506 = vmatpush1.msra.mxu0 0.0
    %3507 = vmatprep.subr.mxu0 0.0
    %3508 = vmatpush1.msra.mxu0 0.0
    %3509 = vmatprep.subr.mxu0 0.0
    %3510 = vmatpush1.msra.mxu0 0.0
    %3511 = vmatprep.subr.mxu0 0.0
    %3512 = vmatpush1.msra.mxu0 0.0
    %3513 = vmatprep.subr.mxu0 0.0
    %3514 = vmatpush1.msra.mxu0 0.0
    %3515 = vmatprep.mubr.f32.mxu0 0.0
    %v3516 = vand.u32 %v3021, 4294901760
    %3517 = vmatmul.mubr.f32.gmra.mrb[0].mxu0 %v3516
    %v3518 = vpop.f32.mrb[0].mxu0
    %v3519 = vadd.f32 %v3440, %v3518
    %v3520 = vpop.f32.mrb[0].mxu0
    %3521 = vmatprep.mubr.f32.mxu0 0.0
    %v3522 = vand.u32 %v3024, 4294901760
    %3523 = vmatmul.mubr.f32.gmra.mrb[0].mxu0 %v3522
    %v3524 = vpop.f32.mrb[0].mxu0
    %v3525 = vadd.f32 %v3446, %v3524
    %v3526 = vpop.f32.mrb[0].mxu0
    %3527 = vdwg.mxu0
    %v3528 = vadd.f32 %v2999, %v3519
    %v3529 = vadd.f32 %v3005, %v3525
    %v3530 = vmax.f32 %v3528, 0.0
    %v3531 = vmax.f32 %v3529, 0.0
    %v3532 = vld [vmem:[%s9] sm:$0xff]
    %v3533 = vld [vmem:[%s9 + $0x8] sm:$0xff]
    %v3534 = vld [vmem:[%s9 + $0x10] sm:$0xff]
    %v3535 = vld [vmem:[%s9 + $0x18] sm:$0xff]
    %v3536 = vld [vmem:[%s9 + $0x20] sm:$0xff]
    %v3537 = vld [vmem:[%s9 + $0x28] sm:$0xff]
    %v3538 = vld [vmem:[%s9 + $0x30] sm:$0xff]
    %v3539 = vld [vmem:[%s9 + $0x38] sm:$0xff]
    %v3540 = vld [vmem:[%s9 + $0x40] sm:$0xff]
    %v3541 = vld [vmem:[%s9 + $0x48] sm:$0xff]
    %v3542 = vld [vmem:[%s9 + $0x50] sm:$0xff]
    %v3543 = vld [vmem:[%s9 + $0x58] sm:$0xff]
    %v3544 = vld [vmem:[%s9 + $0x60] sm:$0xff]
    %v3545 = vld [vmem:[%s9 + $0x68] sm:$0xff]
    %v3546 = vld [vmem:[%s9 + $0x70] sm:$0xff]
    %v3547 = vld [vmem:[%s9 + $0x78] sm:$0xff]
    %v3548 = vld [vmem:[%s10] sm:$0x1]
    %v3550 = vlaneseq
    %v3551 = vshrl.u32 %v3550, 7
    %v3552 = vsub.s32 0, %v3551
    %v3553 = vrot.slane %v3548, %v3552
    %3555 = vmatprep.subr.mxu0 0.0
    %v3556 = vand.u32 %v3532, 4294901760
    %3557 = vmatpush1.msra.mxu0 %v3556
    %3558 = vmatprep.subr.mxu0 0.0
    %v3559 = vand.u32 %v3533, 4294901760
    %3560 = vmatpush1.msra.mxu0 %v3559
    %3561 = vmatprep.subr.mxu0 0.0
    %v3562 = vand.u32 %v3534, 4294901760
    %3563 = vmatpush1.msra.mxu0 %v3562
    %3564 = vmatprep.subr.mxu0 0.0
    %v3565 = vand.u32 %v3535, 4294901760
    %3566 = vmatpush1.msra.mxu0 %v3565
    %3567 = vmatprep.subr.mxu0 0.0
    %v3568 = vand.u32 %v3536, 4294901760
    %3569 = vmatpush1.msra.mxu0 %v3568
    %3570 = vmatprep.subr.mxu0 0.0
    %v3571 = vand.u32 %v3537, 4294901760
    %3572 = vmatpush1.msra.mxu0 %v3571
    %3573 = vmatprep.subr.mxu0 0.0
    %v3574 = vand.u32 %v3538, 4294901760
    %3575 = vmatpush1.msra.mxu0 %v3574
    %3576 = vmatprep.subr.mxu0 0.0
    %v3577 = vand.u32 %v3539, 4294901760
    %3578 = vmatpush1.msra.mxu0 %v3577
    %3579 = vmatprep.subr.mxu0 0.0
    %v3580 = vand.u32 %v3540, 4294901760
    %3581 = vmatpush1.msra.mxu0 %v3580
    %3582 = vmatprep.subr.mxu0 0.0
    %v3583 = vand.u32 %v3541, 4294901760
    %3584 = vmatpush1.msra.mxu0 %v3583
    %3585 = vmatprep.subr.mxu0 0.0
    %v3586 = vand.u32 %v3542, 4294901760
    %3587 = vmatpush1.msra.mxu0 %v3586
    %3588 = vmatprep.subr.mxu0 0.0
    %v3589 = vand.u32 %v3543, 4294901760
    %3590 = vmatpush1.msra.mxu0 %v3589
    %3591 = vmatprep.subr.mxu0 0.0
    %v3592 = vand.u32 %v3544, 4294901760
    %3593 = vmatpush1.msra.mxu0 %v3592
    %3594 = vmatprep.subr.mxu0 0.0
    %v3595 = vand.u32 %v3545, 4294901760
    %3596 = vmatpush1.msra.mxu0 %v3595
    %3597 = vmatprep.subr.mxu0 0.0
    %v3598 = vand.u32 %v3546, 4294901760
    %3599 = vmatpush1.msra.mxu0 %v3598
    %3600 = vmatprep.subr.mxu0 0.0
    %v3601 = vand.u32 %v3547, 4294901760
    %3602 = vmatpush1.msra.mxu0 %v3601
    %3603 = vmatprep.subr.mxu0 0.0
    %3604 = vmatpush1.msra.mxu0 0.0
    %3605 = vmatprep.subr.mxu0 0.0
    %3606 = vmatpush1.msra.mxu0 0.0
    %3607 = vmatprep.subr.mxu0 0.0
    %3608 = vmatpush1.msra.mxu0 0.0
    %3609 = vmatprep.subr.mxu0 0.0
    %3610 = vmatpush1.msra.mxu0 0.0
    %3611 = vmatprep.subr.mxu0 0.0
    %3612 = vmatpush1.msra.mxu0 0.0
    %3613 = vmatprep.subr.mxu0 0.0
    %3614 = vmatpush1.msra.mxu0 0.0
    %3615 = vmatprep.subr.mxu0 0.0
    %3616 = vmatpush1.msra.mxu0 0.0
    %3617 = vmatprep.subr.mxu0 0.0
    %3618 = vmatpush1.msra.mxu0 0.0
    %3619 = vmatprep.subr.mxu0 0.0
    %3620 = vmatpush1.msra.mxu0 0.0
    %3621 = vmatprep.subr.mxu0 0.0
    %3622 = vmatpush1.msra.mxu0 0.0
    %3623 = vmatprep.subr.mxu0 0.0
    %3624 = vmatpush1.msra.mxu0 0.0
    %3625 = vmatprep.subr.mxu0 0.0
    %3626 = vmatpush1.msra.mxu0 0.0
    %3627 = vmatprep.subr.mxu0 0.0
    %3628 = vmatpush1.msra.mxu0 0.0
    %3629 = vmatprep.subr.mxu0 0.0
    %3630 = vmatpush1.msra.mxu0 0.0
    %3631 = vmatprep.subr.mxu0 0.0
    %3632 = vmatpush1.msra.mxu0 0.0
    %3633 = vmatprep.subr.mxu0 0.0
    %3634 = vmatpush1.msra.mxu0 0.0
    %3635 = vmatprep.mubr.f32.mxu0 0.0
    %v3636 = vand.u32 %v3530, 4294901760
    %v3637 = vsub.f32 %v3530, %v3636
    %v3638 = vand.u32 %v3637, 4294901760
    %v3639 = vsub.f32 %v3637, %v3638
    %v3640 = vand.u32 %v3639, 4294901760
    %3641 = vmatmul.mubr.f32.gmra.mrb[0].mxu0 %v3640
    %v3642 = vpop.f32.mrb[0].mxu0
    %v3643 = vadd.f32 %v3553, %v3642
    %v3644 = vpop.f32.mrb[0].mxu0
    %3645 = vmatprep.mubr.f32.mxu0 0.0
    %v3646 = vand.u32 %v3531, 4294901760
    %v3647 = vsub.f32 %v3531, %v3646
    %v3648 = vand.u32 %v3647, 4294901760
    %v3649 = vsub.f32 %v3647, %v3648
    %v3650 = vand.u32 %v3649, 4294901760
    %3651 = vmatmul.mubr.f32.gmra.mrb[0].mxu0 %v3650
    %v3652 = vpop.f32.mrb[0].mxu0
    %v3653 = vadd.f32 %v3553, %v3652
    %v3654 = vpop.f32.mrb[0].mxu0
    %3655 = vdwg.mxu0
    %3656 = vmatprep.subr.mxu0 0.0
    %v3657 = vand.u32 %v3532, 4294901760
    %v3658 = vsub.f32 %v3532, %v3657
    %v3659 = vand.u32 %v3658, 4294901760
    %v3660 = vsub.f32 %v3658, %v3659
    %v3661 = vand.u32 %v3660, 4294901760
    %3662 = vmatpush1.msra.mxu0 %v3661
    %3663 = vmatprep.subr.mxu0 0.0
    %v3664 = vand.u32 %v3533, 4294901760
    %v3665 = vsub.f32 %v3533, %v3664
    %v3666 = vand.u32 %v3665, 4294901760
    %v3667 = vsub.f32 %v3665, %v3666
    %v3668 = vand.u32 %v3667, 4294901760
    %3669 = vmatpush1.msra.mxu0 %v3668
    %3670 = vmatprep.subr.mxu0 0.0
    %v3671 = vand.u32 %v3534, 4294901760
    %v3672 = vsub.f32 %v3534, %v3671
    %v3673 = vand.u32 %v3672, 4294901760
    %v3674 = vsub.f32 %v3672, %v3673
    %v3675 = vand.u32 %v3674, 4294901760
    %3676 = vmatpush1.msra.mxu0 %v3675
    %3677 = vmatprep.subr.mxu0 0.0
    %v3678 = vand.u32 %v3535, 4294901760
    %v3679 = vsub.f32 %v3535, %v3678
    %v3680 = vand.u32 %v3679, 4294901760
    %v3681 = vsub.f32 %v3679, %v3680
    %v3682 = vand.u32 %v3681, 4294901760
    %3683 = vmatpush1.msra.mxu0 %v3682
    %3684 = vmatprep.subr.mxu0 0.0
    %v3685 = vand.u32 %v3536, 4294901760
    %v3686 = vsub.f32 %v3536, %v3685
    %v3687 = vand.u32 %v3686, 4294901760
    %v3688 = vsub.f32 %v3686, %v3687
    %v3689 = vand.u32 %v3688, 4294901760
    %3690 = vmatpush1.msra.mxu0 %v3689
    %3691 = vmatprep.subr.mxu0 0.0
    %v3692 = vand.u32 %v3537, 4294901760
    %v3693 = vsub.f32 %v3537, %v3692
    %v3694 = vand.u32 %v3693, 4294901760
    %v3695 = vsub.f32 %v3693, %v3694
    %v3696 = vand.u32 %v3695, 4294901760
    %3697 = vmatpush1.msra.mxu0 %v3696
    %3698 = vmatprep.subr.mxu0 0.0
    %v3699 = vand.u32 %v3538, 4294901760
    %v3700 = vsub.f32 %v3538, %v3699
    %v3701 = vand.u32 %v3700, 4294901760
    %v3702 = vsub.f32 %v3700, %v3701
    %v3703 = vand.u32 %v3702, 4294901760
    %3704 = vmatpush1.msra.mxu0 %v3703
    %3705 = vmatprep.subr.mxu0 0.0
    %v3706 = vand.u32 %v3539, 4294901760
    %v3707 = vsub.f32 %v3539, %v3706
    %v3708 = vand.u32 %v3707, 4294901760
    %v3709 = vsub.f32 %v3707, %v3708
    %v3710 = vand.u32 %v3709, 4294901760
    %3711 = vmatpush1.msra.mxu0 %v3710
    %3712 = vmatprep.subr.mxu0 0.0
    %v3713 = vand.u32 %v3540, 4294901760
    %v3714 = vsub.f32 %v3540, %v3713
    %v3715 = vand.u32 %v3714, 4294901760
    %v3716 = vsub.f32 %v3714, %v3715
    %v3717 = vand.u32 %v3716, 4294901760
    %3718 = vmatpush1.msra.mxu0 %v3717
    %3719 = vmatprep.subr.mxu0 0.0
    %v3720 = vand.u32 %v3541, 4294901760
    %v3721 = vsub.f32 %v3541, %v3720
    %v3722 = vand.u32 %v3721, 4294901760
    %v3723 = vsub.f32 %v3721, %v3722
    %v3724 = vand.u32 %v3723, 4294901760
    %3725 = vmatpush1.msra.mxu0 %v3724
    %3726 = vmatprep.subr.mxu0 0.0
    %v3727 = vand.u32 %v3542, 4294901760
    %v3728 = vsub.f32 %v3542, %v3727
    %v3729 = vand.u32 %v3728, 4294901760
    %v3730 = vsub.f32 %v3728, %v3729
    %v3731 = vand.u32 %v3730, 4294901760
    %3732 = vmatpush1.msra.mxu0 %v3731
    %3733 = vmatprep.subr.mxu0 0.0
    %v3734 = vand.u32 %v3543, 4294901760
    %v3735 = vsub.f32 %v3543, %v3734
    %v3736 = vand.u32 %v3735, 4294901760
    %v3737 = vsub.f32 %v3735, %v3736
    %v3738 = vand.u32 %v3737, 4294901760
    %3739 = vmatpush1.msra.mxu0 %v3738
    %3740 = vmatprep.subr.mxu0 0.0
    %v3741 = vand.u32 %v3544, 4294901760
    %v3742 = vsub.f32 %v3544, %v3741
    %v3743 = vand.u32 %v3742, 4294901760
    %v3744 = vsub.f32 %v3742, %v3743
    %v3745 = vand.u32 %v3744, 4294901760
    %3746 = vmatpush1.msra.mxu0 %v3745
    %3747 = vmatprep.subr.mxu0 0.0
    %v3748 = vand.u32 %v3545, 4294901760
    %v3749 = vsub.f32 %v3545, %v3748
    %v3750 = vand.u32 %v3749, 4294901760
    %v3751 = vsub.f32 %v3749, %v3750
    %v3752 = vand.u32 %v3751, 4294901760
    %3753 = vmatpush1.msra.mxu0 %v3752
    %3754 = vmatprep.subr.mxu0 0.0
    %v3755 = vand.u32 %v3546, 4294901760
    %v3756 = vsub.f32 %v3546, %v3755
    %v3757 = vand.u32 %v3756, 4294901760
    %v3758 = vsub.f32 %v3756, %v3757
    %v3759 = vand.u32 %v3758, 4294901760
    %3760 = vmatpush1.msra.mxu0 %v3759
    %3761 = vmatprep.subr.mxu0 0.0
    %v3762 = vand.u32 %v3547, 4294901760
    %v3763 = vsub.f32 %v3547, %v3762
    %v3764 = vand.u32 %v3763, 4294901760
    %v3765 = vsub.f32 %v3763, %v3764
    %v3766 = vand.u32 %v3765, 4294901760
    %3767 = vmatpush1.msra.mxu0 %v3766
    %3768 = vmatprep.subr.mxu0 0.0
    %3769 = vmatpush1.msra.mxu0 0.0
    %3770 = vmatprep.subr.mxu0 0.0
    %3771 = vmatpush1.msra.mxu0 0.0
    %3772 = vmatprep.subr.mxu0 0.0
    %3773 = vmatpush1.msra.mxu0 0.0
    %3774 = vmatprep.subr.mxu0 0.0
    %3775 = vmatpush1.msra.mxu0 0.0
    %3776 = vmatprep.subr.mxu0 0.0
    %3777 = vmatpush1.msra.mxu0 0.0
    %3778 = vmatprep.subr.mxu0 0.0
    %3779 = vmatpush1.msra.mxu0 0.0
    %3780 = vmatprep.subr.mxu0 0.0
    %3781 = vmatpush1.msra.mxu0 0.0
    %3782 = vmatprep.subr.mxu0 0.0
    %3783 = vmatpush1.msra.mxu0 0.0
    %3784 = vmatprep.subr.mxu0 0.0
    %3785 = vmatpush1.msra.mxu0 0.0
    %3786 = vmatprep.subr.mxu0 0.0
    %3787 = vmatpush1.msra.mxu0 0.0
    %3788 = vmatprep.subr.mxu0 0.0
    %3789 = vmatpush1.msra.mxu0 0.0
    %3790 = vmatprep.subr.mxu0 0.0
    %3791 = vmatpush1.msra.mxu0 0.0
    %3792 = vmatprep.subr.mxu0 0.0
    %3793 = vmatpush1.msra.mxu0 0.0
    %3794 = vmatprep.subr.mxu0 0.0
    %3795 = vmatpush1.msra.mxu0 0.0
    %3796 = vmatprep.subr.mxu0 0.0
    %3797 = vmatpush1.msra.mxu0 0.0
    %3798 = vmatprep.subr.mxu0 0.0
    %3799 = vmatpush1.msra.mxu0 0.0
    %3800 = vmatprep.mubr.f32.mxu0 0.0
    %v3801 = vand.u32 %v3530, 4294901760
    %3802 = vmatmul.mubr.f32.gmra.mrb[0].mxu0 %v3801
    %v3803 = vpop.f32.mrb[0].mxu0
    %v3804 = vadd.f32 %v3643, %v3803
    %v3805 = vpop.f32.mrb[0].mxu0
    %3806 = vmatprep.mubr.f32.mxu0 0.0
    %v3807 = vand.u32 %v3531, 4294901760
    %3808 = vmatmul.mubr.f32.gmra.mrb[0].mxu0 %v3807
    %v3809 = vpop.f32.mrb[0].mxu0
    %v3810 = vadd.f32 %v3653, %v3809
    %v3811 = vpop.f32.mrb[0].mxu0
    %3812 = vdwg.mxu0
    %3813 = vmatprep.subr.mxu0 0.0
    %v3814 = vand.u32 %v3532, 4294901760
    %v3815 = vsub.f32 %v3532, %v3814
    %3816 = vmatpush1.msra.mxu0 %v3815
    %3817 = vmatprep.subr.mxu0 0.0
    %v3818 = vand.u32 %v3533, 4294901760
    %v3819 = vsub.f32 %v3533, %v3818
    %3820 = vmatpush1.msra.mxu0 %v3819
    %3821 = vmatprep.subr.mxu0 0.0
    %v3822 = vand.u32 %v3534, 4294901760
    %v3823 = vsub.f32 %v3534, %v3822
    %3824 = vmatpush1.msra.mxu0 %v3823
    %3825 = vmatprep.subr.mxu0 0.0
    %v3826 = vand.u32 %v3535, 4294901760
    %v3827 = vsub.f32 %v3535, %v3826
    %3828 = vmatpush1.msra.mxu0 %v3827
    %3829 = vmatprep.subr.mxu0 0.0
    %v3830 = vand.u32 %v3536, 4294901760
    %v3831 = vsub.f32 %v3536, %v3830
    %3832 = vmatpush1.msra.mxu0 %v3831
    %3833 = vmatprep.subr.mxu0 0.0
    %v3834 = vand.u32 %v3537, 4294901760
    %v3835 = vsub.f32 %v3537, %v3834
    %3836 = vmatpush1.msra.mxu0 %v3835
    %3837 = vmatprep.subr.mxu0 0.0
    %v3838 = vand.u32 %v3538, 4294901760
    %v3839 = vsub.f32 %v3538, %v3838
    %3840 = vmatpush1.msra.mxu0 %v3839
    %3841 = vmatprep.subr.mxu0 0.0
    %v3842 = vand.u32 %v3539, 4294901760
    %v3843 = vsub.f32 %v3539, %v3842
    %3844 = vmatpush1.msra.mxu0 %v3843
    %3845 = vmatprep.subr.mxu0 0.0
    %v3846 = vand.u32 %v3540, 4294901760
    %v3847 = vsub.f32 %v3540, %v3846
    %3848 = vmatpush1.msra.mxu0 %v3847
    %3849 = vmatprep.subr.mxu0 0.0
    %v3850 = vand.u32 %v3541, 4294901760
    %v3851 = vsub.f32 %v3541, %v3850
    %3852 = vmatpush1.msra.mxu0 %v3851
    %3853 = vmatprep.subr.mxu0 0.0
    %v3854 = vand.u32 %v3542, 4294901760
    %v3855 = vsub.f32 %v3542, %v3854
    %3856 = vmatpush1.msra.mxu0 %v3855
    %3857 = vmatprep.subr.mxu0 0.0
    %v3858 = vand.u32 %v3543, 4294901760
    %v3859 = vsub.f32 %v3543, %v3858
    %3860 = vmatpush1.msra.mxu0 %v3859
    %3861 = vmatprep.subr.mxu0 0.0
    %v3862 = vand.u32 %v3544, 4294901760
    %v3863 = vsub.f32 %v3544, %v3862
    %3864 = vmatpush1.msra.mxu0 %v3863
    %3865 = vmatprep.subr.mxu0 0.0
    %v3866 = vand.u32 %v3545, 4294901760
    %v3867 = vsub.f32 %v3545, %v3866
    %3868 = vmatpush1.msra.mxu0 %v3867
    %3869 = vmatprep.subr.mxu0 0.0
    %v3870 = vand.u32 %v3546, 4294901760
    %v3871 = vsub.f32 %v3546, %v3870
    %3872 = vmatpush1.msra.mxu0 %v3871
    %3873 = vmatprep.subr.mxu0 0.0
    %v3874 = vand.u32 %v3547, 4294901760
    %v3875 = vsub.f32 %v3547, %v3874
    %3876 = vmatpush1.msra.mxu0 %v3875
    %3877 = vmatprep.subr.mxu0 0.0
    %3878 = vmatpush1.msra.mxu0 0.0
    %3879 = vmatprep.subr.mxu0 0.0
    %3880 = vmatpush1.msra.mxu0 0.0
    %3881 = vmatprep.subr.mxu0 0.0
    %3882 = vmatpush1.msra.mxu0 0.0
    %3883 = vmatprep.subr.mxu0 0.0
    %3884 = vmatpush1.msra.mxu0 0.0
    %3885 = vmatprep.subr.mxu0 0.0
    %3886 = vmatpush1.msra.mxu0 0.0
    %3887 = vmatprep.subr.mxu0 0.0
    %3888 = vmatpush1.msra.mxu0 0.0
    %3889 = vmatprep.subr.mxu0 0.0
    %3890 = vmatpush1.msra.mxu0 0.0
    %3891 = vmatprep.subr.mxu0 0.0
    %3892 = vmatpush1.msra.mxu0 0.0
    %3893 = vmatprep.subr.mxu0 0.0
    %3894 = vmatpush1.msra.mxu0 0.0
    %3895 = vmatprep.subr.mxu0 0.0
    %3896 = vmatpush1.msra.mxu0 0.0
    %3897 = vmatprep.subr.mxu0 0.0
    %3898 = vmatpush1.msra.mxu0 0.0
    %3899 = vmatprep.subr.mxu0 0.0
    %3900 = vmatpush1.msra.mxu0 0.0
    %3901 = vmatprep.subr.mxu0 0.0
    %3902 = vmatpush1.msra.mxu0 0.0
    %3903 = vmatprep.subr.mxu0 0.0
    %3904 = vmatpush1.msra.mxu0 0.0
    %3905 = vmatprep.subr.mxu0 0.0
    %3906 = vmatpush1.msra.mxu0 0.0
    %3907 = vmatprep.subr.mxu0 0.0
    %3908 = vmatpush1.msra.mxu0 0.0
    %3909 = vmatprep.mubr.f32.mxu0 0.0
    %v3910 = vand.u32 %v3530, 4294901760
    %v3911 = vsub.f32 %v3530, %v3910
    %3912 = vmatmul.mubr.f32.gmra.mrb[0].mxu0 %v3911
    %v3913 = vpop.f32.mrb[0].mxu0
    %v3914 = vadd.f32 %v3804, %v3913
    %v3915 = vpop.f32.mrb[0].mxu0
    %3916 = vmatprep.mubr.f32.mxu0 0.0
    %v3917 = vand.u32 %v3531, 4294901760
    %v3918 = vsub.f32 %v3531, %v3917
    %3919 = vmatmul.mubr.f32.gmra.mrb[0].mxu0 %v3918
    %v3920 = vpop.f32.mrb[0].mxu0
    %v3921 = vadd.f32 %v3810, %v3920
    %v3922 = vpop.f32.mrb[0].mxu0
    %3923 = vdwg.mxu0
    %3924 = vmatprep.subr.mxu0 0.0
    %v3925 = vand.u32 %v3532, 4294901760
    %3926 = vmatpush1.msra.mxu0 %v3925
    %3927 = vmatprep.subr.mxu0 0.0
    %v3928 = vand.u32 %v3533, 4294901760
    %3929 = vmatpush1.msra.mxu0 %v3928
    %3930 = vmatprep.subr.mxu0 0.0
    %v3931 = vand.u32 %v3534, 4294901760
    %3932 = vmatpush1.msra.mxu0 %v3931
    %3933 = vmatprep.subr.mxu0 0.0
    %v3934 = vand.u32 %v3535, 4294901760
    %3935 = vmatpush1.msra.mxu0 %v3934
    %3936 = vmatprep.subr.mxu0 0.0
    %v3937 = vand.u32 %v3536, 4294901760
    %3938 = vmatpush1.msra.mxu0 %v3937
    %3939 = vmatprep.subr.mxu0 0.0
    %v3940 = vand.u32 %v3537, 4294901760
    %3941 = vmatpush1.msra.mxu0 %v3940
    %3942 = vmatprep.subr.mxu0 0.0
    %v3943 = vand.u32 %v3538, 4294901760
    %3944 = vmatpush1.msra.mxu0 %v3943
    %3945 = vmatprep.subr.mxu0 0.0
    %v3946 = vand.u32 %v3539, 4294901760
    %3947 = vmatpush1.msra.mxu0 %v3946
    %3948 = vmatprep.subr.mxu0 0.0
    %v3949 = vand.u32 %v3540, 4294901760
    %3950 = vmatpush1.msra.mxu0 %v3949
    %3951 = vmatprep.subr.mxu0 0.0
    %v3952 = vand.u32 %v3541, 4294901760
    %3953 = vmatpush1.msra.mxu0 %v3952
    %3954 = vmatprep.subr.mxu0 0.0
    %v3955 = vand.u32 %v3542, 4294901760
    %3956 = vmatpush1.msra.mxu0 %v3955
    %3957 = vmatprep.subr.mxu0 0.0
    %v3958 = vand.u32 %v3543, 4294901760
    %3959 = vmatpush1.msra.mxu0 %v3958
    %3960 = vmatprep.subr.mxu0 0.0
    %v3961 = vand.u32 %v3544, 4294901760
    %3962 = vmatpush1.msra.mxu0 %v3961
    %3963 = vmatprep.subr.mxu0 0.0
    %v3964 = vand.u32 %v3545, 4294901760
    %3965 = vmatpush1.msra.mxu0 %v3964
    %3966 = vmatprep.subr.mxu0 0.0
    %v3967 = vand.u32 %v3546, 4294901760
    %3968 = vmatpush1.msra.mxu0 %v3967
    %3969 = vmatprep.subr.mxu0 0.0
    %v3970 = vand.u32 %v3547, 4294901760
    %3971 = vmatpush1.msra.mxu0 %v3970
    %3972 = vmatprep.subr.mxu0 0.0
    %3973 = vmatpush1.msra.mxu0 0.0
    %3974 = vmatprep.subr.mxu0 0.0
    %3975 = vmatpush1.msra.mxu0 0.0
    %3976 = vmatprep.subr.mxu0 0.0
    %3977 = vmatpush1.msra.mxu0 0.0
    %3978 = vmatprep.subr.mxu0 0.0
    %3979 = vmatpush1.msra.mxu0 0.0
    %3980 = vmatprep.subr.mxu0 0.0
    %3981 = vmatpush1.msra.mxu0 0.0
    %3982 = vmatprep.subr.mxu0 0.0
    %3983 = vmatpush1.msra.mxu0 0.0
    %3984 = vmatprep.subr.mxu0 0.0
    %3985 = vmatpush1.msra.mxu0 0.0
    %3986 = vmatprep.subr.mxu0 0.0
    %3987 = vmatpush1.msra.mxu0 0.0
    %3988 = vmatprep.subr.mxu0 0.0
    %3989 = vmatpush1.msra.mxu0 0.0
    %3990 = vmatprep.subr.mxu0 0.0
    %3991 = vmatpush1.msra.mxu0 0.0
    %3992 = vmatprep.subr.mxu0 0.0
    %3993 = vmatpush1.msra.mxu0 0.0
    %3994 = vmatprep.subr.mxu0 0.0
    %3995 = vmatpush1.msra.mxu0 0.0
    %3996 = vmatprep.subr.mxu0 0.0
    %3997 = vmatpush1.msra.mxu0 0.0
    %3998 = vmatprep.subr.mxu0 0.0
    %3999 = vmatpush1.msra.mxu0 0.0
    %4000 = vmatprep.subr.mxu0 0.0
    %4001 = vmatpush1.msra.mxu0 0.0
    %4002 = vmatprep.subr.mxu0 0.0
    %4003 = vmatpush1.msra.mxu0 0.0
    %4004 = vmatprep.mubr.f32.mxu0 0.0
    %v4005 = vand.u32 %v3530, 4294901760
    %v4006 = vsub.f32 %v3530, %v4005
    %v4007 = vand.u32 %v4006, 4294901760
    %4008 = vmatmul.mubr.f32.gmra.mrb[0].mxu0 %v4007
    %v4009 = vpop.f32.mrb[0].mxu0
    %v4010 = vadd.f32 %v3914, %v4009
    %v4011 = vpop.f32.mrb[0].mxu0
    %4012 = vmatprep.mubr.f32.mxu0 0.0
    %v4013 = vand.u32 %v3531, 4294901760
    %v4014 = vsub.f32 %v3531, %v4013
    %v4015 = vand.u32 %v4014, 4294901760
    %4016 = vmatmul.mubr.f32.gmra.mrb[0].mxu0 %v4015
    %v4017 = vpop.f32.mrb[0].mxu0
    %v4018 = vadd.f32 %v3921, %v4017
    %v4019 = vpop.f32.mrb[0].mxu0
    %4020 = vdwg.mxu0
    %4021 = vmatprep.subr.mxu0 0.0
    %v4022 = vand.u32 %v3532, 4294901760
    %v4023 = vsub.f32 %v3532, %v4022
    %v4024 = vand.u32 %v4023, 4294901760
    %4025 = vmatpush1.msra.mxu0 %v4024
    %4026 = vmatprep.subr.mxu0 0.0
    %v4027 = vand.u32 %v3533, 4294901760
    %v4028 = vsub.f32 %v3533, %v4027
    %v4029 = vand.u32 %v4028, 4294901760
    %4030 = vmatpush1.msra.mxu0 %v4029
    %4031 = vmatprep.subr.mxu0 0.0
    %v4032 = vand.u32 %v3534, 4294901760
    %v4033 = vsub.f32 %v3534, %v4032
    %v4034 = vand.u32 %v4033, 4294901760
    %4035 = vmatpush1.msra.mxu0 %v4034
    %4036 = vmatprep.subr.mxu0 0.0
    %v4037 = vand.u32 %v3535, 4294901760
    %v4038 = vsub.f32 %v3535, %v4037
    %v4039 = vand.u32 %v4038, 4294901760
    %4040 = vmatpush1.msra.mxu0 %v4039
    %4041 = vmatprep.subr.mxu0 0.0
    %v4042 = vand.u32 %v3536, 4294901760
    %v4043 = vsub.f32 %v3536, %v4042
    %v4044 = vand.u32 %v4043, 4294901760
    %4045 = vmatpush1.msra.mxu0 %v4044
    %4046 = vmatprep.subr.mxu0 0.0
    %v4047 = vand.u32 %v3537, 4294901760
    %v4048 = vsub.f32 %v3537, %v4047
    %v4049 = vand.u32 %v4048, 4294901760
    %4050 = vmatpush1.msra.mxu0 %v4049
    %4051 = vmatprep.subr.mxu0 0.0
    %v4052 = vand.u32 %v3538, 4294901760
    %v4053 = vsub.f32 %v3538, %v4052
    %v4054 = vand.u32 %v4053, 4294901760
    %4055 = vmatpush1.msra.mxu0 %v4054
    %4056 = vmatprep.subr.mxu0 0.0
    %v4057 = vand.u32 %v3539, 4294901760
    %v4058 = vsub.f32 %v3539, %v4057
    %v4059 = vand.u32 %v4058, 4294901760
    %4060 = vmatpush1.msra.mxu0 %v4059
    %4061 = vmatprep.subr.mxu0 0.0
    %v4062 = vand.u32 %v3540, 4294901760
    %v4063 = vsub.f32 %v3540, %v4062
    %v4064 = vand.u32 %v4063, 4294901760
    %4065 = vmatpush1.msra.mxu0 %v4064
    %4066 = vmatprep.subr.mxu0 0.0
    %v4067 = vand.u32 %v3541, 4294901760
    %v4068 = vsub.f32 %v3541, %v4067
    %v4069 = vand.u32 %v4068, 4294901760
    %4070 = vmatpush1.msra.mxu0 %v4069
    %4071 = vmatprep.subr.mxu0 0.0
    %v4072 = vand.u32 %v3542, 4294901760
    %v4073 = vsub.f32 %v3542, %v4072
    %v4074 = vand.u32 %v4073, 4294901760
    %4075 = vmatpush1.msra.mxu0 %v4074
    %4076 = vmatprep.subr.mxu0 0.0
    %v4077 = vand.u32 %v3543, 4294901760
    %v4078 = vsub.f32 %v3543, %v4077
    %v4079 = vand.u32 %v4078, 4294901760
    %4080 = vmatpush1.msra.mxu0 %v4079
    %4081 = vmatprep.subr.mxu0 0.0
    %v4082 = vand.u32 %v3544, 4294901760
    %v4083 = vsub.f32 %v3544, %v4082
    %v4084 = vand.u32 %v4083, 4294901760
    %4085 = vmatpush1.msra.mxu0 %v4084
    %4086 = vmatprep.subr.mxu0 0.0
    %v4087 = vand.u32 %v3545, 4294901760
    %v4088 = vsub.f32 %v3545, %v4087
    %v4089 = vand.u32 %v4088, 4294901760
    %4090 = vmatpush1.msra.mxu0 %v4089
    %4091 = vmatprep.subr.mxu0 0.0
    %v4092 = vand.u32 %v3546, 4294901760
    %v4093 = vsub.f32 %v3546, %v4092
    %v4094 = vand.u32 %v4093, 4294901760
    %4095 = vmatpush1.msra.mxu0 %v4094
    %4096 = vmatprep.subr.mxu0 0.0
    %v4097 = vand.u32 %v3547, 4294901760
    %v4098 = vsub.f32 %v3547, %v4097
    %v4099 = vand.u32 %v4098, 4294901760
    %4100 = vmatpush1.msra.mxu0 %v4099
    %4101 = vmatprep.subr.mxu0 0.0
    %4102 = vmatpush1.msra.mxu0 0.0
    %4103 = vmatprep.subr.mxu0 0.0
    %4104 = vmatpush1.msra.mxu0 0.0
    %4105 = vmatprep.subr.mxu0 0.0
    %4106 = vmatpush1.msra.mxu0 0.0
    %4107 = vmatprep.subr.mxu0 0.0
    %4108 = vmatpush1.msra.mxu0 0.0
    %4109 = vmatprep.subr.mxu0 0.0
    %4110 = vmatpush1.msra.mxu0 0.0
    %4111 = vmatprep.subr.mxu0 0.0
    %4112 = vmatpush1.msra.mxu0 0.0
    %4113 = vmatprep.subr.mxu0 0.0
    %4114 = vmatpush1.msra.mxu0 0.0
    %4115 = vmatprep.subr.mxu0 0.0
    %4116 = vmatpush1.msra.mxu0 0.0
    %4117 = vmatprep.subr.mxu0 0.0
    %4118 = vmatpush1.msra.mxu0 0.0
    %4119 = vmatprep.subr.mxu0 0.0
    %4120 = vmatpush1.msra.mxu0 0.0
    %4121 = vmatprep.subr.mxu0 0.0
    %4122 = vmatpush1.msra.mxu0 0.0
    %4123 = vmatprep.subr.mxu0 0.0
    %4124 = vmatpush1.msra.mxu0 0.0
    %4125 = vmatprep.subr.mxu0 0.0
    %4126 = vmatpush1.msra.mxu0 0.0
    %4127 = vmatprep.subr.mxu0 0.0
    %4128 = vmatpush1.msra.mxu0 0.0
    %4129 = vmatprep.subr.mxu0 0.0
    %4130 = vmatpush1.msra.mxu0 0.0
    %4131 = vmatprep.subr.mxu0 0.0
    %4132 = vmatpush1.msra.mxu0 0.0
    %4133 = vmatprep.mubr.f32.mxu0 0.0
    %v4134 = vand.u32 %v3530, 4294901760
    %4135 = vmatmul.mubr.f32.gmra.mrb[0].mxu0 %v4134
    %v4136 = vpop.f32.mrb[0].mxu0
    %v4137 = vadd.f32 %v4010, %v4136
    %v4138 = vpop.f32.mrb[0].mxu0
    %4139 = vmatprep.mubr.f32.mxu0 0.0
    %v4140 = vand.u32 %v3531, 4294901760
    %4141 = vmatmul.mubr.f32.gmra.mrb[0].mxu0 %v4140
    %v4142 = vpop.f32.mrb[0].mxu0
    %v4143 = vadd.f32 %v4018, %v4142
    %v4144 = vpop.f32.mrb[0].mxu0
    %4145 = vdwg.mxu0
    %4146 = vmatprep.subr.mxu0 0.0
    %v4147 = vand.u32 %v3532, 4294901760
    %4148 = vmatpush1.msra.mxu0 %v4147
    %4149 = vmatprep.subr.mxu0 0.0
    %v4150 = vand.u32 %v3533, 4294901760
    %4151 = vmatpush1.msra.mxu0 %v4150
    %4152 = vmatprep.subr.mxu0 0.0
    %v4153 = vand.u32 %v3534, 4294901760
    %4154 = vmatpush1.msra.mxu0 %v4153
    %4155 = vmatprep.subr.mxu0 0.0
    %v4156 = vand.u32 %v3535, 4294901760
    %4157 = vmatpush1.msra.mxu0 %v4156
    %4158 = vmatprep.subr.mxu0 0.0
    %v4159 = vand.u32 %v3536, 4294901760
    %4160 = vmatpush1.msra.mxu0 %v4159
    %4161 = vmatprep.subr.mxu0 0.0
    %v4162 = vand.u32 %v3537, 4294901760
    %4163 = vmatpush1.msra.mxu0 %v4162
    %4164 = vmatprep.subr.mxu0 0.0
    %v4165 = vand.u32 %v3538, 4294901760
    %4166 = vmatpush1.msra.mxu0 %v4165
    %4167 = vmatprep.subr.mxu0 0.0
    %v4168 = vand.u32 %v3539, 4294901760
    %4169 = vmatpush1.msra.mxu0 %v4168
    %4170 = vmatprep.subr.mxu0 0.0
    %v4171 = vand.u32 %v3540, 4294901760
    %4172 = vmatpush1.msra.mxu0 %v4171
    %4173 = vmatprep.subr.mxu0 0.0
    %v4174 = vand.u32 %v3541, 4294901760
    %4175 = vmatpush1.msra.mxu0 %v4174
    %4176 = vmatprep.subr.mxu0 0.0
    %v4177 = vand.u32 %v3542, 4294901760
    %4178 = vmatpush1.msra.mxu0 %v4177
    %4179 = vmatprep.subr.mxu0 0.0
    %v4180 = vand.u32 %v3543, 4294901760
    %4181 = vmatpush1.msra.mxu0 %v4180
    %4182 = vmatprep.subr.mxu0 0.0
    %v4183 = vand.u32 %v3544, 4294901760
    %4184 = vmatpush1.msra.mxu0 %v4183
    %4185 = vmatprep.subr.mxu0 0.0
    %v4186 = vand.u32 %v3545, 4294901760
    %4187 = vmatpush1.msra.mxu0 %v4186
    %4188 = vmatprep.subr.mxu0 0.0
    %v4189 = vand.u32 %v3546, 4294901760
    %4190 = vmatpush1.msra.mxu0 %v4189
    %4191 = vmatprep.subr.mxu0 0.0
    %v4192 = vand.u32 %v3547, 4294901760
    %4193 = vmatpush1.msra.mxu0 %v4192
    %4194 = vmatprep.subr.mxu0 0.0
    %4195 = vmatpush1.msra.mxu0 0.0
    %4196 = vmatprep.subr.mxu0 0.0
    %4197 = vmatpush1.msra.mxu0 0.0
    %4198 = vmatprep.subr.mxu0 0.0
    %4199 = vmatpush1.msra.mxu0 0.0
    %4200 = vmatprep.subr.mxu0 0.0
    %4201 = vmatpush1.msra.mxu0 0.0
    %4202 = vmatprep.subr.mxu0 0.0
    %4203 = vmatpush1.msra.mxu0 0.0
    %4204 = vmatprep.subr.mxu0 0.0
    %4205 = vmatpush1.msra.mxu0 0.0
    %4206 = vmatprep.subr.mxu0 0.0
    %4207 = vmatpush1.msra.mxu0 0.0
    %4208 = vmatprep.subr.mxu0 0.0
    %4209 = vmatpush1.msra.mxu0 0.0
    %4210 = vmatprep.subr.mxu0 0.0
    %4211 = vmatpush1.msra.mxu0 0.0
    %4212 = vmatprep.subr.mxu0 0.0
    %4213 = vmatpush1.msra.mxu0 0.0
    %4214 = vmatprep.subr.mxu0 0.0
    %4215 = vmatpush1.msra.mxu0 0.0
    %4216 = vmatprep.subr.mxu0 0.0
    %4217 = vmatpush1.msra.mxu0 0.0
    %4218 = vmatprep.subr.mxu0 0.0
    %4219 = vmatpush1.msra.mxu0 0.0
    %4220 = vmatprep.subr.mxu0 0.0
    %4221 = vmatpush1.msra.mxu0 0.0
    %4222 = vmatprep.subr.mxu0 0.0
    %4223 = vmatpush1.msra.mxu0 0.0
    %4224 = vmatprep.subr.mxu0 0.0
    %4225 = vmatpush1.msra.mxu0 0.0
    %4226 = vmatprep.mubr.f32.mxu0 0.0
    %v4227 = vand.u32 %v3530, 4294901760
    %4228 = vmatmul.mubr.f32.gmra.mrb[0].mxu0 %v4227
    %v4229 = vpop.f32.mrb[0].mxu0
    %v4230 = vadd.f32 %v4137, %v4229
    %v4231 = vpop.f32.mrb[0].mxu0
    %4232 = vmatprep.mubr.f32.mxu0 0.0
    %v4233 = vand.u32 %v3531, 4294901760
    %4234 = vmatmul.mubr.f32.gmra.mrb[0].mxu0 %v4233
    %v4235 = vpop.f32.mrb[0].mxu0
    %v4236 = vadd.f32 %v4143, %v4235
    %v4237 = vpop.f32.mrb[0].mxu0
    %4238 = vdwg.mxu0
    %v4239 = vxor.u32 %v4230, 2147483648
    %v4240 = vxor.u32 %v4236, 2147483648
    %v4241 = vmul.f32 %v4239, 1.442695
    %v4242 = vpow.pop %v4241
    %v4243 = vmul.f32 %v4240, 1.442695
    %v4244 = vpow.pop %v4243
    %v4245 = vadd.f32 %v4242, 1.0
    %v4246 = vadd.f32 %v4244, 1.0
    %v4247 = vrcp.pop %v4245
    %v4248 = vmul.f32 1.0, %v4247
    %v4249 = vrcp.pop %v4246
    %v4250 = vmul.f32 1.0, %v4249
    %v4251 = vmul.f32 %v4230, %v4248
    %v4252 = vmul.f32 %v4236, %v4250
    %v4253 = vld [vmem:[%s11] sm:$0xff]
    %v4254 = vld [vmem:[%s11 + $0x8] sm:$0xff]
    %v4255 = vld [vmem:[%s11 + $0x10] sm:$0xff]
    %v4256 = vld [vmem:[%s11 + $0x18] sm:$0xff]
    %v4257 = vld [vmem:[%s11 + $0x20] sm:$0xff]
    %v4258 = vld [vmem:[%s11 + $0x28] sm:$0xff]
    %v4259 = vld [vmem:[%s11 + $0x30] sm:$0xff]
    %v4260 = vld [vmem:[%s11 + $0x38] sm:$0xff]
    %v4261 = vld [vmem:[%s11 + $0x40] sm:$0xff]
    %v4262 = vld [vmem:[%s11 + $0x48] sm:$0xff]
    %v4263 = vld [vmem:[%s11 + $0x50] sm:$0xff]
    %v4264 = vld [vmem:[%s11 + $0x58] sm:$0xff]
    %v4267 = vrot.slane %v4251, 7
    %v4268 = vrot.slane %v4252, 7
    %v4271 = vsel %vm800, 0.0, %v4267
    %v4272 = vsel %vm800, 0.0, %v4268
    %v4273 = vsel %vm800, %v4267, 0.0
    %v4274 = vsel %vm800, %v4268, 0.0
    %vm4279 = vcmask 1046528
    %v4280 = vrot.slane %v4271, 1
    %v4281 = vrot.slane %v4273, 1
    %v4282 = vsel %vm4279, %v4280, %v4281
    %v4283 = vrot.slane %v4272, 1
    %v4284 = vrot.slane %v4274, 1
    %v4285 = vsel %vm4279, %v4283, %v4284
    %v4286 = vsel %vm817, %v4282, 0
    %v4288 = vsel %vm817, %v4285, 0
    %4290 = vmatprep.subr.mxu0 0.0
    %v4291 = vand.u32 %v4257, 4294901760
    %4292 = vmatpush1.msra.mxu0 %v4291
    %4293 = vmatprep.subr.mxu0 0.0
    %v4294 = vand.u32 %v4258, 4294901760
    %4295 = vmatpush1.msra.mxu0 %v4294
    %4296 = vmatprep.subr.mxu0 0.0
    %v4297 = vand.u32 %v4259, 4294901760
    %4298 = vmatpush1.msra.mxu0 %v4297
    %4299 = vmatprep.subr.mxu0 0.0
    %v4300 = vand.u32 %v4260, 4294901760
    %4301 = vmatpush1.msra.mxu0 %v4300
    %4302 = vmatprep.subr.mxu0 0.0
    %4303 = vmatpush1.msra.mxu0 0.0
    %4304 = vmatprep.subr.mxu0 0.0
    %4305 = vmatpush1.msra.mxu0 0.0
    %4306 = vmatprep.subr.mxu0 0.0
    %4307 = vmatpush1.msra.mxu0 0.0
    %4308 = vmatprep.subr.mxu0 0.0
    %4309 = vmatpush1.msra.mxu0 0.0
    %4310 = vmatprep.subr.mxu0 0.0
    %4311 = vmatpush1.msra.mxu0 0.0
    %4312 = vmatprep.subr.mxu0 0.0
    %4313 = vmatpush1.msra.mxu0 0.0
    %4314 = vmatprep.subr.mxu0 0.0
    %4315 = vmatpush1.msra.mxu0 0.0
    %4316 = vmatprep.subr.mxu0 0.0
    %4317 = vmatpush1.msra.mxu0 0.0
    %4318 = vmatprep.subr.mxu0 0.0
    %4319 = vmatpush1.msra.mxu0 0.0
    %4320 = vmatprep.subr.mxu0 0.0
    %4321 = vmatpush1.msra.mxu0 0.0
    %4322 = vmatprep.subr.mxu0 0.0
    %4323 = vmatpush1.msra.mxu0 0.0
    %4324 = vmatprep.subr.mxu0 0.0
    %4325 = vmatpush1.msra.mxu0 0.0
    %4326 = vmatprep.subr.mxu0 0.0
    %4327 = vmatpush1.msra.mxu0 0.0
    %4328 = vmatprep.subr.mxu0 0.0
    %4329 = vmatpush1.msra.mxu0 0.0
    %4330 = vmatprep.subr.mxu0 0.0
    %4331 = vmatpush1.msra.mxu0 0.0
    %4332 = vmatprep.subr.mxu0 0.0
    %4333 = vmatpush1.msra.mxu0 0.0
    %4334 = vmatprep.subr.mxu0 0.0
    %4335 = vmatpush1.msra.mxu0 0.0
    %4336 = vmatprep.subr.mxu0 0.0
    %4337 = vmatpush1.msra.mxu0 0.0
    %4338 = vmatprep.subr.mxu0 0.0
    %4339 = vmatpush1.msra.mxu0 0.0
    %4340 = vmatprep.subr.mxu0 0.0
    %4341 = vmatpush1.msra.mxu0 0.0
    %4342 = vmatprep.subr.mxu0 0.0
    %4343 = vmatpush1.msra.mxu0 0.0
    %4344 = vmatprep.subr.mxu0 0.0
    %4345 = vmatpush1.msra.mxu0 0.0
    %4346 = vmatprep.subr.mxu0 0.0
    %4347 = vmatpush1.msra.mxu0 0.0
    %4348 = vmatprep.subr.mxu0 0.0
    %4349 = vmatpush1.msra.mxu0 0.0
    %4350 = vmatprep.subr.mxu0 0.0
    %4351 = vmatpush1.msra.mxu0 0.0
    %4352 = vmatprep.subr.mxu0 0.0
    %4353 = vmatpush1.msra.mxu0 0.0
    %4354 = vmatprep.subr.mxu0 0.0
    %4355 = vmatpush1.msra.mxu0 0.0
    %4356 = vmatprep.subr.mxu0 0.0
    %4357 = vmatpush1.msra.mxu0 0.0
    %4358 = vmatprep.mubr.f32.mxu0 0.0
    %v4359 = vand.u32 %v4286, 4294901760
    %v4360 = vsub.f32 %v4286, %v4359
    %v4361 = vand.u32 %v4360, 4294901760
    %v4362 = vsub.f32 %v4360, %v4361
    %v4363 = vand.u32 %v4362, 4294901760
    %4364 = vmatmul.mubr.f32.gmra.mrb[0].mxu0 %v4363
    %v4365 = vpop.f32.mrb[0].mxu0
    %v4366 = vadd.f32 0.0, %v4365
    %v4367 = vpop.f32.mrb[0].mxu0
    %4368 = vmatprep.mubr.f32.mxu0 0.0
    %v4369 = vand.u32 %v4288, 4294901760
    %v4370 = vsub.f32 %v4288, %v4369
    %v4371 = vand.u32 %v4370, 4294901760
    %v4372 = vsub.f32 %v4370, %v4371
    %v4373 = vand.u32 %v4372, 4294901760
    %4374 = vmatmul.mubr.f32.gmra.mrb[0].mxu0 %v4373
    %v4375 = vpop.f32.mrb[0].mxu0
    %v4376 = vadd.f32 0.0, %v4375
    %v4377 = vpop.f32.mrb[0].mxu0
    %4378 = vdwg.mxu0
    %4379 = vmatprep.subr.mxu0 0.0
    %v4380 = vand.u32 %v4257, 4294901760
    %v4381 = vsub.f32 %v4257, %v4380
    %v4382 = vand.u32 %v4381, 4294901760
    %v4383 = vsub.f32 %v4381, %v4382
    %v4384 = vand.u32 %v4383, 4294901760
    %4385 = vmatpush1.msra.mxu0 %v4384
    %4386 = vmatprep.subr.mxu0 0.0
    %v4387 = vand.u32 %v4258, 4294901760
    %v4388 = vsub.f32 %v4258, %v4387
    %v4389 = vand.u32 %v4388, 4294901760
    %v4390 = vsub.f32 %v4388, %v4389
    %v4391 = vand.u32 %v4390, 4294901760
    %4392 = vmatpush1.msra.mxu0 %v4391
    %4393 = vmatprep.subr.mxu0 0.0
    %v4394 = vand.u32 %v4259, 4294901760
    %v4395 = vsub.f32 %v4259, %v4394
    %v4396 = vand.u32 %v4395, 4294901760
    %v4397 = vsub.f32 %v4395, %v4396
    %v4398 = vand.u32 %v4397, 4294901760
    %4399 = vmatpush1.msra.mxu0 %v4398
    %4400 = vmatprep.subr.mxu0 0.0
    %v4401 = vand.u32 %v4260, 4294901760
    %v4402 = vsub.f32 %v4260, %v4401
    %v4403 = vand.u32 %v4402, 4294901760
    %v4404 = vsub.f32 %v4402, %v4403
    %v4405 = vand.u32 %v4404, 4294901760
    %4406 = vmatpush1.msra.mxu0 %v4405
    %4407 = vmatprep.subr.mxu0 0.0
    %4408 = vmatpush1.msra.mxu0 0.0
    %4409 = vmatprep.subr.mxu0 0.0
    %4410 = vmatpush1.msra.mxu0 0.0
    %4411 = vmatprep.subr.mxu0 0.0
    %4412 = vmatpush1.msra.mxu0 0.0
    %4413 = vmatprep.subr.mxu0 0.0
    %4414 = vmatpush1.msra.mxu0 0.0
    %4415 = vmatprep.subr.mxu0 0.0
    %4416 = vmatpush1.msra.mxu0 0.0
    %4417 = vmatprep.subr.mxu0 0.0
    %4418 = vmatpush1.msra.mxu0 0.0
    %4419 = vmatprep.subr.mxu0 0.0
    %4420 = vmatpush1.msra.mxu0 0.0
    %4421 = vmatprep.subr.mxu0 0.0
    %4422 = vmatpush1.msra.mxu0 0.0
    %4423 = vmatprep.subr.mxu0 0.0
    %4424 = vmatpush1.msra.mxu0 0.0
    %4425 = vmatprep.subr.mxu0 0.0
    %4426 = vmatpush1.msra.mxu0 0.0
    %4427 = vmatprep.subr.mxu0 0.0
    %4428 = vmatpush1.msra.mxu0 0.0
    %4429 = vmatprep.subr.mxu0 0.0
    %4430 = vmatpush1.msra.mxu0 0.0
    %4431 = vmatprep.subr.mxu0 0.0
    %4432 = vmatpush1.msra.mxu0 0.0
    %4433 = vmatprep.subr.mxu0 0.0
    %4434 = vmatpush1.msra.mxu0 0.0
    %4435 = vmatprep.subr.mxu0 0.0
    %4436 = vmatpush1.msra.mxu0 0.0
    %4437 = vmatprep.subr.mxu0 0.0
    %4438 = vmatpush1.msra.mxu0 0.0
    %4439 = vmatprep.subr.mxu0 0.0
    %4440 = vmatpush1.msra.mxu0 0.0
    %4441 = vmatprep.subr.mxu0 0.0
    %4442 = vmatpush1.msra.mxu0 0.0
    %4443 = vmatprep.subr.mxu0 0.0
    %4444 = vmatpush1.msra.mxu0 0.0
    %4445 = vmatprep.subr.mxu0 0.0
    %4446 = vmatpush1.msra.mxu0 0.0
    %4447 = vmatprep.subr.mxu0 0.0
    %4448 = vmatpush1.msra.mxu0 0.0
    %4449 = vmatprep.subr.mxu0 0.0
    %4450 = vmatpush1.msra.mxu0 0.0
    %4451 = vmatprep.subr.mxu0 0.0
    %4452 = vmatpush1.msra.mxu0 0.0
    %4453 = vmatprep.subr.mxu0 0.0
    %4454 = vmatpush1.msra.mxu0 0.0
    %4455 = vmatprep.subr.mxu0 0.0
    %4456 = vmatpush1.msra.mxu0 0.0
    %4457 = vmatprep.subr.mxu0 0.0
    %4458 = vmatpush1.msra.mxu0 0.0
    %4459 = vmatprep.subr.mxu0 0.0
    %4460 = vmatpush1.msra.mxu0 0.0
    %4461 = vmatprep.subr.mxu0 0.0
    %4462 = vmatpush1.msra.mxu0 0.0
    %4463 = vmatprep.mubr.f32.mxu0 0.0
    %v4464 = vand.u32 %v4286, 4294901760
    %4465 = vmatmul.mubr.f32.gmra.mrb[0].mxu0 %v4464
    %v4466 = vpop.f32.mrb[0].mxu0
    %v4467 = vadd.f32 %v4366, %v4466
    %v4468 = vpop.f32.mrb[0].mxu0
    %4469 = vmatprep.mubr.f32.mxu0 0.0
    %v4470 = vand.u32 %v4288, 4294901760
    %4471 = vmatmul.mubr.f32.gmra.mrb[0].mxu0 %v4470
    %v4472 = vpop.f32.mrb[0].mxu0
    %v4473 = vadd.f32 %v4376, %v4472
    %v4474 = vpop.f32.mrb[0].mxu0
    %4475 = vdwg.mxu0
    %4476 = vmatprep.subr.mxu0 0.0
    %v4477 = vand.u32 %v4257, 4294901760
    %v4478 = vsub.f32 %v4257, %v4477
    %4479 = vmatpush1.msra.mxu0 %v4478
    %4480 = vmatprep.subr.mxu0 0.0
    %v4481 = vand.u32 %v4258, 4294901760
    %v4482 = vsub.f32 %v4258, %v4481
    %4483 = vmatpush1.msra.mxu0 %v4482
    %4484 = vmatprep.subr.mxu0 0.0
    %v4485 = vand.u32 %v4259, 4294901760
    %v4486 = vsub.f32 %v4259, %v4485
    %4487 = vmatpush1.msra.mxu0 %v4486
    %4488 = vmatprep.subr.mxu0 0.0
    %v4489 = vand.u32 %v4260, 4294901760
    %v4490 = vsub.f32 %v4260, %v4489
    %4491 = vmatpush1.msra.mxu0 %v4490
    %4492 = vmatprep.subr.mxu0 0.0
    %4493 = vmatpush1.msra.mxu0 0.0
    %4494 = vmatprep.subr.mxu0 0.0
    %4495 = vmatpush1.msra.mxu0 0.0
    %4496 = vmatprep.subr.mxu0 0.0
    %4497 = vmatpush1.msra.mxu0 0.0
    %4498 = vmatprep.subr.mxu0 0.0
    %4499 = vmatpush1.msra.mxu0 0.0
    %4500 = vmatprep.subr.mxu0 0.0
    %4501 = vmatpush1.msra.mxu0 0.0
    %4502 = vmatprep.subr.mxu0 0.0
    %4503 = vmatpush1.msra.mxu0 0.0
    %4504 = vmatprep.subr.mxu0 0.0
    %4505 = vmatpush1.msra.mxu0 0.0
    %4506 = vmatprep.subr.mxu0 0.0
    %4507 = vmatpush1.msra.mxu0 0.0
    %4508 = vmatprep.subr.mxu0 0.0
    %4509 = vmatpush1.msra.mxu0 0.0
    %4510 = vmatprep.subr.mxu0 0.0
    %4511 = vmatpush1.msra.mxu0 0.0
    %4512 = vmatprep.subr.mxu0 0.0
    %4513 = vmatpush1.msra.mxu0 0.0
    %4514 = vmatprep.subr.mxu0 0.0
    %4515 = vmatpush1.msra.mxu0 0.0
    %4516 = vmatprep.subr.mxu0 0.0
    %4517 = vmatpush1.msra.mxu0 0.0
    %4518 = vmatprep.subr.mxu0 0.0
    %4519 = vmatpush1.msra.mxu0 0.0
    %4520 = vmatprep.subr.mxu0 0.0
    %4521 = vmatpush1.msra.mxu0 0.0
    %4522 = vmatprep.subr.mxu0 0.0
    %4523 = vmatpush1.msra.mxu0 0.0
    %4524 = vmatprep.subr.mxu0 0.0
    %4525 = vmatpush1.msra.mxu0 0.0
    %4526 = vmatprep.subr.mxu0 0.0
    %4527 = vmatpush1.msra.mxu0 0.0
    %4528 = vmatprep.subr.mxu0 0.0
    %4529 = vmatpush1.msra.mxu0 0.0
    %4530 = vmatprep.subr.mxu0 0.0
    %4531 = vmatpush1.msra.mxu0 0.0
    %4532 = vmatprep.subr.mxu0 0.0
    %4533 = vmatpush1.msra.mxu0 0.0
    %4534 = vmatprep.subr.mxu0 0.0
    %4535 = vmatpush1.msra.mxu0 0.0
    %4536 = vmatprep.subr.mxu0 0.0
    %4537 = vmatpush1.msra.mxu0 0.0
    %4538 = vmatprep.subr.mxu0 0.0
    %4539 = vmatpush1.msra.mxu0 0.0
    %4540 = vmatprep.subr.mxu0 0.0
    %4541 = vmatpush1.msra.mxu0 0.0
    %4542 = vmatprep.subr.mxu0 0.0
    %4543 = vmatpush1.msra.mxu0 0.0
    %4544 = vmatprep.subr.mxu0 0.0
    %4545 = vmatpush1.msra.mxu0 0.0
    %4546 = vmatprep.subr.mxu0 0.0
    %4547 = vmatpush1.msra.mxu0 0.0
    %4548 = vmatprep.mubr.f32.mxu0 0.0
    %v4549 = vand.u32 %v4286, 4294901760
    %v4550 = vsub.f32 %v4286, %v4549
    %4551 = vmatmul.mubr.f32.gmra.mrb[0].mxu0 %v4550
    %v4552 = vpop.f32.mrb[0].mxu0
    %v4553 = vadd.f32 %v4467, %v4552
    %v4554 = vpop.f32.mrb[0].mxu0
    %4555 = vmatprep.mubr.f32.mxu0 0.0
    %v4556 = vand.u32 %v4288, 4294901760
    %v4557 = vsub.f32 %v4288, %v4556
    %4558 = vmatmul.mubr.f32.gmra.mrb[0].mxu0 %v4557
    %v4559 = vpop.f32.mrb[0].mxu0
    %v4560 = vadd.f32 %v4473, %v4559
    %v4561 = vpop.f32.mrb[0].mxu0
    %4562 = vdwg.mxu0
    %4563 = vmatprep.subr.mxu0 0.0
    %v4564 = vand.u32 %v4257, 4294901760
    %4565 = vmatpush1.msra.mxu0 %v4564
    %4566 = vmatprep.subr.mxu0 0.0
    %v4567 = vand.u32 %v4258, 4294901760
    %4568 = vmatpush1.msra.mxu0 %v4567
    %4569 = vmatprep.subr.mxu0 0.0
    %v4570 = vand.u32 %v4259, 4294901760
    %4571 = vmatpush1.msra.mxu0 %v4570
    %4572 = vmatprep.subr.mxu0 0.0
    %v4573 = vand.u32 %v4260, 4294901760
    %4574 = vmatpush1.msra.mxu0 %v4573
    %4575 = vmatprep.subr.mxu0 0.0
    %4576 = vmatpush1.msra.mxu0 0.0
    %4577 = vmatprep.subr.mxu0 0.0
    %4578 = vmatpush1.msra.mxu0 0.0
    %4579 = vmatprep.subr.mxu0 0.0
    %4580 = vmatpush1.msra.mxu0 0.0
    %4581 = vmatprep.subr.mxu0 0.0
    %4582 = vmatpush1.msra.mxu0 0.0
    %4583 = vmatprep.subr.mxu0 0.0
    %4584 = vmatpush1.msra.mxu0 0.0
    %4585 = vmatprep.subr.mxu0 0.0
    %4586 = vmatpush1.msra.mxu0 0.0
    %4587 = vmatprep.subr.mxu0 0.0
    %4588 = vmatpush1.msra.mxu0 0.0
    %4589 = vmatprep.subr.mxu0 0.0
    %4590 = vmatpush1.msra.mxu0 0.0
    %4591 = vmatprep.subr.mxu0 0.0
    %4592 = vmatpush1.msra.mxu0 0.0
    %4593 = vmatprep.subr.mxu0 0.0
    %4594 = vmatpush1.msra.mxu0 0.0
    %4595 = vmatprep.subr.mxu0 0.0
    %4596 = vmatpush1.msra.mxu0 0.0
    %4597 = vmatprep.subr.mxu0 0.0
    %4598 = vmatpush1.msra.mxu0 0.0
    %4599 = vmatprep.subr.mxu0 0.0
    %4600 = vmatpush1.msra.mxu0 0.0
    %4601 = vmatprep.subr.mxu0 0.0
    %4602 = vmatpush1.msra.mxu0 0.0
    %4603 = vmatprep.subr.mxu0 0.0
    %4604 = vmatpush1.msra.mxu0 0.0
    %4605 = vmatprep.subr.mxu0 0.0
    %4606 = vmatpush1.msra.mxu0 0.0
    %4607 = vmatprep.subr.mxu0 0.0
    %4608 = vmatpush1.msra.mxu0 0.0
    %4609 = vmatprep.subr.mxu0 0.0
    %4610 = vmatpush1.msra.mxu0 0.0
    %4611 = vmatprep.subr.mxu0 0.0
    %4612 = vmatpush1.msra.mxu0 0.0
    %4613 = vmatprep.subr.mxu0 0.0
    %4614 = vmatpush1.msra.mxu0 0.0
    %4615 = vmatprep.subr.mxu0 0.0
    %4616 = vmatpush1.msra.mxu0 0.0
    %4617 = vmatprep.subr.mxu0 0.0
    %4618 = vmatpush1.msra.mxu0 0.0
    %4619 = vmatprep.subr.mxu0 0.0
    %4620 = vmatpush1.msra.mxu0 0.0
    %4621 = vmatprep.subr.mxu0 0.0
    %4622 = vmatpush1.msra.mxu0 0.0
    %4623 = vmatprep.subr.mxu0 0.0
    %4624 = vmatpush1.msra.mxu0 0.0
    %4625 = vmatprep.subr.mxu0 0.0
    %4626 = vmatpush1.msra.mxu0 0.0
    %4627 = vmatprep.subr.mxu0 0.0
    %4628 = vmatpush1.msra.mxu0 0.0
    %4629 = vmatprep.subr.mxu0 0.0
    %4630 = vmatpush1.msra.mxu0 0.0
    %4631 = vmatprep.mubr.f32.mxu0 0.0
    %v4632 = vand.u32 %v4286, 4294901760
    %v4633 = vsub.f32 %v4286, %v4632
    %v4634 = vand.u32 %v4633, 4294901760
    %4635 = vmatmul.mubr.f32.gmra.mrb[0].mxu0 %v4634
    %v4636 = vpop.f32.mrb[0].mxu0
    %v4637 = vadd.f32 %v4553, %v4636
    %v4638 = vpop.f32.mrb[0].mxu0
    %4639 = vmatprep.mubr.f32.mxu0 0.0
    %v4640 = vand.u32 %v4288, 4294901760
    %v4641 = vsub.f32 %v4288, %v4640
    %v4642 = vand.u32 %v4641, 4294901760
    %4643 = vmatmul.mubr.f32.gmra.mrb[0].mxu0 %v4642
    %v4644 = vpop.f32.mrb[0].mxu0
    %v4645 = vadd.f32 %v4560, %v4644
    %v4646 = vpop.f32.mrb[0].mxu0
    %4647 = vdwg.mxu0
    %4648 = vmatprep.subr.mxu0 0.0
    %v4649 = vand.u32 %v4257, 4294901760
    %v4650 = vsub.f32 %v4257, %v4649
    %v4651 = vand.u32 %v4650, 4294901760
    %4652 = vmatpush1.msra.mxu0 %v4651
    %4653 = vmatprep.subr.mxu0 0.0
    %v4654 = vand.u32 %v4258, 4294901760
    %v4655 = vsub.f32 %v4258, %v4654
    %v4656 = vand.u32 %v4655, 4294901760
    %4657 = vmatpush1.msra.mxu0 %v4656
    %4658 = vmatprep.subr.mxu0 0.0
    %v4659 = vand.u32 %v4259, 4294901760
    %v4660 = vsub.f32 %v4259, %v4659
    %v4661 = vand.u32 %v4660, 4294901760
    %4662 = vmatpush1.msra.mxu0 %v4661
    %4663 = vmatprep.subr.mxu0 0.0
    %v4664 = vand.u32 %v4260, 4294901760
    %v4665 = vsub.f32 %v4260, %v4664
    %v4666 = vand.u32 %v4665, 4294901760
    %4667 = vmatpush1.msra.mxu0 %v4666
    %4668 = vmatprep.subr.mxu0 0.0
    %4669 = vmatpush1.msra.mxu0 0.0
    %4670 = vmatprep.subr.mxu0 0.0
    %4671 = vmatpush1.msra.mxu0 0.0
    %4672 = vmatprep.subr.mxu0 0.0
    %4673 = vmatpush1.msra.mxu0 0.0
    %4674 = vmatprep.subr.mxu0 0.0
    %4675 = vmatpush1.msra.mxu0 0.0
    %4676 = vmatprep.subr.mxu0 0.0
    %4677 = vmatpush1.msra.mxu0 0.0
    %4678 = vmatprep.subr.mxu0 0.0
    %4679 = vmatpush1.msra.mxu0 0.0
    %4680 = vmatprep.subr.mxu0 0.0
    %4681 = vmatpush1.msra.mxu0 0.0
    %4682 = vmatprep.subr.mxu0 0.0
    %4683 = vmatpush1.msra.mxu0 0.0
    %4684 = vmatprep.subr.mxu0 0.0
    %4685 = vmatpush1.msra.mxu0 0.0
    %4686 = vmatprep.subr.mxu0 0.0
    %4687 = vmatpush1.msra.mxu0 0.0
    %4688 = vmatprep.subr.mxu0 0.0
    %4689 = vmatpush1.msra.mxu0 0.0
    %4690 = vmatprep.subr.mxu0 0.0
    %4691 = vmatpush1.msra.mxu0 0.0
    %4692 = vmatprep.subr.mxu0 0.0
    %4693 = vmatpush1.msra.mxu0 0.0
    %4694 = vmatprep.subr.mxu0 0.0
    %4695 = vmatpush1.msra.mxu0 0.0
    %4696 = vmatprep.subr.mxu0 0.0
    %4697 = vmatpush1.msra.mxu0 0.0
    %4698 = vmatprep.subr.mxu0 0.0
    %4699 = vmatpush1.msra.mxu0 0.0
    %4700 = vmatprep.subr.mxu0 0.0
    %4701 = vmatpush1.msra.mxu0 0.0
    %4702 = vmatprep.subr.mxu0 0.0
    %4703 = vmatpush1.msra.mxu0 0.0
    %4704 = vmatprep.subr.mxu0 0.0
    %4705 = vmatpush1.msra.mxu0 0.0
    %4706 = vmatprep.subr.mxu0 0.0
    %4707 = vmatpush1.msra.mxu0 0.0
    %4708 = vmatprep.subr.mxu0 0.0
    %4709 = vmatpush1.msra.mxu0 0.0
    %4710 = vmatprep.subr.mxu0 0.0
    %4711 = vmatpush1.msra.mxu0 0.0
    %4712 = vmatprep.subr.mxu0 0.0
    %4713 = vmatpush1.msra.mxu0 0.0
    %4714 = vmatprep.subr.mxu0 0.0
    %4715 = vmatpush1.msra.mxu0 0.0
    %4716 = vmatprep.subr.mxu0 0.0
    %4717 = vmatpush1.msra.mxu0 0.0
    %4718 = vmatprep.subr.mxu0 0.0
    %4719 = vmatpush1.msra.mxu0 0.0
    %4720 = vmatprep.subr.mxu0 0.0
    %4721 = vmatpush1.msra.mxu0 0.0
    %4722 = vmatprep.subr.mxu0 0.0
    %4723 = vmatpush1.msra.mxu0 0.0
    %4724 = vmatprep.mubr.f32.mxu0 0.0
    %v4725 = vand.u32 %v4286, 4294901760
    %4726 = vmatmul.mubr.f32.gmra.mrb[0].mxu0 %v4725
    %v4727 = vpop.f32.mrb[0].mxu0
    %v4728 = vadd.f32 %v4637, %v4727
    %v4729 = vpop.f32.mrb[0].mxu0
    %4730 = vmatprep.mubr.f32.mxu0 0.0
    %v4731 = vand.u32 %v4288, 4294901760
    %4732 = vmatmul.mubr.f32.gmra.mrb[0].mxu0 %v4731
    %v4733 = vpop.f32.mrb[0].mxu0
    %v4734 = vadd.f32 %v4645, %v4733
    %v4735 = vpop.f32.mrb[0].mxu0
    %4736 = vdwg.mxu0
    %4737 = vmatprep.subr.mxu0 0.0
    %v4738 = vand.u32 %v4257, 4294901760
    %4739 = vmatpush1.msra.mxu0 %v4738
    %4740 = vmatprep.subr.mxu0 0.0
    %v4741 = vand.u32 %v4258, 4294901760
    %4742 = vmatpush1.msra.mxu0 %v4741
    %4743 = vmatprep.subr.mxu0 0.0
    %v4744 = vand.u32 %v4259, 4294901760
    %4745 = vmatpush1.msra.mxu0 %v4744
    %4746 = vmatprep.subr.mxu0 0.0
    %v4747 = vand.u32 %v4260, 4294901760
    %4748 = vmatpush1.msra.mxu0 %v4747
    %4749 = vmatprep.subr.mxu0 0.0
    %4750 = vmatpush1.msra.mxu0 0.0
    %4751 = vmatprep.subr.mxu0 0.0
    %4752 = vmatpush1.msra.mxu0 0.0
    %4753 = vmatprep.subr.mxu0 0.0
    %4754 = vmatpush1.msra.mxu0 0.0
    %4755 = vmatprep.subr.mxu0 0.0
    %4756 = vmatpush1.msra.mxu0 0.0
    %4757 = vmatprep.subr.mxu0 0.0
    %4758 = vmatpush1.msra.mxu0 0.0
    %4759 = vmatprep.subr.mxu0 0.0
    %4760 = vmatpush1.msra.mxu0 0.0
    %4761 = vmatprep.subr.mxu0 0.0
    %4762 = vmatpush1.msra.mxu0 0.0
    %4763 = vmatprep.subr.mxu0 0.0
    %4764 = vmatpush1.msra.mxu0 0.0
    %4765 = vmatprep.subr.mxu0 0.0
    %4766 = vmatpush1.msra.mxu0 0.0
    %4767 = vmatprep.subr.mxu0 0.0
    %4768 = vmatpush1.msra.mxu0 0.0
    %4769 = vmatprep.subr.mxu0 0.0
    %4770 = vmatpush1.msra.mxu0 0.0
    %4771 = vmatprep.subr.mxu0 0.0
    %4772 = vmatpush1.msra.mxu0 0.0
    %4773 = vmatprep.subr.mxu0 0.0
    %4774 = vmatpush1.msra.mxu0 0.0
    %4775 = vmatprep.subr.mxu0 0.0
    %4776 = vmatpush1.msra.mxu0 0.0
    %4777 = vmatprep.subr.mxu0 0.0
    %4778 = vmatpush1.msra.mxu0 0.0
    %4779 = vmatprep.subr.mxu0 0.0
    %4780 = vmatpush1.msra.mxu0 0.0
    %4781 = vmatprep.subr.mxu0 0.0
    %4782 = vmatpush1.msra.mxu0 0.0
    %4783 = vmatprep.subr.mxu0 0.0
    %4784 = vmatpush1.msra.mxu0 0.0
    %4785 = vmatprep.subr.mxu0 0.0
    %4786 = vmatpush1.msra.mxu0 0.0
    %4787 = vmatprep.subr.mxu0 0.0
    %4788 = vmatpush1.msra.mxu0 0.0
    %4789 = vmatprep.subr.mxu0 0.0
    %4790 = vmatpush1.msra.mxu0 0.0
    %4791 = vmatprep.subr.mxu0 0.0
    %4792 = vmatpush1.msra.mxu0 0.0
    %4793 = vmatprep.subr.mxu0 0.0
    %4794 = vmatpush1.msra.mxu0 0.0
    %4795 = vmatprep.subr.mxu0 0.0
    %4796 = vmatpush1.msra.mxu0 0.0
    %4797 = vmatprep.subr.mxu0 0.0
    %4798 = vmatpush1.msra.mxu0 0.0
    %4799 = vmatprep.subr.mxu0 0.0
    %4800 = vmatpush1.msra.mxu0 0.0
    %4801 = vmatprep.subr.mxu0 0.0
    %4802 = vmatpush1.msra.mxu0 0.0
    %4803 = vmatprep.subr.mxu0 0.0
    %4804 = vmatpush1.msra.mxu0 0.0
    %4805 = vmatprep.mubr.f32.mxu0 0.0
    %v4806 = vand.u32 %v4286, 4294901760
    %4807 = vmatmul.mubr.f32.gmra.mrb[0].mxu0 %v4806
    %v4808 = vpop.f32.mrb[0].mxu0
    %v4809 = vadd.f32 %v4728, %v4808
    %v4810 = vpop.f32.mrb[0].mxu0
    %4811 = vmatprep.mubr.f32.mxu0 0.0
    %v4812 = vand.u32 %v4288, 4294901760
    %4813 = vmatmul.mubr.f32.gmra.mrb[0].mxu0 %v4812
    %v4814 = vpop.f32.mrb[0].mxu0
    %v4815 = vadd.f32 %v4734, %v4814
    %v4816 = vpop.f32.mrb[0].mxu0
    %4817 = vdwg.mxu0
    %v4818 = vsel %vm817, %v4271, 0
    %v4820 = vsel %vm817, %v4272, 0
    %4822 = vmatprep.subr.mxu0 0.0
    %v4823 = vand.u32 %v4253, 4294901760
    %4824 = vmatpush1.msra.mxu0 %v4823
    %4825 = vmatprep.subr.mxu0 0.0
    %v4826 = vand.u32 %v4254, 4294901760
    %4827 = vmatpush1.msra.mxu0 %v4826
    %4828 = vmatprep.subr.mxu0 0.0
    %v4829 = vand.u32 %v4255, 4294901760
    %4830 = vmatpush1.msra.mxu0 %v4829
    %4831 = vmatprep.subr.mxu0 0.0
    %v4832 = vand.u32 %v4256, 4294901760
    %4833 = vmatpush1.msra.mxu0 %v4832
    %4834 = vmatprep.subr.mxu0 0.0
    %4835 = vmatpush1.msra.mxu0 0.0
    %4836 = vmatprep.subr.mxu0 0.0
    %4837 = vmatpush1.msra.mxu0 0.0
    %4838 = vmatprep.subr.mxu0 0.0
    %4839 = vmatpush1.msra.mxu0 0.0
    %4840 = vmatprep.subr.mxu0 0.0
    %4841 = vmatpush1.msra.mxu0 0.0
    %4842 = vmatprep.subr.mxu0 0.0
    %4843 = vmatpush1.msra.mxu0 0.0
    %4844 = vmatprep.subr.mxu0 0.0
    %4845 = vmatpush1.msra.mxu0 0.0
    %4846 = vmatprep.subr.mxu0 0.0
    %4847 = vmatpush1.msra.mxu0 0.0
    %4848 = vmatprep.subr.mxu0 0.0
    %4849 = vmatpush1.msra.mxu0 0.0
    %4850 = vmatprep.subr.mxu0 0.0
    %4851 = vmatpush1.msra.mxu0 0.0
    %4852 = vmatprep.subr.mxu0 0.0
    %4853 = vmatpush1.msra.mxu0 0.0
    %4854 = vmatprep.subr.mxu0 0.0
    %4855 = vmatpush1.msra.mxu0 0.0
    %4856 = vmatprep.subr.mxu0 0.0
    %4857 = vmatpush1.msra.mxu0 0.0
    %4858 = vmatprep.subr.mxu0 0.0
    %4859 = vmatpush1.msra.mxu0 0.0
    %4860 = vmatprep.subr.mxu0 0.0
    %4861 = vmatpush1.msra.mxu0 0.0
    %4862 = vmatprep.subr.mxu0 0.0
    %4863 = vmatpush1.msra.mxu0 0.0
    %4864 = vmatprep.subr.mxu0 0.0
    %4865 = vmatpush1.msra.mxu0 0.0
    %4866 = vmatprep.subr.mxu0 0.0
    %4867 = vmatpush1.msra.mxu0 0.0
    %4868 = vmatprep.subr.mxu0 0.0
    %4869 = vmatpush1.msra.mxu0 0.0
    %4870 = vmatprep.subr.mxu0 0.0
    %4871 = vmatpush1.msra.mxu0 0.0
    %4872 = vmatprep.subr.mxu0 0.0
    %4873 = vmatpush1.msra.mxu0 0.0
    %4874 = vmatprep.subr.mxu0 0.0
    %4875 = vmatpush1.msra.mxu0 0.0
    %4876 = vmatprep.subr.mxu0 0.0
    %4877 = vmatpush1.msra.mxu0 0.0
    %4878 = vmatprep.subr.mxu0 0.0
    %4879 = vmatpush1.msra.mxu0 0.0
    %4880 = vmatprep.subr.mxu0 0.0
    %4881 = vmatpush1.msra.mxu0 0.0
    %4882 = vmatprep.subr.mxu0 0.0
    %4883 = vmatpush1.msra.mxu0 0.0
    %4884 = vmatprep.subr.mxu0 0.0
    %4885 = vmatpush1.msra.mxu0 0.0
    %4886 = vmatprep.subr.mxu0 0.0
    %4887 = vmatpush1.msra.mxu0 0.0
    %4888 = vmatprep.subr.mxu0 0.0
    %4889 = vmatpush1.msra.mxu0 0.0
    %4890 = vmatprep.mubr.f32.mxu0 0.0
    %v4891 = vand.u32 %v4818, 4294901760
    %v4892 = vsub.f32 %v4818, %v4891
    %v4893 = vand.u32 %v4892, 4294901760
    %v4894 = vsub.f32 %v4892, %v4893
    %v4895 = vand.u32 %v4894, 4294901760
    %4896 = vmatmul.mubr.f32.gmra.mrb[0].mxu0 %v4895
    %v4897 = vpop.f32.mrb[0].mxu0
    %v4898 = vadd.f32 %v4809, %v4897
    %v4899 = vpop.f32.mrb[0].mxu0
    %4900 = vmatprep.mubr.f32.mxu0 0.0
    %v4901 = vand.u32 %v4820, 4294901760
    %v4902 = vsub.f32 %v4820, %v4901
    %v4903 = vand.u32 %v4902, 4294901760
    %v4904 = vsub.f32 %v4902, %v4903
    %v4905 = vand.u32 %v4904, 4294901760
    %4906 = vmatmul.mubr.f32.gmra.mrb[0].mxu0 %v4905
    %v4907 = vpop.f32.mrb[0].mxu0
    %v4908 = vadd.f32 %v4815, %v4907
    %v4909 = vpop.f32.mrb[0].mxu0
    %4910 = vdwg.mxu0
    %4911 = vmatprep.subr.mxu0 0.0
    %v4912 = vand.u32 %v4253, 4294901760
    %v4913 = vsub.f32 %v4253, %v4912
    %v4914 = vand.u32 %v4913, 4294901760
    %v4915 = vsub.f32 %v4913, %v4914
    %v4916 = vand.u32 %v4915, 4294901760
    %4917 = vmatpush1.msra.mxu0 %v4916
    %4918 = vmatprep.subr.mxu0 0.0
    %v4919 = vand.u32 %v4254, 4294901760
    %v4920 = vsub.f32 %v4254, %v4919
    %v4921 = vand.u32 %v4920, 4294901760
    %v4922 = vsub.f32 %v4920, %v4921
    %v4923 = vand.u32 %v4922, 4294901760
    %4924 = vmatpush1.msra.mxu0 %v4923
    %4925 = vmatprep.subr.mxu0 0.0
    %v4926 = vand.u32 %v4255, 4294901760
    %v4927 = vsub.f32 %v4255, %v4926
    %v4928 = vand.u32 %v4927, 4294901760
    %v4929 = vsub.f32 %v4927, %v4928
    %v4930 = vand.u32 %v4929, 4294901760
    %4931 = vmatpush1.msra.mxu0 %v4930
    %4932 = vmatprep.subr.mxu0 0.0
    %v4933 = vand.u32 %v4256, 4294901760
    %v4934 = vsub.f32 %v4256, %v4933
    %v4935 = vand.u32 %v4934, 4294901760
    %v4936 = vsub.f32 %v4934, %v4935
    %v4937 = vand.u32 %v4936, 4294901760
    %4938 = vmatpush1.msra.mxu0 %v4937
    %4939 = vmatprep.subr.mxu0 0.0
    %4940 = vmatpush1.msra.mxu0 0.0
    %4941 = vmatprep.subr.mxu0 0.0
    %4942 = vmatpush1.msra.mxu0 0.0
    %4943 = vmatprep.subr.mxu0 0.0
    %4944 = vmatpush1.msra.mxu0 0.0
    %4945 = vmatprep.subr.mxu0 0.0
    %4946 = vmatpush1.msra.mxu0 0.0
    %4947 = vmatprep.subr.mxu0 0.0
    %4948 = vmatpush1.msra.mxu0 0.0
    %4949 = vmatprep.subr.mxu0 0.0
    %4950 = vmatpush1.msra.mxu0 0.0
    %4951 = vmatprep.subr.mxu0 0.0
    %4952 = vmatpush1.msra.mxu0 0.0
    %4953 = vmatprep.subr.mxu0 0.0
    %4954 = vmatpush1.msra.mxu0 0.0
    %4955 = vmatprep.subr.mxu0 0.0
    %4956 = vmatpush1.msra.mxu0 0.0
    %4957 = vmatprep.subr.mxu0 0.0
    %4958 = vmatpush1.msra.mxu0 0.0
    %4959 = vmatprep.subr.mxu0 0.0
    %4960 = vmatpush1.msra.mxu0 0.0
    %4961 = vmatprep.subr.mxu0 0.0
    %4962 = vmatpush1.msra.mxu0 0.0
    %4963 = vmatprep.subr.mxu0 0.0
    %4964 = vmatpush1.msra.mxu0 0.0
    %4965 = vmatprep.subr.mxu0 0.0
    %4966 = vmatpush1.msra.mxu0 0.0
    %4967 = vmatprep.subr.mxu0 0.0
    %4968 = vmatpush1.msra.mxu0 0.0
    %4969 = vmatprep.subr.mxu0 0.0
    %4970 = vmatpush1.msra.mxu0 0.0
    %4971 = vmatprep.subr.mxu0 0.0
    %4972 = vmatpush1.msra.mxu0 0.0
    %4973 = vmatprep.subr.mxu0 0.0
    %4974 = vmatpush1.msra.mxu0 0.0
    %4975 = vmatprep.subr.mxu0 0.0
    %4976 = vmatpush1.msra.mxu0 0.0
    %4977 = vmatprep.subr.mxu0 0.0
    %4978 = vmatpush1.msra.mxu0 0.0
    %4979 = vmatprep.subr.mxu0 0.0
    %4980 = vmatpush1.msra.mxu0 0.0
    %4981 = vmatprep.subr.mxu0 0.0
    %4982 = vmatpush1.msra.mxu0 0.0
    %4983 = vmatprep.subr.mxu0 0.0
    %4984 = vmatpush1.msra.mxu0 0.0
    %4985 = vmatprep.subr.mxu0 0.0
    %4986 = vmatpush1.msra.mxu0 0.0
    %4987 = vmatprep.subr.mxu0 0.0
    %4988 = vmatpush1.msra.mxu0 0.0
    %4989 = vmatprep.subr.mxu0 0.0
    %4990 = vmatpush1.msra.mxu0 0.0
    %4991 = vmatprep.subr.mxu0 0.0
    %4992 = vmatpush1.msra.mxu0 0.0
    %4993 = vmatprep.subr.mxu0 0.0
    %4994 = vmatpush1.msra.mxu0 0.0
    %4995 = vmatprep.mubr.f32.mxu0 0.0
    %v4996 = vand.u32 %v4818, 4294901760
    %4997 = vmatmul.mubr.f32.gmra.mrb[0].mxu0 %v4996
    %v4998 = vpop.f32.mrb[0].mxu0
    %v4999 = vadd.f32 %v4898, %v4998
    %v5000 = vpop.f32.mrb[0].mxu0
    %5001 = vmatprep.mubr.f32.mxu0 0.0
    %v5002 = vand.u32 %v4820, 4294901760
    %5003 = vmatmul.mubr.f32.gmra.mrb[0].mxu0 %v5002
    %v5004 = vpop.f32.mrb[0].mxu0
    %v5005 = vadd.f32 %v4908, %v5004
    %v5006 = vpop.f32.mrb[0].mxu0
    %5007 = vdwg.mxu0
    %5008 = vmatprep.subr.mxu0 0.0
    %v5009 = vand.u32 %v4253, 4294901760
    %v5010 = vsub.f32 %v4253, %v5009
    %5011 = vmatpush1.msra.mxu0 %v5010
    %5012 = vmatprep.subr.mxu0 0.0
    %v5013 = vand.u32 %v4254, 4294901760
    %v5014 = vsub.f32 %v4254, %v5013
    %5015 = vmatpush1.msra.mxu0 %v5014
    %5016 = vmatprep.subr.mxu0 0.0
    %v5017 = vand.u32 %v4255, 4294901760
    %v5018 = vsub.f32 %v4255, %v5017
    %5019 = vmatpush1.msra.mxu0 %v5018
    %5020 = vmatprep.subr.mxu0 0.0
    %v5021 = vand.u32 %v4256, 4294901760
    %v5022 = vsub.f32 %v4256, %v5021
    %5023 = vmatpush1.msra.mxu0 %v5022
    %5024 = vmatprep.subr.mxu0 0.0
    %5025 = vmatpush1.msra.mxu0 0.0
    %5026 = vmatprep.subr.mxu0 0.0
    %5027 = vmatpush1.msra.mxu0 0.0
    %5028 = vmatprep.subr.mxu0 0.0
    %5029 = vmatpush1.msra.mxu0 0.0
    %5030 = vmatprep.subr.mxu0 0.0
    %5031 = vmatpush1.msra.mxu0 0.0
    %5032 = vmatprep.subr.mxu0 0.0
    %5033 = vmatpush1.msra.mxu0 0.0
    %5034 = vmatprep.subr.mxu0 0.0
    %5035 = vmatpush1.msra.mxu0 0.0
    %5036 = vmatprep.subr.mxu0 0.0
    %5037 = vmatpush1.msra.mxu0 0.0
    %5038 = vmatprep.subr.mxu0 0.0
    %5039 = vmatpush1.msra.mxu0 0.0
    %5040 = vmatprep.subr.mxu0 0.0
    %5041 = vmatpush1.msra.mxu0 0.0
    %5042 = vmatprep.subr.mxu0 0.0
    %5043 = vmatpush1.msra.mxu0 0.0
    %5044 = vmatprep.subr.mxu0 0.0
    %5045 = vmatpush1.msra.mxu0 0.0
    %5046 = vmatprep.subr.mxu0 0.0
    %5047 = vmatpush1.msra.mxu0 0.0
    %5048 = vmatprep.subr.mxu0 0.0
    %5049 = vmatpush1.msra.mxu0 0.0
    %5050 = vmatprep.subr.mxu0 0.0
    %5051 = vmatpush1.msra.mxu0 0.0
    %5052 = vmatprep.subr.mxu0 0.0
    %5053 = vmatpush1.msra.mxu0 0.0
    %5054 = vmatprep.subr.mxu0 0.0
    %5055 = vmatpush1.msra.mxu0 0.0
    %5056 = vmatprep.subr.mxu0 0.0
    %5057 = vmatpush1.msra.mxu0 0.0
    %5058 = vmatprep.subr.mxu0 0.0
    %5059 = vmatpush1.msra.mxu0 0.0
    %5060 = vmatprep.subr.mxu0 0.0
    %5061 = vmatpush1.msra.mxu0 0.0
    %5062 = vmatprep.subr.mxu0 0.0
    %5063 = vmatpush1.msra.mxu0 0.0
    %5064 = vmatprep.subr.mxu0 0.0
    %5065 = vmatpush1.msra.mxu0 0.0
    %5066 = vmatprep.subr.mxu0 0.0
    %5067 = vmatpush1.msra.mxu0 0.0
    %5068 = vmatprep.subr.mxu0 0.0
    %5069 = vmatpush1.msra.mxu0 0.0
    %5070 = vmatprep.subr.mxu0 0.0
    %5071 = vmatpush1.msra.mxu0 0.0
    %5072 = vmatprep.subr.mxu0 0.0
    %5073 = vmatpush1.msra.mxu0 0.0
    %5074 = vmatprep.subr.mxu0 0.0
    %5075 = vmatpush1.msra.mxu0 0.0
    %5076 = vmatprep.subr.mxu0 0.0
    %5077 = vmatpush1.msra.mxu0 0.0
    %5078 = vmatprep.subr.mxu0 0.0
    %5079 = vmatpush1.msra.mxu0 0.0
    %5080 = vmatprep.mubr.f32.mxu0 0.0
    %v5081 = vand.u32 %v4818, 4294901760
    %v5082 = vsub.f32 %v4818, %v5081
    %5083 = vmatmul.mubr.f32.gmra.mrb[0].mxu0 %v5082
    %v5084 = vpop.f32.mrb[0].mxu0
    %v5085 = vadd.f32 %v4999, %v5084
    %v5086 = vpop.f32.mrb[0].mxu0
    %5087 = vmatprep.mubr.f32.mxu0 0.0
    %v5088 = vand.u32 %v4820, 4294901760
    %v5089 = vsub.f32 %v4820, %v5088
    %5090 = vmatmul.mubr.f32.gmra.mrb[0].mxu0 %v5089
    %v5091 = vpop.f32.mrb[0].mxu0
    %v5092 = vadd.f32 %v5005, %v5091
    %v5093 = vpop.f32.mrb[0].mxu0
    %5094 = vdwg.mxu0
    %5095 = vmatprep.subr.mxu0 0.0
    %v5096 = vand.u32 %v4253, 4294901760
    %5097 = vmatpush1.msra.mxu0 %v5096
    %5098 = vmatprep.subr.mxu0 0.0
    %v5099 = vand.u32 %v4254, 4294901760
    %5100 = vmatpush1.msra.mxu0 %v5099
    %5101 = vmatprep.subr.mxu0 0.0
    %v5102 = vand.u32 %v4255, 4294901760
    %5103 = vmatpush1.msra.mxu0 %v5102
    %5104 = vmatprep.subr.mxu0 0.0
    %v5105 = vand.u32 %v4256, 4294901760
    %5106 = vmatpush1.msra.mxu0 %v5105
    %5107 = vmatprep.subr.mxu0 0.0
    %5108 = vmatpush1.msra.mxu0 0.0
    %5109 = vmatprep.subr.mxu0 0.0
    %5110 = vmatpush1.msra.mxu0 0.0
    %5111 = vmatprep.subr.mxu0 0.0
    %5112 = vmatpush1.msra.mxu0 0.0
    %5113 = vmatprep.subr.mxu0 0.0
    %5114 = vmatpush1.msra.mxu0 0.0
    %5115 = vmatprep.subr.mxu0 0.0
    %5116 = vmatpush1.msra.mxu0 0.0
    %5117 = vmatprep.subr.mxu0 0.0
    %5118 = vmatpush1.msra.mxu0 0.0
    %5119 = vmatprep.subr.mxu0 0.0
    %5120 = vmatpush1.msra.mxu0 0.0
    %5121 = vmatprep.subr.mxu0 0.0
    %5122 = vmatpush1.msra.mxu0 0.0
    %5123 = vmatprep.subr.mxu0 0.0
    %5124 = vmatpush1.msra.mxu0 0.0
    %5125 = vmatprep.subr.mxu0 0.0
    %5126 = vmatpush1.msra.mxu0 0.0
    %5127 = vmatprep.subr.mxu0 0.0
    %5128 = vmatpush1.msra.mxu0 0.0
    %5129 = vmatprep.subr.mxu0 0.0
    %5130 = vmatpush1.msra.mxu0 0.0
    %5131 = vmatprep.subr.mxu0 0.0
    %5132 = vmatpush1.msra.mxu0 0.0
    %5133 = vmatprep.subr.mxu0 0.0
    %5134 = vmatpush1.msra.mxu0 0.0
    %5135 = vmatprep.subr.mxu0 0.0
    %5136 = vmatpush1.msra.mxu0 0.0
    %5137 = vmatprep.subr.mxu0 0.0
    %5138 = vmatpush1.msra.mxu0 0.0
    %5139 = vmatprep.subr.mxu0 0.0
    %5140 = vmatpush1.msra.mxu0 0.0
    %5141 = vmatprep.subr.mxu0 0.0
    %5142 = vmatpush1.msra.mxu0 0.0
    %5143 = vmatprep.subr.mxu0 0.0
    %5144 = vmatpush1.msra.mxu0 0.0
    %5145 = vmatprep.subr.mxu0 0.0
    %5146 = vmatpush1.msra.mxu0 0.0
    %5147 = vmatprep.subr.mxu0 0.0
    %5148 = vmatpush1.msra.mxu0 0.0
    %5149 = vmatprep.subr.mxu0 0.0
    %5150 = vmatpush1.msra.mxu0 0.0
    %5151 = vmatprep.subr.mxu0 0.0
    %5152 = vmatpush1.msra.mxu0 0.0
    %5153 = vmatprep.subr.mxu0 0.0
    %5154 = vmatpush1.msra.mxu0 0.0
    %5155 = vmatprep.subr.mxu0 0.0
    %5156 = vmatpush1.msra.mxu0 0.0
    %5157 = vmatprep.subr.mxu0 0.0
    %5158 = vmatpush1.msra.mxu0 0.0
    %5159 = vmatprep.subr.mxu0 0.0
    %5160 = vmatpush1.msra.mxu0 0.0
    %5161 = vmatprep.subr.mxu0 0.0
    %5162 = vmatpush1.msra.mxu0 0.0
    %5163 = vmatprep.mubr.f32.mxu0 0.0
    %v5164 = vand.u32 %v4818, 4294901760
    %v5165 = vsub.f32 %v4818, %v5164
    %v5166 = vand.u32 %v5165, 4294901760
    %5167 = vmatmul.mubr.f32.gmra.mrb[0].mxu0 %v5166
    %v5168 = vpop.f32.mrb[0].mxu0
    %v5169 = vadd.f32 %v5085, %v5168
    %v5170 = vpop.f32.mrb[0].mxu0
    %5171 = vmatprep.mubr.f32.mxu0 0.0
    %v5172 = vand.u32 %v4820, 4294901760
    %v5173 = vsub.f32 %v4820, %v5172
    %v5174 = vand.u32 %v5173, 4294901760
    %5175 = vmatmul.mubr.f32.gmra.mrb[0].mxu0 %v5174
    %v5176 = vpop.f32.mrb[0].mxu0
    %v5177 = vadd.f32 %v5092, %v5176
    %v5178 = vpop.f32.mrb[0].mxu0
    %5179 = vdwg.mxu0
    %5180 = vmatprep.subr.mxu0 0.0
    %v5181 = vand.u32 %v4253, 4294901760
    %v5182 = vsub.f32 %v4253, %v5181
    %v5183 = vand.u32 %v5182, 4294901760
    %5184 = vmatpush1.msra.mxu0 %v5183
    %5185 = vmatprep.subr.mxu0 0.0
    %v5186 = vand.u32 %v4254, 4294901760
    %v5187 = vsub.f32 %v4254, %v5186
    %v5188 = vand.u32 %v5187, 4294901760
    %5189 = vmatpush1.msra.mxu0 %v5188
    %5190 = vmatprep.subr.mxu0 0.0
    %v5191 = vand.u32 %v4255, 4294901760
    %v5192 = vsub.f32 %v4255, %v5191
    %v5193 = vand.u32 %v5192, 4294901760
    %5194 = vmatpush1.msra.mxu0 %v5193
    %5195 = vmatprep.subr.mxu0 0.0
    %v5196 = vand.u32 %v4256, 4294901760
    %v5197 = vsub.f32 %v4256, %v5196
    %v5198 = vand.u32 %v5197, 4294901760
    %5199 = vmatpush1.msra.mxu0 %v5198
    %5200 = vmatprep.subr.mxu0 0.0
    %5201 = vmatpush1.msra.mxu0 0.0
    %5202 = vmatprep.subr.mxu0 0.0
    %5203 = vmatpush1.msra.mxu0 0.0
    %5204 = vmatprep.subr.mxu0 0.0
    %5205 = vmatpush1.msra.mxu0 0.0
    %5206 = vmatprep.subr.mxu0 0.0
    %5207 = vmatpush1.msra.mxu0 0.0
    %5208 = vmatprep.subr.mxu0 0.0
    %5209 = vmatpush1.msra.mxu0 0.0
    %5210 = vmatprep.subr.mxu0 0.0
    %5211 = vmatpush1.msra.mxu0 0.0
    %5212 = vmatprep.subr.mxu0 0.0
    %5213 = vmatpush1.msra.mxu0 0.0
    %5214 = vmatprep.subr.mxu0 0.0
    %5215 = vmatpush1.msra.mxu0 0.0
    %5216 = vmatprep.subr.mxu0 0.0
    %5217 = vmatpush1.msra.mxu0 0.0
    %5218 = vmatprep.subr.mxu0 0.0
    %5219 = vmatpush1.msra.mxu0 0.0
    %5220 = vmatprep.subr.mxu0 0.0
    %5221 = vmatpush1.msra.mxu0 0.0
    %5222 = vmatprep.subr.mxu0 0.0
    %5223 = vmatpush1.msra.mxu0 0.0
    %5224 = vmatprep.subr.mxu0 0.0
    %5225 = vmatpush1.msra.mxu0 0.0
    %5226 = vmatprep.subr.mxu0 0.0
    %5227 = vmatpush1.msra.mxu0 0.0
    %5228 = vmatprep.subr.mxu0 0.0
    %5229 = vmatpush1.msra.mxu0 0.0
    %5230 = vmatprep.subr.mxu0 0.0
    %5231 = vmatpush1.msra.mxu0 0.0
    %5232 = vmatprep.subr.mxu0 0.0
    %5233 = vmatpush1.msra.mxu0 0.0
    %5234 = vmatprep.subr.mxu0 0.0
    %5235 = vmatpush1.msra.mxu0 0.0
    %5236 = vmatprep.subr.mxu0 0.0
    %5237 = vmatpush1.msra.mxu0 0.0
    %5238 = vmatprep.subr.mxu0 0.0
    %5239 = vmatpush1.msra.mxu0 0.0
    %5240 = vmatprep.subr.mxu0 0.0
    %5241 = vmatpush1.msra.mxu0 0.0
    %5242 = vmatprep.subr.mxu0 0.0
    %5243 = vmatpush1.msra.mxu0 0.0
    %5244 = vmatprep.subr.mxu0 0.0
    %5245 = vmatpush1.msra.mxu0 0.0
    %5246 = vmatprep.subr.mxu0 0.0
    %5247 = vmatpush1.msra.mxu0 0.0
    %5248 = vmatprep.subr.mxu0 0.0
    %5249 = vmatpush1.msra.mxu0 0.0
    %5250 = vmatprep.subr.mxu0 0.0
    %5251 = vmatpush1.msra.mxu0 0.0
    %5252 = vmatprep.subr.mxu0 0.0
    %5253 = vmatpush1.msra.mxu0 0.0
    %5254 = vmatprep.subr.mxu0 0.0
    %5255 = vmatpush1.msra.mxu0 0.0
    %5256 = vmatprep.mubr.f32.mxu0 0.0
    %v5257 = vand.u32 %v4818, 4294901760
    %5258 = vmatmul.mubr.f32.gmra.mrb[0].mxu0 %v5257
    %v5259 = vpop.f32.mrb[0].mxu0
    %v5260 = vadd.f32 %v5169, %v5259
    %v5261 = vpop.f32.mrb[0].mxu0
    %5262 = vmatprep.mubr.f32.mxu0 0.0
    %v5263 = vand.u32 %v4820, 4294901760
    %5264 = vmatmul.mubr.f32.gmra.mrb[0].mxu0 %v5263
    %v5265 = vpop.f32.mrb[0].mxu0
    %v5266 = vadd.f32 %v5177, %v5265
    %v5267 = vpop.f32.mrb[0].mxu0
    %5268 = vdwg.mxu0
    %5269 = vmatprep.subr.mxu0 0.0
    %v5270 = vand.u32 %v4253, 4294901760
    %5271 = vmatpush1.msra.mxu0 %v5270
    %5272 = vmatprep.subr.mxu0 0.0
    %v5273 = vand.u32 %v4254, 4294901760
    %5274 = vmatpush1.msra.mxu0 %v5273
    %5275 = vmatprep.subr.mxu0 0.0
    %v5276 = vand.u32 %v4255, 4294901760
    %5277 = vmatpush1.msra.mxu0 %v5276
    %5278 = vmatprep.subr.mxu0 0.0
    %v5279 = vand.u32 %v4256, 4294901760
    %5280 = vmatpush1.msra.mxu0 %v5279
    %5281 = vmatprep.subr.mxu0 0.0
    %5282 = vmatpush1.msra.mxu0 0.0
    %5283 = vmatprep.subr.mxu0 0.0
    %5284 = vmatpush1.msra.mxu0 0.0
    %5285 = vmatprep.subr.mxu0 0.0
    %5286 = vmatpush1.msra.mxu0 0.0
    %5287 = vmatprep.subr.mxu0 0.0
    %5288 = vmatpush1.msra.mxu0 0.0
    %5289 = vmatprep.subr.mxu0 0.0
    %5290 = vmatpush1.msra.mxu0 0.0
    %5291 = vmatprep.subr.mxu0 0.0
    %5292 = vmatpush1.msra.mxu0 0.0
    %5293 = vmatprep.subr.mxu0 0.0
    %5294 = vmatpush1.msra.mxu0 0.0
    %5295 = vmatprep.subr.mxu0 0.0
    %5296 = vmatpush1.msra.mxu0 0.0
    %5297 = vmatprep.subr.mxu0 0.0
    %5298 = vmatpush1.msra.mxu0 0.0
    %5299 = vmatprep.subr.mxu0 0.0
    %5300 = vmatpush1.msra.mxu0 0.0
    %5301 = vmatprep.subr.mxu0 0.0
    %5302 = vmatpush1.msra.mxu0 0.0
    %5303 = vmatprep.subr.mxu0 0.0
    %5304 = vmatpush1.msra.mxu0 0.0
    %5305 = vmatprep.subr.mxu0 0.0
    %5306 = vmatpush1.msra.mxu0 0.0
    %5307 = vmatprep.subr.mxu0 0.0
    %5308 = vmatpush1.msra.mxu0 0.0
    %5309 = vmatprep.subr.mxu0 0.0
    %5310 = vmatpush1.msra.mxu0 0.0
    %5311 = vmatprep.subr.mxu0 0.0
    %5312 = vmatpush1.msra.mxu0 0.0
    %5313 = vmatprep.subr.mxu0 0.0
    %5314 = vmatpush1.msra.mxu0 0.0
    %5315 = vmatprep.subr.mxu0 0.0
    %5316 = vmatpush1.msra.mxu0 0.0
    %5317 = vmatprep.subr.mxu0 0.0
    %5318 = vmatpush1.msra.mxu0 0.0
    %5319 = vmatprep.subr.mxu0 0.0
    %5320 = vmatpush1.msra.mxu0 0.0
    %5321 = vmatprep.subr.mxu0 0.0
    %5322 = vmatpush1.msra.mxu0 0.0
    %5323 = vmatprep.subr.mxu0 0.0
    %5324 = vmatpush1.msra.mxu0 0.0
    %5325 = vmatprep.subr.mxu0 0.0
    %5326 = vmatpush1.msra.mxu0 0.0
    %5327 = vmatprep.subr.mxu0 0.0
    %5328 = vmatpush1.msra.mxu0 0.0
    %5329 = vmatprep.subr.mxu0 0.0
    %5330 = vmatpush1.msra.mxu0 0.0
    %5331 = vmatprep.subr.mxu0 0.0
    %5332 = vmatpush1.msra.mxu0 0.0
    %5333 = vmatprep.subr.mxu0 0.0
    %5334 = vmatpush1.msra.mxu0 0.0
    %5335 = vmatprep.subr.mxu0 0.0
    %5336 = vmatpush1.msra.mxu0 0.0
    %5337 = vmatprep.mubr.f32.mxu0 0.0
    %v5338 = vand.u32 %v4818, 4294901760
    %5339 = vmatmul.mubr.f32.gmra.mrb[0].mxu0 %v5338
    %v5340 = vpop.f32.mrb[0].mxu0
    %v5341 = vadd.f32 %v5260, %v5340
    %v5342 = vpop.f32.mrb[0].mxu0
    %5343 = vmatprep.mubr.f32.mxu0 0.0
    %v5344 = vand.u32 %v4820, 4294901760
    %5345 = vmatmul.mubr.f32.gmra.mrb[0].mxu0 %v5344
    %v5346 = vpop.f32.mrb[0].mxu0
    %v5347 = vadd.f32 %v5266, %v5346
    %v5348 = vpop.f32.mrb[0].mxu0
    %5349 = vdwg.mxu0
    %vm5350 = vcmask 1045504
    %v5351 = vrot.slane %v4271, 2
    %v5352 = vrot.slane %v4273, 2
    %v5353 = vsel %vm5350, %v5351, %v5352
    %v5354 = vrot.slane %v4272, 2
    %v5355 = vrot.slane %v4274, 2
    %v5356 = vsel %vm5350, %v5354, %v5355
    %v5357 = vsel %vm817, %v5353, 0
    %v5359 = vsel %vm817, %v5356, 0
    %5361 = vmatprep.subr.mxu0 0.0
    %v5362 = vand.u32 %v4261, 4294901760
    %5363 = vmatpush1.msra.mxu0 %v5362
    %5364 = vmatprep.subr.mxu0 0.0
    %v5365 = vand.u32 %v4262, 4294901760
    %5366 = vmatpush1.msra.mxu0 %v5365
    %5367 = vmatprep.subr.mxu0 0.0
    %v5368 = vand.u32 %v4263, 4294901760
    %5369 = vmatpush1.msra.mxu0 %v5368
    %5370 = vmatprep.subr.mxu0 0.0
    %v5371 = vand.u32 %v4264, 4294901760
    %5372 = vmatpush1.msra.mxu0 %v5371
    %5373 = vmatprep.subr.mxu0 0.0
    %5374 = vmatpush1.msra.mxu0 0.0
    %5375 = vmatprep.subr.mxu0 0.0
    %5376 = vmatpush1.msra.mxu0 0.0
    %5377 = vmatprep.subr.mxu0 0.0
    %5378 = vmatpush1.msra.mxu0 0.0
    %5379 = vmatprep.subr.mxu0 0.0
    %5380 = vmatpush1.msra.mxu0 0.0
    %5381 = vmatprep.subr.mxu0 0.0
    %5382 = vmatpush1.msra.mxu0 0.0
    %5383 = vmatprep.subr.mxu0 0.0
    %5384 = vmatpush1.msra.mxu0 0.0
    %5385 = vmatprep.subr.mxu0 0.0
    %5386 = vmatpush1.msra.mxu0 0.0
    %5387 = vmatprep.subr.mxu0 0.0
    %5388 = vmatpush1.msra.mxu0 0.0
    %5389 = vmatprep.subr.mxu0 0.0
    %5390 = vmatpush1.msra.mxu0 0.0
    %5391 = vmatprep.subr.mxu0 0.0
    %5392 = vmatpush1.msra.mxu0 0.0
    %5393 = vmatprep.subr.mxu0 0.0
    %5394 = vmatpush1.msra.mxu0 0.0
    %5395 = vmatprep.subr.mxu0 0.0
    %5396 = vmatpush1.msra.mxu0 0.0
    %5397 = vmatprep.subr.mxu0 0.0
    %5398 = vmatpush1.msra.mxu0 0.0
    %5399 = vmatprep.subr.mxu0 0.0
    %5400 = vmatpush1.msra.mxu0 0.0
    %5401 = vmatprep.subr.mxu0 0.0
    %5402 = vmatpush1.msra.mxu0 0.0
    %5403 = vmatprep.subr.mxu0 0.0
    %5404 = vmatpush1.msra.mxu0 0.0
    %5405 = vmatprep.subr.mxu0 0.0
    %5406 = vmatpush1.msra.mxu0 0.0
    %5407 = vmatprep.subr.mxu0 0.0
    %5408 = vmatpush1.msra.mxu0 0.0
    %5409 = vmatprep.subr.mxu0 0.0
    %5410 = vmatpush1.msra.mxu0 0.0
    %5411 = vmatprep.subr.mxu0 0.0
    %5412 = vmatpush1.msra.mxu0 0.0
    %5413 = vmatprep.subr.mxu0 0.0
    %5414 = vmatpush1.msra.mxu0 0.0
    %5415 = vmatprep.subr.mxu0 0.0
    %5416 = vmatpush1.msra.mxu0 0.0
    %5417 = vmatprep.subr.mxu0 0.0
    %5418 = vmatpush1.msra.mxu0 0.0
    %5419 = vmatprep.subr.mxu0 0.0
    %5420 = vmatpush1.msra.mxu0 0.0
    %5421 = vmatprep.subr.mxu0 0.0
    %5422 = vmatpush1.msra.mxu0 0.0
    %5423 = vmatprep.subr.mxu0 0.0
    %5424 = vmatpush1.msra.mxu0 0.0
    %5425 = vmatprep.subr.mxu0 0.0
    %5426 = vmatpush1.msra.mxu0 0.0
    %5427 = vmatprep.subr.mxu0 0.0
    %5428 = vmatpush1.msra.mxu0 0.0
    %5429 = vmatprep.mubr.f32.mxu0 0.0
    %v5430 = vand.u32 %v5357, 4294901760
    %v5431 = vsub.f32 %v5357, %v5430
    %v5432 = vand.u32 %v5431, 4294901760
    %v5433 = vsub.f32 %v5431, %v5432
    %v5434 = vand.u32 %v5433, 4294901760
    %5435 = vmatmul.mubr.f32.gmra.mrb[0].mxu0 %v5434
    %v5436 = vpop.f32.mrb[0].mxu0
    %v5437 = vadd.f32 0.0, %v5436
    %v5438 = vpop.f32.mrb[0].mxu0
    %5439 = vmatprep.mubr.f32.mxu0 0.0
    %v5440 = vand.u32 %v5359, 4294901760
    %v5441 = vsub.f32 %v5359, %v5440
    %v5442 = vand.u32 %v5441, 4294901760
    %v5443 = vsub.f32 %v5441, %v5442
    %v5444 = vand.u32 %v5443, 4294901760
    %5445 = vmatmul.mubr.f32.gmra.mrb[0].mxu0 %v5444
    %v5446 = vpop.f32.mrb[0].mxu0
    %v5447 = vadd.f32 0.0, %v5446
    %v5448 = vpop.f32.mrb[0].mxu0
    %5449 = vdwg.mxu0
    %5450 = vmatprep.subr.mxu0 0.0
    %v5451 = vand.u32 %v4261, 4294901760
    %v5452 = vsub.f32 %v4261, %v5451
    %v5453 = vand.u32 %v5452, 4294901760
    %v5454 = vsub.f32 %v5452, %v5453
    %v5455 = vand.u32 %v5454, 4294901760
    %5456 = vmatpush1.msra.mxu0 %v5455
    %5457 = vmatprep.subr.mxu0 0.0
    %v5458 = vand.u32 %v4262, 4294901760
    %v5459 = vsub.f32 %v4262, %v5458
    %v5460 = vand.u32 %v5459, 4294901760
    %v5461 = vsub.f32 %v5459, %v5460
    %v5462 = vand.u32 %v5461, 4294901760
    %5463 = vmatpush1.msra.mxu0 %v5462
    %5464 = vmatprep.subr.mxu0 0.0
    %v5465 = vand.u32 %v4263, 4294901760
    %v5466 = vsub.f32 %v4263, %v5465
    %v5467 = vand.u32 %v5466, 4294901760
    %v5468 = vsub.f32 %v5466, %v5467
    %v5469 = vand.u32 %v5468, 4294901760
    %5470 = vmatpush1.msra.mxu0 %v5469
    %5471 = vmatprep.subr.mxu0 0.0
    %v5472 = vand.u32 %v4264, 4294901760
    %v5473 = vsub.f32 %v4264, %v5472
    %v5474 = vand.u32 %v5473, 4294901760
    %v5475 = vsub.f32 %v5473, %v5474
    %v5476 = vand.u32 %v5475, 4294901760
    %5477 = vmatpush1.msra.mxu0 %v5476
    %5478 = vmatprep.subr.mxu0 0.0
    %5479 = vmatpush1.msra.mxu0 0.0
    %5480 = vmatprep.subr.mxu0 0.0
    %5481 = vmatpush1.msra.mxu0 0.0
    %5482 = vmatprep.subr.mxu0 0.0
    %5483 = vmatpush1.msra.mxu0 0.0
    %5484 = vmatprep.subr.mxu0 0.0
    %5485 = vmatpush1.msra.mxu0 0.0
    %5486 = vmatprep.subr.mxu0 0.0
    %5487 = vmatpush1.msra.mxu0 0.0
    %5488 = vmatprep.subr.mxu0 0.0
    %5489 = vmatpush1.msra.mxu0 0.0
    %5490 = vmatprep.subr.mxu0 0.0
    %5491 = vmatpush1.msra.mxu0 0.0
    %5492 = vmatprep.subr.mxu0 0.0
    %5493 = vmatpush1.msra.mxu0 0.0
    %5494 = vmatprep.subr.mxu0 0.0
    %5495 = vmatpush1.msra.mxu0 0.0
    %5496 = vmatprep.subr.mxu0 0.0
    %5497 = vmatpush1.msra.mxu0 0.0
    %5498 = vmatprep.subr.mxu0 0.0
    %5499 = vmatpush1.msra.mxu0 0.0
    %5500 = vmatprep.subr.mxu0 0.0
    %5501 = vmatpush1.msra.mxu0 0.0
    %5502 = vmatprep.subr.mxu0 0.0
    %5503 = vmatpush1.msra.mxu0 0.0
    %5504 = vmatprep.subr.mxu0 0.0
    %5505 = vmatpush1.msra.mxu0 0.0
    %5506 = vmatprep.subr.mxu0 0.0
    %5507 = vmatpush1.msra.mxu0 0.0
    %5508 = vmatprep.subr.mxu0 0.0
    %5509 = vmatpush1.msra.mxu0 0.0
    %5510 = vmatprep.subr.mxu0 0.0
    %5511 = vmatpush1.msra.mxu0 0.0
    %5512 = vmatprep.subr.mxu0 0.0
    %5513 = vmatpush1.msra.mxu0 0.0
    %5514 = vmatprep.subr.mxu0 0.0
    %5515 = vmatpush1.msra.mxu0 0.0
    %5516 = vmatprep.subr.mxu0 0.0
    %5517 = vmatpush1.msra.mxu0 0.0
    %5518 = vmatprep.subr.mxu0 0.0
    %5519 = vmatpush1.msra.mxu0 0.0
    %5520 = vmatprep.subr.mxu0 0.0
    %5521 = vmatpush1.msra.mxu0 0.0
    %5522 = vmatprep.subr.mxu0 0.0
    %5523 = vmatpush1.msra.mxu0 0.0
    %5524 = vmatprep.subr.mxu0 0.0
    %5525 = vmatpush1.msra.mxu0 0.0
    %5526 = vmatprep.subr.mxu0 0.0
    %5527 = vmatpush1.msra.mxu0 0.0
    %5528 = vmatprep.subr.mxu0 0.0
    %5529 = vmatpush1.msra.mxu0 0.0
    %5530 = vmatprep.subr.mxu0 0.0
    %5531 = vmatpush1.msra.mxu0 0.0
    %5532 = vmatprep.subr.mxu0 0.0
    %5533 = vmatpush1.msra.mxu0 0.0
    %5534 = vmatprep.mubr.f32.mxu0 0.0
    %v5535 = vand.u32 %v5357, 4294901760
    %5536 = vmatmul.mubr.f32.gmra.mrb[0].mxu0 %v5535
    %v5537 = vpop.f32.mrb[0].mxu0
    %v5538 = vadd.f32 %v5437, %v5537
    %v5539 = vpop.f32.mrb[0].mxu0
    %5540 = vmatprep.mubr.f32.mxu0 0.0
    %v5541 = vand.u32 %v5359, 4294901760
    %5542 = vmatmul.mubr.f32.gmra.mrb[0].mxu0 %v5541
    %v5543 = vpop.f32.mrb[0].mxu0
    %v5544 = vadd.f32 %v5447, %v5543
    %v5545 = vpop.f32.mrb[0].mxu0
    %5546 = vdwg.mxu0
    %5547 = vmatprep.subr.mxu0 0.0
    %v5548 = vand.u32 %v4261, 4294901760
    %v5549 = vsub.f32 %v4261, %v5548
    %5550 = vmatpush1.msra.mxu0 %v5549
    %5551 = vmatprep.subr.mxu0 0.0
    %v5552 = vand.u32 %v4262, 4294901760
    %v5553 = vsub.f32 %v4262, %v5552
    %5554 = vmatpush1.msra.mxu0 %v5553
    %5555 = vmatprep.subr.mxu0 0.0
    %v5556 = vand.u32 %v4263, 4294901760
    %v5557 = vsub.f32 %v4263, %v5556
    %5558 = vmatpush1.msra.mxu0 %v5557
    %5559 = vmatprep.subr.mxu0 0.0
    %v5560 = vand.u32 %v4264, 4294901760
    %v5561 = vsub.f32 %v4264, %v5560
    %5562 = vmatpush1.msra.mxu0 %v5561
    %5563 = vmatprep.subr.mxu0 0.0
    %5564 = vmatpush1.msra.mxu0 0.0
    %5565 = vmatprep.subr.mxu0 0.0
    %5566 = vmatpush1.msra.mxu0 0.0
    %5567 = vmatprep.subr.mxu0 0.0
    %5568 = vmatpush1.msra.mxu0 0.0
    %5569 = vmatprep.subr.mxu0 0.0
    %5570 = vmatpush1.msra.mxu0 0.0
    %5571 = vmatprep.subr.mxu0 0.0
    %5572 = vmatpush1.msra.mxu0 0.0
    %5573 = vmatprep.subr.mxu0 0.0
    %5574 = vmatpush1.msra.mxu0 0.0
    %5575 = vmatprep.subr.mxu0 0.0
    %5576 = vmatpush1.msra.mxu0 0.0
    %5577 = vmatprep.subr.mxu0 0.0
    %5578 = vmatpush1.msra.mxu0 0.0
    %5579 = vmatprep.subr.mxu0 0.0
    %5580 = vmatpush1.msra.mxu0 0.0
    %5581 = vmatprep.subr.mxu0 0.0
    %5582 = vmatpush1.msra.mxu0 0.0
    %5583 = vmatprep.subr.mxu0 0.0
    %5584 = vmatpush1.msra.mxu0 0.0
    %5585 = vmatprep.subr.mxu0 0.0
    %5586 = vmatpush1.msra.mxu0 0.0
    %5587 = vmatprep.subr.mxu0 0.0
    %5588 = vmatpush1.msra.mxu0 0.0
    %5589 = vmatprep.subr.mxu0 0.0
    %5590 = vmatpush1.msra.mxu0 0.0
    %5591 = vmatprep.subr.mxu0 0.0
    %5592 = vmatpush1.msra.mxu0 0.0
    %5593 = vmatprep.subr.mxu0 0.0
    %5594 = vmatpush1.msra.mxu0 0.0
    %5595 = vmatprep.subr.mxu0 0.0
    %5596 = vmatpush1.msra.mxu0 0.0
    %5597 = vmatprep.subr.mxu0 0.0
    %5598 = vmatpush1.msra.mxu0 0.0
    %5599 = vmatprep.subr.mxu0 0.0
    %5600 = vmatpush1.msra.mxu0 0.0
    %5601 = vmatprep.subr.mxu0 0.0
    %5602 = vmatpush1.msra.mxu0 0.0
    %5603 = vmatprep.subr.mxu0 0.0
    %5604 = vmatpush1.msra.mxu0 0.0
    %5605 = vmatprep.subr.mxu0 0.0
    %5606 = vmatpush1.msra.mxu0 0.0
    %5607 = vmatprep.subr.mxu0 0.0
    %5608 = vmatpush1.msra.mxu0 0.0
    %5609 = vmatprep.subr.mxu0 0.0
    %5610 = vmatpush1.msra.mxu0 0.0
    %5611 = vmatprep.subr.mxu0 0.0
    %5612 = vmatpush1.msra.mxu0 0.0
    %5613 = vmatprep.subr.mxu0 0.0
    %5614 = vmatpush1.msra.mxu0 0.0
    %5615 = vmatprep.subr.mxu0 0.0
    %5616 = vmatpush1.msra.mxu0 0.0
    %5617 = vmatprep.subr.mxu0 0.0
    %5618 = vmatpush1.msra.mxu0 0.0
    %5619 = vmatprep.mubr.f32.mxu0 0.0
    %v5620 = vand.u32 %v5357, 4294901760
    %v5621 = vsub.f32 %v5357, %v5620
    %5622 = vmatmul.mubr.f32.gmra.mrb[0].mxu0 %v5621
    %v5623 = vpop.f32.mrb[0].mxu0
    %v5624 = vadd.f32 %v5538, %v5623
    %v5625 = vpop.f32.mrb[0].mxu0
    %5626 = vmatprep.mubr.f32.mxu0 0.0
    %v5627 = vand.u32 %v5359, 4294901760
    %v5628 = vsub.f32 %v5359, %v5627
    %5629 = vmatmul.mubr.f32.gmra.mrb[0].mxu0 %v5628
    %v5630 = vpop.f32.mrb[0].mxu0
    %v5631 = vadd.f32 %v5544, %v5630
    %v5632 = vpop.f32.mrb[0].mxu0
    %5633 = vdwg.mxu0
    %5634 = vmatprep.subr.mxu0 0.0
    %v5635 = vand.u32 %v4261, 4294901760
    %5636 = vmatpush1.msra.mxu0 %v5635
    %5637 = vmatprep.subr.mxu0 0.0
    %v5638 = vand.u32 %v4262, 4294901760
    %5639 = vmatpush1.msra.mxu0 %v5638
    %5640 = vmatprep.subr.mxu0 0.0
    %v5641 = vand.u32 %v4263, 4294901760
    %5642 = vmatpush1.msra.mxu0 %v5641
    %5643 = vmatprep.subr.mxu0 0.0
    %v5644 = vand.u32 %v4264, 4294901760
    %5645 = vmatpush1.msra.mxu0 %v5644
    %5646 = vmatprep.subr.mxu0 0.0
    %5647 = vmatpush1.msra.mxu0 0.0
    %5648 = vmatprep.subr.mxu0 0.0
    %5649 = vmatpush1.msra.mxu0 0.0
    %5650 = vmatprep.subr.mxu0 0.0
    %5651 = vmatpush1.msra.mxu0 0.0
    %5652 = vmatprep.subr.mxu0 0.0
    %5653 = vmatpush1.msra.mxu0 0.0
    %5654 = vmatprep.subr.mxu0 0.0
    %5655 = vmatpush1.msra.mxu0 0.0
    %5656 = vmatprep.subr.mxu0 0.0
    %5657 = vmatpush1.msra.mxu0 0.0
    %5658 = vmatprep.subr.mxu0 0.0
    %5659 = vmatpush1.msra.mxu0 0.0
    %5660 = vmatprep.subr.mxu0 0.0
    %5661 = vmatpush1.msra.mxu0 0.0
    %5662 = vmatprep.subr.mxu0 0.0
    %5663 = vmatpush1.msra.mxu0 0.0
    %5664 = vmatprep.subr.mxu0 0.0
    %5665 = vmatpush1.msra.mxu0 0.0
    %5666 = vmatprep.subr.mxu0 0.0
    %5667 = vmatpush1.msra.mxu0 0.0
    %5668 = vmatprep.subr.mxu0 0.0
    %5669 = vmatpush1.msra.mxu0 0.0
    %5670 = vmatprep.subr.mxu0 0.0
    %5671 = vmatpush1.msra.mxu0 0.0
    %5672 = vmatprep.subr.mxu0 0.0
    %5673 = vmatpush1.msra.mxu0 0.0
    %5674 = vmatprep.subr.mxu0 0.0
    %5675 = vmatpush1.msra.mxu0 0.0
    %5676 = vmatprep.subr.mxu0 0.0
    %5677 = vmatpush1.msra.mxu0 0.0
    %5678 = vmatprep.subr.mxu0 0.0
    %5679 = vmatpush1.msra.mxu0 0.0
    %5680 = vmatprep.subr.mxu0 0.0
    %5681 = vmatpush1.msra.mxu0 0.0
    %5682 = vmatprep.subr.mxu0 0.0
    %5683 = vmatpush1.msra.mxu0 0.0
    %5684 = vmatprep.subr.mxu0 0.0
    %5685 = vmatpush1.msra.mxu0 0.0
    %5686 = vmatprep.subr.mxu0 0.0
    %5687 = vmatpush1.msra.mxu0 0.0
    %5688 = vmatprep.subr.mxu0 0.0
    %5689 = vmatpush1.msra.mxu0 0.0
    %5690 = vmatprep.subr.mxu0 0.0
    %5691 = vmatpush1.msra.mxu0 0.0
    %5692 = vmatprep.subr.mxu0 0.0
    %5693 = vmatpush1.msra.mxu0 0.0
    %5694 = vmatprep.subr.mxu0 0.0
    %5695 = vmatpush1.msra.mxu0 0.0
    %5696 = vmatprep.subr.mxu0 0.0
    %5697 = vmatpush1.msra.mxu0 0.0
    %5698 = vmatprep.subr.mxu0 0.0
    %5699 = vmatpush1.msra.mxu0 0.0
    %5700 = vmatprep.subr.mxu0 0.0
    %5701 = vmatpush1.msra.mxu0 0.0
    %5702 = vmatprep.mubr.f32.mxu0 0.0
    %v5703 = vand.u32 %v5357, 4294901760
    %v5704 = vsub.f32 %v5357, %v5703
    %v5705 = vand.u32 %v5704, 4294901760
    %5706 = vmatmul.mubr.f32.gmra.mrb[0].mxu0 %v5705
    %v5707 = vpop.f32.mrb[0].mxu0
    %v5708 = vadd.f32 %v5624, %v5707
    %v5709 = vpop.f32.mrb[0].mxu0
    %5710 = vmatprep.mubr.f32.mxu0 0.0
    %v5711 = vand.u32 %v5359, 4294901760
    %v5712 = vsub.f32 %v5359, %v5711
    %v5713 = vand.u32 %v5712, 4294901760
    %5714 = vmatmul.mubr.f32.gmra.mrb[0].mxu0 %v5713
    %v5715 = vpop.f32.mrb[0].mxu0
    %v5716 = vadd.f32 %v5631, %v5715
    %v5717 = vpop.f32.mrb[0].mxu0
    %5718 = vdwg.mxu0
    %5719 = vmatprep.subr.mxu0 0.0
    %v5720 = vand.u32 %v4261, 4294901760
    %v5721 = vsub.f32 %v4261, %v5720
    %v5722 = vand.u32 %v5721, 4294901760
    %5723 = vmatpush1.msra.mxu0 %v5722
    %5724 = vmatprep.subr.mxu0 0.0
    %v5725 = vand.u32 %v4262, 4294901760
    %v5726 = vsub.f32 %v4262, %v5725
    %v5727 = vand.u32 %v5726, 4294901760
    %5728 = vmatpush1.msra.mxu0 %v5727
    %5729 = vmatprep.subr.mxu0 0.0
    %v5730 = vand.u32 %v4263, 4294901760
    %v5731 = vsub.f32 %v4263, %v5730
    %v5732 = vand.u32 %v5731, 4294901760
    %5733 = vmatpush1.msra.mxu0 %v5732
    %5734 = vmatprep.subr.mxu0 0.0
    %v5735 = vand.u32 %v4264, 4294901760
    %v5736 = vsub.f32 %v4264, %v5735
    %v5737 = vand.u32 %v5736, 4294901760
    %5738 = vmatpush1.msra.mxu0 %v5737
    %5739 = vmatprep.subr.mxu0 0.0
    %5740 = vmatpush1.msra.mxu0 0.0
    %5741 = vmatprep.subr.mxu0 0.0
    %5742 = vmatpush1.msra.mxu0 0.0
    %5743 = vmatprep.subr.mxu0 0.0
    %5744 = vmatpush1.msra.mxu0 0.0
    %5745 = vmatprep.subr.mxu0 0.0
    %5746 = vmatpush1.msra.mxu0 0.0
    %5747 = vmatprep.subr.mxu0 0.0
    %5748 = vmatpush1.msra.mxu0 0.0
    %5749 = vmatprep.subr.mxu0 0.0
    %5750 = vmatpush1.msra.mxu0 0.0
    %5751 = vmatprep.subr.mxu0 0.0
    %5752 = vmatpush1.msra.mxu0 0.0
    %5753 = vmatprep.subr.mxu0 0.0
    %5754 = vmatpush1.msra.mxu0 0.0
    %5755 = vmatprep.subr.mxu0 0.0
    %5756 = vmatpush1.msra.mxu0 0.0
    %5757 = vmatprep.subr.mxu0 0.0
    %5758 = vmatpush1.msra.mxu0 0.0
    %5759 = vmatprep.subr.mxu0 0.0
    %5760 = vmatpush1.msra.mxu0 0.0
    %5761 = vmatprep.subr.mxu0 0.0
    %5762 = vmatpush1.msra.mxu0 0.0
    %5763 = vmatprep.subr.mxu0 0.0
    %5764 = vmatpush1.msra.mxu0 0.0
    %5765 = vmatprep.subr.mxu0 0.0
    %5766 = vmatpush1.msra.mxu0 0.0
    %5767 = vmatprep.subr.mxu0 0.0
    %5768 = vmatpush1.msra.mxu0 0.0
    %5769 = vmatprep.subr.mxu0 0.0
    %5770 = vmatpush1.msra.mxu0 0.0
    %5771 = vmatprep.subr.mxu0 0.0
    %5772 = vmatpush1.msra.mxu0 0.0
    %5773 = vmatprep.subr.mxu0 0.0
    %5774 = vmatpush1.msra.mxu0 0.0
    %5775 = vmatprep.subr.mxu0 0.0
    %5776 = vmatpush1.msra.mxu0 0.0
    %5777 = vmatprep.subr.mxu0 0.0
    %5778 = vmatpush1.msra.mxu0 0.0
    %5779 = vmatprep.subr.mxu0 0.0
    %5780 = vmatpush1.msra.mxu0 0.0
    %5781 = vmatprep.subr.mxu0 0.0
    %5782 = vmatpush1.msra.mxu0 0.0
    %5783 = vmatprep.subr.mxu0 0.0
    %5784 = vmatpush1.msra.mxu0 0.0
    %5785 = vmatprep.subr.mxu0 0.0
    %5786 = vmatpush1.msra.mxu0 0.0
    %5787 = vmatprep.subr.mxu0 0.0
    %5788 = vmatpush1.msra.mxu0 0.0
    %5789 = vmatprep.subr.mxu0 0.0
    %5790 = vmatpush1.msra.mxu0 0.0
    %5791 = vmatprep.subr.mxu0 0.0
    %5792 = vmatpush1.msra.mxu0 0.0
    %5793 = vmatprep.subr.mxu0 0.0
    %5794 = vmatpush1.msra.mxu0 0.0
    %5795 = vmatprep.mubr.f32.mxu0 0.0
    %v5796 = vand.u32 %v5357, 4294901760
    %5797 = vmatmul.mubr.f32.gmra.mrb[0].mxu0 %v5796
    %v5798 = vpop.f32.mrb[0].mxu0
    %v5799 = vadd.f32 %v5708, %v5798
    %v5800 = vpop.f32.mrb[0].mxu0
    %5801 = vmatprep.mubr.f32.mxu0 0.0
    %v5802 = vand.u32 %v5359, 4294901760
    %5803 = vmatmul.mubr.f32.gmra.mrb[0].mxu0 %v5802
    %v5804 = vpop.f32.mrb[0].mxu0
    %v5805 = vadd.f32 %v5716, %v5804
    %v5806 = vpop.f32.mrb[0].mxu0
    %5807 = vdwg.mxu0
    %5808 = vmatprep.subr.mxu0 0.0
    %v5809 = vand.u32 %v4261, 4294901760
    %5810 = vmatpush1.msra.mxu0 %v5809
    %5811 = vmatprep.subr.mxu0 0.0
    %v5812 = vand.u32 %v4262, 4294901760
    %5813 = vmatpush1.msra.mxu0 %v5812
    %5814 = vmatprep.subr.mxu0 0.0
    %v5815 = vand.u32 %v4263, 4294901760
    %5816 = vmatpush1.msra.mxu0 %v5815
    %5817 = vmatprep.subr.mxu0 0.0
    %v5818 = vand.u32 %v4264, 4294901760
    %5819 = vmatpush1.msra.mxu0 %v5818
    %5820 = vmatprep.subr.mxu0 0.0
    %5821 = vmatpush1.msra.mxu0 0.0
    %5822 = vmatprep.subr.mxu0 0.0
    %5823 = vmatpush1.msra.mxu0 0.0
    %5824 = vmatprep.subr.mxu0 0.0
    %5825 = vmatpush1.msra.mxu0 0.0
    %5826 = vmatprep.subr.mxu0 0.0
    %5827 = vmatpush1.msra.mxu0 0.0
    %5828 = vmatprep.subr.mxu0 0.0
    %5829 = vmatpush1.msra.mxu0 0.0
    %5830 = vmatprep.subr.mxu0 0.0
    %5831 = vmatpush1.msra.mxu0 0.0
    %5832 = vmatprep.subr.mxu0 0.0
    %5833 = vmatpush1.msra.mxu0 0.0
    %5834 = vmatprep.subr.mxu0 0.0
    %5835 = vmatpush1.msra.mxu0 0.0
    %5836 = vmatprep.subr.mxu0 0.0
    %5837 = vmatpush1.msra.mxu0 0.0
    %5838 = vmatprep.subr.mxu0 0.0
    %5839 = vmatpush1.msra.mxu0 0.0
    %5840 = vmatprep.subr.mxu0 0.0
    %5841 = vmatpush1.msra.mxu0 0.0
    %5842 = vmatprep.subr.mxu0 0.0
    %5843 = vmatpush1.msra.mxu0 0.0
    %5844 = vmatprep.subr.mxu0 0.0
    %5845 = vmatpush1.msra.mxu0 0.0
    %5846 = vmatprep.subr.mxu0 0.0
    %5847 = vmatpush1.msra.mxu0 0.0
    %5848 = vmatprep.subr.mxu0 0.0
    %5849 = vmatpush1.msra.mxu0 0.0
    %5850 = vmatprep.subr.mxu0 0.0
    %5851 = vmatpush1.msra.mxu0 0.0
    %5852 = vmatprep.subr.mxu0 0.0
    %5853 = vmatpush1.msra.mxu0 0.0
    %5854 = vmatprep.subr.mxu0 0.0
    %5855 = vmatpush1.msra.mxu0 0.0
    %5856 = vmatprep.subr.mxu0 0.0
    %5857 = vmatpush1.msra.mxu0 0.0
    %5858 = vmatprep.subr.mxu0 0.0
    %5859 = vmatpush1.msra.mxu0 0.0
    %5860 = vmatprep.subr.mxu0 0.0
    %5861 = vmatpush1.msra.mxu0 0.0
    %5862 = vmatprep.subr.mxu0 0.0
    %5863 = vmatpush1.msra.mxu0 0.0
    %5864 = vmatprep.subr.mxu0 0.0
    %5865 = vmatpush1.msra.mxu0 0.0
    %5866 = vmatprep.subr.mxu0 0.0
    %5867 = vmatpush1.msra.mxu0 0.0
    %5868 = vmatprep.subr.mxu0 0.0
    %5869 = vmatpush1.msra.mxu0 0.0
    %5870 = vmatprep.subr.mxu0 0.0
    %5871 = vmatpush1.msra.mxu0 0.0
    %5872 = vmatprep.subr.mxu0 0.0
    %5873 = vmatpush1.msra.mxu0 0.0
    %5874 = vmatprep.subr.mxu0 0.0
    %5875 = vmatpush1.msra.mxu0 0.0
    %5876 = vmatprep.mubr.f32.mxu0 0.0
    %v5877 = vand.u32 %v5357, 4294901760
    %5878 = vmatmul.mubr.f32.gmra.mrb[0].mxu0 %v5877
    %v5879 = vpop.f32.mrb[0].mxu0
    %v5880 = vadd.f32 %v5799, %v5879
    %v5881 = vpop.f32.mrb[0].mxu0
    %5882 = vmatprep.mubr.f32.mxu0 0.0
    %v5883 = vand.u32 %v5359, 4294901760
    %5884 = vmatmul.mubr.f32.gmra.mrb[0].mxu0 %v5883
    %v5885 = vpop.f32.mrb[0].mxu0
    %v5886 = vadd.f32 %v5805, %v5885
    %v5887 = vpop.f32.mrb[0].mxu0
    %5888 = vdwg.mxu0
    %v5889 = vadd.f32 %v5341, %v5880
    %v5890 = vadd.f32 %v5347, %v5886
    %v5891 = vld [vmem:[%s12] sm:$0x1]
    %v5893 = vlaneseq
    %v5894 = vshrl.u32 %v5893, 7
    %v5895 = vsub.s32 0, %v5894
    %v5896 = vrot.slane %v5891, %v5895
    %v5898 = vadd.f32 %v5889, %v5896
    %v5899 = vadd.f32 %v5890, %v5896
    %v5900 = vxor.u32 %v5898, 2147483648
    %v5901 = vxor.u32 %v5899, 2147483648
    %v5902 = vmul.f32 %v5900, 1.442695
    %v5903 = vpow.pop %v5902
    %v5904 = vmul.f32 %v5901, 1.442695
    %v5905 = vpow.pop %v5904
    %v5906 = vadd.f32 %v5903, 1.0
    %v5907 = vadd.f32 %v5905, 1.0
    %v5908 = vrcp.pop %v5906
    %v5909 = vmul.f32 1.0, %v5908
    %v5910 = vrcp.pop %v5907
    %v5911 = vmul.f32 1.0, %v5910
    %v5912 = vmul.f32 %v5898, %v5909
    %v5913 = vmul.f32 %v5899, %v5911
    %v5914 = vld [vmem:[#allocation14] sm:$0xff]
    %v5915 = vld [vmem:[#allocation14 + $0x8] sm:$0xff]
    %v5916 = vld [vmem:[#allocation14 + $0x10] sm:$0xff]
    %v5917 = vld [vmem:[#allocation14 + $0x18] sm:$0xff]
    %v5918 = vld [vmem:[%s14] sm:$0x1]
    %v5920 = vlaneseq
    %v5921 = vshrl.u32 %v5920, 7
    %v5922 = vsub.s32 0, %v5921
    %v5923 = vrot.slane %v5918, %v5922
    %v5926 = vsel %vm817, %v5912, 0
    %v5929 = vsel %vm817, %v5913, 0
    %5931 = vmatprep.subr.mxu0 0.0
    %v5932 = vand.u32 %v5914, 4294901760
    %5933 = vmatpush1.msra.mxu0 %v5932
    %5934 = vmatprep.subr.mxu0 0.0
    %v5935 = vand.u32 %v5915, 4294901760
    %5936 = vmatpush1.msra.mxu0 %v5935
    %5937 = vmatprep.subr.mxu0 0.0
    %v5938 = vand.u32 %v5916, 4294901760
    %5939 = vmatpush1.msra.mxu0 %v5938
    %5940 = vmatprep.subr.mxu0 0.0
    %v5941 = vand.u32 %v5917, 4294901760
    %5942 = vmatpush1.msra.mxu0 %v5941
    %5943 = vmatprep.subr.mxu0 0.0
    %5944 = vmatpush1.msra.mxu0 0.0
    %5945 = vmatprep.subr.mxu0 0.0
    %5946 = vmatpush1.msra.mxu0 0.0
    %5947 = vmatprep.subr.mxu0 0.0
    %5948 = vmatpush1.msra.mxu0 0.0
    %5949 = vmatprep.subr.mxu0 0.0
    %5950 = vmatpush1.msra.mxu0 0.0
    %5951 = vmatprep.subr.mxu0 0.0
    %5952 = vmatpush1.msra.mxu0 0.0
    %5953 = vmatprep.subr.mxu0 0.0
    %5954 = vmatpush1.msra.mxu0 0.0
    %5955 = vmatprep.subr.mxu0 0.0
    %5956 = vmatpush1.msra.mxu0 0.0
    %5957 = vmatprep.subr.mxu0 0.0
    %5958 = vmatpush1.msra.mxu0 0.0
    %5959 = vmatprep.subr.mxu0 0.0
    %5960 = vmatpush1.msra.mxu0 0.0
    %5961 = vmatprep.subr.mxu0 0.0
    %5962 = vmatpush1.msra.mxu0 0.0
    %5963 = vmatprep.subr.mxu0 0.0
    %5964 = vmatpush1.msra.mxu0 0.0
    %5965 = vmatprep.subr.mxu0 0.0
    %5966 = vmatpush1.msra.mxu0 0.0
    %5967 = vmatprep.subr.mxu0 0.0
    %5968 = vmatpush1.msra.mxu0 0.0
    %5969 = vmatprep.subr.mxu0 0.0
    %5970 = vmatpush1.msra.mxu0 0.0
    %5971 = vmatprep.subr.mxu0 0.0
    %5972 = vmatpush1.msra.mxu0 0.0
    %5973 = vmatprep.subr.mxu0 0.0
    %5974 = vmatpush1.msra.mxu0 0.0
    %5975 = vmatprep.subr.mxu0 0.0
    %5976 = vmatpush1.msra.mxu0 0.0
    %5977 = vmatprep.subr.mxu0 0.0
    %5978 = vmatpush1.msra.mxu0 0.0
    %5979 = vmatprep.subr.mxu0 0.0
    %5980 = vmatpush1.msra.mxu0 0.0
    %5981 = vmatprep.subr.mxu0 0.0
    %5982 = vmatpush1.msra.mxu0 0.0
    %5983 = vmatprep.subr.mxu0 0.0
    %5984 = vmatpush1.msra.mxu0 0.0
    %5985 = vmatprep.subr.mxu0 0.0
    %5986 = vmatpush1.msra.mxu0 0.0
    %5987 = vmatprep.subr.mxu0 0.0
    %5988 = vmatpush1.msra.mxu0 0.0
    %5989 = vmatprep.subr.mxu0 0.0
    %5990 = vmatpush1.msra.mxu0 0.0
    %5991 = vmatprep.subr.mxu0 0.0
    %5992 = vmatpush1.msra.mxu0 0.0
    %5993 = vmatprep.subr.mxu0 0.0
    %5994 = vmatpush1.msra.mxu0 0.0
    %5995 = vmatprep.subr.mxu0 0.0
    %5996 = vmatpush1.msra.mxu0 0.0
    %5997 = vmatprep.subr.mxu0 0.0
    %5998 = vmatpush1.msra.mxu0 0.0
    %5999 = vmatprep.mubr.f32.mxu0 0.0
    %v6000 = vand.u32 %v5926, 4294901760
    %v6001 = vsub.f32 %v5926, %v6000
    %v6002 = vand.u32 %v6001, 4294901760
    %v6003 = vsub.f32 %v6001, %v6002
    %v6004 = vand.u32 %v6003, 4294901760
    %6005 = vmatmul.mubr.f32.gmra.mrb[0].mxu0 %v6004
    %v6006 = vpop.f32.mrb[0].mxu0
    %v6007 = vadd.f32 %v5923, %v6006
    %v6008 = vpop.f32.mrb[0].mxu0
    %6009 = vmatprep.mubr.f32.mxu0 0.0
    %v6010 = vand.u32 %v5929, 4294901760
    %v6011 = vsub.f32 %v5929, %v6010
    %v6012 = vand.u32 %v6011, 4294901760
    %v6013 = vsub.f32 %v6011, %v6012
    %v6014 = vand.u32 %v6013, 4294901760
    %6015 = vmatmul.mubr.f32.gmra.mrb[0].mxu0 %v6014
    %v6016 = vpop.f32.mrb[0].mxu0
    %v6017 = vadd.f32 %v5923, %v6016
    %v6018 = vpop.f32.mrb[0].mxu0
    %6019 = vdwg.mxu0
    %6020 = vmatprep.subr.mxu0 0.0
    %v6021 = vand.u32 %v5914, 4294901760
    %v6022 = vsub.f32 %v5914, %v6021
    %v6023 = vand.u32 %v6022, 4294901760
    %v6024 = vsub.f32 %v6022, %v6023
    %v6025 = vand.u32 %v6024, 4294901760
    %6026 = vmatpush1.msra.mxu0 %v6025
    %6027 = vmatprep.subr.mxu0 0.0
    %v6028 = vand.u32 %v5915, 4294901760
    %v6029 = vsub.f32 %v5915, %v6028
    %v6030 = vand.u32 %v6029, 4294901760
    %v6031 = vsub.f32 %v6029, %v6030
    %v6032 = vand.u32 %v6031, 4294901760
    %6033 = vmatpush1.msra.mxu0 %v6032
    %6034 = vmatprep.subr.mxu0 0.0
    %v6035 = vand.u32 %v5916, 4294901760
    %v6036 = vsub.f32 %v5916, %v6035
    %v6037 = vand.u32 %v6036, 4294901760
    %v6038 = vsub.f32 %v6036, %v6037
    %v6039 = vand.u32 %v6038, 4294901760
    %6040 = vmatpush1.msra.mxu0 %v6039
    %6041 = vmatprep.subr.mxu0 0.0
    %v6042 = vand.u32 %v5917, 4294901760
    %v6043 = vsub.f32 %v5917, %v6042
    %v6044 = vand.u32 %v6043, 4294901760
    %v6045 = vsub.f32 %v6043, %v6044
    %v6046 = vand.u32 %v6045, 4294901760
    %6047 = vmatpush1.msra.mxu0 %v6046
    %6048 = vmatprep.subr.mxu0 0.0
    %6049 = vmatpush1.msra.mxu0 0.0
    %6050 = vmatprep.subr.mxu0 0.0
    %6051 = vmatpush1.msra.mxu0 0.0
    %6052 = vmatprep.subr.mxu0 0.0
    %6053 = vmatpush1.msra.mxu0 0.0
    %6054 = vmatprep.subr.mxu0 0.0
    %6055 = vmatpush1.msra.mxu0 0.0
    %6056 = vmatprep.subr.mxu0 0.0
    %6057 = vmatpush1.msra.mxu0 0.0
    %6058 = vmatprep.subr.mxu0 0.0
    %6059 = vmatpush1.msra.mxu0 0.0
    %6060 = vmatprep.subr.mxu0 0.0
    %6061 = vmatpush1.msra.mxu0 0.0
    %6062 = vmatprep.subr.mxu0 0.0
    %6063 = vmatpush1.msra.mxu0 0.0
    %6064 = vmatprep.subr.mxu0 0.0
    %6065 = vmatpush1.msra.mxu0 0.0
    %6066 = vmatprep.subr.mxu0 0.0
    %6067 = vmatpush1.msra.mxu0 0.0
    %6068 = vmatprep.subr.mxu0 0.0
    %6069 = vmatpush1.msra.mxu0 0.0
    %6070 = vmatprep.subr.mxu0 0.0
    %6071 = vmatpush1.msra.mxu0 0.0
    %6072 = vmatprep.subr.mxu0 0.0
    %6073 = vmatpush1.msra.mxu0 0.0
    %6074 = vmatprep.subr.mxu0 0.0
    %6075 = vmatpush1.msra.mxu0 0.0
    %6076 = vmatprep.subr.mxu0 0.0
    %6077 = vmatpush1.msra.mxu0 0.0
    %6078 = vmatprep.subr.mxu0 0.0
    %6079 = vmatpush1.msra.mxu0 0.0
    %6080 = vmatprep.subr.mxu0 0.0
    %6081 = vmatpush1.msra.mxu0 0.0
    %6082 = vmatprep.subr.mxu0 0.0
    %6083 = vmatpush1.msra.mxu0 0.0
    %6084 = vmatprep.subr.mxu0 0.0
    %6085 = vmatpush1.msra.mxu0 0.0
    %6086 = vmatprep.subr.mxu0 0.0
    %6087 = vmatpush1.msra.mxu0 0.0
    %6088 = vmatprep.subr.mxu0 0.0
    %6089 = vmatpush1.msra.mxu0 0.0
    %6090 = vmatprep.subr.mxu0 0.0
    %6091 = vmatpush1.msra.mxu0 0.0
    %6092 = vmatprep.subr.mxu0 0.0
    %6093 = vmatpush1.msra.mxu0 0.0
    %6094 = vmatprep.subr.mxu0 0.0
    %6095 = vmatpush1.msra.mxu0 0.0
    %6096 = vmatprep.subr.mxu0 0.0
    %6097 = vmatpush1.msra.mxu0 0.0
    %6098 = vmatprep.subr.mxu0 0.0
    %6099 = vmatpush1.msra.mxu0 0.0
    %6100 = vmatprep.subr.mxu0 0.0
    %6101 = vmatpush1.msra.mxu0 0.0
    %6102 = vmatprep.subr.mxu0 0.0
    %6103 = vmatpush1.msra.mxu0 0.0
    %6104 = vmatprep.mubr.f32.mxu0 0.0
    %v6105 = vand.u32 %v5926, 4294901760
    %6106 = vmatmul.mubr.f32.gmra.mrb[0].mxu0 %v6105
    %v6107 = vpop.f32.mrb[0].mxu0
    %v6108 = vadd.f32 %v6007, %v6107
    %v6109 = vpop.f32.mrb[0].mxu0
    %6110 = vmatprep.mubr.f32.mxu0 0.0
    %v6111 = vand.u32 %v5929, 4294901760
    %6112 = vmatmul.mubr.f32.gmra.mrb[0].mxu0 %v6111
    %v6113 = vpop.f32.mrb[0].mxu0
    %v6114 = vadd.f32 %v6017, %v6113
    %v6115 = vpop.f32.mrb[0].mxu0
    %6116 = vdwg.mxu0
    %6117 = vmatprep.subr.mxu0 0.0
    %v6118 = vand.u32 %v5914, 4294901760
    %v6119 = vsub.f32 %v5914, %v6118
    %6120 = vmatpush1.msra.mxu0 %v6119
    %6121 = vmatprep.subr.mxu0 0.0
    %v6122 = vand.u32 %v5915, 4294901760
    %v6123 = vsub.f32 %v5915, %v6122
    %6124 = vmatpush1.msra.mxu0 %v6123
    %6125 = vmatprep.subr.mxu0 0.0
    %v6126 = vand.u32 %v5916, 4294901760
    %v6127 = vsub.f32 %v5916, %v6126
    %6128 = vmatpush1.msra.mxu0 %v6127
    %6129 = vmatprep.subr.mxu0 0.0
    %v6130 = vand.u32 %v5917, 4294901760
    %v6131 = vsub.f32 %v5917, %v6130
    %6132 = vmatpush1.msra.mxu0 %v6131
    %6133 = vmatprep.subr.mxu0 0.0
    %6134 = vmatpush1.msra.mxu0 0.0
    %6135 = vmatprep.subr.mxu0 0.0
    %6136 = vmatpush1.msra.mxu0 0.0
    %6137 = vmatprep.subr.mxu0 0.0
    %6138 = vmatpush1.msra.mxu0 0.0
    %6139 = vmatprep.subr.mxu0 0.0
    %6140 = vmatpush1.msra.mxu0 0.0
    %6141 = vmatprep.subr.mxu0 0.0
    %6142 = vmatpush1.msra.mxu0 0.0
    %6143 = vmatprep.subr.mxu0 0.0
    %6144 = vmatpush1.msra.mxu0 0.0
    %6145 = vmatprep.subr.mxu0 0.0
    %6146 = vmatpush1.msra.mxu0 0.0
    %6147 = vmatprep.subr.mxu0 0.0
    %6148 = vmatpush1.msra.mxu0 0.0
    %6149 = vmatprep.subr.mxu0 0.0
    %6150 = vmatpush1.msra.mxu0 0.0
    %6151 = vmatprep.subr.mxu0 0.0
    %6152 = vmatpush1.msra.mxu0 0.0
    %6153 = vmatprep.subr.mxu0 0.0
    %6154 = vmatpush1.msra.mxu0 0.0
    %6155 = vmatprep.subr.mxu0 0.0
    %6156 = vmatpush1.msra.mxu0 0.0
    %6157 = vmatprep.subr.mxu0 0.0
    %6158 = vmatpush1.msra.mxu0 0.0
    %6159 = vmatprep.subr.mxu0 0.0
    %6160 = vmatpush1.msra.mxu0 0.0
    %6161 = vmatprep.subr.mxu0 0.0
    %6162 = vmatpush1.msra.mxu0 0.0
    %6163 = vmatprep.subr.mxu0 0.0
    %6164 = vmatpush1.msra.mxu0 0.0
    %6165 = vmatprep.subr.mxu0 0.0
    %6166 = vmatpush1.msra.mxu0 0.0
    %6167 = vmatprep.subr.mxu0 0.0
    %6168 = vmatpush1.msra.mxu0 0.0
    %6169 = vmatprep.subr.mxu0 0.0
    %6170 = vmatpush1.msra.mxu0 0.0
    %6171 = vmatprep.subr.mxu0 0.0
    %6172 = vmatpush1.msra.mxu0 0.0
    %6173 = vmatprep.subr.mxu0 0.0
    %6174 = vmatpush1.msra.mxu0 0.0
    %6175 = vmatprep.subr.mxu0 0.0
    %6176 = vmatpush1.msra.mxu0 0.0
    %6177 = vmatprep.subr.mxu0 0.0
    %6178 = vmatpush1.msra.mxu0 0.0
    %6179 = vmatprep.subr.mxu0 0.0
    %6180 = vmatpush1.msra.mxu0 0.0
    %6181 = vmatprep.subr.mxu0 0.0
    %6182 = vmatpush1.msra.mxu0 0.0
    %6183 = vmatprep.subr.mxu0 0.0
    %6184 = vmatpush1.msra.mxu0 0.0
    %6185 = vmatprep.subr.mxu0 0.0
    %6186 = vmatpush1.msra.mxu0 0.0
    %6187 = vmatprep.subr.mxu0 0.0
    %6188 = vmatpush1.msra.mxu0 0.0
    %6189 = vmatprep.mubr.f32.mxu0 0.0
    %v6190 = vand.u32 %v5926, 4294901760
    %v6191 = vsub.f32 %v5926, %v6190
    %6192 = vmatmul.mubr.f32.gmra.mrb[0].mxu0 %v6191
    %v6193 = vpop.f32.mrb[0].mxu0
    %v6194 = vadd.f32 %v6108, %v6193
    %v6195 = vpop.f32.mrb[0].mxu0
    %6196 = vmatprep.mubr.f32.mxu0 0.0
    %v6197 = vand.u32 %v5929, 4294901760
    %v6198 = vsub.f32 %v5929, %v6197
    %6199 = vmatmul.mubr.f32.gmra.mrb[0].mxu0 %v6198
    %v6200 = vpop.f32.mrb[0].mxu0
    %v6201 = vadd.f32 %v6114, %v6200
    %v6202 = vpop.f32.mrb[0].mxu0
    %6203 = vdwg.mxu0
    %6204 = vmatprep.subr.mxu0 0.0
    %v6205 = vand.u32 %v5914, 4294901760
    %6206 = vmatpush1.msra.mxu0 %v6205
    %6207 = vmatprep.subr.mxu0 0.0
    %v6208 = vand.u32 %v5915, 4294901760
    %6209 = vmatpush1.msra.mxu0 %v6208
    %6210 = vmatprep.subr.mxu0 0.0
    %v6211 = vand.u32 %v5916, 4294901760
    %6212 = vmatpush1.msra.mxu0 %v6211
    %6213 = vmatprep.subr.mxu0 0.0
    %v6214 = vand.u32 %v5917, 4294901760
    %6215 = vmatpush1.msra.mxu0 %v6214
    %6216 = vmatprep.subr.mxu0 0.0
    %6217 = vmatpush1.msra.mxu0 0.0
    %6218 = vmatprep.subr.mxu0 0.0
    %6219 = vmatpush1.msra.mxu0 0.0
    %6220 = vmatprep.subr.mxu0 0.0
    %6221 = vmatpush1.msra.mxu0 0.0
    %6222 = vmatprep.subr.mxu0 0.0
    %6223 = vmatpush1.msra.mxu0 0.0
    %6224 = vmatprep.subr.mxu0 0.0
    %6225 = vmatpush1.msra.mxu0 0.0
    %6226 = vmatprep.subr.mxu0 0.0
    %6227 = vmatpush1.msra.mxu0 0.0
    %6228 = vmatprep.subr.mxu0 0.0
    %6229 = vmatpush1.msra.mxu0 0.0
    %6230 = vmatprep.subr.mxu0 0.0
    %6231 = vmatpush1.msra.mxu0 0.0
    %6232 = vmatprep.subr.mxu0 0.0
    %6233 = vmatpush1.msra.mxu0 0.0
    %6234 = vmatprep.subr.mxu0 0.0
    %6235 = vmatpush1.msra.mxu0 0.0
    %6236 = vmatprep.subr.mxu0 0.0
    %6237 = vmatpush1.msra.mxu0 0.0
    %6238 = vmatprep.subr.mxu0 0.0
    %6239 = vmatpush1.msra.mxu0 0.0
    %6240 = vmatprep.subr.mxu0 0.0
    %6241 = vmatpush1.msra.mxu0 0.0
    %6242 = vmatprep.subr.mxu0 0.0
    %6243 = vmatpush1.msra.mxu0 0.0
    %6244 = vmatprep.subr.mxu0 0.0
    %6245 = vmatpush1.msra.mxu0 0.0
    %6246 = vmatprep.subr.mxu0 0.0
    %6247 = vmatpush1.msra.mxu0 0.0
    %6248 = vmatprep.subr.mxu0 0.0
    %6249 = vmatpush1.msra.mxu0 0.0
    %6250 = vmatprep.subr.mxu0 0.0
    %6251 = vmatpush1.msra.mxu0 0.0
    %6252 = vmatprep.subr.mxu0 0.0
    %6253 = vmatpush1.msra.mxu0 0.0
    %6254 = vmatprep.subr.mxu0 0.0
    %6255 = vmatpush1.msra.mxu0 0.0
    %6256 = vmatprep.subr.mxu0 0.0
    %6257 = vmatpush1.msra.mxu0 0.0
    %6258 = vmatprep.subr.mxu0 0.0
    %6259 = vmatpush1.msra.mxu0 0.0
    %6260 = vmatprep.subr.mxu0 0.0
    %6261 = vmatpush1.msra.mxu0 0.0
    %6262 = vmatprep.subr.mxu0 0.0
    %6263 = vmatpush1.msra.mxu0 0.0
    %6264 = vmatprep.subr.mxu0 0.0
    %6265 = vmatpush1.msra.mxu0 0.0
    %6266 = vmatprep.subr.mxu0 0.0
    %6267 = vmatpush1.msra.mxu0 0.0
    %6268 = vmatprep.subr.mxu0 0.0
    %6269 = vmatpush1.msra.mxu0 0.0
    %6270 = vmatprep.subr.mxu0 0.0
    %6271 = vmatpush1.msra.mxu0 0.0
    %6272 = vmatprep.mubr.f32.mxu0 0.0
    %v6273 = vand.u32 %v5926, 4294901760
    %v6274 = vsub.f32 %v5926, %v6273
    %v6275 = vand.u32 %v6274, 4294901760
    %6276 = vmatmul.mubr.f32.gmra.mrb[0].mxu0 %v6275
    %v6277 = vpop.f32.mrb[0].mxu0
    %v6278 = vadd.f32 %v6194, %v6277
    %v6279 = vpop.f32.mrb[0].mxu0
    %6280 = vmatprep.mubr.f32.mxu0 0.0
    %v6281 = vand.u32 %v5929, 4294901760
    %v6282 = vsub.f32 %v5929, %v6281
    %v6283 = vand.u32 %v6282, 4294901760
    %6284 = vmatmul.mubr.f32.gmra.mrb[0].mxu0 %v6283
    %v6285 = vpop.f32.mrb[0].mxu0
    %v6286 = vadd.f32 %v6201, %v6285
    %v6287 = vpop.f32.mrb[0].mxu0
    %6288 = vdwg.mxu0
    %6289 = vmatprep.subr.mxu0 0.0
    %v6290 = vand.u32 %v5914, 4294901760
    %v6291 = vsub.f32 %v5914, %v6290
    %v6292 = vand.u32 %v6291, 4294901760
    %6293 = vmatpush1.msra.mxu0 %v6292
    %6294 = vmatprep.subr.mxu0 0.0
    %v6295 = vand.u32 %v5915, 4294901760
    %v6296 = vsub.f32 %v5915, %v6295
    %v6297 = vand.u32 %v6296, 4294901760
    %6298 = vmatpush1.msra.mxu0 %v6297
    %6299 = vmatprep.subr.mxu0 0.0
    %v6300 = vand.u32 %v5916, 4294901760
    %v6301 = vsub.f32 %v5916, %v6300
    %v6302 = vand.u32 %v6301, 4294901760
    %6303 = vmatpush1.msra.mxu0 %v6302
    %6304 = vmatprep.subr.mxu0 0.0
    %v6305 = vand.u32 %v5917, 4294901760
    %v6306 = vsub.f32 %v5917, %v6305
    %v6307 = vand.u32 %v6306, 4294901760
    %6308 = vmatpush1.msra.mxu0 %v6307
    %6309 = vmatprep.subr.mxu0 0.0
    %6310 = vmatpush1.msra.mxu0 0.0
    %6311 = vmatprep.subr.mxu0 0.0
    %6312 = vmatpush1.msra.mxu0 0.0
    %6313 = vmatprep.subr.mxu0 0.0
    %6314 = vmatpush1.msra.mxu0 0.0
    %6315 = vmatprep.subr.mxu0 0.0
    %6316 = vmatpush1.msra.mxu0 0.0
    %6317 = vmatprep.subr.mxu0 0.0
    %6318 = vmatpush1.msra.mxu0 0.0
    %6319 = vmatprep.subr.mxu0 0.0
    %6320 = vmatpush1.msra.mxu0 0.0
    %6321 = vmatprep.subr.mxu0 0.0
    %6322 = vmatpush1.msra.mxu0 0.0
    %6323 = vmatprep.subr.mxu0 0.0
    %6324 = vmatpush1.msra.mxu0 0.0
    %6325 = vmatprep.subr.mxu0 0.0
    %6326 = vmatpush1.msra.mxu0 0.0
    %6327 = vmatprep.subr.mxu0 0.0
    %6328 = vmatpush1.msra.mxu0 0.0
    %6329 = vmatprep.subr.mxu0 0.0
    %6330 = vmatpush1.msra.mxu0 0.0
    %6331 = vmatprep.subr.mxu0 0.0
    %6332 = vmatpush1.msra.mxu0 0.0
    %6333 = vmatprep.subr.mxu0 0.0
    %6334 = vmatpush1.msra.mxu0 0.0
    %6335 = vmatprep.subr.mxu0 0.0
    %6336 = vmatpush1.msra.mxu0 0.0
    %6337 = vmatprep.subr.mxu0 0.0
    %6338 = vmatpush1.msra.mxu0 0.0
    %6339 = vmatprep.subr.mxu0 0.0
    %6340 = vmatpush1.msra.mxu0 0.0
    %6341 = vmatprep.subr.mxu0 0.0
    %6342 = vmatpush1.msra.mxu0 0.0
    %6343 = vmatprep.subr.mxu0 0.0
    %6344 = vmatpush1.msra.mxu0 0.0
    %6345 = vmatprep.subr.mxu0 0.0
    %6346 = vmatpush1.msra.mxu0 0.0
    %6347 = vmatprep.subr.mxu0 0.0
    %6348 = vmatpush1.msra.mxu0 0.0
    %6349 = vmatprep.subr.mxu0 0.0
    %6350 = vmatpush1.msra.mxu0 0.0
    %6351 = vmatprep.subr.mxu0 0.0
    %6352 = vmatpush1.msra.mxu0 0.0
    %6353 = vmatprep.subr.mxu0 0.0
    %6354 = vmatpush1.msra.mxu0 0.0
    %6355 = vmatprep.subr.mxu0 0.0
    %6356 = vmatpush1.msra.mxu0 0.0
    %6357 = vmatprep.subr.mxu0 0.0
    %6358 = vmatpush1.msra.mxu0 0.0
    %6359 = vmatprep.subr.mxu0 0.0
    %6360 = vmatpush1.msra.mxu0 0.0
    %6361 = vmatprep.subr.mxu0 0.0
    %6362 = vmatpush1.msra.mxu0 0.0
    %6363 = vmatprep.subr.mxu0 0.0
    %6364 = vmatpush1.msra.mxu0 0.0
    %6365 = vmatprep.mubr.f32.mxu0 0.0
    %v6366 = vand.u32 %v5926, 4294901760
    %6367 = vmatmul.mubr.f32.gmra.mrb[0].mxu0 %v6366
    %v6368 = vpop.f32.mrb[0].mxu0
    %v6369 = vadd.f32 %v6278, %v6368
    %v6370 = vpop.f32.mrb[0].mxu0
    %6371 = vmatprep.mubr.f32.mxu0 0.0
    %v6372 = vand.u32 %v5929, 4294901760
    %6373 = vmatmul.mubr.f32.gmra.mrb[0].mxu0 %v6372
    %v6374 = vpop.f32.mrb[0].mxu0
    %v6375 = vadd.f32 %v6286, %v6374
    %v6376 = vpop.f32.mrb[0].mxu0
    %6377 = vdwg.mxu0
    %6378 = vmatprep.subr.mxu0 0.0
    %v6379 = vand.u32 %v5914, 4294901760
    %6380 = vmatpush1.msra.mxu0 %v6379
    %6381 = vmatprep.subr.mxu0 0.0
    %v6382 = vand.u32 %v5915, 4294901760
    %6383 = vmatpush1.msra.mxu0 %v6382
    %6384 = vmatprep.subr.mxu0 0.0
    %v6385 = vand.u32 %v5916, 4294901760
    %6386 = vmatpush1.msra.mxu0 %v6385
    %6387 = vmatprep.subr.mxu0 0.0
    %v6388 = vand.u32 %v5917, 4294901760
    %6389 = vmatpush1.msra.mxu0 %v6388
    %6390 = vmatprep.subr.mxu0 0.0
    %6391 = vmatpush1.msra.mxu0 0.0
    %6392 = vmatprep.subr.mxu0 0.0
    %6393 = vmatpush1.msra.mxu0 0.0
    %6394 = vmatprep.subr.mxu0 0.0
    %6395 = vmatpush1.msra.mxu0 0.0
    %6396 = vmatprep.subr.mxu0 0.0
    %6397 = vmatpush1.msra.mxu0 0.0
    %6398 = vmatprep.subr.mxu0 0.0
    %6399 = vmatpush1.msra.mxu0 0.0
    %6400 = vmatprep.subr.mxu0 0.0
    %6401 = vmatpush1.msra.mxu0 0.0
    %6402 = vmatprep.subr.mxu0 0.0
    %6403 = vmatpush1.msra.mxu0 0.0
    %6404 = vmatprep.subr.mxu0 0.0
    %6405 = vmatpush1.msra.mxu0 0.0
    %6406 = vmatprep.subr.mxu0 0.0
    %6407 = vmatpush1.msra.mxu0 0.0
    %6408 = vmatprep.subr.mxu0 0.0
    %6409 = vmatpush1.msra.mxu0 0.0
    %6410 = vmatprep.subr.mxu0 0.0
    %6411 = vmatpush1.msra.mxu0 0.0
    %6412 = vmatprep.subr.mxu0 0.0
    %6413 = vmatpush1.msra.mxu0 0.0
    %6414 = vmatprep.subr.mxu0 0.0
    %6415 = vmatpush1.msra.mxu0 0.0
    %6416 = vmatprep.subr.mxu0 0.0
    %6417 = vmatpush1.msra.mxu0 0.0
    %6418 = vmatprep.subr.mxu0 0.0
    %6419 = vmatpush1.msra.mxu0 0.0
    %6420 = vmatprep.subr.mxu0 0.0
    %6421 = vmatpush1.msra.mxu0 0.0
    %6422 = vmatprep.subr.mxu0 0.0
    %6423 = vmatpush1.msra.mxu0 0.0
    %6424 = vmatprep.subr.mxu0 0.0
    %6425 = vmatpush1.msra.mxu0 0.0
    %6426 = vmatprep.subr.mxu0 0.0
    %6427 = vmatpush1.msra.mxu0 0.0
    %6428 = vmatprep.subr.mxu0 0.0
    %6429 = vmatpush1.msra.mxu0 0.0
    %6430 = vmatprep.subr.mxu0 0.0
    %6431 = vmatpush1.msra.mxu0 0.0
    %6432 = vmatprep.subr.mxu0 0.0
    %6433 = vmatpush1.msra.mxu0 0.0
    %6434 = vmatprep.subr.mxu0 0.0
    %6435 = vmatpush1.msra.mxu0 0.0
    %6436 = vmatprep.subr.mxu0 0.0
    %6437 = vmatpush1.msra.mxu0 0.0
    %6438 = vmatprep.subr.mxu0 0.0
    %6439 = vmatpush1.msra.mxu0 0.0
    %6440 = vmatprep.subr.mxu0 0.0
    %6441 = vmatpush1.msra.mxu0 0.0
    %6442 = vmatprep.subr.mxu0 0.0
    %6443 = vmatpush1.msra.mxu0 0.0
    %6444 = vmatprep.subr.mxu0 0.0
    %6445 = vmatpush1.msra.mxu0 0.0
    %6446 = vmatprep.mubr.f32.mxu0 0.0
    %v6447 = vand.u32 %v5926, 4294901760
    %6448 = vmatmul.mubr.f32.gmra.mrb[0].mxu0 %v6447
    %v6449 = vpop.f32.mrb[0].mxu0
    %v6450 = vadd.f32 %v6369, %v6449
    %v6451 = vpop.f32.mrb[0].mxu0
    %6452 = vmatprep.mubr.f32.mxu0 0.0
    %v6453 = vand.u32 %v5929, 4294901760
    %6454 = vmatmul.mubr.f32.gmra.mrb[0].mxu0 %v6453
    %v6455 = vpop.f32.mrb[0].mxu0
    %v6456 = vadd.f32 %v6375, %v6455
    %v6457 = vpop.f32.mrb[0].mxu0
    %6458 = vdwg.mxu0
    %v6459 = vadd.f32 %v6450, %v3530
    %v6460 = vadd.f32 %v6456, %v3531
    %v6461 = vmax.f32 %v6459, 0.0
    %v6462 = vmax.f32 %v6460, 0.0
    %6463 = vst [vmem:[#allocation15] sm:$0xff] %v6461
    %6464 = vst [vmem:[#allocation15 + $0x8] sm:$0xff] %v6462
    // Predicated region
    $region90: #{tpu_custom_call.1} parent=1 // pred_check
      _
    $region91: #{tpu_custom_call.1} parent=1 // pred_check_branch
      %6466 = sbr.rel (0) target = $region93
    $region92: #{tpu_custom_call.1} parent=1 // pred_region
      %s6468 = ssub.s32 256, 256
      %6469 = vsyncadd [#allocation5], %s6468
      %s6470 = sshll.u32 [#allocation15], 4
      %s6471 = int_to_ptr.vmem [resolvable:$true] %s6470
      %6476 = dma.vmem_to_hbm [thread:$0]  %s6471, 256, %s15, [#allocation5], 128, 128, 8
    $region93: #{tpu_custom_call.1} parent=1 // pred_fallthru
      _
    // Predicated region
    $region94: #{tpu_custom_call.1} parent=1 // pred_check
      _
    $region95: #{tpu_custom_call.1} parent=1 // pred_check_branch
      %6478 = sbr.rel (0) target = $region97
    $region96: #{tpu_custom_call.1} parent=1 // pred_region
      %6479 = dma.done [#allocation5], 256
    $region97: #{tpu_custom_call.1} parent=1 // pred_fallthru
      _
    %6480 = vsyncpa [#allocation4], 1
    %6481 = vsyncpa [#allocation7], 1
    %6482 = vsyncpa [#allocation10], 1
    %6483 = vsyncpa [#allocation13], 1
    %6484 = vsyncpa [#allocation5], 1

</llo_original>
